<compile_context>
chip_gen: v7x
topology: tpu7x:2x2x1
jax: 0.10.0
libtpu: 0.0.40
codegen_flags: <defaults>
</compile_context>

<pallas_src>
import functools
import math

import jax
import jax.numpy as jnp
from jax.experimental import pallas as pl
from jax.experimental.pallas import tpu as pltpu

EPS = 1e-6
MASK_SCALE = 1e9      # masked positions get -1e9 added to their scores


# ----------------------------- in-kernel helpers -----------------------------

def _layernorm(x, alpha, bias):
    # alpha * (x - mean) / (std + eps) + bias; unbiased std (matches torch .std()).
    mean = jnp.mean(x, axis=-1, keepdims=True)
    xc = x - mean
    var = jnp.sum(xc * xc, axis=-1, keepdims=True) * (1.0 / (x.shape[-1] - 1))
    inv = pl.reciprocal(jnp.sqrt(var) + EPS, approx=True)
    return alpha * xc * inv + bias


def _mha(num_heads, q_in, kv_in, mask_add, wq, bq, wk, bk, wv, bv, wo, bo):
    # q_in:  (M,  D) bf16   (already layer-normed)
    # kv_in: (Mk, D) bf16
    # mask_add: (M, Mk) f32 additive mask (0 keep / -1e9 drop)
    # wq/wk/wv/wo: (D, D) bf16 (wq, bq pre-scaled by 1/sqrt(dh)); biases (1, D) f32
    D = wq.shape[0]
    dh = D // num_heads

    # Fused, lane-dense projections: (M, D) @ (D, D), f32 accumulation on the MXU.
    q = (jnp.dot(q_in, wq, preferred_element_type=jnp.float32) + bq).astype(jnp.bfloat16)
    k = (jnp.dot(kv_in, wk, preferred_element_type=jnp.float32) + bk).astype(jnp.bfloat16)
    v = (jnp.dot(kv_in, wv, preferred_element_type=jnp.float32) + bv).astype(jnp.bfloat16)

    # Per-head scores + softmax + PV (per-head shapes are inherent to MHA).
    # TODO(synk): for long sequences, tile the KV axis (flash-style online softmax)
    # instead of materializing the full (M, Mk) f32 score tile.
    ctx = []
    for h in range(num_heads):
        sl = slice(h * dh, (h + 1) * dh)
        s = jax.lax.dot_general(q[:, sl], k[:, sl],
                                dimension_numbers=(((1,), (1,)), ((), ())),
                                preferred_element_type=jnp.float32)        # (M, Mk)
        s = s + mask_add
        s = s - jnp.max(s, axis=-1, keepdims=True)
        p = jnp.exp(s)
        p = p * pl.reciprocal(jnp.sum(p, axis=-1, keepdims=True), approx=True)
        ctx.append(jnp.dot(p.astype(jnp.bfloat16), v[:, sl],
                           preferred_element_type=jnp.float32))            # (M, dh)

    # Head concat on the lane axis, then ONE fused output projection: the sum
    # over heads is folded into the MXU K-contraction.
    ctx = jnp.concatenate(ctx, axis=-1).astype(jnp.bfloat16)               # (M, D)
    return jnp.dot(ctx, wo, preferred_element_type=jnp.float32) + bo       # (M, D) f32


# ------------------------------- Pallas kernel --------------------------------

def _decoder_layer_kernel(num_heads, *refs):
    (x_ref, enc_ref, tmask_ref, smask_ref,
     n1a, n1b, sqw, sqb, skw, skb, svw, svb, sow, sob,
     n2a, n2b, cqw, cqb, ckw, ckb, cvw, cvb, cow, cob,
     n3a, n3b, fw1, fb1, fw2, fb2,
     fna, fnb, o_ref) = refs

    l = pl.program_id(1)

    # First layer of this batch element: seed the VMEM-resident activation (the
    # revisited output block) from the embedded input.
    @pl.when(l == 0)
    def _():
        o_ref[...] = x_ref[...]

    x = o_ref[...]                                # (S, D) f32, VMEM-resident
    enc = enc_ref[...]                            # (Se, D) bf16
    tmask = tmask_ref[...].astype(jnp.float32)    # (S, S)  additive
    smask = smask_ref[...].astype(jnp.float32)    # (S, Se) additive

    # TODO(synk): dropout1/2/3 and the positional-encoding dropout are identity
    # (inference / eval mode).

    # ---- x = norm1(x); x = x + self_attn(x, x, x, target_mask) ----
    xn = _layernorm(x, n1a[...], n1b[...]).astype(jnp.bfloat16)
    x = x + _mha(num_heads, xn, xn, tmask,
                 sqw[...], sqb[...], skw[...], skb[...],
                 svw[...], svb[...], sow[...], sob[...])

    # ---- x = norm2(x); x = x + cross_attn(x, enc, enc, src_mask) ----
    xn = _layernorm(x, n2a[...], n2b[...]).astype(jnp.bfloat16)
    x = x + _mha(num_heads, xn, enc, smask,
                 cqw[...], cqb[...], ckw[...], ckb[...],
                 cvw[...], cvb[...], cow[...], cob[...])

    # ---- x = norm3(x); x = feed_forward(x)   (NO residual, per reference) ----
    xn = _layernorm(x, n3a[...], n3b[...]).astype(jnp.bfloat16)
    h = jnp.maximum(
        jnp.dot(xn, fw1[...], preferred_element_type=jnp.float32) + fb1[...], 0.0)
    x = jnp.dot(h.astype(jnp.bfloat16), fw2[...],
                preferred_element_type=jnp.float32) + fb2[...]

    o_ref[...] = x

    # ---- final Norm after the last layer (fused into the same kernel) ----
    @pl.when(l == pl.num_programs(1) - 1)
    def _():
        o_ref[...] = _layernorm(x, fna[...], fnb[...])


def decoder_stack(x, enc, tmask_add, smask_add, stacked, final_norm, num_heads):
    B, S, D = x.shape
    Se = enc.shape[1]
    L = stacked[0].shape[0]
    dff = stacked[-4].shape[-1]

    def batch3(d1, d2):
        return pl.BlockSpec((None, d1, d2), lambda b, l: (b, 0, 0))

    def layer_spec(a):
        return pl.BlockSpec((None,) + a.shape[1:], lambda b, l: (l, 0, 0))

    def full2(a):
        return pl.BlockSpec(a.shape, lambda b, l: (0, 0))

    in_specs = ([batch3(S, D), batch3(Se, D), batch3(S, S), batch3(S, Se)]
                + [layer_spec(a) for a in stacked]
                + [full2(a) for a in final_norm])
    out_spec = batch3(S, D)

    # VMEM cap: ~3x the per-step weight blocks (double buffering + headroom) plus
    # activation slack, kept well under v7x's 64 MiB physical VMEM
    # (v5e/v6e have 128 MiB, so the same cap is safe everywhere).
    weight_bytes = sum(math.prod(a.shape[1:]) * a.dtype.itemsize for a in stacked)
    act_bytes = 4 * (3 * S * D + Se * D + S * S + S * Se + S * dff)
    vmem_limit = int(min(48 << 20, max(16 << 20, 3 * weight_bytes + 4 * act_bytes)))

    return pl.pallas_call(
        functools.partial(_decoder_layer_kernel, num_heads),
        out_shape=jax.ShapeDtypeStruct((B, S, D), jnp.float32),
        grid=(B, L),
        in_specs=in_specs,
        out_specs=out_spec,
        compiler_params=pltpu.CompilerParams(
            dimension_semantics=("parallel", "arbitrary"),
            vmem_limit_bytes=vmem_limit),
    )(x, enc, tmask_add, smask_add, *stacked, *final_norm)


# ------------------------------- parameter init -------------------------------

def positional_encoding_table(max_len, d):
    pos = jnp.arange(max_len, dtype=jnp.float32)[:, None]
    i = jnp.arange(0, d, 2, dtype=jnp.float32)
    div = jnp.exp(-math.log(10000.0) * i / d)
    pe = jnp.zeros((max_len, d), jnp.float32)
    pe = pe.at[:, 0::2].set(jnp.sin(pos * div))
    pe = pe.at[:, 1::2].set(jnp.cos(pos * div))
    return pe


def init_decoder_params(key, *, vocab_size, max_seq_len, embed_dim,
                        num_layers, num_heads, dff):
    dh = embed_dim // num_heads
    keys = iter(jax.random.split(key, 1 + num_layers * 10))

    def linear(fan_in, fan_out):
        w = jax.random.normal(next(keys), (fan_in, fan_out),
                              jnp.float32) * (1.0 / math.sqrt(fan_in))
        b = jnp.zeros((fan_out,), jnp.float32)
        return w, b

    def attn():
        # y = x @ W + b layout; weights stay fused [D, H*dh] (no per-head split).
        # 1/sqrt(dh) folded into the query projection (weight AND bias).
        wq, bq = linear(embed_dim, embed_dim)
        wk, bk = linear(embed_dim, embed_dim)
        wv, bv = linear(embed_dim, embed_dim)
        wo, bo = linear(embed_dim, embed_dim)
        s = 1.0 / math.sqrt(dh)
        return [(wq * s).astype(jnp.bfloat16), (bq * s).reshape(1, embed_dim),
                wk.astype(jnp.bfloat16),       bk.reshape(1, embed_dim),
                wv.astype(jnp.bfloat16),       bv.reshape(1, embed_dim),
                wo.astype(jnp.bfloat16),       bo.reshape(1, embed_dim)]

    def norm():
        return [jnp.ones((1, embed_dim), jnp.float32),
                jnp.zeros((1, embed_dim), jnp.float32)]

    per_layer = []
    for _ in range(num_layers):
        p = []
        p += norm()                          # norm1
        p += attn()                          # self-attention
        p += norm()                          # norm2
        p += attn()                          # cross-attention
        p += norm()                          # norm3
        w1, b1 = linear(embed_dim, dff)      # feed_forward[0]
        w2, b2 = linear(dff, embed_dim)      # feed_forward[2]
        p += [w1.astype(jnp.bfloat16), b1.reshape(1, dff),
              w2.astype(jnp.bfloat16), b2.reshape(1, embed_dim)]
        per_layer.append(p)

    # Stack each per-layer tensor along a leading layer axis so the kernel can
    # stream layer l's block via BlockSpec index_map (l, 0, 0).
    stacked = [jnp.stack([layer[i] for layer in per_layer], axis=0)
               for i in range(len(per_layer[0]))]
    final_norm = norm()                      # final Norm (alpha, bias)

    embedding = jax.random.normal(next(keys), (vocab_size, embed_dim), jnp.float32)
    return {"embedding": embedding,
            "pe": positional_encoding_table(max_seq_len, embed_dim),
            "stacked": stacked,
            "final_norm": final_norm,
            "num_layers": num_layers}


# -------------------------------- forward pass --------------------------------

def _additive_mask(mask01, Sq, Sk):
    # (B, Sq or 1, Sk) 0/1 mask -> (B, Sq, Sk) additive bf16: 0 keep, -1e9 drop.
    B = mask01.shape[0]
    m = jnp.broadcast_to(mask01.astype(jnp.float32), (B, Sq, Sk))
    return ((m - 1.0) * MASK_SCALE).astype(jnp.bfloat16)


def decoder_forward(params, target, encoder_output, src_mask, target_mask, num_heads):
    B, S = target.shape
    Se = encoder_output.shape[1]
    D = params["embedding"].shape[1]

    # InputEmbeddings: embedding(target) * sqrt(embed_dim); PositionalEncoding: + pe
    x = params["embedding"][target] * math.sqrt(D)
    x = (x + params["pe"][:S][None, :, :]).astype(jnp.float32)

    enc = encoder_output.astype(jnp.bfloat16)
    tmask_add = _additive_mask(target_mask, S, S)     # (B, S, S)
    smask_add = _additive_mask(src_mask, S, Se)       # (B, S, Se)

    return decoder_stack(x, enc, tmask_add, smask_add,
                         params["stacked"], params["final_norm"], num_heads)


# ----------------------------------- main --------------------------------------

if __name__ == "__main__":
    B, S, S_enc = 2, 8, 8
    embed_dim, num_heads, num_layers = 128, 8, 2
    vocab_size, max_seq_len, dff = 50, 16, 2048

    key = jax.random.PRNGKey(0)
    k_tok, k_enc, k_par = jax.random.split(key, 3)

    target = jax.random.randint(k_tok, (B, S), 0, vocab_size)
    encoder_output = jax.random.normal(k_enc, (B, S_enc, embed_dim), jnp.float32)
    target_mask = jnp.broadcast_to(
        jnp.tril(jnp.ones((S, S), jnp.float32))[None], (B, S, S))
    src_mask = jnp.ones((B, 1, S_enc), jnp.float32)

    params = init_decoder_params(
        k_par, vocab_size=vocab_size, max_seq_len=max_seq_len,
        embed_dim=embed_dim, num_layers=num_layers,
        num_heads=num_heads, dff=dff)

    out = decoder_forward(params, target, encoder_output, src_mask,
                          target_mask, num_heads)
    out = jax.block_until_ready(out)
    assert out.shape == (B, S, embed_dim)
    print("KERNEL_OK")
</pallas_src>

<mosaic_0001>
module attributes {stable_mosaic.version = 11 : i64} {
  func.func @_decoder_layer_kernel(%arg0: i32, %arg1: i32, %arg2: memref<1x8x128xf32, #tpu.memory_space<vmem>>, %arg3: memref<1x8x128xbf16, #tpu.memory_space<vmem>>, %arg4: memref<1x8x8xbf16, #tpu.memory_space<vmem>>, %arg5: memref<1x8x8xbf16, #tpu.memory_space<vmem>>, %arg6: memref<1x1x128xf32, #tpu.memory_space<vmem>>, %arg7: memref<1x1x128xf32, #tpu.memory_space<vmem>>, %arg8: memref<1x128x128xbf16, #tpu.memory_space<vmem>>, %arg9: memref<1x1x128xf32, #tpu.memory_space<vmem>>, %arg10: memref<1x128x128xbf16, #tpu.memory_space<vmem>>, %arg11: memref<1x1x128xf32, #tpu.memory_space<vmem>>, %arg12: memref<1x128x128xbf16, #tpu.memory_space<vmem>>, %arg13: memref<1x1x128xf32, #tpu.memory_space<vmem>>, %arg14: memref<1x128x128xbf16, #tpu.memory_space<vmem>>, %arg15: memref<1x1x128xf32, #tpu.memory_space<vmem>>, %arg16: memref<1x1x128xf32, #tpu.memory_space<vmem>>, %arg17: memref<1x1x128xf32, #tpu.memory_space<vmem>>, %arg18: memref<1x128x128xbf16, #tpu.memory_space<vmem>>, %arg19: memref<1x1x128xf32, #tpu.memory_space<vmem>>, %arg20: memref<1x128x128xbf16, #tpu.memory_space<vmem>>, %arg21: memref<1x1x128xf32, #tpu.memory_space<vmem>>, %arg22: memref<1x128x128xbf16, #tpu.memory_space<vmem>>, %arg23: memref<1x1x128xf32, #tpu.memory_space<vmem>>, %arg24: memref<1x128x128xbf16, #tpu.memory_space<vmem>>, %arg25: memref<1x1x128xf32, #tpu.memory_space<vmem>>, %arg26: memref<1x1x128xf32, #tpu.memory_space<vmem>>, %arg27: memref<1x1x128xf32, #tpu.memory_space<vmem>>, %arg28: memref<1x128x2048xbf16, #tpu.memory_space<vmem>>, %arg29: memref<1x1x2048xf32, #tpu.memory_space<vmem>>, %arg30: memref<1x2048x128xbf16, #tpu.memory_space<vmem>>, %arg31: memref<1x1x128xf32, #tpu.memory_space<vmem>>, %arg32: memref<1x128xf32, #tpu.memory_space<vmem>>, %arg33: memref<1x128xf32, #tpu.memory_space<vmem>>, %arg34: memref<1x8x128xf32, #tpu.memory_space<vmem>>) attributes {dimension_semantics = [#tpu.dimension_semantics<parallel>, #tpu.dimension_semantics<arbitrary>], iteration_bounds = array<i64: 2, 2>, scalar_prefetch = 0 : i64, scratch_operands = 0 : i64, tpu.core_type = #tpu.core_type<tc>, window_params = [{transform_indices = @transform_0, window_bounds = array<i64: 1, 8, 128>}, {transform_indices = @transform_1, window_bounds = array<i64: 1, 8, 128>}, {transform_indices = @transform_2, window_bounds = array<i64: 1, 8, 8>}, {transform_indices = @transform_3, window_bounds = array<i64: 1, 8, 8>}, {transform_indices = @transform_4, window_bounds = array<i64: 1, 1, 128>}, {transform_indices = @transform_5, window_bounds = array<i64: 1, 1, 128>}, {transform_indices = @transform_6, window_bounds = array<i64: 1, 128, 128>}, {transform_indices = @transform_7, window_bounds = array<i64: 1, 1, 128>}, {transform_indices = @transform_8, window_bounds = array<i64: 1, 128, 128>}, {transform_indices = @transform_9, window_bounds = array<i64: 1, 1, 128>}, {transform_indices = @transform_10, window_bounds = array<i64: 1, 128, 128>}, {transform_indices = @transform_11, window_bounds = array<i64: 1, 1, 128>}, {transform_indices = @transform_12, window_bounds = array<i64: 1, 128, 128>}, {transform_indices = @transform_13, window_bounds = array<i64: 1, 1, 128>}, {transform_indices = @transform_14, window_bounds = array<i64: 1, 1, 128>}, {transform_indices = @transform_15, window_bounds = array<i64: 1, 1, 128>}, {transform_indices = @transform_16, window_bounds = array<i64: 1, 128, 128>}, {transform_indices = @transform_17, window_bounds = array<i64: 1, 1, 128>}, {transform_indices = @transform_18, window_bounds = array<i64: 1, 128, 128>}, {transform_indices = @transform_19, window_bounds = array<i64: 1, 1, 128>}, {transform_indices = @transform_20, window_bounds = array<i64: 1, 128, 128>}, {transform_indices = @transform_21, window_bounds = array<i64: 1, 1, 128>}, {transform_indices = @transform_22, window_bounds = array<i64: 1, 128, 128>}, {transform_indices = @transform_23, window_bounds = array<i64: 1, 1, 128>}, {transform_indices = @transform_24, window_bounds = array<i64: 1, 1, 128>}, {transform_indices = @transform_25, window_bounds = array<i64: 1, 1, 128>}, {transform_indices = @transform_26, window_bounds = array<i64: 1, 128, 2048>}, {transform_indices = @transform_27, window_bounds = array<i64: 1, 1, 2048>}, {transform_indices = @transform_28, window_bounds = array<i64: 1, 2048, 128>}, {transform_indices = @transform_29, window_bounds = array<i64: 1, 1, 128>}, {pipeline_mode = #tpu.pipeline_mode<synchronous>, transform_indices = @transform_30, window_bounds = array<i64: 1, 128>}, {pipeline_mode = #tpu.pipeline_mode<synchronous>, transform_indices = @transform_31, window_bounds = array<i64: 1, 128>}, {transform_indices = @transform_32, window_bounds = array<i64: 1, 8, 128>}]} {
    %c0_i32 = arith.constant 0 : i32
    %0 = arith.cmpi eq, %arg1, %c0_i32 : i32
    %1 = arith.extui %0 : i1 to i32
    %c0_i32_0 = arith.constant 0 : i32
    %2 = arith.cmpi ne, %1, %c0_i32_0 : i32
    scf.if %2 {
      %c0_183 = arith.constant 0 : index
      %c0_184 = arith.constant 0 : index
      %c0_185 = arith.constant 0 : index
      %454 = vector.load %arg2[%c0_183, %c0_184, %c0_185] : memref<1x8x128xf32, #tpu.memory_space<vmem>>, vector<1x8x128xf32>
      %455 = vector.shape_cast %454 : vector<1x8x128xf32> to vector<8x128xf32>
      %c0_186 = arith.constant 0 : index
      %c0_187 = arith.constant 0 : index
      %c0_188 = arith.constant 0 : index
      %456 = vector.load %arg34[%c0_186, %c0_187, %c0_188] : memref<1x8x128xf32, #tpu.memory_space<vmem>>, vector<1x8x128xf32>
      %457 = vector.shape_cast %456 : vector<1x8x128xf32> to vector<8x128xf32>
      %458 = vector.shape_cast %455 : vector<8x128xf32> to vector<1x8x128xf32>
      tpu.vector_store %arg34[%c0_186, %c0_187, %c0_188], %458 {strides = array<i32>} : memref<1x8x128xf32, #tpu.memory_space<vmem>>, vector<1x8x128xf32>,
    } else {
    }
    %c0 = arith.constant 0 : index
    %c0_1 = arith.constant 0 : index
    %c0_2 = arith.constant 0 : index
    %3 = vector.load %arg34[%c0, %c0_1, %c0_2] : memref<1x8x128xf32, #tpu.memory_space<vmem>>, vector<1x8x128xf32>
    %4 = vector.shape_cast %3 : vector<1x8x128xf32> to vector<8x128xf32>
    %c0_3 = arith.constant 0 : index
    %c0_4 = arith.constant 0 : index
    %c0_5 = arith.constant 0 : index
    %5 = vector.load %arg3[%c0_3, %c0_4, %c0_5] : memref<1x8x128xbf16, #tpu.memory_space<vmem>>, vector<1x8x128xbf16>
    %6 = vector.shape_cast %5 : vector<1x8x128xbf16> to vector<8x128xbf16>
    %c0_6 = arith.constant 0 : index
    %c0_7 = arith.constant 0 : index
    %c0_8 = arith.constant 0 : index
    %7 = vector.load %arg4[%c0_6, %c0_7, %c0_8] : memref<1x8x8xbf16, #tpu.memory_space<vmem>>, vector<1x8x8xbf16>
    %8 = vector.shape_cast %7 : vector<1x8x8xbf16> to vector<8x8xbf16>
    %9 = arith.extf %8 : vector<8x8xbf16> to vector<8x8xf32>
    %c0_9 = arith.constant 0 : index
    %c0_10 = arith.constant 0 : index
    %c0_11 = arith.constant 0 : index
    %10 = vector.load %arg5[%c0_9, %c0_10, %c0_11] : memref<1x8x8xbf16, #tpu.memory_space<vmem>>, vector<1x8x8xbf16>
    %11 = vector.shape_cast %10 : vector<1x8x8xbf16> to vector<8x8xbf16>
    %12 = arith.extf %11 : vector<8x8xbf16> to vector<8x8xf32>
    %c0_12 = arith.constant 0 : index
    %c0_13 = arith.constant 0 : index
    %c0_14 = arith.constant 0 : index
    %13 = vector.load %arg6[%c0_12, %c0_13, %c0_14] : memref<1x1x128xf32, #tpu.memory_space<vmem>>, vector<1x1x128xf32>
    %14 = vector.shape_cast %13 : vector<1x1x128xf32> to vector<1x128xf32>
    %c0_15 = arith.constant 0 : index
    %c0_16 = arith.constant 0 : index
    %c0_17 = arith.constant 0 : index
    %15 = vector.load %arg7[%c0_15, %c0_16, %c0_17] : memref<1x1x128xf32, #tpu.memory_space<vmem>>, vector<1x1x128xf32>
    %16 = vector.shape_cast %15 : vector<1x1x128xf32> to vector<1x128xf32>
    %cst = arith.constant dense<0.000000e+00> : vector<8xf32>
    %17 = vector.multi_reduction <add>, %4, %cst [1] : vector<8x128xf32> to vector<8xf32>
    %18 = vector.shape_cast %17 : vector<8xf32> to vector<8x1xf32>
    %cst_18 = arith.constant 1.280000e+02 : f32
    %19 = vector.broadcast %cst_18 : f32 to vector<8x1xf32>
    %20 = arith.divf %18, %19 : vector<8x1xf32>
    %21 = vector.broadcast %20 : vector<8x1xf32> to vector<8x128xf32>
    %22 = arith.subf %4, %21 : vector<8x128xf32>
    %23 = arith.mulf %22, %22 : vector<8x128xf32>
    %cst_19 = arith.constant dense<0.000000e+00> : vector<8xf32>
    %24 = vector.multi_reduction <add>, %23, %cst_19 [1] : vector<8x128xf32> to vector<8xf32>
    %25 = vector.shape_cast %24 : vector<8xf32> to vector<8x1xf32>
    %cst_20 = arith.constant 0.00787401571 : f32
    %26 = vector.broadcast %cst_20 : f32 to vector<8x1xf32>
    %27 = arith.mulf %25, %26 : vector<8x1xf32>
    %28 = math.sqrt %27 : vector<8x1xf32>
    %cst_21 = arith.constant 9.99999997E-7 : f32
    %29 = vector.broadcast %cst_21 : f32 to vector<8x1xf32>
    %30 = arith.addf %28, %29 : vector<8x1xf32>
    %31 = tpu.reciprocal %30 {approx = true} : vector<8x1xf32> -> vector<8x1xf32>
    %32 = vector.broadcast %14 : vector<1x128xf32> to vector<8x128xf32>
    %33 = arith.mulf %32, %22 : vector<8x128xf32>
    %34 = vector.broadcast %31 : vector<8x1xf32> to vector<8x128xf32>
    %35 = arith.mulf %33, %34 : vector<8x128xf32>
    %36 = vector.broadcast %16 : vector<1x128xf32> to vector<8x128xf32>
    %37 = arith.addf %35, %36 : vector<8x128xf32>
    %38 = arith.truncf %37 : vector<8x128xf32> to vector<8x128xbf16>
    %c0_22 = arith.constant 0 : index
    %c0_23 = arith.constant 0 : index
    %c0_24 = arith.constant 0 : index
    %39 = vector.load %arg8[%c0_22, %c0_23, %c0_24] : memref<1x128x128xbf16, #tpu.memory_space<vmem>>, vector<1x128x128xbf16>
    %40 = vector.shape_cast %39 : vector<1x128x128xbf16> to vector<128x128xbf16>
    %c0_25 = arith.constant 0 : index
    %c0_26 = arith.constant 0 : index
    %c0_27 = arith.constant 0 : index
    %41 = vector.load %arg9[%c0_25, %c0_26, %c0_27] : memref<1x1x128xf32, #tpu.memory_space<vmem>>, vector<1x1x128xf32>
    %42 = vector.shape_cast %41 : vector<1x1x128xf32> to vector<1x128xf32>
    %c0_28 = arith.constant 0 : index
    %c0_29 = arith.constant 0 : index
    %c0_30 = arith.constant 0 : index
    %43 = vector.load %arg10[%c0_28, %c0_29, %c0_30] : memref<1x128x128xbf16, #tpu.memory_space<vmem>>, vector<1x128x128xbf16>
    %44 = vector.shape_cast %43 : vector<1x128x128xbf16> to vector<128x128xbf16>
    %c0_31 = arith.constant 0 : index
    %c0_32 = arith.constant 0 : index
    %c0_33 = arith.constant 0 : index
    %45 = vector.load %arg11[%c0_31, %c0_32, %c0_33] : memref<1x1x128xf32, #tpu.memory_space<vmem>>, vector<1x1x128xf32>
    %46 = vector.shape_cast %45 : vector<1x1x128xf32> to vector<1x128xf32>
    %c0_34 = arith.constant 0 : index
    %c0_35 = arith.constant 0 : index
    %c0_36 = arith.constant 0 : index
    %47 = vector.load %arg12[%c0_34, %c0_35, %c0_36] : memref<1x128x128xbf16, #tpu.memory_space<vmem>>, vector<1x128x128xbf16>
    %48 = vector.shape_cast %47 : vector<1x128x128xbf16> to vector<128x128xbf16>
    %c0_37 = arith.constant 0 : index
    %c0_38 = arith.constant 0 : index
    %c0_39 = arith.constant 0 : index
    %49 = vector.load %arg13[%c0_37, %c0_38, %c0_39] : memref<1x1x128xf32, #tpu.memory_space<vmem>>, vector<1x1x128xf32>
    %50 = vector.shape_cast %49 : vector<1x1x128xf32> to vector<1x128xf32>
    %c0_40 = arith.constant 0 : index
    %c0_41 = arith.constant 0 : index
    %c0_42 = arith.constant 0 : index
    %51 = vector.load %arg14[%c0_40, %c0_41, %c0_42] : memref<1x128x128xbf16, #tpu.memory_space<vmem>>, vector<1x128x128xbf16>
    %52 = vector.shape_cast %51 : vector<1x128x128xbf16> to vector<128x128xbf16>
    %c0_43 = arith.constant 0 : index
    %c0_44 = arith.constant 0 : index
    %c0_45 = arith.constant 0 : index
    %53 = vector.load %arg15[%c0_43, %c0_44, %c0_45] : memref<1x1x128xf32, #tpu.memory_space<vmem>>, vector<1x1x128xf32>
    %54 = vector.shape_cast %53 : vector<1x1x128xf32> to vector<1x128xf32>
    %cst_46 = arith.constant dense<0.000000e+00> : vector<8x128xf32>
    %55 = tpu.matmul %38, %40, %cst_46 {dimension_numbers = #tpu.dot_dimension_numbers<[1], [0], [0], [1], [0, 0, 1, 1], [], []>} : vector<8x128xbf16>, vector<128x128xbf16>, vector<8x128xf32> -> vector<8x128xf32>
    %56 = vector.broadcast %42 : vector<1x128xf32> to vector<8x128xf32>
    %57 = arith.addf %55, %56 : vector<8x128xf32>
    %58 = arith.truncf %57 : vector<8x128xf32> to vector<8x128xbf16>
    %cst_47 = arith.constant dense<0.000000e+00> : vector<8x128xf32>
    %59 = tpu.matmul %38, %44, %cst_47 {dimension_numbers = #tpu.dot_dimension_numbers<[1], [0], [0], [1], [0, 0, 1, 1], [], []>} : vector<8x128xbf16>, vector<128x128xbf16>, vector<8x128xf32> -> vector<8x128xf32>
    %60 = vector.broadcast %46 : vector<1x128xf32> to vector<8x128xf32>
    %61 = arith.addf %59, %60 : vector<8x128xf32>
    %62 = arith.truncf %61 : vector<8x128xf32> to vector<8x128xbf16>
    %cst_48 = arith.constant dense<0.000000e+00> : vector<8x128xf32>
    %63 = tpu.matmul %38, %48, %cst_48 {dimension_numbers = #tpu.dot_dimension_numbers<[1], [0], [0], [1], [0, 0, 1, 1], [], []>} : vector<8x128xbf16>, vector<128x128xbf16>, vector<8x128xf32> -> vector<8x128xf32>
    %64 = vector.broadcast %50 : vector<1x128xf32> to vector<8x128xf32>
    %65 = arith.addf %63, %64 : vector<8x128xf32>
    %66 = arith.truncf %65 : vector<8x128xf32> to vector<8x128xbf16>
    %67 = vector.extract_strided_slice %58 {offsets = [0, 0], sizes = [8, 16], strides = [1, 1]} : vector<8x128xbf16> to vector<8x16xbf16>
    %68 = vector.extract_strided_slice %62 {offsets = [0, 0], sizes = [8, 16], strides = [1, 1]} : vector<8x128xbf16> to vector<8x16xbf16>
    %cst_49 = arith.constant dense<0.000000e+00> : vector<8x8xf32>
    %69 = tpu.matmul %67, %68, %cst_49 {dimension_numbers = #tpu.dot_dimension_numbers<[1], [1], [0], [0], [0, 0, 1, 0], [], []>} : vector<8x16xbf16>, vector<8x16xbf16>, vector<8x8xf32> -> vector<8x8xf32>
    %70 = arith.addf %69, %9 : vector<8x8xf32>
    %cst_50 = arith.constant dense<0xFF800000> : vector<8xf32>
    %71 = vector.multi_reduction <maximumf>, %70, %cst_50 [1] : vector<8x8xf32> to vector<8xf32>
    %72 = vector.shape_cast %71 : vector<8xf32> to vector<8x1xf32>
    %73 = vector.broadcast %72 : vector<8x1xf32> to vector<8x8xf32>
    %74 = arith.subf %70, %73 : vector<8x8xf32>
    %75 = math.exp %74 : vector<8x8xf32>
    %cst_51 = arith.constant dense<0.000000e+00> : vector<8xf32>
    %76 = vector.multi_reduction <add>, %75, %cst_51 [1] : vector<8x8xf32> to vector<8xf32>
    %77 = vector.shape_cast %76 : vector<8xf32> to vector<8x1xf32>
    %78 = tpu.reciprocal %77 {approx = true} : vector<8x1xf32> -> vector<8x1xf32>
    %79 = vector.broadcast %78 : vector<8x1xf32> to vector<8x8xf32>
    %80 = arith.mulf %75, %79 : vector<8x8xf32>
    %81 = arith.truncf %80 : vector<8x8xf32> to vector<8x8xbf16>
    %82 = vector.extract_strided_slice %66 {offsets = [0, 0], sizes = [8, 16], strides = [1, 1]} : vector<8x128xbf16> to vector<8x16xbf16>
    %cst_52 = arith.constant dense<0.000000e+00> : vector<8x16xf32>
    %83 = tpu.matmul %81, %82, %cst_52 {dimension_numbers = #tpu.dot_dimension_numbers<[1], [0], [0], [1], [0, 0, 1, 1], [], []>} : vector<8x8xbf16>, vector<8x16xbf16>, vector<8x16xf32> -> vector<8x16xf32>
    %84 = vector.extract_strided_slice %58 {offsets = [0, 16], sizes = [8, 16], strides = [1, 1]} : vector<8x128xbf16> to vector<8x16xbf16>
    %85 = vector.extract_strided_slice %62 {offsets = [0, 16], sizes = [8, 16], strides = [1, 1]} : vector<8x128xbf16> to vector<8x16xbf16>
    %cst_53 = arith.constant dense<0.000000e+00> : vector<8x8xf32>
    %86 = tpu.matmul %84, %85, %cst_53 {dimension_numbers = #tpu.dot_dimension_numbers<[1], [1], [0], [0], [0, 0, 1, 0], [], []>} : vector<8x16xbf16>, vector<8x16xbf16>, vector<8x8xf32> -> vector<8x8xf32>
    %87 = arith.addf %86, %9 : vector<8x8xf32>
    %cst_54 = arith.constant dense<0xFF800000> : vector<8xf32>
    %88 = vector.multi_reduction <maximumf>, %87, %cst_54 [1] : vector<8x8xf32> to vector<8xf32>
    %89 = vector.shape_cast %88 : vector<8xf32> to vector<8x1xf32>
    %90 = vector.broadcast %89 : vector<8x1xf32> to vector<8x8xf32>
    %91 = arith.subf %87, %90 : vector<8x8xf32>
    %92 = math.exp %91 : vector<8x8xf32>
    %cst_55 = arith.constant dense<0.000000e+00> : vector<8xf32>
    %93 = vector.multi_reduction <add>, %92, %cst_55 [1] : vector<8x8xf32> to vector<8xf32>
    %94 = vector.shape_cast %93 : vector<8xf32> to vector<8x1xf32>
    %95 = tpu.reciprocal %94 {approx = true} : vector<8x1xf32> -> vector<8x1xf32>
    %96 = vector.broadcast %95 : vector<8x1xf32> to vector<8x8xf32>
    %97 = arith.mulf %92, %96 : vector<8x8xf32>
    %98 = arith.truncf %97 : vector<8x8xf32> to vector<8x8xbf16>
    %99 = vector.extract_strided_slice %66 {offsets = [0, 16], sizes = [8, 16], strides = [1, 1]} : vector<8x128xbf16> to vector<8x16xbf16>
    %cst_56 = arith.constant dense<0.000000e+00> : vector<8x16xf32>
    %100 = tpu.matmul %98, %99, %cst_56 {dimension_numbers = #tpu.dot_dimension_numbers<[1], [0], [0], [1], [0, 0, 1, 1], [], []>} : vector<8x8xbf16>, vector<8x16xbf16>, vector<8x16xf32> -> vector<8x16xf32>
    %101 = vector.extract_strided_slice %58 {offsets = [0, 32], sizes = [8, 16], strides = [1, 1]} : vector<8x128xbf16> to vector<8x16xbf16>
    %102 = vector.extract_strided_slice %62 {offsets = [0, 32], sizes = [8, 16], strides = [1, 1]} : vector<8x128xbf16> to vector<8x16xbf16>
    %cst_57 = arith.constant dense<0.000000e+00> : vector<8x8xf32>
    %103 = tpu.matmul %101, %102, %cst_57 {dimension_numbers = #tpu.dot_dimension_numbers<[1], [1], [0], [0], [0, 0, 1, 0], [], []>} : vector<8x16xbf16>, vector<8x16xbf16>, vector<8x8xf32> -> vector<8x8xf32>
    %104 = arith.addf %103, %9 : vector<8x8xf32>
    %cst_58 = arith.constant dense<0xFF800000> : vector<8xf32>
    %105 = vector.multi_reduction <maximumf>, %104, %cst_58 [1] : vector<8x8xf32> to vector<8xf32>
    %106 = vector.shape_cast %105 : vector<8xf32> to vector<8x1xf32>
    %107 = vector.broadcast %106 : vector<8x1xf32> to vector<8x8xf32>
    %108 = arith.subf %104, %107 : vector<8x8xf32>
    %109 = math.exp %108 : vector<8x8xf32>
    %cst_59 = arith.constant dense<0.000000e+00> : vector<8xf32>
    %110 = vector.multi_reduction <add>, %109, %cst_59 [1] : vector<8x8xf32> to vector<8xf32>
    %111 = vector.shape_cast %110 : vector<8xf32> to vector<8x1xf32>
    %112 = tpu.reciprocal %111 {approx = true} : vector<8x1xf32> -> vector<8x1xf32>
    %113 = vector.broadcast %112 : vector<8x1xf32> to vector<8x8xf32>
    %114 = arith.mulf %109, %113 : vector<8x8xf32>
    %115 = arith.truncf %114 : vector<8x8xf32> to vector<8x8xbf16>
    %116 = vector.extract_strided_slice %66 {offsets = [0, 32], sizes = [8, 16], strides = [1, 1]} : vector<8x128xbf16> to vector<8x16xbf16>
    %cst_60 = arith.constant dense<0.000000e+00> : vector<8x16xf32>
    %117 = tpu.matmul %115, %116, %cst_60 {dimension_numbers = #tpu.dot_dimension_numbers<[1], [0], [0], [1], [0, 0, 1, 1], [], []>} : vector<8x8xbf16>, vector<8x16xbf16>, vector<8x16xf32> -> vector<8x16xf32>
    %118 = vector.extract_strided_slice %58 {offsets = [0, 48], sizes = [8, 16], strides = [1, 1]} : vector<8x128xbf16> to vector<8x16xbf16>
    %119 = vector.extract_strided_slice %62 {offsets = [0, 48], sizes = [8, 16], strides = [1, 1]} : vector<8x128xbf16> to vector<8x16xbf16>
    %cst_61 = arith.constant dense<0.000000e+00> : vector<8x8xf32>
    %120 = tpu.matmul %118, %119, %cst_61 {dimension_numbers = #tpu.dot_dimension_numbers<[1], [1], [0], [0], [0, 0, 1, 0], [], []>} : vector<8x16xbf16>, vector<8x16xbf16>, vector<8x8xf32> -> vector<8x8xf32>
    %121 = arith.addf %120, %9 : vector<8x8xf32>
    %cst_62 = arith.constant dense<0xFF800000> : vector<8xf32>
    %122 = vector.multi_reduction <maximumf>, %121, %cst_62 [1] : vector<8x8xf32> to vector<8xf32>
    %123 = vector.shape_cast %122 : vector<8xf32> to vector<8x1xf32>
    %124 = vector.broadcast %123 : vector<8x1xf32> to vector<8x8xf32>
    %125 = arith.subf %121, %124 : vector<8x8xf32>
    %126 = math.exp %125 : vector<8x8xf32>
    %cst_63 = arith.constant dense<0.000000e+00> : vector<8xf32>
    %127 = vector.multi_reduction <add>, %126, %cst_63 [1] : vector<8x8xf32> to vector<8xf32>
    %128 = vector.shape_cast %127 : vector<8xf32> to vector<8x1xf32>
    %129 = tpu.reciprocal %128 {approx = true} : vector<8x1xf32> -> vector<8x1xf32>
    %130 = vector.broadcast %129 : vector<8x1xf32> to vector<8x8xf32>
    %131 = arith.mulf %126, %130 : vector<8x8xf32>
    %132 = arith.truncf %131 : vector<8x8xf32> to vector<8x8xbf16>
    %133 = vector.extract_strided_slice %66 {offsets = [0, 48], sizes = [8, 16], strides = [1, 1]} : vector<8x128xbf16> to vector<8x16xbf16>
    %cst_64 = arith.constant dense<0.000000e+00> : vector<8x16xf32>
    %134 = tpu.matmul %132, %133, %cst_64 {dimension_numbers = #tpu.dot_dimension_numbers<[1], [0], [0], [1], [0, 0, 1, 1], [], []>} : vector<8x8xbf16>, vector<8x16xbf16>, vector<8x16xf32> -> vector<8x16xf32>
    %135 = vector.extract_strided_slice %58 {offsets = [0, 64], sizes = [8, 16], strides = [1, 1]} : vector<8x128xbf16> to vector<8x16xbf16>
    %136 = vector.extract_strided_slice %62 {offsets = [0, 64], sizes = [8, 16], strides = [1, 1]} : vector<8x128xbf16> to vector<8x16xbf16>
    %cst_65 = arith.constant dense<0.000000e+00> : vector<8x8xf32>
    %137 = tpu.matmul %135, %136, %cst_65 {dimension_numbers = #tpu.dot_dimension_numbers<[1], [1], [0], [0], [0, 0, 1, 0], [], []>} : vector<8x16xbf16>, vector<8x16xbf16>, vector<8x8xf32> -> vector<8x8xf32>
    %138 = arith.addf %137, %9 : vector<8x8xf32>
    %cst_66 = arith.constant dense<0xFF800000> : vector<8xf32>
    %139 = vector.multi_reduction <maximumf>, %138, %cst_66 [1] : vector<8x8xf32> to vector<8xf32>
    %140 = vector.shape_cast %139 : vector<8xf32> to vector<8x1xf32>
    %141 = vector.broadcast %140 : vector<8x1xf32> to vector<8x8xf32>
    %142 = arith.subf %138, %141 : vector<8x8xf32>
    %143 = math.exp %142 : vector<8x8xf32>
    %cst_67 = arith.constant dense<0.000000e+00> : vector<8xf32>
    %144 = vector.multi_reduction <add>, %143, %cst_67 [1] : vector<8x8xf32> to vector<8xf32>
    %145 = vector.shape_cast %144 : vector<8xf32> to vector<8x1xf32>
    %146 = tpu.reciprocal %145 {approx = true} : vector<8x1xf32> -> vector<8x1xf32>
    %147 = vector.broadcast %146 : vector<8x1xf32> to vector<8x8xf32>
    %148 = arith.mulf %143, %147 : vector<8x8xf32>
    %149 = arith.truncf %148 : vector<8x8xf32> to vector<8x8xbf16>
    %150 = vector.extract_strided_slice %66 {offsets = [0, 64], sizes = [8, 16], strides = [1, 1]} : vector<8x128xbf16> to vector<8x16xbf16>
    %cst_68 = arith.constant dense<0.000000e+00> : vector<8x16xf32>
    %151 = tpu.matmul %149, %150, %cst_68 {dimension_numbers = #tpu.dot_dimension_numbers<[1], [0], [0], [1], [0, 0, 1, 1], [], []>} : vector<8x8xbf16>, vector<8x16xbf16>, vector<8x16xf32> -> vector<8x16xf32>
    %152 = vector.extract_strided_slice %58 {offsets = [0, 80], sizes = [8, 16], strides = [1, 1]} : vector<8x128xbf16> to vector<8x16xbf16>
    %153 = vector.extract_strided_slice %62 {offsets = [0, 80], sizes = [8, 16], strides = [1, 1]} : vector<8x128xbf16> to vector<8x16xbf16>
    %cst_69 = arith.constant dense<0.000000e+00> : vector<8x8xf32>
    %154 = tpu.matmul %152, %153, %cst_69 {dimension_numbers = #tpu.dot_dimension_numbers<[1], [1], [0], [0], [0, 0, 1, 0], [], []>} : vector<8x16xbf16>, vector<8x16xbf16>, vector<8x8xf32> -> vector<8x8xf32>
    %155 = arith.addf %154, %9 : vector<8x8xf32>
    %cst_70 = arith.constant dense<0xFF800000> : vector<8xf32>
    %156 = vector.multi_reduction <maximumf>, %155, %cst_70 [1] : vector<8x8xf32> to vector<8xf32>
    %157 = vector.shape_cast %156 : vector<8xf32> to vector<8x1xf32>
    %158 = vector.broadcast %157 : vector<8x1xf32> to vector<8x8xf32>
    %159 = arith.subf %155, %158 : vector<8x8xf32>
    %160 = math.exp %159 : vector<8x8xf32>
    %cst_71 = arith.constant dense<0.000000e+00> : vector<8xf32>
    %161 = vector.multi_reduction <add>, %160, %cst_71 [1] : vector<8x8xf32> to vector<8xf32>
    %162 = vector.shape_cast %161 : vector<8xf32> to vector<8x1xf32>
    %163 = tpu.reciprocal %162 {approx = true} : vector<8x1xf32> -> vector<8x1xf32>
    %164 = vector.broadcast %163 : vector<8x1xf32> to vector<8x8xf32>
    %165 = arith.mulf %160, %164 : vector<8x8xf32>
    %166 = arith.truncf %165 : vector<8x8xf32> to vector<8x8xbf16>
    %167 = vector.extract_strided_slice %66 {offsets = [0, 80], sizes = [8, 16], strides = [1, 1]} : vector<8x128xbf16> to vector<8x16xbf16>
    %cst_72 = arith.constant dense<0.000000e+00> : vector<8x16xf32>
    %168 = tpu.matmul %166, %167, %cst_72 {dimension_numbers = #tpu.dot_dimension_numbers<[1], [0], [0], [1], [0, 0, 1, 1], [], []>} : vector<8x8xbf16>, vector<8x16xbf16>, vector<8x16xf32> -> vector<8x16xf32>
    %169 = vector.extract_strided_slice %58 {offsets = [0, 96], sizes = [8, 16], strides = [1, 1]} : vector<8x128xbf16> to vector<8x16xbf16>
    %170 = vector.extract_strided_slice %62 {offsets = [0, 96], sizes = [8, 16], strides = [1, 1]} : vector<8x128xbf16> to vector<8x16xbf16>
    %cst_73 = arith.constant dense<0.000000e+00> : vector<8x8xf32>
    %171 = tpu.matmul %169, %170, %cst_73 {dimension_numbers = #tpu.dot_dimension_numbers<[1], [1], [0], [0], [0, 0, 1, 0], [], []>} : vector<8x16xbf16>, vector<8x16xbf16>, vector<8x8xf32> -> vector<8x8xf32>
    %172 = arith.addf %171, %9 : vector<8x8xf32>
    %cst_74 = arith.constant dense<0xFF800000> : vector<8xf32>
    %173 = vector.multi_reduction <maximumf>, %172, %cst_74 [1] : vector<8x8xf32> to vector<8xf32>
    %174 = vector.shape_cast %173 : vector<8xf32> to vector<8x1xf32>
    %175 = vector.broadcast %174 : vector<8x1xf32> to vector<8x8xf32>
    %176 = arith.subf %172, %175 : vector<8x8xf32>
    %177 = math.exp %176 : vector<8x8xf32>
    %cst_75 = arith.constant dense<0.000000e+00> : vector<8xf32>
    %178 = vector.multi_reduction <add>, %177, %cst_75 [1] : vector<8x8xf32> to vector<8xf32>
    %179 = vector.shape_cast %178 : vector<8xf32> to vector<8x1xf32>
    %180 = tpu.reciprocal %179 {approx = true} : vector<8x1xf32> -> vector<8x1xf32>
    %181 = vector.broadcast %180 : vector<8x1xf32> to vector<8x8xf32>
    %182 = arith.mulf %177, %181 : vector<8x8xf32>
    %183 = arith.truncf %182 : vector<8x8xf32> to vector<8x8xbf16>
    %184 = vector.extract_strided_slice %66 {offsets = [0, 96], sizes = [8, 16], strides = [1, 1]} : vector<8x128xbf16> to vector<8x16xbf16>
    %cst_76 = arith.constant dense<0.000000e+00> : vector<8x16xf32>
    %185 = tpu.matmul %183, %184, %cst_76 {dimension_numbers = #tpu.dot_dimension_numbers<[1], [0], [0], [1], [0, 0, 1, 1], [], []>} : vector<8x8xbf16>, vector<8x16xbf16>, vector<8x16xf32> -> vector<8x16xf32>
    %186 = vector.extract_strided_slice %58 {offsets = [0, 112], sizes = [8, 16], strides = [1, 1]} : vector<8x128xbf16> to vector<8x16xbf16>
    %187 = vector.extract_strided_slice %62 {offsets = [0, 112], sizes = [8, 16], strides = [1, 1]} : vector<8x128xbf16> to vector<8x16xbf16>
    %cst_77 = arith.constant dense<0.000000e+00> : vector<8x8xf32>
    %188 = tpu.matmul %186, %187, %cst_77 {dimension_numbers = #tpu.dot_dimension_numbers<[1], [1], [0], [0], [0, 0, 1, 0], [], []>} : vector<8x16xbf16>, vector<8x16xbf16>, vector<8x8xf32> -> vector<8x8xf32>
    %189 = arith.addf %188, %9 : vector<8x8xf32>
    %cst_78 = arith.constant dense<0xFF800000> : vector<8xf32>
    %190 = vector.multi_reduction <maximumf>, %189, %cst_78 [1] : vector<8x8xf32> to vector<8xf32>
    %191 = vector.shape_cast %190 : vector<8xf32> to vector<8x1xf32>
    %192 = vector.broadcast %191 : vector<8x1xf32> to vector<8x8xf32>
    %193 = arith.subf %189, %192 : vector<8x8xf32>
    %194 = math.exp %193 : vector<8x8xf32>
    %cst_79 = arith.constant dense<0.000000e+00> : vector<8xf32>
    %195 = vector.multi_reduction <add>, %194, %cst_79 [1] : vector<8x8xf32> to vector<8xf32>
    %196 = vector.shape_cast %195 : vector<8xf32> to vector<8x1xf32>
    %197 = tpu.reciprocal %196 {approx = true} : vector<8x1xf32> -> vector<8x1xf32>
    %198 = vector.broadcast %197 : vector<8x1xf32> to vector<8x8xf32>
    %199 = arith.mulf %194, %198 : vector<8x8xf32>
    %200 = arith.truncf %199 : vector<8x8xf32> to vector<8x8xbf16>
    %201 = vector.extract_strided_slice %66 {offsets = [0, 112], sizes = [8, 16], strides = [1, 1]} : vector<8x128xbf16> to vector<8x16xbf16>
    %cst_80 = arith.constant dense<0.000000e+00> : vector<8x16xf32>
    %202 = tpu.matmul %200, %201, %cst_80 {dimension_numbers = #tpu.dot_dimension_numbers<[1], [0], [0], [1], [0, 0, 1, 1], [], []>} : vector<8x8xbf16>, vector<8x16xbf16>, vector<8x16xf32> -> vector<8x16xf32>
    %203 = tpu.concatenate %83, %100, %117, %134, %151, %168, %185, %202 in 1 : vector<8x16xf32>, vector<8x16xf32>, vector<8x16xf32>, vector<8x16xf32>, vector<8x16xf32>, vector<8x16xf32>, vector<8x16xf32>, vector<8x16xf32> -> vector<8x128xf32>
    %204 = arith.truncf %203 : vector<8x128xf32> to vector<8x128xbf16>
    %cst_81 = arith.constant dense<0.000000e+00> : vector<8x128xf32>
    %205 = tpu.matmul %204, %52, %cst_81 {dimension_numbers = #tpu.dot_dimension_numbers<[1], [0], [0], [1], [0, 0, 1, 1], [], []>} : vector<8x128xbf16>, vector<128x128xbf16>, vector<8x128xf32> -> vector<8x128xf32>
    %206 = vector.broadcast %54 : vector<1x128xf32> to vector<8x128xf32>
    %207 = arith.addf %205, %206 : vector<8x128xf32>
    %208 = arith.addf %4, %207 : vector<8x128xf32>
    %c0_82 = arith.constant 0 : index
    %c0_83 = arith.constant 0 : index
    %c0_84 = arith.constant 0 : index
    %209 = vector.load %arg16[%c0_82, %c0_83, %c0_84] : memref<1x1x128xf32, #tpu.memory_space<vmem>>, vector<1x1x128xf32>
    %210 = vector.shape_cast %209 : vector<1x1x128xf32> to vector<1x128xf32>
    %c0_85 = arith.constant 0 : index
    %c0_86 = arith.constant 0 : index
    %c0_87 = arith.constant 0 : index
    %211 = vector.load %arg17[%c0_85, %c0_86, %c0_87] : memref<1x1x128xf32, #tpu.memory_space<vmem>>, vector<1x1x128xf32>
    %212 = vector.shape_cast %211 : vector<1x1x128xf32> to vector<1x128xf32>
    %cst_88 = arith.constant dense<0.000000e+00> : vector<8xf32>
    %213 = vector.multi_reduction <add>, %208, %cst_88 [1] : vector<8x128xf32> to vector<8xf32>
    %214 = vector.shape_cast %213 : vector<8xf32> to vector<8x1xf32>
    %cst_89 = arith.constant 1.280000e+02 : f32
    %215 = vector.broadcast %cst_89 : f32 to vector<8x1xf32>
    %216 = arith.divf %214, %215 : vector<8x1xf32>
    %217 = vector.broadcast %216 : vector<8x1xf32> to vector<8x128xf32>
    %218 = arith.subf %208, %217 : vector<8x128xf32>
    %219 = arith.mulf %218, %218 : vector<8x128xf32>
    %cst_90 = arith.constant dense<0.000000e+00> : vector<8xf32>
    %220 = vector.multi_reduction <add>, %219, %cst_90 [1] : vector<8x128xf32> to vector<8xf32>
    %221 = vector.shape_cast %220 : vector<8xf32> to vector<8x1xf32>
    %cst_91 = arith.constant 0.00787401571 : f32
    %222 = vector.broadcast %cst_91 : f32 to vector<8x1xf32>
    %223 = arith.mulf %221, %222 : vector<8x1xf32>
    %224 = math.sqrt %223 : vector<8x1xf32>
    %cst_92 = arith.constant 9.99999997E-7 : f32
    %225 = vector.broadcast %cst_92 : f32 to vector<8x1xf32>
    %226 = arith.addf %224, %225 : vector<8x1xf32>
    %227 = tpu.reciprocal %226 {approx = true} : vector<8x1xf32> -> vector<8x1xf32>
    %228 = vector.broadcast %210 : vector<1x128xf32> to vector<8x128xf32>
    %229 = arith.mulf %228, %218 : vector<8x128xf32>
    %230 = vector.broadcast %227 : vector<8x1xf32> to vector<8x128xf32>
    %231 = arith.mulf %229, %230 : vector<8x128xf32>
    %232 = vector.broadcast %212 : vector<1x128xf32> to vector<8x128xf32>
    %233 = arith.addf %231, %232 : vector<8x128xf32>
    %234 = arith.truncf %233 : vector<8x128xf32> to vector<8x128xbf16>
    %c0_93 = arith.constant 0 : index
    %c0_94 = arith.constant 0 : index
    %c0_95 = arith.constant 0 : index
    %235 = vector.load %arg18[%c0_93, %c0_94, %c0_95] : memref<1x128x128xbf16, #tpu.memory_space<vmem>>, vector<1x128x128xbf16>
    %236 = vector.shape_cast %235 : vector<1x128x128xbf16> to vector<128x128xbf16>
    %c0_96 = arith.constant 0 : index
    %c0_97 = arith.constant 0 : index
    %c0_98 = arith.constant 0 : index
    %237 = vector.load %arg19[%c0_96, %c0_97, %c0_98] : memref<1x1x128xf32, #tpu.memory_space<vmem>>, vector<1x1x128xf32>
    %238 = vector.shape_cast %237 : vector<1x1x128xf32> to vector<1x128xf32>
    %c0_99 = arith.constant 0 : index
    %c0_100 = arith.constant 0 : index
    %c0_101 = arith.constant 0 : index
    %239 = vector.load %arg20[%c0_99, %c0_100, %c0_101] : memref<1x128x128xbf16, #tpu.memory_space<vmem>>, vector<1x128x128xbf16>
    %240 = vector.shape_cast %239 : vector<1x128x128xbf16> to vector<128x128xbf16>
    %c0_102 = arith.constant 0 : index
    %c0_103 = arith.constant 0 : index
    %c0_104 = arith.constant 0 : index
    %241 = vector.load %arg21[%c0_102, %c0_103, %c0_104] : memref<1x1x128xf32, #tpu.memory_space<vmem>>, vector<1x1x128xf32>
    %242 = vector.shape_cast %241 : vector<1x1x128xf32> to vector<1x128xf32>
    %c0_105 = arith.constant 0 : index
    %c0_106 = arith.constant 0 : index
    %c0_107 = arith.constant 0 : index
    %243 = vector.load %arg22[%c0_105, %c0_106, %c0_107] : memref<1x128x128xbf16, #tpu.memory_space<vmem>>, vector<1x128x128xbf16>
    %244 = vector.shape_cast %243 : vector<1x128x128xbf16> to vector<128x128xbf16>
    %c0_108 = arith.constant 0 : index
    %c0_109 = arith.constant 0 : index
    %c0_110 = arith.constant 0 : index
    %245 = vector.load %arg23[%c0_108, %c0_109, %c0_110] : memref<1x1x128xf32, #tpu.memory_space<vmem>>, vector<1x1x128xf32>
    %246 = vector.shape_cast %245 : vector<1x1x128xf32> to vector<1x128xf32>
    %c0_111 = arith.constant 0 : index
    %c0_112 = arith.constant 0 : index
    %c0_113 = arith.constant 0 : index
    %247 = vector.load %arg24[%c0_111, %c0_112, %c0_113] : memref<1x128x128xbf16, #tpu.memory_space<vmem>>, vector<1x128x128xbf16>
    %248 = vector.shape_cast %247 : vector<1x128x128xbf16> to vector<128x128xbf16>
    %c0_114 = arith.constant 0 : index
    %c0_115 = arith.constant 0 : index
    %c0_116 = arith.constant 0 : index
    %249 = vector.load %arg25[%c0_114, %c0_115, %c0_116] : memref<1x1x128xf32, #tpu.memory_space<vmem>>, vector<1x1x128xf32>
    %250 = vector.shape_cast %249 : vector<1x1x128xf32> to vector<1x128xf32>
    %cst_117 = arith.constant dense<0.000000e+00> : vector<8x128xf32>
    %251 = tpu.matmul %234, %236, %cst_117 {dimension_numbers = #tpu.dot_dimension_numbers<[1], [0], [0], [1], [0, 0, 1, 1], [], []>} : vector<8x128xbf16>, vector<128x128xbf16>, vector<8x128xf32> -> vector<8x128xf32>
    %252 = vector.broadcast %238 : vector<1x128xf32> to vector<8x128xf32>
    %253 = arith.addf %251, %252 : vector<8x128xf32>
    %254 = arith.truncf %253 : vector<8x128xf32> to vector<8x128xbf16>
    %cst_118 = arith.constant dense<0.000000e+00> : vector<8x128xf32>
    %255 = tpu.matmul %6, %240, %cst_118 {dimension_numbers = #tpu.dot_dimension_numbers<[1], [0], [0], [1], [0, 0, 1, 1], [], []>} : vector<8x128xbf16>, vector<128x128xbf16>, vector<8x128xf32> -> vector<8x128xf32>
    %256 = vector.broadcast %242 : vector<1x128xf32> to vector<8x128xf32>
    %257 = arith.addf %255, %256 : vector<8x128xf32>
    %258 = arith.truncf %257 : vector<8x128xf32> to vector<8x128xbf16>
    %cst_119 = arith.constant dense<0.000000e+00> : vector<8x128xf32>
    %259 = tpu.matmul %6, %244, %cst_119 {dimension_numbers = #tpu.dot_dimension_numbers<[1], [0], [0], [1], [0, 0, 1, 1], [], []>} : vector<8x128xbf16>, vector<128x128xbf16>, vector<8x128xf32> -> vector<8x128xf32>
    %260 = vector.broadcast %246 : vector<1x128xf32> to vector<8x128xf32>
    %261 = arith.addf %259, %260 : vector<8x128xf32>
    %262 = arith.truncf %261 : vector<8x128xf32> to vector<8x128xbf16>
    %263 = vector.extract_strided_slice %254 {offsets = [0, 0], sizes = [8, 16], strides = [1, 1]} : vector<8x128xbf16> to vector<8x16xbf16>
    %264 = vector.extract_strided_slice %258 {offsets = [0, 0], sizes = [8, 16], strides = [1, 1]} : vector<8x128xbf16> to vector<8x16xbf16>
    %cst_120 = arith.constant dense<0.000000e+00> : vector<8x8xf32>
    %265 = tpu.matmul %263, %264, %cst_120 {dimension_numbers = #tpu.dot_dimension_numbers<[1], [1], [0], [0], [0, 0, 1, 0], [], []>} : vector<8x16xbf16>, vector<8x16xbf16>, vector<8x8xf32> -> vector<8x8xf32>
    %266 = arith.addf %265, %12 : vector<8x8xf32>
    %cst_121 = arith.constant dense<0xFF800000> : vector<8xf32>
    %267 = vector.multi_reduction <maximumf>, %266, %cst_121 [1] : vector<8x8xf32> to vector<8xf32>
    %268 = vector.shape_cast %267 : vector<8xf32> to vector<8x1xf32>
    %269 = vector.broadcast %268 : vector<8x1xf32> to vector<8x8xf32>
    %270 = arith.subf %266, %269 : vector<8x8xf32>
    %271 = math.exp %270 : vector<8x8xf32>
    %cst_122 = arith.constant dense<0.000000e+00> : vector<8xf32>
    %272 = vector.multi_reduction <add>, %271, %cst_122 [1] : vector<8x8xf32> to vector<8xf32>
    %273 = vector.shape_cast %272 : vector<8xf32> to vector<8x1xf32>
    %274 = tpu.reciprocal %273 {approx = true} : vector<8x1xf32> -> vector<8x1xf32>
    %275 = vector.broadcast %274 : vector<8x1xf32> to vector<8x8xf32>
    %276 = arith.mulf %271, %275 : vector<8x8xf32>
    %277 = arith.truncf %276 : vector<8x8xf32> to vector<8x8xbf16>
    %278 = vector.extract_strided_slice %262 {offsets = [0, 0], sizes = [8, 16], strides = [1, 1]} : vector<8x128xbf16> to vector<8x16xbf16>
    %cst_123 = arith.constant dense<0.000000e+00> : vector<8x16xf32>
    %279 = tpu.matmul %277, %278, %cst_123 {dimension_numbers = #tpu.dot_dimension_numbers<[1], [0], [0], [1], [0, 0, 1, 1], [], []>} : vector<8x8xbf16>, vector<8x16xbf16>, vector<8x16xf32> -> vector<8x16xf32>
    %280 = vector.extract_strided_slice %254 {offsets = [0, 16], sizes = [8, 16], strides = [1, 1]} : vector<8x128xbf16> to vector<8x16xbf16>
    %281 = vector.extract_strided_slice %258 {offsets = [0, 16], sizes = [8, 16], strides = [1, 1]} : vector<8x128xbf16> to vector<8x16xbf16>
    %cst_124 = arith.constant dense<0.000000e+00> : vector<8x8xf32>
    %282 = tpu.matmul %280, %281, %cst_124 {dimension_numbers = #tpu.dot_dimension_numbers<[1], [1], [0], [0], [0, 0, 1, 0], [], []>} : vector<8x16xbf16>, vector<8x16xbf16>, vector<8x8xf32> -> vector<8x8xf32>
    %283 = arith.addf %282, %12 : vector<8x8xf32>
    %cst_125 = arith.constant dense<0xFF800000> : vector<8xf32>
    %284 = vector.multi_reduction <maximumf>, %283, %cst_125 [1] : vector<8x8xf32> to vector<8xf32>
    %285 = vector.shape_cast %284 : vector<8xf32> to vector<8x1xf32>
    %286 = vector.broadcast %285 : vector<8x1xf32> to vector<8x8xf32>
    %287 = arith.subf %283, %286 : vector<8x8xf32>
    %288 = math.exp %287 : vector<8x8xf32>
    %cst_126 = arith.constant dense<0.000000e+00> : vector<8xf32>
    %289 = vector.multi_reduction <add>, %288, %cst_126 [1] : vector<8x8xf32> to vector<8xf32>
    %290 = vector.shape_cast %289 : vector<8xf32> to vector<8x1xf32>
    %291 = tpu.reciprocal %290 {approx = true} : vector<8x1xf32> -> vector<8x1xf32>
    %292 = vector.broadcast %291 : vector<8x1xf32> to vector<8x8xf32>
    %293 = arith.mulf %288, %292 : vector<8x8xf32>
    %294 = arith.truncf %293 : vector<8x8xf32> to vector<8x8xbf16>
    %295 = vector.extract_strided_slice %262 {offsets = [0, 16], sizes = [8, 16], strides = [1, 1]} : vector<8x128xbf16> to vector<8x16xbf16>
    %cst_127 = arith.constant dense<0.000000e+00> : vector<8x16xf32>
    %296 = tpu.matmul %294, %295, %cst_127 {dimension_numbers = #tpu.dot_dimension_numbers<[1], [0], [0], [1], [0, 0, 1, 1], [], []>} : vector<8x8xbf16>, vector<8x16xbf16>, vector<8x16xf32> -> vector<8x16xf32>
    %297 = vector.extract_strided_slice %254 {offsets = [0, 32], sizes = [8, 16], strides = [1, 1]} : vector<8x128xbf16> to vector<8x16xbf16>
    %298 = vector.extract_strided_slice %258 {offsets = [0, 32], sizes = [8, 16], strides = [1, 1]} : vector<8x128xbf16> to vector<8x16xbf16>
    %cst_128 = arith.constant dense<0.000000e+00> : vector<8x8xf32>
    %299 = tpu.matmul %297, %298, %cst_128 {dimension_numbers = #tpu.dot_dimension_numbers<[1], [1], [0], [0], [0, 0, 1, 0], [], []>} : vector<8x16xbf16>, vector<8x16xbf16>, vector<8x8xf32> -> vector<8x8xf32>
    %300 = arith.addf %299, %12 : vector<8x8xf32>
    %cst_129 = arith.constant dense<0xFF800000> : vector<8xf32>
    %301 = vector.multi_reduction <maximumf>, %300, %cst_129 [1] : vector<8x8xf32> to vector<8xf32>
    %302 = vector.shape_cast %301 : vector<8xf32> to vector<8x1xf32>
    %303 = vector.broadcast %302 : vector<8x1xf32> to vector<8x8xf32>
    %304 = arith.subf %300, %303 : vector<8x8xf32>
    %305 = math.exp %304 : vector<8x8xf32>
    %cst_130 = arith.constant dense<0.000000e+00> : vector<8xf32>
    %306 = vector.multi_reduction <add>, %305, %cst_130 [1] : vector<8x8xf32> to vector<8xf32>
    %307 = vector.shape_cast %306 : vector<8xf32> to vector<8x1xf32>
    %308 = tpu.reciprocal %307 {approx = true} : vector<8x1xf32> -> vector<8x1xf32>
    %309 = vector.broadcast %308 : vector<8x1xf32> to vector<8x8xf32>
    %310 = arith.mulf %305, %309 : vector<8x8xf32>
    %311 = arith.truncf %310 : vector<8x8xf32> to vector<8x8xbf16>
    %312 = vector.extract_strided_slice %262 {offsets = [0, 32], sizes = [8, 16], strides = [1, 1]} : vector<8x128xbf16> to vector<8x16xbf16>
    %cst_131 = arith.constant dense<0.000000e+00> : vector<8x16xf32>
    %313 = tpu.matmul %311, %312, %cst_131 {dimension_numbers = #tpu.dot_dimension_numbers<[1], [0], [0], [1], [0, 0, 1, 1], [], []>} : vector<8x8xbf16>, vector<8x16xbf16>, vector<8x16xf32> -> vector<8x16xf32>
    %314 = vector.extract_strided_slice %254 {offsets = [0, 48], sizes = [8, 16], strides = [1, 1]} : vector<8x128xbf16> to vector<8x16xbf16>
    %315 = vector.extract_strided_slice %258 {offsets = [0, 48], sizes = [8, 16], strides = [1, 1]} : vector<8x128xbf16> to vector<8x16xbf16>
    %cst_132 = arith.constant dense<0.000000e+00> : vector<8x8xf32>
    %316 = tpu.matmul %314, %315, %cst_132 {dimension_numbers = #tpu.dot_dimension_numbers<[1], [1], [0], [0], [0, 0, 1, 0], [], []>} : vector<8x16xbf16>, vector<8x16xbf16>, vector<8x8xf32> -> vector<8x8xf32>
    %317 = arith.addf %316, %12 : vector<8x8xf32>
    %cst_133 = arith.constant dense<0xFF800000> : vector<8xf32>
    %318 = vector.multi_reduction <maximumf>, %317, %cst_133 [1] : vector<8x8xf32> to vector<8xf32>
    %319 = vector.shape_cast %318 : vector<8xf32> to vector<8x1xf32>
    %320 = vector.broadcast %319 : vector<8x1xf32> to vector<8x8xf32>
    %321 = arith.subf %317, %320 : vector<8x8xf32>
    %322 = math.exp %321 : vector<8x8xf32>
    %cst_134 = arith.constant dense<0.000000e+00> : vector<8xf32>
    %323 = vector.multi_reduction <add>, %322, %cst_134 [1] : vector<8x8xf32> to vector<8xf32>
    %324 = vector.shape_cast %323 : vector<8xf32> to vector<8x1xf32>
    %325 = tpu.reciprocal %324 {approx = true} : vector<8x1xf32> -> vector<8x1xf32>
    %326 = vector.broadcast %325 : vector<8x1xf32> to vector<8x8xf32>
    %327 = arith.mulf %322, %326 : vector<8x8xf32>
    %328 = arith.truncf %327 : vector<8x8xf32> to vector<8x8xbf16>
    %329 = vector.extract_strided_slice %262 {offsets = [0, 48], sizes = [8, 16], strides = [1, 1]} : vector<8x128xbf16> to vector<8x16xbf16>
    %cst_135 = arith.constant dense<0.000000e+00> : vector<8x16xf32>
    %330 = tpu.matmul %328, %329, %cst_135 {dimension_numbers = #tpu.dot_dimension_numbers<[1], [0], [0], [1], [0, 0, 1, 1], [], []>} : vector<8x8xbf16>, vector<8x16xbf16>, vector<8x16xf32> -> vector<8x16xf32>
    %331 = vector.extract_strided_slice %254 {offsets = [0, 64], sizes = [8, 16], strides = [1, 1]} : vector<8x128xbf16> to vector<8x16xbf16>
    %332 = vector.extract_strided_slice %258 {offsets = [0, 64], sizes = [8, 16], strides = [1, 1]} : vector<8x128xbf16> to vector<8x16xbf16>
    %cst_136 = arith.constant dense<0.000000e+00> : vector<8x8xf32>
    %333 = tpu.matmul %331, %332, %cst_136 {dimension_numbers = #tpu.dot_dimension_numbers<[1], [1], [0], [0], [0, 0, 1, 0], [], []>} : vector<8x16xbf16>, vector<8x16xbf16>, vector<8x8xf32> -> vector<8x8xf32>
    %334 = arith.addf %333, %12 : vector<8x8xf32>
    %cst_137 = arith.constant dense<0xFF800000> : vector<8xf32>
    %335 = vector.multi_reduction <maximumf>, %334, %cst_137 [1] : vector<8x8xf32> to vector<8xf32>
    %336 = vector.shape_cast %335 : vector<8xf32> to vector<8x1xf32>
    %337 = vector.broadcast %336 : vector<8x1xf32> to vector<8x8xf32>
    %338 = arith.subf %334, %337 : vector<8x8xf32>
    %339 = math.exp %338 : vector<8x8xf32>
    %cst_138 = arith.constant dense<0.000000e+00> : vector<8xf32>
    %340 = vector.multi_reduction <add>, %339, %cst_138 [1] : vector<8x8xf32> to vector<8xf32>
    %341 = vector.shape_cast %340 : vector<8xf32> to vector<8x1xf32>
    %342 = tpu.reciprocal %341 {approx = true} : vector<8x1xf32> -> vector<8x1xf32>
    %343 = vector.broadcast %342 : vector<8x1xf32> to vector<8x8xf32>
    %344 = arith.mulf %339, %343 : vector<8x8xf32>
    %345 = arith.truncf %344 : vector<8x8xf32> to vector<8x8xbf16>
    %346 = vector.extract_strided_slice %262 {offsets = [0, 64], sizes = [8, 16], strides = [1, 1]} : vector<8x128xbf16> to vector<8x16xbf16>
    %cst_139 = arith.constant dense<0.000000e+00> : vector<8x16xf32>
    %347 = tpu.matmul %345, %346, %cst_139 {dimension_numbers = #tpu.dot_dimension_numbers<[1], [0], [0], [1], [0, 0, 1, 1], [], []>} : vector<8x8xbf16>, vector<8x16xbf16>, vector<8x16xf32> -> vector<8x16xf32>
    %348 = vector.extract_strided_slice %254 {offsets = [0, 80], sizes = [8, 16], strides = [1, 1]} : vector<8x128xbf16> to vector<8x16xbf16>
    %349 = vector.extract_strided_slice %258 {offsets = [0, 80], sizes = [8, 16], strides = [1, 1]} : vector<8x128xbf16> to vector<8x16xbf16>
    %cst_140 = arith.constant dense<0.000000e+00> : vector<8x8xf32>
    %350 = tpu.matmul %348, %349, %cst_140 {dimension_numbers = #tpu.dot_dimension_numbers<[1], [1], [0], [0], [0, 0, 1, 0], [], []>} : vector<8x16xbf16>, vector<8x16xbf16>, vector<8x8xf32> -> vector<8x8xf32>
    %351 = arith.addf %350, %12 : vector<8x8xf32>
    %cst_141 = arith.constant dense<0xFF800000> : vector<8xf32>
    %352 = vector.multi_reduction <maximumf>, %351, %cst_141 [1] : vector<8x8xf32> to vector<8xf32>
    %353 = vector.shape_cast %352 : vector<8xf32> to vector<8x1xf32>
    %354 = vector.broadcast %353 : vector<8x1xf32> to vector<8x8xf32>
    %355 = arith.subf %351, %354 : vector<8x8xf32>
    %356 = math.exp %355 : vector<8x8xf32>
    %cst_142 = arith.constant dense<0.000000e+00> : vector<8xf32>
    %357 = vector.multi_reduction <add>, %356, %cst_142 [1] : vector<8x8xf32> to vector<8xf32>
    %358 = vector.shape_cast %357 : vector<8xf32> to vector<8x1xf32>
    %359 = tpu.reciprocal %358 {approx = true} : vector<8x1xf32> -> vector<8x1xf32>
    %360 = vector.broadcast %359 : vector<8x1xf32> to vector<8x8xf32>
    %361 = arith.mulf %356, %360 : vector<8x8xf32>
    %362 = arith.truncf %361 : vector<8x8xf32> to vector<8x8xbf16>
    %363 = vector.extract_strided_slice %262 {offsets = [0, 80], sizes = [8, 16], strides = [1, 1]} : vector<8x128xbf16> to vector<8x16xbf16>
    %cst_143 = arith.constant dense<0.000000e+00> : vector<8x16xf32>
    %364 = tpu.matmul %362, %363, %cst_143 {dimension_numbers = #tpu.dot_dimension_numbers<[1], [0], [0], [1], [0, 0, 1, 1], [], []>} : vector<8x8xbf16>, vector<8x16xbf16>, vector<8x16xf32> -> vector<8x16xf32>
    %365 = vector.extract_strided_slice %254 {offsets = [0, 96], sizes = [8, 16], strides = [1, 1]} : vector<8x128xbf16> to vector<8x16xbf16>
    %366 = vector.extract_strided_slice %258 {offsets = [0, 96], sizes = [8, 16], strides = [1, 1]} : vector<8x128xbf16> to vector<8x16xbf16>
    %cst_144 = arith.constant dense<0.000000e+00> : vector<8x8xf32>
    %367 = tpu.matmul %365, %366, %cst_144 {dimension_numbers = #tpu.dot_dimension_numbers<[1], [1], [0], [0], [0, 0, 1, 0], [], []>} : vector<8x16xbf16>, vector<8x16xbf16>, vector<8x8xf32> -> vector<8x8xf32>
    %368 = arith.addf %367, %12 : vector<8x8xf32>
    %cst_145 = arith.constant dense<0xFF800000> : vector<8xf32>
    %369 = vector.multi_reduction <maximumf>, %368, %cst_145 [1] : vector<8x8xf32> to vector<8xf32>
    %370 = vector.shape_cast %369 : vector<8xf32> to vector<8x1xf32>
    %371 = vector.broadcast %370 : vector<8x1xf32> to vector<8x8xf32>
    %372 = arith.subf %368, %371 : vector<8x8xf32>
    %373 = math.exp %372 : vector<8x8xf32>
    %cst_146 = arith.constant dense<0.000000e+00> : vector<8xf32>
    %374 = vector.multi_reduction <add>, %373, %cst_146 [1] : vector<8x8xf32> to vector<8xf32>
    %375 = vector.shape_cast %374 : vector<8xf32> to vector<8x1xf32>
    %376 = tpu.reciprocal %375 {approx = true} : vector<8x1xf32> -> vector<8x1xf32>
    %377 = vector.broadcast %376 : vector<8x1xf32> to vector<8x8xf32>
    %378 = arith.mulf %373, %377 : vector<8x8xf32>
    %379 = arith.truncf %378 : vector<8x8xf32> to vector<8x8xbf16>
    %380 = vector.extract_strided_slice %262 {offsets = [0, 96], sizes = [8, 16], strides = [1, 1]} : vector<8x128xbf16> to vector<8x16xbf16>
    %cst_147 = arith.constant dense<0.000000e+00> : vector<8x16xf32>
    %381 = tpu.matmul %379, %380, %cst_147 {dimension_numbers = #tpu.dot_dimension_numbers<[1], [0], [0], [1], [0, 0, 1, 1], [], []>} : vector<8x8xbf16>, vector<8x16xbf16>, vector<8x16xf32> -> vector<8x16xf32>
    %382 = vector.extract_strided_slice %254 {offsets = [0, 112], sizes = [8, 16], strides = [1, 1]} : vector<8x128xbf16> to vector<8x16xbf16>
    %383 = vector.extract_strided_slice %258 {offsets = [0, 112], sizes = [8, 16], strides = [1, 1]} : vector<8x128xbf16> to vector<8x16xbf16>
    %cst_148 = arith.constant dense<0.000000e+00> : vector<8x8xf32>
    %384 = tpu.matmul %382, %383, %cst_148 {dimension_numbers = #tpu.dot_dimension_numbers<[1], [1], [0], [0], [0, 0, 1, 0], [], []>} : vector<8x16xbf16>, vector<8x16xbf16>, vector<8x8xf32> -> vector<8x8xf32>
    %385 = arith.addf %384, %12 : vector<8x8xf32>
    %cst_149 = arith.constant dense<0xFF800000> : vector<8xf32>
    %386 = vector.multi_reduction <maximumf>, %385, %cst_149 [1] : vector<8x8xf32> to vector<8xf32>
    %387 = vector.shape_cast %386 : vector<8xf32> to vector<8x1xf32>
    %388 = vector.broadcast %387 : vector<8x1xf32> to vector<8x8xf32>
    %389 = arith.subf %385, %388 : vector<8x8xf32>
    %390 = math.exp %389 : vector<8x8xf32>
    %cst_150 = arith.constant dense<0.000000e+00> : vector<8xf32>
    %391 = vector.multi_reduction <add>, %390, %cst_150 [1] : vector<8x8xf32> to vector<8xf32>
    %392 = vector.shape_cast %391 : vector<8xf32> to vector<8x1xf32>
    %393 = tpu.reciprocal %392 {approx = true} : vector<8x1xf32> -> vector<8x1xf32>
    %394 = vector.broadcast %393 : vector<8x1xf32> to vector<8x8xf32>
    %395 = arith.mulf %390, %394 : vector<8x8xf32>
    %396 = arith.truncf %395 : vector<8x8xf32> to vector<8x8xbf16>
    %397 = vector.extract_strided_slice %262 {offsets = [0, 112], sizes = [8, 16], strides = [1, 1]} : vector<8x128xbf16> to vector<8x16xbf16>
    %cst_151 = arith.constant dense<0.000000e+00> : vector<8x16xf32>
    %398 = tpu.matmul %396, %397, %cst_151 {dimension_numbers = #tpu.dot_dimension_numbers<[1], [0], [0], [1], [0, 0, 1, 1], [], []>} : vector<8x8xbf16>, vector<8x16xbf16>, vector<8x16xf32> -> vector<8x16xf32>
    %399 = tpu.concatenate %279, %296, %313, %330, %347, %364, %381, %398 in 1 : vector<8x16xf32>, vector<8x16xf32>, vector<8x16xf32>, vector<8x16xf32>, vector<8x16xf32>, vector<8x16xf32>, vector<8x16xf32>, vector<8x16xf32> -> vector<8x128xf32>
    %400 = arith.truncf %399 : vector<8x128xf32> to vector<8x128xbf16>
    %cst_152 = arith.constant dense<0.000000e+00> : vector<8x128xf32>
    %401 = tpu.matmul %400, %248, %cst_152 {dimension_numbers = #tpu.dot_dimension_numbers<[1], [0], [0], [1], [0, 0, 1, 1], [], []>} : vector<8x128xbf16>, vector<128x128xbf16>, vector<8x128xf32> -> vector<8x128xf32>
    %402 = vector.broadcast %250 : vector<1x128xf32> to vector<8x128xf32>
    %403 = arith.addf %401, %402 : vector<8x128xf32>
    %404 = arith.addf %208, %403 : vector<8x128xf32>
    %c0_153 = arith.constant 0 : index
    %c0_154 = arith.constant 0 : index
    %c0_155 = arith.constant 0 : index
    %405 = vector.load %arg26[%c0_153, %c0_154, %c0_155] : memref<1x1x128xf32, #tpu.memory_space<vmem>>, vector<1x1x128xf32>
    %406 = vector.shape_cast %405 : vector<1x1x128xf32> to vector<1x128xf32>
    %c0_156 = arith.constant 0 : index
    %c0_157 = arith.constant 0 : index
    %c0_158 = arith.constant 0 : index
    %407 = vector.load %arg27[%c0_156, %c0_157, %c0_158] : memref<1x1x128xf32, #tpu.memory_space<vmem>>, vector<1x1x128xf32>
    %408 = vector.shape_cast %407 : vector<1x1x128xf32> to vector<1x128xf32>
    %cst_159 = arith.constant dense<0.000000e+00> : vector<8xf32>
    %409 = vector.multi_reduction <add>, %404, %cst_159 [1] : vector<8x128xf32> to vector<8xf32>
    %410 = vector.shape_cast %409 : vector<8xf32> to vector<8x1xf32>
    %cst_160 = arith.constant 1.280000e+02 : f32
    %411 = vector.broadcast %cst_160 : f32 to vector<8x1xf32>
    %412 = arith.divf %410, %411 : vector<8x1xf32>
    %413 = vector.broadcast %412 : vector<8x1xf32> to vector<8x128xf32>
    %414 = arith.subf %404, %413 : vector<8x128xf32>
    %415 = arith.mulf %414, %414 : vector<8x128xf32>
    %cst_161 = arith.constant dense<0.000000e+00> : vector<8xf32>
    %416 = vector.multi_reduction <add>, %415, %cst_161 [1] : vector<8x128xf32> to vector<8xf32>
    %417 = vector.shape_cast %416 : vector<8xf32> to vector<8x1xf32>
    %cst_162 = arith.constant 0.00787401571 : f32
    %418 = vector.broadcast %cst_162 : f32 to vector<8x1xf32>
    %419 = arith.mulf %417, %418 : vector<8x1xf32>
    %420 = math.sqrt %419 : vector<8x1xf32>
    %cst_163 = arith.constant 9.99999997E-7 : f32
    %421 = vector.broadcast %cst_163 : f32 to vector<8x1xf32>
    %422 = arith.addf %420, %421 : vector<8x1xf32>
    %423 = tpu.reciprocal %422 {approx = true} : vector<8x1xf32> -> vector<8x1xf32>
    %424 = vector.broadcast %406 : vector<1x128xf32> to vector<8x128xf32>
    %425 = arith.mulf %424, %414 : vector<8x128xf32>
    %426 = vector.broadcast %423 : vector<8x1xf32> to vector<8x128xf32>
    %427 = arith.mulf %425, %426 : vector<8x128xf32>
    %428 = vector.broadcast %408 : vector<1x128xf32> to vector<8x128xf32>
    %429 = arith.addf %427, %428 : vector<8x128xf32>
    %430 = arith.truncf %429 : vector<8x128xf32> to vector<8x128xbf16>
    %c0_164 = arith.constant 0 : index
    %c0_165 = arith.constant 0 : index
    %c0_166 = arith.constant 0 : index
    %431 = vector.load %arg28[%c0_164, %c0_165, %c0_166] : memref<1x128x2048xbf16, #tpu.memory_space<vmem>>, vector<1x128x2048xbf16>
    %432 = vector.shape_cast %431 : vector<1x128x2048xbf16> to vector<128x2048xbf16>
    %cst_167 = arith.constant dense<0.000000e+00> : vector<8x2048xf32>
    %433 = tpu.matmul %430, %432, %cst_167 {dimension_numbers = #tpu.dot_dimension_numbers<[1], [0], [0], [1], [0, 0, 1, 1], [], []>} : vector<8x128xbf16>, vector<128x2048xbf16>, vector<8x2048xf32> -> vector<8x2048xf32>
    %c0_168 = arith.constant 0 : index
    %c0_169 = arith.constant 0 : index
    %c0_170 = arith.constant 0 : index
    %434 = vector.load %arg29[%c0_168, %c0_169, %c0_170] : memref<1x1x2048xf32, #tpu.memory_space<vmem>>, vector<1x1x2048xf32>
    %435 = vector.shape_cast %434 : vector<1x1x2048xf32> to vector<1x2048xf32>
    %436 = vector.broadcast %435 : vector<1x2048xf32> to vector<8x2048xf32>
    %437 = arith.addf %433, %436 : vector<8x2048xf32>
    %cst_171 = arith.constant 0.000000e+00 : f32
    %438 = vector.broadcast %cst_171 : f32 to vector<8x2048xf32>
    %439 = arith.maximumf %437, %438 : vector<8x2048xf32>
    %440 = arith.truncf %439 : vector<8x2048xf32> to vector<8x2048xbf16>
    %c0_172 = arith.constant 0 : index
    %c0_173 = arith.constant 0 : index
    %c0_174 = arith.constant 0 : index
    %441 = vector.load %arg30[%c0_172, %c0_173, %c0_174] : memref<1x2048x128xbf16, #tpu.memory_space<vmem>>, vector<1x2048x128xbf16>
    %442 = vector.shape_cast %441 : vector<1x2048x128xbf16> to vector<2048x128xbf16>
    %cst_175 = arith.constant dense<0.000000e+00> : vector<8x128xf32>
    %443 = tpu.matmul %440, %442, %cst_175 {dimension_numbers = #tpu.dot_dimension_numbers<[1], [0], [0], [1], [0, 0, 1, 1], [], []>} : vector<8x2048xbf16>, vector<2048x128xbf16>, vector<8x128xf32> -> vector<8x128xf32>
    %c0_176 = arith.constant 0 : index
    %c0_177 = arith.constant 0 : index
    %c0_178 = arith.constant 0 : index
    %444 = vector.load %arg31[%c0_176, %c0_177, %c0_178] : memref<1x1x128xf32, #tpu.memory_space<vmem>>, vector<1x1x128xf32>
    %445 = vector.shape_cast %444 : vector<1x1x128xf32> to vector<1x128xf32>
    %446 = vector.broadcast %445 : vector<1x128xf32> to vector<8x128xf32>
    %447 = arith.addf %443, %446 : vector<8x128xf32>
    %c0_179 = arith.constant 0 : index
    %c0_180 = arith.constant 0 : index
    %c0_181 = arith.constant 0 : index
    %448 = vector.load %arg34[%c0_179, %c0_180, %c0_181] : memref<1x8x128xf32, #tpu.memory_space<vmem>>, vector<1x8x128xf32>
    %449 = vector.shape_cast %448 : vector<1x8x128xf32> to vector<8x128xf32>
    %450 = vector.shape_cast %447 : vector<8x128xf32> to vector<1x8x128xf32>
    tpu.vector_store %arg34[%c0_179, %c0_180, %c0_181], %450 {strides = array<i32>} : memref<1x8x128xf32, #tpu.memory_space<vmem>>, vector<1x8x128xf32>,
    %c1_i32 = arith.constant 1 : i32
    %451 = arith.cmpi eq, %arg1, %c1_i32 : i32
    %452 = arith.extui %451 : i1 to i32
    %c0_i32_182 = arith.constant 0 : i32
    %453 = arith.cmpi ne, %452, %c0_i32_182 : i32
    scf.if %453 {
      %c0_183 = arith.constant 0 : index
      %c0_184 = arith.constant 0 : index
      %454 = vector.load %arg32[%c0_183, %c0_184] : memref<1x128xf32, #tpu.memory_space<vmem>>, vector<1x128xf32>
      %c0_185 = arith.constant 0 : index
      %c0_186 = arith.constant 0 : index
      %455 = vector.load %arg33[%c0_185, %c0_186] : memref<1x128xf32, #tpu.memory_space<vmem>>, vector<1x128xf32>
      %cst_187 = arith.constant dense<0.000000e+00> : vector<8xf32>
      %456 = vector.multi_reduction <add>, %447, %cst_187 [1] : vector<8x128xf32> to vector<8xf32>
      %457 = vector.shape_cast %456 : vector<8xf32> to vector<8x1xf32>
      %cst_188 = arith.constant 1.280000e+02 : f32
      %458 = vector.broadcast %cst_188 : f32 to vector<8x1xf32>
      %459 = arith.divf %457, %458 : vector<8x1xf32>
      %460 = vector.broadcast %459 : vector<8x1xf32> to vector<8x128xf32>
      %461 = arith.subf %447, %460 : vector<8x128xf32>
      %462 = arith.mulf %461, %461 : vector<8x128xf32>
      %cst_189 = arith.constant dense<0.000000e+00> : vector<8xf32>
      %463 = vector.multi_reduction <add>, %462, %cst_189 [1] : vector<8x128xf32> to vector<8xf32>
      %464 = vector.shape_cast %463 : vector<8xf32> to vector<8x1xf32>
      %cst_190 = arith.constant 0.00787401571 : f32
      %465 = vector.broadcast %cst_190 : f32 to vector<8x1xf32>
      %466 = arith.mulf %464, %465 : vector<8x1xf32>
      %467 = math.sqrt %466 : vector<8x1xf32>
      %cst_191 = arith.constant 9.99999997E-7 : f32
      %468 = vector.broadcast %cst_191 : f32 to vector<8x1xf32>
      %469 = arith.addf %467, %468 : vector<8x1xf32>
      %470 = tpu.reciprocal %469 {approx = true} : vector<8x1xf32> -> vector<8x1xf32>
      %471 = vector.broadcast %454 : vector<1x128xf32> to vector<8x128xf32>
      %472 = arith.mulf %471, %461 : vector<8x128xf32>
      %473 = vector.broadcast %470 : vector<8x1xf32> to vector<8x128xf32>
      %474 = arith.mulf %472, %473 : vector<8x128xf32>
      %475 = vector.broadcast %455 : vector<1x128xf32> to vector<8x128xf32>
      %476 = arith.addf %474, %475 : vector<8x128xf32>
      %c0_192 = arith.constant 0 : index
      %c0_193 = arith.constant 0 : index
      %c0_194 = arith.constant 0 : index
      %477 = vector.load %arg34[%c0_192, %c0_193, %c0_194] : memref<1x8x128xf32, #tpu.memory_space<vmem>>, vector<1x8x128xf32>
      %478 = vector.shape_cast %477 : vector<1x8x128xf32> to vector<8x128xf32>
      %479 = vector.shape_cast %476 : vector<8x128xf32> to vector<1x8x128xf32>
      tpu.vector_store %arg34[%c0_192, %c0_193, %c0_194], %479 {strides = array<i32>} : memref<1x8x128xf32, #tpu.memory_space<vmem>>, vector<1x8x128xf32>,
    } else {
    }
    return
  }
  func.func @transform_0(%arg0: i32, %arg1: i32) -> (i32, i32, i32) {
    %c0_i32 = arith.constant 0 : i32
    %c0_i32_0 = arith.constant 0 : i32
    %c0_i32_1 = arith.constant 0 : i32
    return %arg0, %c0_i32, %c0_i32_0 : i32, i32, i32
  }
  func.func @transform_1(%arg0: i32, %arg1: i32) -> (i32, i32, i32) {
    %c0_i32 = arith.constant 0 : i32
    %c0_i32_0 = arith.constant 0 : i32
    %c0_i32_1 = arith.constant 0 : i32
    return %arg0, %c0_i32, %c0_i32_0 : i32, i32, i32
  }
  func.func @transform_2(%arg0: i32, %arg1: i32) -> (i32, i32, i32) {
    %c0_i32 = arith.constant 0 : i32
    %c0_i32_0 = arith.constant 0 : i32
    %c0_i32_1 = arith.constant 0 : i32
    return %arg0, %c0_i32, %c0_i32_0 : i32, i32, i32
  }
  func.func @transform_3(%arg0: i32, %arg1: i32) -> (i32, i32, i32) {
    %c0_i32 = arith.constant 0 : i32
    %c0_i32_0 = arith.constant 0 : i32
    %c0_i32_1 = arith.constant 0 : i32
    return %arg0, %c0_i32, %c0_i32_0 : i32, i32, i32
  }
  func.func @transform_4(%arg0: i32, %arg1: i32) -> (i32, i32, i32) {
    %c0_i32 = arith.constant 0 : i32
    %c0_i32_0 = arith.constant 0 : i32
    %c0_i32_1 = arith.constant 0 : i32
    return %arg1, %c0_i32, %c0_i32_0 : i32, i32, i32
  }
  func.func @transform_5(%arg0: i32, %arg1: i32) -> (i32, i32, i32) {
    %c0_i32 = arith.constant 0 : i32
    %c0_i32_0 = arith.constant 0 : i32
    %c0_i32_1 = arith.constant 0 : i32
    return %arg1, %c0_i32, %c0_i32_0 : i32, i32, i32
  }
  func.func @transform_6(%arg0: i32, %arg1: i32) -> (i32, i32, i32) {
    %c0_i32 = arith.constant 0 : i32
    %c0_i32_0 = arith.constant 0 : i32
    %c0_i32_1 = arith.constant 0 : i32
    return %arg1, %c0_i32, %c0_i32_0 : i32, i32, i32
  }
  func.func @transform_7(%arg0: i32, %arg1: i32) -> (i32, i32, i32) {
    %c0_i32 = arith.constant 0 : i32
    %c0_i32_0 = arith.constant 0 : i32
    %c0_i32_1 = arith.constant 0 : i32
    return %arg1, %c0_i32, %c0_i32_0 : i32, i32, i32
  }
  func.func @transform_8(%arg0: i32, %arg1: i32) -> (i32, i32, i32) {
    %c0_i32 = arith.constant 0 : i32
    %c0_i32_0 = arith.constant 0 : i32
    %c0_i32_1 = arith.constant 0 : i32
    return %arg1, %c0_i32, %c0_i32_0 : i32, i32, i32
  }
  func.func @transform_9(%arg0: i32, %arg1: i32) -> (i32, i32, i32) {
    %c0_i32 = arith.constant 0 : i32
    %c0_i32_0 = arith.constant 0 : i32
    %c0_i32_1 = arith.constant 0 : i32
    return %arg1, %c0_i32, %c0_i32_0 : i32, i32, i32
  }
  func.func @transform_10(%arg0: i32, %arg1: i32) -> (i32, i32, i32) {
    %c0_i32 = arith.constant 0 : i32
    %c0_i32_0 = arith.constant 0 : i32
    %c0_i32_1 = arith.constant 0 : i32
    return %arg1, %c0_i32, %c0_i32_0 : i32, i32, i32
  }
  func.func @transform_11(%arg0: i32, %arg1: i32) -> (i32, i32, i32) {
    %c0_i32 = arith.constant 0 : i32
    %c0_i32_0 = arith.constant 0 : i32
    %c0_i32_1 = arith.constant 0 : i32
    return %arg1, %c0_i32, %c0_i32_0 : i32, i32, i32
  }
  func.func @transform_12(%arg0: i32, %arg1: i32) -> (i32, i32, i32) {
    %c0_i32 = arith.constant 0 : i32
    %c0_i32_0 = arith.constant 0 : i32
    %c0_i32_1 = arith.constant 0 : i32
    return %arg1, %c0_i32, %c0_i32_0 : i32, i32, i32
  }
  func.func @transform_13(%arg0: i32, %arg1: i32) -> (i32, i32, i32) {
    %c0_i32 = arith.constant 0 : i32
    %c0_i32_0 = arith.constant 0 : i32
    %c0_i32_1 = arith.constant 0 : i32
    return %arg1, %c0_i32, %c0_i32_0 : i32, i32, i32
  }
  func.func @transform_14(%arg0: i32, %arg1: i32) -> (i32, i32, i32) {
    %c0_i32 = arith.constant 0 : i32
    %c0_i32_0 = arith.constant 0 : i32
    %c0_i32_1 = arith.constant 0 : i32
    return %arg1, %c0_i32, %c0_i32_0 : i32, i32, i32
  }
  func.func @transform_15(%arg0: i32, %arg1: i32) -> (i32, i32, i32) {
    %c0_i32 = arith.constant 0 : i32
    %c0_i32_0 = arith.constant 0 : i32
    %c0_i32_1 = arith.constant 0 : i32
    return %arg1, %c0_i32, %c0_i32_0 : i32, i32, i32
  }
  func.func @transform_16(%arg0: i32, %arg1: i32) -> (i32, i32, i32) {
    %c0_i32 = arith.constant 0 : i32
    %c0_i32_0 = arith.constant 0 : i32
    %c0_i32_1 = arith.constant 0 : i32
    return %arg1, %c0_i32, %c0_i32_0 : i32, i32, i32
  }
  func.func @transform_17(%arg0: i32, %arg1: i32) -> (i32, i32, i32) {
    %c0_i32 = arith.constant 0 : i32
    %c0_i32_0 = arith.constant 0 : i32
    %c0_i32_1 = arith.constant 0 : i32
    return %arg1, %c0_i32, %c0_i32_0 : i32, i32, i32
  }
  func.func @transform_18(%arg0: i32, %arg1: i32) -> (i32, i32, i32) {
    %c0_i32 = arith.constant 0 : i32
    %c0_i32_0 = arith.constant 0 : i32
    %c0_i32_1 = arith.constant 0 : i32
    return %arg1, %c0_i32, %c0_i32_0 : i32, i32, i32
  }
  func.func @transform_19(%arg0: i32, %arg1: i32) -> (i32, i32, i32) {
    %c0_i32 = arith.constant 0 : i32
    %c0_i32_0 = arith.constant 0 : i32
    %c0_i32_1 = arith.constant 0 : i32
    return %arg1, %c0_i32, %c0_i32_0 : i32, i32, i32
  }
  func.func @transform_20(%arg0: i32, %arg1: i32) -> (i32, i32, i32) {
    %c0_i32 = arith.constant 0 : i32
    %c0_i32_0 = arith.constant 0 : i32
    %c0_i32_1 = arith.constant 0 : i32
    return %arg1, %c0_i32, %c0_i32_0 : i32, i32, i32
  }
  func.func @transform_21(%arg0: i32, %arg1: i32) -> (i32, i32, i32) {
    %c0_i32 = arith.constant 0 : i32
    %c0_i32_0 = arith.constant 0 : i32
    %c0_i32_1 = arith.constant 0 : i32
    return %arg1, %c0_i32, %c0_i32_0 : i32, i32, i32
  }
  func.func @transform_22(%arg0: i32, %arg1: i32) -> (i32, i32, i32) {
    %c0_i32 = arith.constant 0 : i32
    %c0_i32_0 = arith.constant 0 : i32
    %c0_i32_1 = arith.constant 0 : i32
    return %arg1, %c0_i32, %c0_i32_0 : i32, i32, i32
  }
  func.func @transform_23(%arg0: i32, %arg1: i32) -> (i32, i32, i32) {
    %c0_i32 = arith.constant 0 : i32
    %c0_i32_0 = arith.constant 0 : i32
    %c0_i32_1 = arith.constant 0 : i32
    return %arg1, %c0_i32, %c0_i32_0 : i32, i32, i32
  }
  func.func @transform_24(%arg0: i32, %arg1: i32) -> (i32, i32, i32) {
    %c0_i32 = arith.constant 0 : i32
    %c0_i32_0 = arith.constant 0 : i32
    %c0_i32_1 = arith.constant 0 : i32
    return %arg1, %c0_i32, %c0_i32_0 : i32, i32, i32
  }
  func.func @transform_25(%arg0: i32, %arg1: i32) -> (i32, i32, i32) {
    %c0_i32 = arith.constant 0 : i32
    %c0_i32_0 = arith.constant 0 : i32
    %c0_i32_1 = arith.constant 0 : i32
    return %arg1, %c0_i32, %c0_i32_0 : i32, i32, i32
  }
  func.func @transform_26(%arg0: i32, %arg1: i32) -> (i32, i32, i32) {
    %c0_i32 = arith.constant 0 : i32
    %c0_i32_0 = arith.constant 0 : i32
    %c0_i32_1 = arith.constant 0 : i32
    return %arg1, %c0_i32, %c0_i32_0 : i32, i32, i32
  }
  func.func @transform_27(%arg0: i32, %arg1: i32) -> (i32, i32, i32) {
    %c0_i32 = arith.constant 0 : i32
    %c0_i32_0 = arith.constant 0 : i32
    %c0_i32_1 = arith.constant 0 : i32
    return %arg1, %c0_i32, %c0_i32_0 : i32, i32, i32
  }
  func.func @transform_28(%arg0: i32, %arg1: i32) -> (i32, i32, i32) {
    %c0_i32 = arith.constant 0 : i32
    %c0_i32_0 = arith.constant 0 : i32
    %c0_i32_1 = arith.constant 0 : i32
    return %arg1, %c0_i32, %c0_i32_0 : i32, i32, i32
  }
  func.func @transform_29(%arg0: i32, %arg1: i32) -> (i32, i32, i32) {
    %c0_i32 = arith.constant 0 : i32
    %c0_i32_0 = arith.constant 0 : i32
    %c0_i32_1 = arith.constant 0 : i32
    return %arg1, %c0_i32, %c0_i32_0 : i32, i32, i32
  }
  func.func @transform_30(%arg0: i32, %arg1: i32) -> (i32, i32) {
    %c0_i32 = arith.constant 0 : i32
    %c0_i32_0 = arith.constant 0 : i32
    %c0_i32_1 = arith.constant 0 : i32
    return %c0_i32, %c0_i32_0 : i32, i32
  }
  func.func @transform_31(%arg0: i32, %arg1: i32) -> (i32, i32) {
    %c0_i32 = arith.constant 0 : i32
    %c0_i32_0 = arith.constant 0 : i32
    %c0_i32_1 = arith.constant 0 : i32
    return %c0_i32, %c0_i32_0 : i32, i32
  }
  func.func @transform_32(%arg0: i32, %arg1: i32) -> (i32, i32, i32) {
    %c0_i32 = arith.constant 0 : i32
    %c0_i32_0 = arith.constant 0 : i32
    %c0_i32_1 = arith.constant 0 : i32
    return %arg0, %c0_i32, %c0_i32_0 : i32, i32, i32
  }
}

</mosaic_0001>

<llo_original>
// kernel: tpu_custom_call.1
$region0: #{tpu_custom_call.1}
  #allocation0 [shape = 'u32[]', space=smem, size = 0x4, offset = 0x4, fixed_abs, tag = 'smem constant byte address 0x4 - core index']
  #allocation1 [shape = 'u32[144,128]{1,0:T(1,128)}', space=vmem, size = 0x12000, scoped, tag = 'internal scratch']
  %s0 = inlined_call_operand.smem [shape: u32[33], index: -1, kind: input, shape index: {}]
  %s1 = sld [smem:[%s0]]
  %s2 = scalar_lea.smem %s0, 1
  %s3 = sld [smem:[%s2]]
  %s4 = scalar_lea.smem %s0, 2
  %s5 = sld [smem:[%s4]]
  %s6 = scalar_lea.smem %s0, 3
  %s7 = sld [smem:[%s6]]
  %s8 = scalar_lea.smem %s0, 4
  %s9 = sld [smem:[%s8]]
  %s10 = scalar_lea.smem %s0, 5
  %s11 = sld [smem:[%s10]]
  %s12 = scalar_lea.smem %s0, 6
  %s13 = sld [smem:[%s12]]
  %s14 = scalar_lea.smem %s0, 7
  %s15 = sld [smem:[%s14]]
  %s16 = scalar_lea.smem %s0, 8
  %s17 = sld [smem:[%s16]]
  %s18 = scalar_lea.smem %s0, 9
  %s19 = sld [smem:[%s18]]
  %s20 = scalar_lea.smem %s0, 10
  %s21 = sld [smem:[%s20]]
  %s22 = scalar_lea.smem %s0, 11
  %s23 = sld [smem:[%s22]]
  %s24 = scalar_lea.smem %s0, 12
  %s25 = sld [smem:[%s24]]
  %s26 = scalar_lea.smem %s0, 13
  %s27 = sld [smem:[%s26]]
  %s28 = scalar_lea.smem %s0, 14
  %s29 = sld [smem:[%s28]]
  %s30 = scalar_lea.smem %s0, 15
  %s31 = sld [smem:[%s30]]
  %s32 = scalar_lea.smem %s0, 16
  %s33 = sld [smem:[%s32]]
  %s34 = scalar_lea.smem %s0, 17
  %s35 = sld [smem:[%s34]]
  %s36 = scalar_lea.smem %s0, 18
  %s37 = sld [smem:[%s36]]
  %s38 = scalar_lea.smem %s0, 19
  %s39 = sld [smem:[%s38]]
  %s40 = scalar_lea.smem %s0, 20
  %s41 = sld [smem:[%s40]]
  %s42 = scalar_lea.smem %s0, 21
  %s43 = sld [smem:[%s42]]
  %s44 = scalar_lea.smem %s0, 22
  %s45 = sld [smem:[%s44]]
  %s46 = scalar_lea.smem %s0, 23
  %s47 = sld [smem:[%s46]]
  %s48 = scalar_lea.smem %s0, 24
  %s49 = sld [smem:[%s48]]
  %s50 = scalar_lea.smem %s0, 25
  %s51 = sld [smem:[%s50]]
  %s52 = scalar_lea.smem %s0, 26
  %s53 = sld [smem:[%s52]]
  %s54 = scalar_lea.smem %s0, 27
  %s55 = sld [smem:[%s54]]
  %s56 = scalar_lea.smem %s0, 28
  %s57 = sld [smem:[%s56]]
  %s58 = scalar_lea.smem %s0, 29
  %s59 = sld [smem:[%s58]]
  %s60 = scalar_lea.smem %s0, 30
  %s61 = sld [smem:[%s60]]
  %s62 = scalar_lea.smem %s0, 31
  %s63 = sld [smem:[%s62]]
  %s64 = scalar_lea.smem %s0, 32
  %s65 = sld [smem:[%s64]]
  %s66 = sld [smem:[#allocation0]]
  $region221: #{tpu_custom_call.1} parent=0
    _
  %s68 = ssub.s32 1, %s66
  %s69 = scalar_select 0, %s68, %s66
  $region1: #{tpu_custom_call.1} parent=0
    #allocation2 [shape = 'u8[8192]{0}', space=vmem, size = 0x2000, scoped, tag = 'input window, operand 0']
    #allocation3 [shape = 's32[2]{0}', space=sflag, size = 0x8, scoped, tag = 'scoped memory for tpu_custom_call.1']
    #allocation4 [shape = 's32[2]{0}', space=sflag, size = 0x8, scoped, tag = 'scoped memory for tpu_custom_call.1']
    #allocation5 [shape = 'u8[4096]{0}', space=vmem, size = 0x1000, scoped, tag = 'input window, operand 1']
    #allocation6 [shape = 's32[2]{0}', space=sflag, size = 0x8, scoped, tag = 'scoped memory for tpu_custom_call.1']
    #allocation7 [shape = 'u8[4096]{0}', space=vmem, size = 0x1000, scoped, tag = 'input window, operand 2']
    #allocation8 [shape = 'u8[65536]{0}', space=vmem, size = 0x10000, scoped, tag = 'input window, operand 6']
    #allocation9 [shape = 's32[2]{0}', space=sflag, size = 0x8, scoped, tag = 'scoped memory for tpu_custom_call.1']
    #allocation10 [shape = 'u8[65536]{0}', space=vmem, size = 0x10000, scoped, tag = 'input window, operand 8']
    #allocation11 [shape = 'u8[65536]{0}', space=vmem, size = 0x10000, scoped, tag = 'input window, operand 10']
    #allocation12 [shape = 's32[2]{0}', space=sflag, size = 0x8, scoped, tag = 'scoped memory for tpu_custom_call.1']
    #allocation13 [shape = 'u8[65536]{0}', space=vmem, size = 0x10000, scoped, tag = 'input window, operand 12']
    #allocation14 [shape = 'u8[65536]{0}', space=vmem, size = 0x10000, scoped, tag = 'input window, operand 16']
    #allocation15 [shape = 's32[2]{0}', space=sflag, size = 0x8, scoped, tag = 'scoped memory for tpu_custom_call.1']
    #allocation16 [shape = 'u8[65536]{0}', space=vmem, size = 0x10000, scoped, tag = 'input window, operand 18']
    #allocation17 [shape = 'u8[65536]{0}', space=vmem, size = 0x10000, scoped, tag = 'input window, operand 20']
    #allocation18 [shape = 's32[2]{0}', space=sflag, size = 0x8, scoped, tag = 'scoped memory for tpu_custom_call.1']
    #allocation19 [shape = 'u8[65536]{0}', space=vmem, size = 0x10000, scoped, tag = 'input window, operand 22']
    #allocation20 [shape = 'u8[1048576]{0}', space=vmem, size = 0x100000, scoped, tag = 'input window, operand 26']
    #allocation21 [shape = 's32[2]{0}', space=sflag, size = 0x8, scoped, tag = 'scoped memory for tpu_custom_call.1']
    #allocation22 [shape = 'u8[1048576]{0}', space=vmem, size = 0x100000, scoped, tag = 'input window, operand 28']
    #allocation23 [shape = 'u8[8192]{0}', space=vmem, size = 0x2000, scoped, tag = 'output window, operand 0']
    %70 = vsyncpa [#allocation3], 0
    %s71 = scalar_lea.sflag [#allocation3], 1
    %72 = vsyncpa %s71, 0
    %73 = vsyncpa [#allocation6], 0
    %s74 = scalar_lea.sflag [#allocation6], 1
    %75 = vsyncpa %s74, 0
    %76 = vsyncpa [#allocation9], 0
    %s77 = scalar_lea.sflag [#allocation9], 1
    %78 = vsyncpa %s77, 0
    %79 = vsyncpa [#allocation12], 0
    %s80 = scalar_lea.sflag [#allocation12], 1
    %81 = vsyncpa %s80, 0
    %82 = vsyncpa [#allocation15], 0
    %s83 = scalar_lea.sflag [#allocation15], 1
    %84 = vsyncpa %s83, 0
    %85 = vsyncpa [#allocation18], 0
    %s86 = scalar_lea.sflag [#allocation18], 1
    %87 = vsyncpa %s86, 0
    %88 = vsyncpa [#allocation21], 0
    %s89 = scalar_lea.sflag [#allocation21], 1
    %90 = vsyncpa %s89, 0
    %91 = vsyncpa [#allocation4], 0
    %s92 = scalar_lea.sflag [#allocation4], 1
    %93 = vsyncpa %s92, 0
    loop: start=0, step=1, limit=6
    $region2: #{tpu_custom_call.1} parent=1 // loop_pre_header
      _
    $region3: #{tpu_custom_call.1} parent=1 // loop_header
      %s95 = sphi 0, %s99
      %p96 = scmp.ge.s32.totalorder %s95, 6
      %s102 = sphi 0, %s114
      %s103 = sphi 0, %s110
      %s104 = sphi 0, %s102
      %s105 = sphi 0, %s103
      %s106 = sphi 0, %s104
      %s107 = sphi 0, %s105
      %s117 = sphi 0, %s119
      %s120 = sphi 0, %s117
      %s121 = sphi 0, %s120
      %s137 = sphi 0, %s121
      %s143 = sphi 0, %s145
      %s146 = sphi 0, %s143
      %s147 = sphi 0, %s146
      %s163 = sphi 0, %s147
      %s169 = sphi 0, %s171
      %s172 = sphi 0, %s169
      %s173 = sphi 0, %s172
      %s189 = sphi 0, %s173
      %s195 = sphi 0, %s197
      %s198 = sphi 0, %s195
      %s199 = sphi 0, %s198
      %s215 = sphi 0, %s199
      %s221 = sphi 0, %s223
      %s224 = sphi 0, %s221
      %s225 = sphi 0, %s224
      %s241 = sphi 0, %s225
      %s247 = sphi 0, %s249
      %s250 = sphi 0, %s247
      %s251 = sphi 0, %s250
      %s267 = sphi 0, %s251
      %s273 = sphi 0, %s275
      %s276 = sphi 0, %s273
      %s277 = sphi 0, %s276
      %s293 = sphi 0, %s277
      %s299 = sphi 0, %s301
      %s302 = sphi 0, %s299
      %s303 = sphi 0, %s302
      %s319 = sphi 0, %s303
      %s325 = sphi 0, %s327
      %s328 = sphi 0, %s325
      %s329 = sphi 0, %s328
      %s345 = sphi 0, %s329
      %s351 = sphi 0, %s353
      %s354 = sphi 0, %s351
      %s355 = sphi 0, %s354
      %s371 = sphi 0, %s355
      %s377 = sphi 0, %s379
      %s380 = sphi 0, %s377
      %s381 = sphi 0, %s380
      %s397 = sphi 0, %s381
      %s403 = sphi 0, %s405
      %s406 = sphi 0, %s403
      %s407 = sphi 0, %s406
      %s423 = sphi 0, %s407
      %s429 = sphi 0, %s431
      %s432 = sphi 0, %s429
      %s433 = sphi 0, %s432
      %s449 = sphi 0, %s433
      %s455 = sphi 0, %s457
      %s458 = sphi 0, %s455
      %s459 = sphi 0, %s458
      %s475 = sphi 0, %s459
      %s481 = sphi 0, %s483
      %s484 = sphi 0, %s481
      %s485 = sphi 0, %s484
      %s501 = sphi 0, %s485
      %s507 = sphi 0, %s509
      %s510 = sphi 0, %s507
      %s511 = sphi 0, %s510
      %s527 = sphi 0, %s511
      %s533 = sphi 0, %s535
      %s536 = sphi 0, %s533
      %s537 = sphi 0, %s536
      %s553 = sphi 0, %s537
      %s559 = sphi 0, %s561
      %s562 = sphi 0, %s559
      %s563 = sphi 0, %s562
      %s579 = sphi 0, %s563
      %s585 = sphi 0, %s587
      %s588 = sphi 0, %s585
      %s589 = sphi 0, %s588
      %s605 = sphi 0, %s589
      %s611 = sphi 0, %s613
      %s614 = sphi 0, %s611
      %s615 = sphi 0, %s614
      %s631 = sphi 0, %s615
      %s637 = sphi 0, %s639
      %s640 = sphi 0, %s637
      %s641 = sphi 0, %s640
      %s657 = sphi 0, %s641
      %s663 = sphi 0, %s665
      %s666 = sphi 0, %s663
      %s667 = sphi 0, %s666
      %s683 = sphi 0, %s667
      %s689 = sphi 0, %s691
      %s692 = sphi 0, %s689
      %s693 = sphi 0, %s692
      %s709 = sphi 0, %s693
      %s715 = sphi 0, %s717
      %s718 = sphi 0, %s715
      %s719 = sphi 0, %s718
      %s735 = sphi 0, %s719
      %s741 = sphi 0, %s743
      %s744 = sphi 0, %s741
      %s745 = sphi 0, %s744
      %s761 = sphi 0, %s745
      %s767 = sphi 0, %s769
      %s770 = sphi 0, %s767
      %s771 = sphi 0, %s770
      %s787 = sphi 0, %s771
      %s793 = sphi 0, %s795
      %s796 = sphi 0, %s793
      %s797 = sphi 0, %s796
      %s813 = sphi 0, %s797
      %s819 = sphi 0, %s821
      %s822 = sphi 0, %s819
      %s823 = sphi 0, %s822
      %s839 = sphi 0, %s823
      %s845 = sphi 0, %s847
      %s848 = sphi 0, %s845
      %s849 = sphi 0, %s848
      %s865 = sphi 0, %s849
      %s871 = sphi 0, %s873
      %s874 = sphi 0, %s871
      %s875 = sphi 0, %s874
      %s891 = sphi 0, %s875
      %s895 = sphi 0, %s895
      %s897 = sphi 0, %s895
      %s898 = sphi 0, %s897
      %s912 = sphi 0, %s898
      %s916 = sphi 0, %s916
      %s918 = sphi 0, %s916
      %s919 = sphi 0, %s918
      %s933 = sphi 0, %s919
      %s939 = sphi 0, %s941
      %s942 = sphi 0, %s939
      %s943 = sphi 0, %s942
      %s959 = sphi 0, %s943
    $region4: #{tpu_custom_call.1} parent=1 // loop_header_branch
      %98 = sbr.rel (%p96) target = $region8
    $region5: #{tpu_custom_call.1} parent=1 // loop_body
      %s100 = ssub.s32 %s95, 1
      %s101 = ssub.s32 %s95, 2
      %s108 = sadd.s32 1, %s103
      %p109 = scmp.ge.s32.totalorder %s108, 2
      %s110 = scalar_select %p109, 0, %s108
      %s111 = sadd.s32 1, %s102
      %s112 = scalar_select %p109, %s111, %s102
      %p113 = scmp.ge.s32.totalorder %s112, 2
      %s114 = scalar_select %p113, 0, %s112
      %s115 = ssub.s32 %s102, %s114
      %p116 = scmp.eq.s32.totalorder %s115, 0
      %s118 = sadd.s32 %s117, 1
      %s119 = scalar_select %p116, %s117, %s118
      %p122 = pneg %p116
      %p123 = scmp.eq.s32.totalorder %s95, 3
      %p124 = por %p122, %p123
      %p125 = scmp.ne.s32.totalorder %s117, %s120
      %p126 = scmp.eq.s32.totalorder %s95, 0
      %p127 = por %p125, %p126
      %p128 = scmp.ne.s32.totalorder %s117, %s120
      %p129 = scmp.eq.s32.totalorder %s100, 3
      %p130 = por %p128, %p129
      %p131 = scmp.ne.s32.totalorder %s120, %s121
      %p132 = scmp.eq.s32.totalorder %s100, 0
      %p133 = por %p131, %p132
      %p134 = scmp.ne.s32.totalorder %s120, %s121
      %p135 = scmp.eq.s32.totalorder %s101, 3
      %p136 = por %p134, %p135
      %p138 = scmp.ne.s32.totalorder %s121, %s137
      %p139 = scmp.eq.s32.totalorder %s101, 0
      %p140 = por %p138, %p139
      %s141 = ssub.s32 %s102, %s114
      %p142 = scmp.eq.s32.totalorder %s141, 0
      %s144 = sadd.s32 %s143, 1
      %s145 = scalar_select %p142, %s143, %s144
      %p148 = pneg %p142
      %p149 = scmp.eq.s32.totalorder %s95, 3
      %p150 = por %p148, %p149
      %p151 = scmp.ne.s32.totalorder %s143, %s146
      %p152 = scmp.eq.s32.totalorder %s95, 0
      %p153 = por %p151, %p152
      %p154 = scmp.ne.s32.totalorder %s143, %s146
      %p155 = scmp.eq.s32.totalorder %s100, 3
      %p156 = por %p154, %p155
      %p157 = scmp.ne.s32.totalorder %s146, %s147
      %p158 = scmp.eq.s32.totalorder %s100, 0
      %p159 = por %p157, %p158
      %p160 = scmp.ne.s32.totalorder %s146, %s147
      %p161 = scmp.eq.s32.totalorder %s101, 3
      %p162 = por %p160, %p161
      %p164 = scmp.ne.s32.totalorder %s147, %s163
      %p165 = scmp.eq.s32.totalorder %s101, 0
      %p166 = por %p164, %p165
      %s167 = ssub.s32 %s102, %s114
      %p168 = scmp.eq.s32.totalorder %s167, 0
      %s170 = sadd.s32 %s169, 1
      %s171 = scalar_select %p168, %s169, %s170
      %p174 = pneg %p168
      %p175 = scmp.eq.s32.totalorder %s95, 3
      %p176 = por %p174, %p175
      %p177 = scmp.ne.s32.totalorder %s169, %s172
      %p178 = scmp.eq.s32.totalorder %s95, 0
      %p179 = por %p177, %p178
      %p180 = scmp.ne.s32.totalorder %s169, %s172
      %p181 = scmp.eq.s32.totalorder %s100, 3
      %p182 = por %p180, %p181
      %p183 = scmp.ne.s32.totalorder %s172, %s173
      %p184 = scmp.eq.s32.totalorder %s100, 0
      %p185 = por %p183, %p184
      %p186 = scmp.ne.s32.totalorder %s172, %s173
      %p187 = scmp.eq.s32.totalorder %s101, 3
      %p188 = por %p186, %p187
      %p190 = scmp.ne.s32.totalorder %s173, %s189
      %p191 = scmp.eq.s32.totalorder %s101, 0
      %p192 = por %p190, %p191
      %s193 = ssub.s32 %s102, %s114
      %p194 = scmp.eq.s32.totalorder %s193, 0
      %s196 = sadd.s32 %s195, 1
      %s197 = scalar_select %p194, %s195, %s196
      %p200 = pneg %p194
      %p201 = scmp.eq.s32.totalorder %s95, 3
      %p202 = por %p200, %p201
      %p203 = scmp.ne.s32.totalorder %s195, %s198
      %p204 = scmp.eq.s32.totalorder %s95, 0
      %p205 = por %p203, %p204
      %p206 = scmp.ne.s32.totalorder %s195, %s198
      %p207 = scmp.eq.s32.totalorder %s100, 3
      %p208 = por %p206, %p207
      %p209 = scmp.ne.s32.totalorder %s198, %s199
      %p210 = scmp.eq.s32.totalorder %s100, 0
      %p211 = por %p209, %p210
      %p212 = scmp.ne.s32.totalorder %s198, %s199
      %p213 = scmp.eq.s32.totalorder %s101, 3
      %p214 = por %p212, %p213
      %p216 = scmp.ne.s32.totalorder %s199, %s215
      %p217 = scmp.eq.s32.totalorder %s101, 0
      %p218 = por %p216, %p217
      %s219 = ssub.s32 %s103, %s110
      %p220 = scmp.eq.s32.totalorder %s219, 0
      %s222 = sadd.s32 %s221, 1
      %s223 = scalar_select %p220, %s221, %s222
      %p226 = pneg %p220
      %p227 = scmp.eq.s32.totalorder %s95, 3
      %p228 = por %p226, %p227
      %p229 = scmp.ne.s32.totalorder %s221, %s224
      %p230 = scmp.eq.s32.totalorder %s95, 0
      %p231 = por %p229, %p230
      %p232 = scmp.ne.s32.totalorder %s221, %s224
      %p233 = scmp.eq.s32.totalorder %s100, 3
      %p234 = por %p232, %p233
      %p235 = scmp.ne.s32.totalorder %s224, %s225
      %p236 = scmp.eq.s32.totalorder %s100, 0
      %p237 = por %p235, %p236
      %p238 = scmp.ne.s32.totalorder %s224, %s225
      %p239 = scmp.eq.s32.totalorder %s101, 3
      %p240 = por %p238, %p239
      %p242 = scmp.ne.s32.totalorder %s225, %s241
      %p243 = scmp.eq.s32.totalorder %s101, 0
      %p244 = por %p242, %p243
      %s245 = ssub.s32 %s103, %s110
      %p246 = scmp.eq.s32.totalorder %s245, 0
      %s248 = sadd.s32 %s247, 1
      %s249 = scalar_select %p246, %s247, %s248
      %p252 = pneg %p246
      %p253 = scmp.eq.s32.totalorder %s95, 3
      %p254 = por %p252, %p253
      %p255 = scmp.ne.s32.totalorder %s247, %s250
      %p256 = scmp.eq.s32.totalorder %s95, 0
      %p257 = por %p255, %p256
      %p258 = scmp.ne.s32.totalorder %s247, %s250
      %p259 = scmp.eq.s32.totalorder %s100, 3
      %p260 = por %p258, %p259
      %p261 = scmp.ne.s32.totalorder %s250, %s251
      %p262 = scmp.eq.s32.totalorder %s100, 0
      %p263 = por %p261, %p262
      %p264 = scmp.ne.s32.totalorder %s250, %s251
      %p265 = scmp.eq.s32.totalorder %s101, 3
      %p266 = por %p264, %p265
      %p268 = scmp.ne.s32.totalorder %s251, %s267
      %p269 = scmp.eq.s32.totalorder %s101, 0
      %p270 = por %p268, %p269
      %s271 = ssub.s32 %s103, %s110
      %p272 = scmp.eq.s32.totalorder %s271, 0
      %s274 = sadd.s32 %s273, 1
      %s275 = scalar_select %p272, %s273, %s274
      %p278 = pneg %p272
      %p279 = scmp.eq.s32.totalorder %s95, 3
      %p280 = por %p278, %p279
      %p281 = scmp.ne.s32.totalorder %s273, %s276
      %p282 = scmp.eq.s32.totalorder %s95, 0
      %p283 = por %p281, %p282
      %p284 = scmp.ne.s32.totalorder %s273, %s276
      %p285 = scmp.eq.s32.totalorder %s100, 3
      %p286 = por %p284, %p285
      %p287 = scmp.ne.s32.totalorder %s276, %s277
      %p288 = scmp.eq.s32.totalorder %s100, 0
      %p289 = por %p287, %p288
      %p290 = scmp.ne.s32.totalorder %s276, %s277
      %p291 = scmp.eq.s32.totalorder %s101, 3
      %p292 = por %p290, %p291
      %p294 = scmp.ne.s32.totalorder %s277, %s293
      %p295 = scmp.eq.s32.totalorder %s101, 0
      %p296 = por %p294, %p295
      %s297 = ssub.s32 %s103, %s110
      %p298 = scmp.eq.s32.totalorder %s297, 0
      %s300 = sadd.s32 %s299, 1
      %s301 = scalar_select %p298, %s299, %s300
      %p304 = pneg %p298
      %p305 = scmp.eq.s32.totalorder %s95, 3
      %p306 = por %p304, %p305
      %p307 = scmp.ne.s32.totalorder %s299, %s302
      %p308 = scmp.eq.s32.totalorder %s95, 0
      %p309 = por %p307, %p308
      %p310 = scmp.ne.s32.totalorder %s299, %s302
      %p311 = scmp.eq.s32.totalorder %s100, 3
      %p312 = por %p310, %p311
      %p313 = scmp.ne.s32.totalorder %s302, %s303
      %p314 = scmp.eq.s32.totalorder %s100, 0
      %p315 = por %p313, %p314
      %p316 = scmp.ne.s32.totalorder %s302, %s303
      %p317 = scmp.eq.s32.totalorder %s101, 3
      %p318 = por %p316, %p317
      %p320 = scmp.ne.s32.totalorder %s303, %s319
      %p321 = scmp.eq.s32.totalorder %s101, 0
      %p322 = por %p320, %p321
      %s323 = ssub.s32 %s103, %s110
      %p324 = scmp.eq.s32.totalorder %s323, 0
      %s326 = sadd.s32 %s325, 1
      %s327 = scalar_select %p324, %s325, %s326
      %p330 = pneg %p324
      %p331 = scmp.eq.s32.totalorder %s95, 3
      %p332 = por %p330, %p331
      %p333 = scmp.ne.s32.totalorder %s325, %s328
      %p334 = scmp.eq.s32.totalorder %s95, 0
      %p335 = por %p333, %p334
      %p336 = scmp.ne.s32.totalorder %s325, %s328
      %p337 = scmp.eq.s32.totalorder %s100, 3
      %p338 = por %p336, %p337
      %p339 = scmp.ne.s32.totalorder %s328, %s329
      %p340 = scmp.eq.s32.totalorder %s100, 0
      %p341 = por %p339, %p340
      %p342 = scmp.ne.s32.totalorder %s328, %s329
      %p343 = scmp.eq.s32.totalorder %s101, 3
      %p344 = por %p342, %p343
      %p346 = scmp.ne.s32.totalorder %s329, %s345
      %p347 = scmp.eq.s32.totalorder %s101, 0
      %p348 = por %p346, %p347
      %s349 = ssub.s32 %s103, %s110
      %p350 = scmp.eq.s32.totalorder %s349, 0
      %s352 = sadd.s32 %s351, 1
      %s353 = scalar_select %p350, %s351, %s352
      %p356 = pneg %p350
      %p357 = scmp.eq.s32.totalorder %s95, 3
      %p358 = por %p356, %p357
      %p359 = scmp.ne.s32.totalorder %s351, %s354
      %p360 = scmp.eq.s32.totalorder %s95, 0
      %p361 = por %p359, %p360
      %p362 = scmp.ne.s32.totalorder %s351, %s354
      %p363 = scmp.eq.s32.totalorder %s100, 3
      %p364 = por %p362, %p363
      %p365 = scmp.ne.s32.totalorder %s354, %s355
      %p366 = scmp.eq.s32.totalorder %s100, 0
      %p367 = por %p365, %p366
      %p368 = scmp.ne.s32.totalorder %s354, %s355
      %p369 = scmp.eq.s32.totalorder %s101, 3
      %p370 = por %p368, %p369
      %p372 = scmp.ne.s32.totalorder %s355, %s371
      %p373 = scmp.eq.s32.totalorder %s101, 0
      %p374 = por %p372, %p373
      %s375 = ssub.s32 %s103, %s110
      %p376 = scmp.eq.s32.totalorder %s375, 0
      %s378 = sadd.s32 %s377, 1
      %s379 = scalar_select %p376, %s377, %s378
      %p382 = pneg %p376
      %p383 = scmp.eq.s32.totalorder %s95, 3
      %p384 = por %p382, %p383
      %p385 = scmp.ne.s32.totalorder %s377, %s380
      %p386 = scmp.eq.s32.totalorder %s95, 0
      %p387 = por %p385, %p386
      %p388 = scmp.ne.s32.totalorder %s377, %s380
      %p389 = scmp.eq.s32.totalorder %s100, 3
      %p390 = por %p388, %p389
      %p391 = scmp.ne.s32.totalorder %s380, %s381
      %p392 = scmp.eq.s32.totalorder %s100, 0
      %p393 = por %p391, %p392
      %p394 = scmp.ne.s32.totalorder %s380, %s381
      %p395 = scmp.eq.s32.totalorder %s101, 3
      %p396 = por %p394, %p395
      %p398 = scmp.ne.s32.totalorder %s381, %s397
      %p399 = scmp.eq.s32.totalorder %s101, 0
      %p400 = por %p398, %p399
      %s401 = ssub.s32 %s103, %s110
      %p402 = scmp.eq.s32.totalorder %s401, 0
      %s404 = sadd.s32 %s403, 1
      %s405 = scalar_select %p402, %s403, %s404
      %p408 = pneg %p402
      %p409 = scmp.eq.s32.totalorder %s95, 3
      %p410 = por %p408, %p409
      %p411 = scmp.ne.s32.totalorder %s403, %s406
      %p412 = scmp.eq.s32.totalorder %s95, 0
      %p413 = por %p411, %p412
      %p414 = scmp.ne.s32.totalorder %s403, %s406
      %p415 = scmp.eq.s32.totalorder %s100, 3
      %p416 = por %p414, %p415
      %p417 = scmp.ne.s32.totalorder %s406, %s407
      %p418 = scmp.eq.s32.totalorder %s100, 0
      %p419 = por %p417, %p418
      %p420 = scmp.ne.s32.totalorder %s406, %s407
      %p421 = scmp.eq.s32.totalorder %s101, 3
      %p422 = por %p420, %p421
      %p424 = scmp.ne.s32.totalorder %s407, %s423
      %p425 = scmp.eq.s32.totalorder %s101, 0
      %p426 = por %p424, %p425
      %s427 = ssub.s32 %s103, %s110
      %p428 = scmp.eq.s32.totalorder %s427, 0
      %s430 = sadd.s32 %s429, 1
      %s431 = scalar_select %p428, %s429, %s430
      %p434 = pneg %p428
      %p435 = scmp.eq.s32.totalorder %s95, 3
      %p436 = por %p434, %p435
      %p437 = scmp.ne.s32.totalorder %s429, %s432
      %p438 = scmp.eq.s32.totalorder %s95, 0
      %p439 = por %p437, %p438
      %p440 = scmp.ne.s32.totalorder %s429, %s432
      %p441 = scmp.eq.s32.totalorder %s100, 3
      %p442 = por %p440, %p441
      %p443 = scmp.ne.s32.totalorder %s432, %s433
      %p444 = scmp.eq.s32.totalorder %s100, 0
      %p445 = por %p443, %p444
      %p446 = scmp.ne.s32.totalorder %s432, %s433
      %p447 = scmp.eq.s32.totalorder %s101, 3
      %p448 = por %p446, %p447
      %p450 = scmp.ne.s32.totalorder %s433, %s449
      %p451 = scmp.eq.s32.totalorder %s101, 0
      %p452 = por %p450, %p451
      %s453 = ssub.s32 %s103, %s110
      %p454 = scmp.eq.s32.totalorder %s453, 0
      %s456 = sadd.s32 %s455, 1
      %s457 = scalar_select %p454, %s455, %s456
      %p460 = pneg %p454
      %p461 = scmp.eq.s32.totalorder %s95, 3
      %p462 = por %p460, %p461
      %p463 = scmp.ne.s32.totalorder %s455, %s458
      %p464 = scmp.eq.s32.totalorder %s95, 0
      %p465 = por %p463, %p464
      %p466 = scmp.ne.s32.totalorder %s455, %s458
      %p467 = scmp.eq.s32.totalorder %s100, 3
      %p468 = por %p466, %p467
      %p469 = scmp.ne.s32.totalorder %s458, %s459
      %p470 = scmp.eq.s32.totalorder %s100, 0
      %p471 = por %p469, %p470
      %p472 = scmp.ne.s32.totalorder %s458, %s459
      %p473 = scmp.eq.s32.totalorder %s101, 3
      %p474 = por %p472, %p473
      %p476 = scmp.ne.s32.totalorder %s459, %s475
      %p477 = scmp.eq.s32.totalorder %s101, 0
      %p478 = por %p476, %p477
      %s479 = ssub.s32 %s103, %s110
      %p480 = scmp.eq.s32.totalorder %s479, 0
      %s482 = sadd.s32 %s481, 1
      %s483 = scalar_select %p480, %s481, %s482
      %p486 = pneg %p480
      %p487 = scmp.eq.s32.totalorder %s95, 3
      %p488 = por %p486, %p487
      %p489 = scmp.ne.s32.totalorder %s481, %s484
      %p490 = scmp.eq.s32.totalorder %s95, 0
      %p491 = por %p489, %p490
      %p492 = scmp.ne.s32.totalorder %s481, %s484
      %p493 = scmp.eq.s32.totalorder %s100, 3
      %p494 = por %p492, %p493
      %p495 = scmp.ne.s32.totalorder %s484, %s485
      %p496 = scmp.eq.s32.totalorder %s100, 0
      %p497 = por %p495, %p496
      %p498 = scmp.ne.s32.totalorder %s484, %s485
      %p499 = scmp.eq.s32.totalorder %s101, 3
      %p500 = por %p498, %p499
      %p502 = scmp.ne.s32.totalorder %s485, %s501
      %p503 = scmp.eq.s32.totalorder %s101, 0
      %p504 = por %p502, %p503
      %s505 = ssub.s32 %s103, %s110
      %p506 = scmp.eq.s32.totalorder %s505, 0
      %s508 = sadd.s32 %s507, 1
      %s509 = scalar_select %p506, %s507, %s508
      %p512 = pneg %p506
      %p513 = scmp.eq.s32.totalorder %s95, 3
      %p514 = por %p512, %p513
      %p515 = scmp.ne.s32.totalorder %s507, %s510
      %p516 = scmp.eq.s32.totalorder %s95, 0
      %p517 = por %p515, %p516
      %p518 = scmp.ne.s32.totalorder %s507, %s510
      %p519 = scmp.eq.s32.totalorder %s100, 3
      %p520 = por %p518, %p519
      %p521 = scmp.ne.s32.totalorder %s510, %s511
      %p522 = scmp.eq.s32.totalorder %s100, 0
      %p523 = por %p521, %p522
      %p524 = scmp.ne.s32.totalorder %s510, %s511
      %p525 = scmp.eq.s32.totalorder %s101, 3
      %p526 = por %p524, %p525
      %p528 = scmp.ne.s32.totalorder %s511, %s527
      %p529 = scmp.eq.s32.totalorder %s101, 0
      %p530 = por %p528, %p529
      %s531 = ssub.s32 %s103, %s110
      %p532 = scmp.eq.s32.totalorder %s531, 0
      %s534 = sadd.s32 %s533, 1
      %s535 = scalar_select %p532, %s533, %s534
      %p538 = pneg %p532
      %p539 = scmp.eq.s32.totalorder %s95, 3
      %p540 = por %p538, %p539
      %p541 = scmp.ne.s32.totalorder %s533, %s536
      %p542 = scmp.eq.s32.totalorder %s95, 0
      %p543 = por %p541, %p542
      %p544 = scmp.ne.s32.totalorder %s533, %s536
      %p545 = scmp.eq.s32.totalorder %s100, 3
      %p546 = por %p544, %p545
      %p547 = scmp.ne.s32.totalorder %s536, %s537
      %p548 = scmp.eq.s32.totalorder %s100, 0
      %p549 = por %p547, %p548
      %p550 = scmp.ne.s32.totalorder %s536, %s537
      %p551 = scmp.eq.s32.totalorder %s101, 3
      %p552 = por %p550, %p551
      %p554 = scmp.ne.s32.totalorder %s537, %s553
      %p555 = scmp.eq.s32.totalorder %s101, 0
      %p556 = por %p554, %p555
      %s557 = ssub.s32 %s103, %s110
      %p558 = scmp.eq.s32.totalorder %s557, 0
      %s560 = sadd.s32 %s559, 1
      %s561 = scalar_select %p558, %s559, %s560
      %p564 = pneg %p558
      %p565 = scmp.eq.s32.totalorder %s95, 3
      %p566 = por %p564, %p565
      %p567 = scmp.ne.s32.totalorder %s559, %s562
      %p568 = scmp.eq.s32.totalorder %s95, 0
      %p569 = por %p567, %p568
      %p570 = scmp.ne.s32.totalorder %s559, %s562
      %p571 = scmp.eq.s32.totalorder %s100, 3
      %p572 = por %p570, %p571
      %p573 = scmp.ne.s32.totalorder %s562, %s563
      %p574 = scmp.eq.s32.totalorder %s100, 0
      %p575 = por %p573, %p574
      %p576 = scmp.ne.s32.totalorder %s562, %s563
      %p577 = scmp.eq.s32.totalorder %s101, 3
      %p578 = por %p576, %p577
      %p580 = scmp.ne.s32.totalorder %s563, %s579
      %p581 = scmp.eq.s32.totalorder %s101, 0
      %p582 = por %p580, %p581
      %s583 = ssub.s32 %s103, %s110
      %p584 = scmp.eq.s32.totalorder %s583, 0
      %s586 = sadd.s32 %s585, 1
      %s587 = scalar_select %p584, %s585, %s586
      %p590 = pneg %p584
      %p591 = scmp.eq.s32.totalorder %s95, 3
      %p592 = por %p590, %p591
      %p593 = scmp.ne.s32.totalorder %s585, %s588
      %p594 = scmp.eq.s32.totalorder %s95, 0
      %p595 = por %p593, %p594
      %p596 = scmp.ne.s32.totalorder %s585, %s588
      %p597 = scmp.eq.s32.totalorder %s100, 3
      %p598 = por %p596, %p597
      %p599 = scmp.ne.s32.totalorder %s588, %s589
      %p600 = scmp.eq.s32.totalorder %s100, 0
      %p601 = por %p599, %p600
      %p602 = scmp.ne.s32.totalorder %s588, %s589
      %p603 = scmp.eq.s32.totalorder %s101, 3
      %p604 = por %p602, %p603
      %p606 = scmp.ne.s32.totalorder %s589, %s605
      %p607 = scmp.eq.s32.totalorder %s101, 0
      %p608 = por %p606, %p607
      %s609 = ssub.s32 %s103, %s110
      %p610 = scmp.eq.s32.totalorder %s609, 0
      %s612 = sadd.s32 %s611, 1
      %s613 = scalar_select %p610, %s611, %s612
      %p616 = pneg %p610
      %p617 = scmp.eq.s32.totalorder %s95, 3
      %p618 = por %p616, %p617
      %p619 = scmp.ne.s32.totalorder %s611, %s614
      %p620 = scmp.eq.s32.totalorder %s95, 0
      %p621 = por %p619, %p620
      %p622 = scmp.ne.s32.totalorder %s611, %s614
      %p623 = scmp.eq.s32.totalorder %s100, 3
      %p624 = por %p622, %p623
      %p625 = scmp.ne.s32.totalorder %s614, %s615
      %p626 = scmp.eq.s32.totalorder %s100, 0
      %p627 = por %p625, %p626
      %p628 = scmp.ne.s32.totalorder %s614, %s615
      %p629 = scmp.eq.s32.totalorder %s101, 3
      %p630 = por %p628, %p629
      %p632 = scmp.ne.s32.totalorder %s615, %s631
      %p633 = scmp.eq.s32.totalorder %s101, 0
      %p634 = por %p632, %p633
      %s635 = ssub.s32 %s103, %s110
      %p636 = scmp.eq.s32.totalorder %s635, 0
      %s638 = sadd.s32 %s637, 1
      %s639 = scalar_select %p636, %s637, %s638
      %p642 = pneg %p636
      %p643 = scmp.eq.s32.totalorder %s95, 3
      %p644 = por %p642, %p643
      %p645 = scmp.ne.s32.totalorder %s637, %s640
      %p646 = scmp.eq.s32.totalorder %s95, 0
      %p647 = por %p645, %p646
      %p648 = scmp.ne.s32.totalorder %s637, %s640
      %p649 = scmp.eq.s32.totalorder %s100, 3
      %p650 = por %p648, %p649
      %p651 = scmp.ne.s32.totalorder %s640, %s641
      %p652 = scmp.eq.s32.totalorder %s100, 0
      %p653 = por %p651, %p652
      %p654 = scmp.ne.s32.totalorder %s640, %s641
      %p655 = scmp.eq.s32.totalorder %s101, 3
      %p656 = por %p654, %p655
      %p658 = scmp.ne.s32.totalorder %s641, %s657
      %p659 = scmp.eq.s32.totalorder %s101, 0
      %p660 = por %p658, %p659
      %s661 = ssub.s32 %s103, %s110
      %p662 = scmp.eq.s32.totalorder %s661, 0
      %s664 = sadd.s32 %s663, 1
      %s665 = scalar_select %p662, %s663, %s664
      %p668 = pneg %p662
      %p669 = scmp.eq.s32.totalorder %s95, 3
      %p670 = por %p668, %p669
      %p671 = scmp.ne.s32.totalorder %s663, %s666
      %p672 = scmp.eq.s32.totalorder %s95, 0
      %p673 = por %p671, %p672
      %p674 = scmp.ne.s32.totalorder %s663, %s666
      %p675 = scmp.eq.s32.totalorder %s100, 3
      %p676 = por %p674, %p675
      %p677 = scmp.ne.s32.totalorder %s666, %s667
      %p678 = scmp.eq.s32.totalorder %s100, 0
      %p679 = por %p677, %p678
      %p680 = scmp.ne.s32.totalorder %s666, %s667
      %p681 = scmp.eq.s32.totalorder %s101, 3
      %p682 = por %p680, %p681
      %p684 = scmp.ne.s32.totalorder %s667, %s683
      %p685 = scmp.eq.s32.totalorder %s101, 0
      %p686 = por %p684, %p685
      %s687 = ssub.s32 %s103, %s110
      %p688 = scmp.eq.s32.totalorder %s687, 0
      %s690 = sadd.s32 %s689, 1
      %s691 = scalar_select %p688, %s689, %s690
      %p694 = pneg %p688
      %p695 = scmp.eq.s32.totalorder %s95, 3
      %p696 = por %p694, %p695
      %p697 = scmp.ne.s32.totalorder %s689, %s692
      %p698 = scmp.eq.s32.totalorder %s95, 0
      %p699 = por %p697, %p698
      %p700 = scmp.ne.s32.totalorder %s689, %s692
      %p701 = scmp.eq.s32.totalorder %s100, 3
      %p702 = por %p700, %p701
      %p703 = scmp.ne.s32.totalorder %s692, %s693
      %p704 = scmp.eq.s32.totalorder %s100, 0
      %p705 = por %p703, %p704
      %p706 = scmp.ne.s32.totalorder %s692, %s693
      %p707 = scmp.eq.s32.totalorder %s101, 3
      %p708 = por %p706, %p707
      %p710 = scmp.ne.s32.totalorder %s693, %s709
      %p711 = scmp.eq.s32.totalorder %s101, 0
      %p712 = por %p710, %p711
      %s713 = ssub.s32 %s103, %s110
      %p714 = scmp.eq.s32.totalorder %s713, 0
      %s716 = sadd.s32 %s715, 1
      %s717 = scalar_select %p714, %s715, %s716
      %p720 = pneg %p714
      %p721 = scmp.eq.s32.totalorder %s95, 3
      %p722 = por %p720, %p721
      %p723 = scmp.ne.s32.totalorder %s715, %s718
      %p724 = scmp.eq.s32.totalorder %s95, 0
      %p725 = por %p723, %p724
      %p726 = scmp.ne.s32.totalorder %s715, %s718
      %p727 = scmp.eq.s32.totalorder %s100, 3
      %p728 = por %p726, %p727
      %p729 = scmp.ne.s32.totalorder %s718, %s719
      %p730 = scmp.eq.s32.totalorder %s100, 0
      %p731 = por %p729, %p730
      %p732 = scmp.ne.s32.totalorder %s718, %s719
      %p733 = scmp.eq.s32.totalorder %s101, 3
      %p734 = por %p732, %p733
      %p736 = scmp.ne.s32.totalorder %s719, %s735
      %p737 = scmp.eq.s32.totalorder %s101, 0
      %p738 = por %p736, %p737
      %s739 = ssub.s32 %s103, %s110
      %p740 = scmp.eq.s32.totalorder %s739, 0
      %s742 = sadd.s32 %s741, 1
      %s743 = scalar_select %p740, %s741, %s742
      %p746 = pneg %p740
      %p747 = scmp.eq.s32.totalorder %s95, 3
      %p748 = por %p746, %p747
      %p749 = scmp.ne.s32.totalorder %s741, %s744
      %p750 = scmp.eq.s32.totalorder %s95, 0
      %p751 = por %p749, %p750
      %p752 = scmp.ne.s32.totalorder %s741, %s744
      %p753 = scmp.eq.s32.totalorder %s100, 3
      %p754 = por %p752, %p753
      %p755 = scmp.ne.s32.totalorder %s744, %s745
      %p756 = scmp.eq.s32.totalorder %s100, 0
      %p757 = por %p755, %p756
      %p758 = scmp.ne.s32.totalorder %s744, %s745
      %p759 = scmp.eq.s32.totalorder %s101, 3
      %p760 = por %p758, %p759
      %p762 = scmp.ne.s32.totalorder %s745, %s761
      %p763 = scmp.eq.s32.totalorder %s101, 0
      %p764 = por %p762, %p763
      %s765 = ssub.s32 %s103, %s110
      %p766 = scmp.eq.s32.totalorder %s765, 0
      %s768 = sadd.s32 %s767, 1
      %s769 = scalar_select %p766, %s767, %s768
      %p772 = pneg %p766
      %p773 = scmp.eq.s32.totalorder %s95, 3
      %p774 = por %p772, %p773
      %p775 = scmp.ne.s32.totalorder %s767, %s770
      %p776 = scmp.eq.s32.totalorder %s95, 0
      %p777 = por %p775, %p776
      %p778 = scmp.ne.s32.totalorder %s767, %s770
      %p779 = scmp.eq.s32.totalorder %s100, 3
      %p780 = por %p778, %p779
      %p781 = scmp.ne.s32.totalorder %s770, %s771
      %p782 = scmp.eq.s32.totalorder %s100, 0
      %p783 = por %p781, %p782
      %p784 = scmp.ne.s32.totalorder %s770, %s771
      %p785 = scmp.eq.s32.totalorder %s101, 3
      %p786 = por %p784, %p785
      %p788 = scmp.ne.s32.totalorder %s771, %s787
      %p789 = scmp.eq.s32.totalorder %s101, 0
      %p790 = por %p788, %p789
      %s791 = ssub.s32 %s103, %s110
      %p792 = scmp.eq.s32.totalorder %s791, 0
      %s794 = sadd.s32 %s793, 1
      %s795 = scalar_select %p792, %s793, %s794
      %p798 = pneg %p792
      %p799 = scmp.eq.s32.totalorder %s95, 3
      %p800 = por %p798, %p799
      %p801 = scmp.ne.s32.totalorder %s793, %s796
      %p802 = scmp.eq.s32.totalorder %s95, 0
      %p803 = por %p801, %p802
      %p804 = scmp.ne.s32.totalorder %s793, %s796
      %p805 = scmp.eq.s32.totalorder %s100, 3
      %p806 = por %p804, %p805
      %p807 = scmp.ne.s32.totalorder %s796, %s797
      %p808 = scmp.eq.s32.totalorder %s100, 0
      %p809 = por %p807, %p808
      %p810 = scmp.ne.s32.totalorder %s796, %s797
      %p811 = scmp.eq.s32.totalorder %s101, 3
      %p812 = por %p810, %p811
      %p814 = scmp.ne.s32.totalorder %s797, %s813
      %p815 = scmp.eq.s32.totalorder %s101, 0
      %p816 = por %p814, %p815
      %s817 = ssub.s32 %s103, %s110
      %p818 = scmp.eq.s32.totalorder %s817, 0
      %s820 = sadd.s32 %s819, 1
      %s821 = scalar_select %p818, %s819, %s820
      %p824 = pneg %p818
      %p825 = scmp.eq.s32.totalorder %s95, 3
      %p826 = por %p824, %p825
      %p827 = scmp.ne.s32.totalorder %s819, %s822
      %p828 = scmp.eq.s32.totalorder %s95, 0
      %p829 = por %p827, %p828
      %p830 = scmp.ne.s32.totalorder %s819, %s822
      %p831 = scmp.eq.s32.totalorder %s100, 3
      %p832 = por %p830, %p831
      %p833 = scmp.ne.s32.totalorder %s822, %s823
      %p834 = scmp.eq.s32.totalorder %s100, 0
      %p835 = por %p833, %p834
      %p836 = scmp.ne.s32.totalorder %s822, %s823
      %p837 = scmp.eq.s32.totalorder %s101, 3
      %p838 = por %p836, %p837
      %p840 = scmp.ne.s32.totalorder %s823, %s839
      %p841 = scmp.eq.s32.totalorder %s101, 0
      %p842 = por %p840, %p841
      %s843 = ssub.s32 %s103, %s110
      %p844 = scmp.eq.s32.totalorder %s843, 0
      %s846 = sadd.s32 %s845, 1
      %s847 = scalar_select %p844, %s845, %s846
      %p850 = pneg %p844
      %p851 = scmp.eq.s32.totalorder %s95, 3
      %p852 = por %p850, %p851
      %p853 = scmp.ne.s32.totalorder %s845, %s848
      %p854 = scmp.eq.s32.totalorder %s95, 0
      %p855 = por %p853, %p854
      %p856 = scmp.ne.s32.totalorder %s845, %s848
      %p857 = scmp.eq.s32.totalorder %s100, 3
      %p858 = por %p856, %p857
      %p859 = scmp.ne.s32.totalorder %s848, %s849
      %p860 = scmp.eq.s32.totalorder %s100, 0
      %p861 = por %p859, %p860
      %p862 = scmp.ne.s32.totalorder %s848, %s849
      %p863 = scmp.eq.s32.totalorder %s101, 3
      %p864 = por %p862, %p863
      %p866 = scmp.ne.s32.totalorder %s849, %s865
      %p867 = scmp.eq.s32.totalorder %s101, 0
      %p868 = por %p866, %p867
      %s869 = ssub.s32 %s103, %s110
      %p870 = scmp.eq.s32.totalorder %s869, 0
      %s872 = sadd.s32 %s871, 1
      %s873 = scalar_select %p870, %s871, %s872
      %p876 = pneg %p870
      %p877 = scmp.eq.s32.totalorder %s95, 3
      %p878 = por %p876, %p877
      %p879 = scmp.ne.s32.totalorder %s871, %s874
      %p880 = scmp.eq.s32.totalorder %s95, 0
      %p881 = por %p879, %p880
      %p882 = scmp.ne.s32.totalorder %s871, %s874
      %p883 = scmp.eq.s32.totalorder %s100, 3
      %p884 = por %p882, %p883
      %p885 = scmp.ne.s32.totalorder %s874, %s875
      %p886 = scmp.eq.s32.totalorder %s100, 0
      %p887 = por %p885, %p886
      %p888 = scmp.ne.s32.totalorder %s874, %s875
      %p889 = scmp.eq.s32.totalorder %s101, 3
      %p890 = por %p888, %p889
      %p892 = scmp.ne.s32.totalorder %s875, %s891
      %p893 = scmp.eq.s32.totalorder %s101, 0
      %p894 = por %p892, %p893
      %s896 = sadd.s32 %s895, 1
      %p899 = scmp.eq.s32.totalorder %s95, 3
      %p900 = scmp.ne.s32.totalorder %s895, %s897
      %p901 = scmp.eq.s32.totalorder %s95, 0
      %p902 = por %p900, %p901
      %p903 = scmp.ne.s32.totalorder %s895, %s897
      %p904 = scmp.eq.s32.totalorder %s100, 3
      %p905 = por %p903, %p904
      %p906 = scmp.ne.s32.totalorder %s897, %s898
      %p907 = scmp.eq.s32.totalorder %s100, 0
      %p908 = por %p906, %p907
      %p909 = scmp.ne.s32.totalorder %s897, %s898
      %p910 = scmp.eq.s32.totalorder %s101, 3
      %p911 = por %p909, %p910
      %p913 = scmp.ne.s32.totalorder %s898, %s912
      %p914 = scmp.eq.s32.totalorder %s101, 0
      %p915 = por %p913, %p914
      %s917 = sadd.s32 %s916, 1
      %p920 = scmp.eq.s32.totalorder %s95, 3
      %p921 = scmp.ne.s32.totalorder %s916, %s918
      %p922 = scmp.eq.s32.totalorder %s95, 0
      %p923 = por %p921, %p922
      %p924 = scmp.ne.s32.totalorder %s916, %s918
      %p925 = scmp.eq.s32.totalorder %s100, 3
      %p926 = por %p924, %p925
      %p927 = scmp.ne.s32.totalorder %s918, %s919
      %p928 = scmp.eq.s32.totalorder %s100, 0
      %p929 = por %p927, %p928
      %p930 = scmp.ne.s32.totalorder %s918, %s919
      %p931 = scmp.eq.s32.totalorder %s101, 3
      %p932 = por %p930, %p931
      %p934 = scmp.ne.s32.totalorder %s919, %s933
      %p935 = scmp.eq.s32.totalorder %s101, 0
      %p936 = por %p934, %p935
      %s937 = ssub.s32 %s102, %s114
      %p938 = scmp.eq.s32.totalorder %s937, 0
      %s940 = sadd.s32 %s939, 1
      %s941 = scalar_select %p938, %s939, %s940
      %p944 = pneg %p938
      %p945 = scmp.eq.s32.totalorder %s95, 3
      %p946 = por %p944, %p945
      %p947 = scmp.ne.s32.totalorder %s939, %s942
      %p948 = scmp.eq.s32.totalorder %s95, 0
      %p949 = por %p947, %p948
      %p950 = scmp.ne.s32.totalorder %s939, %s942
      %p951 = scmp.eq.s32.totalorder %s100, 3
      %p952 = por %p950, %p951
      %p953 = scmp.ne.s32.totalorder %s942, %s943
      %p954 = scmp.eq.s32.totalorder %s100, 0
      %p955 = por %p953, %p954
      %p956 = scmp.ne.s32.totalorder %s942, %s943
      %p957 = scmp.eq.s32.totalorder %s101, 3
      %p958 = por %p956, %p957
      %p960 = scmp.ne.s32.totalorder %s943, %s959
      %p961 = scmp.eq.s32.totalorder %s101, 0
      %p962 = por %p960, %p961
      %p963 = scmp.le.s32.totalorder 1, %s95
      %p964 = scmp.lt.s32.totalorder %s95, 5
      %p965 = pnand %p963, %p964
      %p966 = pneg %p965
      // Predicated region
      $region9: #{tpu_custom_call.1} parent=5 // pred_check
        _
      $region10: #{tpu_custom_call.1} parent=5 // pred_check_branch
        %968 = sbr.rel (%p965) target = $region12
      $region11: #{tpu_custom_call.1} parent=5 // pred_region
        %s969 = ssub.s32 %s95, 1
        // Predicated region
        $region13: #{tpu_custom_call.1} parent=11 // pred_check
          %p970 = pneg %p908
        $region14: #{tpu_custom_call.1} parent=11 // pred_check_branch
          %972 = sbr.rel (%p970) target = $region16
        $region15: #{tpu_custom_call.1} parent=11 // pred_region
          _
        $region16: #{tpu_custom_call.1} parent=11 // pred_fallthru
          _
        // Predicated region
        $region17: #{tpu_custom_call.1} parent=11 // pred_check
          %p973 = pneg %p929
        $region18: #{tpu_custom_call.1} parent=11 // pred_check_branch
          %975 = sbr.rel (%p973) target = $region20
        $region19: #{tpu_custom_call.1} parent=11 // pred_region
          _
        $region20: #{tpu_custom_call.1} parent=11 // pred_fallthru
          _
      $region12: #{tpu_custom_call.1} parent=5 // pred_fallthru
        _
      %p976 = scmp.lt.s32.totalorder %s95, 4
      // Predicated region
      $region21: #{tpu_custom_call.1} parent=5 // pred_check
        %p977 = pneg %p976
      $region22: #{tpu_custom_call.1} parent=5 // pred_check_branch
        %979 = sbr.rel (%p977) target = $region24
      $region23: #{tpu_custom_call.1} parent=5 // pred_region
        // Predicated region
        $region25: #{tpu_custom_call.1} parent=23 // pred_check
          %p980 = pneg %p127
        $region26: #{tpu_custom_call.1} parent=23 // pred_check_branch
          %982 = sbr.rel (%p980) target = $region28
        $region27: #{tpu_custom_call.1} parent=23 // pred_region
          %s983 = sand.u32 %s117, 1
          %s984 = scalar_lea.sflag [#allocation3], %s983
          %s985 = sand.u32 %s117, 1
          %s986 = smul.addr %s985, 8
          %s987 = scalar_lea.vmem [#allocation2], %s986
          %s989 = ssub.s32 128, 128
          %990 = vsyncadd %s984, %s989
          %s991 = smul.addr %s102, 128
          %s992 = scalar_lea.hbm %s1, %s991
          %s994 = sshll.u32 %s987, 4
          %s995 = int_to_ptr.vmem [resolvable:$true] %s994
          %997 = dma.hbm_to_vmem [thread:$0]  %s992, 128, %s995, %s984
        $region28: #{tpu_custom_call.1} parent=23 // pred_fallthru
          _
        // Predicated region
        $region29: #{tpu_custom_call.1} parent=23 // pred_check
          %p998 = pneg %p153
        $region30: #{tpu_custom_call.1} parent=23 // pred_check_branch
          %1000 = sbr.rel (%p998) target = $region32
        $region31: #{tpu_custom_call.1} parent=23 // pred_region
          %s1001 = sand.u32 %s95, 1
          %s1002 = scalar_lea.sflag [#allocation6], %s1001
          %s1003 = sand.u32 %s143, 1
          %s1004 = smul.addr %s1003, 4
          %s1005 = scalar_lea.vmem [#allocation5], %s1004
          %s1007 = ssub.s32 64, 64
          %1008 = vsyncadd %s1002, %s1007
          %s1009 = smul.addr %s102, 64
          %s1010 = scalar_lea.hbm %s3, %s1009
          %s1012 = sshll.u32 %s1005, 4
          %s1013 = int_to_ptr.vmem [resolvable:$true] %s1012
          %1015 = dma.hbm_to_vmem [thread:$0]  %s1010, 64, %s1013, %s1002
        $region32: #{tpu_custom_call.1} parent=23 // pred_fallthru
          _
        // Predicated region
        $region33: #{tpu_custom_call.1} parent=23 // pred_check
          %p1016 = pneg %p179
        $region34: #{tpu_custom_call.1} parent=23 // pred_check_branch
          %1018 = sbr.rel (%p1016) target = $region36
        $region35: #{tpu_custom_call.1} parent=23 // pred_region
          %s1019 = sand.u32 %s95, 1
          %s1020 = scalar_lea.sflag [#allocation6], %s1019
          %s1021 = sand.u32 %s169, 1
          %s1022 = smul.addr %s1021, 4
          %s1023 = scalar_lea.vmem [#allocation7], %s1022
          %s1025 = ssub.s32 64, 64
          %1026 = vsyncadd %s1020, %s1025
          %s1027 = smul.addr %s102, 64
          %s1028 = scalar_lea.hbm %s5, %s1027
          %s1030 = sshll.u32 %s1023, 4
          %s1031 = int_to_ptr.vmem [resolvable:$true] %s1030
          %1033 = dma.hbm_to_vmem [thread:$0]  %s1028, 64, %s1031, %s1020
        $region36: #{tpu_custom_call.1} parent=23 // pred_fallthru
          _
        // Predicated region
        $region37: #{tpu_custom_call.1} parent=23 // pred_check
          %p1034 = pneg %p205
        $region38: #{tpu_custom_call.1} parent=23 // pred_check_branch
          %1036 = sbr.rel (%p1034) target = $region40
        $region39: #{tpu_custom_call.1} parent=23 // pred_region
          %p1037 = scmp.lt.s32.totalorder %s102, 1
          %s1038 = scalar_select %p1037, %s102, 1
          %s1039 = smul.addr %s1038, 4
          %s1040 = scalar_lea.vmem %s7, %s1039
        $region40: #{tpu_custom_call.1} parent=23 // pred_fallthru
          _
        // Predicated region
        $region41: #{tpu_custom_call.1} parent=23 // pred_check
          %p1041 = pneg %p231
        $region42: #{tpu_custom_call.1} parent=23 // pred_check_branch
          %1043 = sbr.rel (%p1041) target = $region44
        $region43: #{tpu_custom_call.1} parent=23 // pred_region
          %p1044 = scmp.lt.s32.totalorder %s103, 1
          %s1045 = scalar_select %p1044, %s103, 1
          %s1046 = scalar_lea.vmem %s9, %s1045
        $region44: #{tpu_custom_call.1} parent=23 // pred_fallthru
          _
        // Predicated region
        $region45: #{tpu_custom_call.1} parent=23 // pred_check
          %p1047 = pneg %p257
        $region46: #{tpu_custom_call.1} parent=23 // pred_check_branch
          %1049 = sbr.rel (%p1047) target = $region48
        $region47: #{tpu_custom_call.1} parent=23 // pred_region
          %p1050 = scmp.lt.s32.totalorder %s103, 1
          %s1051 = scalar_select %p1050, %s103, 1
          %s1052 = scalar_lea.vmem %s11, %s1051
        $region48: #{tpu_custom_call.1} parent=23 // pred_fallthru
          _
        // Predicated region
        $region49: #{tpu_custom_call.1} parent=23 // pred_check
          %p1053 = pneg %p283
        $region50: #{tpu_custom_call.1} parent=23 // pred_check_branch
          %1055 = sbr.rel (%p1053) target = $region52
        $region51: #{tpu_custom_call.1} parent=23 // pred_region
          %s1056 = sand.u32 %s95, 1
          %s1057 = scalar_lea.sflag [#allocation9], %s1056
          %s1058 = sand.u32 %s273, 1
          %s1059 = smul.addr %s1058, 64
          %s1060 = scalar_lea.vmem [#allocation8], %s1059
          %s1062 = ssub.s32 1024, 1024
          %1063 = vsyncadd %s1057, %s1062
          %s1064 = smul.addr %s103, 16
          %s1065 = smul.addr %s1064, 64
          %s1066 = scalar_lea.hbm %s13, %s1065
          %s1067 = sshll.u32 %s1060, 4
          %s1068 = int_to_ptr.vmem [resolvable:$true] %s1067
          %1073 = dma.hbm_to_vmem [thread:$0]  %s1066, 1024, %s1068, %s1057, 64, 64, 4
        $region52: #{tpu_custom_call.1} parent=23 // pred_fallthru
          _
        // Predicated region
        $region53: #{tpu_custom_call.1} parent=23 // pred_check
          %p1074 = pneg %p309
        $region54: #{tpu_custom_call.1} parent=23 // pred_check_branch
          %1076 = sbr.rel (%p1074) target = $region56
        $region55: #{tpu_custom_call.1} parent=23 // pred_region
          %p1077 = scmp.lt.s32.totalorder %s103, 1
          %s1078 = scalar_select %p1077, %s103, 1
          %s1079 = scalar_lea.vmem %s15, %s1078
        $region56: #{tpu_custom_call.1} parent=23 // pred_fallthru
          _
        // Predicated region
        $region57: #{tpu_custom_call.1} parent=23 // pred_check
          %p1080 = pneg %p335
        $region58: #{tpu_custom_call.1} parent=23 // pred_check_branch
          %1082 = sbr.rel (%p1080) target = $region60
        $region59: #{tpu_custom_call.1} parent=23 // pred_region
          %s1083 = sand.u32 %s95, 1
          %s1084 = scalar_lea.sflag [#allocation9], %s1083
          %s1085 = sand.u32 %s325, 1
          %s1086 = smul.addr %s1085, 64
          %s1087 = scalar_lea.vmem [#allocation10], %s1086
          %s1089 = ssub.s32 1024, 1024
          %1090 = vsyncadd %s1084, %s1089
          %s1091 = smul.addr %s103, 16
          %s1092 = smul.addr %s1091, 64
          %s1093 = scalar_lea.hbm %s17, %s1092
          %s1094 = sshll.u32 %s1087, 4
          %s1095 = int_to_ptr.vmem [resolvable:$true] %s1094
          %1100 = dma.hbm_to_vmem [thread:$0]  %s1093, 1024, %s1095, %s1084, 64, 64, 4
        $region60: #{tpu_custom_call.1} parent=23 // pred_fallthru
          _
        // Predicated region
        $region61: #{tpu_custom_call.1} parent=23 // pred_check
          %p1101 = pneg %p361
        $region62: #{tpu_custom_call.1} parent=23 // pred_check_branch
          %1103 = sbr.rel (%p1101) target = $region64
        $region63: #{tpu_custom_call.1} parent=23 // pred_region
          %p1104 = scmp.lt.s32.totalorder %s103, 1
          %s1105 = scalar_select %p1104, %s103, 1
          %s1106 = scalar_lea.vmem %s19, %s1105
        $region64: #{tpu_custom_call.1} parent=23 // pred_fallthru
          _
        // Predicated region
        $region65: #{tpu_custom_call.1} parent=23 // pred_check
          %p1107 = pneg %p387
        $region66: #{tpu_custom_call.1} parent=23 // pred_check_branch
          %1109 = sbr.rel (%p1107) target = $region68
        $region67: #{tpu_custom_call.1} parent=23 // pred_region
          %s1110 = sand.u32 %s95, 1
          %s1111 = scalar_lea.sflag [#allocation12], %s1110
          %s1112 = sand.u32 %s377, 1
          %s1113 = smul.addr %s1112, 64
          %s1114 = scalar_lea.vmem [#allocation11], %s1113
          %s1116 = ssub.s32 1024, 1024
          %1117 = vsyncadd %s1111, %s1116
          %s1118 = smul.addr %s103, 16
          %s1119 = smul.addr %s1118, 64
          %s1120 = scalar_lea.hbm %s21, %s1119
          %s1121 = sshll.u32 %s1114, 4
          %s1122 = int_to_ptr.vmem [resolvable:$true] %s1121
          %1127 = dma.hbm_to_vmem [thread:$0]  %s1120, 1024, %s1122, %s1111, 64, 64, 4
        $region68: #{tpu_custom_call.1} parent=23 // pred_fallthru
          _
        // Predicated region
        $region69: #{tpu_custom_call.1} parent=23 // pred_check
          %p1128 = pneg %p413
        $region70: #{tpu_custom_call.1} parent=23 // pred_check_branch
          %1130 = sbr.rel (%p1128) target = $region72
        $region71: #{tpu_custom_call.1} parent=23 // pred_region
          %p1131 = scmp.lt.s32.totalorder %s103, 1
          %s1132 = scalar_select %p1131, %s103, 1
          %s1133 = scalar_lea.vmem %s23, %s1132
        $region72: #{tpu_custom_call.1} parent=23 // pred_fallthru
          _
        // Predicated region
        $region73: #{tpu_custom_call.1} parent=23 // pred_check
          %p1134 = pneg %p439
        $region74: #{tpu_custom_call.1} parent=23 // pred_check_branch
          %1136 = sbr.rel (%p1134) target = $region76
        $region75: #{tpu_custom_call.1} parent=23 // pred_region
          %s1137 = sand.u32 %s95, 1
          %s1138 = scalar_lea.sflag [#allocation12], %s1137
          %s1139 = sand.u32 %s429, 1
          %s1140 = smul.addr %s1139, 64
          %s1141 = scalar_lea.vmem [#allocation13], %s1140
          %s1143 = ssub.s32 1024, 1024
          %1144 = vsyncadd %s1138, %s1143
          %s1145 = smul.addr %s103, 16
          %s1146 = smul.addr %s1145, 64
          %s1147 = scalar_lea.hbm %s25, %s1146
          %s1148 = sshll.u32 %s1141, 4
          %s1149 = int_to_ptr.vmem [resolvable:$true] %s1148
          %1154 = dma.hbm_to_vmem [thread:$0]  %s1147, 1024, %s1149, %s1138, 64, 64, 4
        $region76: #{tpu_custom_call.1} parent=23 // pred_fallthru
          _
        // Predicated region
        $region77: #{tpu_custom_call.1} parent=23 // pred_check
          %p1155 = pneg %p465
        $region78: #{tpu_custom_call.1} parent=23 // pred_check_branch
          %1157 = sbr.rel (%p1155) target = $region80
        $region79: #{tpu_custom_call.1} parent=23 // pred_region
          %p1158 = scmp.lt.s32.totalorder %s103, 1
          %s1159 = scalar_select %p1158, %s103, 1
          %s1160 = scalar_lea.vmem %s27, %s1159
        $region80: #{tpu_custom_call.1} parent=23 // pred_fallthru
          _
        // Predicated region
        $region81: #{tpu_custom_call.1} parent=23 // pred_check
          %p1161 = pneg %p491
        $region82: #{tpu_custom_call.1} parent=23 // pred_check_branch
          %1163 = sbr.rel (%p1161) target = $region84
        $region83: #{tpu_custom_call.1} parent=23 // pred_region
          %p1164 = scmp.lt.s32.totalorder %s103, 1
          %s1165 = scalar_select %p1164, %s103, 1
          %s1166 = scalar_lea.vmem %s29, %s1165
        $region84: #{tpu_custom_call.1} parent=23 // pred_fallthru
          _
        // Predicated region
        $region85: #{tpu_custom_call.1} parent=23 // pred_check
          %p1167 = pneg %p517
        $region86: #{tpu_custom_call.1} parent=23 // pred_check_branch
          %1169 = sbr.rel (%p1167) target = $region88
        $region87: #{tpu_custom_call.1} parent=23 // pred_region
          %p1170 = scmp.lt.s32.totalorder %s103, 1
          %s1171 = scalar_select %p1170, %s103, 1
          %s1172 = scalar_lea.vmem %s31, %s1171
        $region88: #{tpu_custom_call.1} parent=23 // pred_fallthru
          _
        // Predicated region
        $region89: #{tpu_custom_call.1} parent=23 // pred_check
          %p1173 = pneg %p543
        $region90: #{tpu_custom_call.1} parent=23 // pred_check_branch
          %1175 = sbr.rel (%p1173) target = $region92
        $region91: #{tpu_custom_call.1} parent=23 // pred_region
          %s1176 = sand.u32 %s95, 1
          %s1177 = scalar_lea.sflag [#allocation15], %s1176
          %s1178 = sand.u32 %s533, 1
          %s1179 = smul.addr %s1178, 64
          %s1180 = scalar_lea.vmem [#allocation14], %s1179
          %s1182 = ssub.s32 1024, 1024
          %1183 = vsyncadd %s1177, %s1182
          %s1184 = smul.addr %s103, 16
          %s1185 = smul.addr %s1184, 64
          %s1186 = scalar_lea.hbm %s33, %s1185
          %s1187 = sshll.u32 %s1180, 4
          %s1188 = int_to_ptr.vmem [resolvable:$true] %s1187
          %1193 = dma.hbm_to_vmem [thread:$0]  %s1186, 1024, %s1188, %s1177, 64, 64, 4
        $region92: #{tpu_custom_call.1} parent=23 // pred_fallthru
          _
        // Predicated region
        $region93: #{tpu_custom_call.1} parent=23 // pred_check
          %p1194 = pneg %p569
        $region94: #{tpu_custom_call.1} parent=23 // pred_check_branch
          %1196 = sbr.rel (%p1194) target = $region96
        $region95: #{tpu_custom_call.1} parent=23 // pred_region
          %p1197 = scmp.lt.s32.totalorder %s103, 1
          %s1198 = scalar_select %p1197, %s103, 1
          %s1199 = scalar_lea.vmem %s35, %s1198
        $region96: #{tpu_custom_call.1} parent=23 // pred_fallthru
          _
        // Predicated region
        $region97: #{tpu_custom_call.1} parent=23 // pred_check
          %p1200 = pneg %p595
        $region98: #{tpu_custom_call.1} parent=23 // pred_check_branch
          %1202 = sbr.rel (%p1200) target = $region100
        $region99: #{tpu_custom_call.1} parent=23 // pred_region
          %s1203 = sand.u32 %s95, 1
          %s1204 = scalar_lea.sflag [#allocation15], %s1203
          %s1205 = sand.u32 %s585, 1
          %s1206 = smul.addr %s1205, 64
          %s1207 = scalar_lea.vmem [#allocation16], %s1206
          %s1209 = ssub.s32 1024, 1024
          %1210 = vsyncadd %s1204, %s1209
          %s1211 = smul.addr %s103, 16
          %s1212 = smul.addr %s1211, 64
          %s1213 = scalar_lea.hbm %s37, %s1212
          %s1214 = sshll.u32 %s1207, 4
          %s1215 = int_to_ptr.vmem [resolvable:$true] %s1214
          %1220 = dma.hbm_to_vmem [thread:$0]  %s1213, 1024, %s1215, %s1204, 64, 64, 4
        $region100: #{tpu_custom_call.1} parent=23 // pred_fallthru
          _
        // Predicated region
        $region101: #{tpu_custom_call.1} parent=23 // pred_check
          %p1221 = pneg %p621
        $region102: #{tpu_custom_call.1} parent=23 // pred_check_branch
          %1223 = sbr.rel (%p1221) target = $region104
        $region103: #{tpu_custom_call.1} parent=23 // pred_region
          %p1224 = scmp.lt.s32.totalorder %s103, 1
          %s1225 = scalar_select %p1224, %s103, 1
          %s1226 = scalar_lea.vmem %s39, %s1225
        $region104: #{tpu_custom_call.1} parent=23 // pred_fallthru
          _
        // Predicated region
        $region105: #{tpu_custom_call.1} parent=23 // pred_check
          %p1227 = pneg %p647
        $region106: #{tpu_custom_call.1} parent=23 // pred_check_branch
          %1229 = sbr.rel (%p1227) target = $region108
        $region107: #{tpu_custom_call.1} parent=23 // pred_region
          %s1230 = sand.u32 %s95, 1
          %s1231 = scalar_lea.sflag [#allocation18], %s1230
          %s1232 = sand.u32 %s637, 1
          %s1233 = smul.addr %s1232, 64
          %s1234 = scalar_lea.vmem [#allocation17], %s1233
          %s1236 = ssub.s32 1024, 1024
          %1237 = vsyncadd %s1231, %s1236
          %s1238 = smul.addr %s103, 16
          %s1239 = smul.addr %s1238, 64
          %s1240 = scalar_lea.hbm %s41, %s1239
          %s1241 = sshll.u32 %s1234, 4
          %s1242 = int_to_ptr.vmem [resolvable:$true] %s1241
          %1247 = dma.hbm_to_vmem [thread:$0]  %s1240, 1024, %s1242, %s1231, 64, 64, 4
        $region108: #{tpu_custom_call.1} parent=23 // pred_fallthru
          _
        // Predicated region
        $region109: #{tpu_custom_call.1} parent=23 // pred_check
          %p1248 = pneg %p673
        $region110: #{tpu_custom_call.1} parent=23 // pred_check_branch
          %1250 = sbr.rel (%p1248) target = $region112
        $region111: #{tpu_custom_call.1} parent=23 // pred_region
          %p1251 = scmp.lt.s32.totalorder %s103, 1
          %s1252 = scalar_select %p1251, %s103, 1
          %s1253 = scalar_lea.vmem %s43, %s1252
        $region112: #{tpu_custom_call.1} parent=23 // pred_fallthru
          _
        // Predicated region
        $region113: #{tpu_custom_call.1} parent=23 // pred_check
          %p1254 = pneg %p699
        $region114: #{tpu_custom_call.1} parent=23 // pred_check_branch
          %1256 = sbr.rel (%p1254) target = $region116
        $region115: #{tpu_custom_call.1} parent=23 // pred_region
          %s1257 = sand.u32 %s95, 1
          %s1258 = scalar_lea.sflag [#allocation18], %s1257
          %s1259 = sand.u32 %s689, 1
          %s1260 = smul.addr %s1259, 64
          %s1261 = scalar_lea.vmem [#allocation19], %s1260
          %s1263 = ssub.s32 1024, 1024
          %1264 = vsyncadd %s1258, %s1263
          %s1265 = smul.addr %s103, 16
          %s1266 = smul.addr %s1265, 64
          %s1267 = scalar_lea.hbm %s45, %s1266
          %s1268 = sshll.u32 %s1261, 4
          %s1269 = int_to_ptr.vmem [resolvable:$true] %s1268
          %1274 = dma.hbm_to_vmem [thread:$0]  %s1267, 1024, %s1269, %s1258, 64, 64, 4
        $region116: #{tpu_custom_call.1} parent=23 // pred_fallthru
          _
        // Predicated region
        $region117: #{tpu_custom_call.1} parent=23 // pred_check
          %p1275 = pneg %p725
        $region118: #{tpu_custom_call.1} parent=23 // pred_check_branch
          %1277 = sbr.rel (%p1275) target = $region120
        $region119: #{tpu_custom_call.1} parent=23 // pred_region
          %p1278 = scmp.lt.s32.totalorder %s103, 1
          %s1279 = scalar_select %p1278, %s103, 1
          %s1280 = scalar_lea.vmem %s47, %s1279
        $region120: #{tpu_custom_call.1} parent=23 // pred_fallthru
          _
        // Predicated region
        $region121: #{tpu_custom_call.1} parent=23 // pred_check
          %p1281 = pneg %p751
        $region122: #{tpu_custom_call.1} parent=23 // pred_check_branch
          %1283 = sbr.rel (%p1281) target = $region124
        $region123: #{tpu_custom_call.1} parent=23 // pred_region
          %p1284 = scmp.lt.s32.totalorder %s103, 1
          %s1285 = scalar_select %p1284, %s103, 1
          %s1286 = scalar_lea.vmem %s49, %s1285
        $region124: #{tpu_custom_call.1} parent=23 // pred_fallthru
          _
        // Predicated region
        $region125: #{tpu_custom_call.1} parent=23 // pred_check
          %p1287 = pneg %p777
        $region126: #{tpu_custom_call.1} parent=23 // pred_check_branch
          %1289 = sbr.rel (%p1287) target = $region128
        $region127: #{tpu_custom_call.1} parent=23 // pred_region
          %p1290 = scmp.lt.s32.totalorder %s103, 1
          %s1291 = scalar_select %p1290, %s103, 1
          %s1292 = scalar_lea.vmem %s51, %s1291
        $region128: #{tpu_custom_call.1} parent=23 // pred_fallthru
          _
        // Predicated region
        $region129: #{tpu_custom_call.1} parent=23 // pred_check
          %p1293 = pneg %p803
        $region130: #{tpu_custom_call.1} parent=23 // pred_check_branch
          %1295 = sbr.rel (%p1293) target = $region132
        $region131: #{tpu_custom_call.1} parent=23 // pred_region
          %s1296 = sand.u32 %s95, 1
          %s1297 = scalar_lea.sflag [#allocation21], %s1296
          %s1298 = sand.u32 %s793, 1
          %s1299 = smul.addr %s1298, 1024
          %s1300 = scalar_lea.vmem [#allocation20], %s1299
          %s1302 = ssub.s32 16384, 16384
          %1303 = vsyncadd %s1297, %s1302
          %s1304 = smul.addr %s103, 256
          %s1305 = smul.addr %s1304, 64
          %s1306 = scalar_lea.hbm %s53, %s1305
          %s1307 = sshll.u32 %s1300, 4
          %s1308 = int_to_ptr.vmem [resolvable:$true] %s1307
          %1313 = dma.hbm_to_vmem [thread:$0]  %s1306, 16384, %s1308, %s1297, 1024, 1024, 64
        $region132: #{tpu_custom_call.1} parent=23 // pred_fallthru
          _
        // Predicated region
        $region133: #{tpu_custom_call.1} parent=23 // pred_check
          %p1314 = pneg %p829
        $region134: #{tpu_custom_call.1} parent=23 // pred_check_branch
          %1316 = sbr.rel (%p1314) target = $region136
        $region135: #{tpu_custom_call.1} parent=23 // pred_region
          %p1317 = scmp.lt.s32.totalorder %s103, 1
          %s1318 = scalar_select %p1317, %s103, 1
          %s1319 = smul.addr %s1318, 16
          %s1320 = scalar_lea.vmem %s55, %s1319
        $region136: #{tpu_custom_call.1} parent=23 // pred_fallthru
          _
        // Predicated region
        $region137: #{tpu_custom_call.1} parent=23 // pred_check
          %p1321 = pneg %p855
        $region138: #{tpu_custom_call.1} parent=23 // pred_check_branch
          %1323 = sbr.rel (%p1321) target = $region140
        $region139: #{tpu_custom_call.1} parent=23 // pred_region
          %s1324 = sand.u32 %s95, 1
          %s1325 = scalar_lea.sflag [#allocation21], %s1324
          %s1326 = sand.u32 %s845, 1
          %s1327 = smul.addr %s1326, 1024
          %s1328 = scalar_lea.vmem [#allocation22], %s1327
          %s1330 = ssub.s32 16384, 16384
          %1331 = vsyncadd %s1325, %s1330
          %s1332 = smul.addr %s103, 256
          %s1333 = smul.addr %s1332, 64
          %s1334 = scalar_lea.hbm %s57, %s1333
          %s1335 = sshll.u32 %s1328, 4
          %s1336 = int_to_ptr.vmem [resolvable:$true] %s1335
          %1341 = dma.hbm_to_vmem [thread:$0]  %s1334, 16384, %s1336, %s1325, 64, 64, 4
        $region140: #{tpu_custom_call.1} parent=23 // pred_fallthru
          _
        // Predicated region
        $region141: #{tpu_custom_call.1} parent=23 // pred_check
          %p1342 = pneg %p881
        $region142: #{tpu_custom_call.1} parent=23 // pred_check_branch
          %1344 = sbr.rel (%p1342) target = $region144
        $region143: #{tpu_custom_call.1} parent=23 // pred_region
          %p1345 = scmp.lt.s32.totalorder %s103, 1
          %s1346 = scalar_select %p1345, %s103, 1
          %s1347 = scalar_lea.vmem %s59, %s1346
        $region144: #{tpu_custom_call.1} parent=23 // pred_fallthru
          _
      $region24: #{tpu_custom_call.1} parent=5 // pred_fallthru
        _
      %p1348 = scmp.le.s32.totalorder 1, %s95
      %p1349 = scmp.lt.s32.totalorder %s95, 5
      %p1350 = pnand %p1348, %p1349
      %p1351 = pneg %p1350
      // Predicated region
      $region145: #{tpu_custom_call.1} parent=5 // pred_check
        _
      $region146: #{tpu_custom_call.1} parent=5 // pred_check_branch
        %1353 = sbr.rel (%p1350) target = $region148
      $region147: #{tpu_custom_call.1} parent=5 // pred_region
        %s1354 = ssub.s32 %s95, 1
        %s1355 = sand.u32 %s120, 1
        %s1356 = scalar_lea.sflag [#allocation3], %s1355
        %s1357 = sand.u32 %s120, 1
        %s1358 = smul.addr %s1357, 8
        %s1359 = scalar_lea.vmem [#allocation2], %s1358
        // Predicated region
        $region149: #{tpu_custom_call.1} parent=147 // pred_check
          %p1360 = pneg %p133
        $region150: #{tpu_custom_call.1} parent=147 // pred_check_branch
          %1362 = sbr.rel (%p1360) target = $region152
        $region151: #{tpu_custom_call.1} parent=147 // pred_region
          %1363 = dma.done %s1356, 128
        $region152: #{tpu_custom_call.1} parent=147 // pred_fallthru
          _
        %s1364 = sand.u32 %s100, 1
        %s1365 = scalar_lea.sflag [#allocation6], %s1364
        %s1366 = sand.u32 %s146, 1
        %s1367 = smul.addr %s1366, 4
        %s1368 = scalar_lea.vmem [#allocation5], %s1367
        // Predicated region
        $region153: #{tpu_custom_call.1} parent=147 // pred_check
          %p1369 = pneg %p159
        $region154: #{tpu_custom_call.1} parent=147 // pred_check_branch
          %1371 = sbr.rel (%p1369) target = $region156
        $region155: #{tpu_custom_call.1} parent=147 // pred_region
          %1372 = dma.done %s1365, 64
        $region156: #{tpu_custom_call.1} parent=147 // pred_fallthru
          _
        %s1373 = sand.u32 %s100, 1
        %s1374 = scalar_lea.sflag [#allocation6], %s1373
        %s1375 = sand.u32 %s172, 1
        %s1376 = smul.addr %s1375, 4
        %s1377 = scalar_lea.vmem [#allocation7], %s1376
        // Predicated region
        $region157: #{tpu_custom_call.1} parent=147 // pred_check
          %p1378 = pneg %p185
        $region158: #{tpu_custom_call.1} parent=147 // pred_check_branch
          %1380 = sbr.rel (%p1378) target = $region160
        $region159: #{tpu_custom_call.1} parent=147 // pred_region
          %1381 = dma.done %s1374, 64
        $region160: #{tpu_custom_call.1} parent=147 // pred_fallthru
          _
        %s1382 = sand.u32 %s100, 1
        %s1383 = scalar_lea.sflag [#allocation9], %s1382
        %s1384 = sand.u32 %s276, 1
        %s1385 = smul.addr %s1384, 64
        %s1386 = scalar_lea.vmem [#allocation8], %s1385
        // Predicated region
        $region161: #{tpu_custom_call.1} parent=147 // pred_check
          %p1387 = pneg %p289
        $region162: #{tpu_custom_call.1} parent=147 // pred_check_branch
          %1389 = sbr.rel (%p1387) target = $region164
        $region163: #{tpu_custom_call.1} parent=147 // pred_region
          %1390 = dma.done %s1383, 1024
        $region164: #{tpu_custom_call.1} parent=147 // pred_fallthru
          _
        %s1391 = sand.u32 %s100, 1
        %s1392 = scalar_lea.sflag [#allocation9], %s1391
        %s1393 = sand.u32 %s328, 1
        %s1394 = smul.addr %s1393, 64
        %s1395 = scalar_lea.vmem [#allocation10], %s1394
        // Predicated region
        $region165: #{tpu_custom_call.1} parent=147 // pred_check
          %p1396 = pneg %p341
        $region166: #{tpu_custom_call.1} parent=147 // pred_check_branch
          %1398 = sbr.rel (%p1396) target = $region168
        $region167: #{tpu_custom_call.1} parent=147 // pred_region
          %1399 = dma.done %s1392, 1024
        $region168: #{tpu_custom_call.1} parent=147 // pred_fallthru
          _
        %s1400 = sand.u32 %s100, 1
        %s1401 = scalar_lea.sflag [#allocation12], %s1400
        %s1402 = sand.u32 %s380, 1
        %s1403 = smul.addr %s1402, 64
        %s1404 = scalar_lea.vmem [#allocation11], %s1403
        // Predicated region
        $region169: #{tpu_custom_call.1} parent=147 // pred_check
          %p1405 = pneg %p393
        $region170: #{tpu_custom_call.1} parent=147 // pred_check_branch
          %1407 = sbr.rel (%p1405) target = $region172
        $region171: #{tpu_custom_call.1} parent=147 // pred_region
          %1408 = dma.done %s1401, 1024
        $region172: #{tpu_custom_call.1} parent=147 // pred_fallthru
          _
        %s1409 = sand.u32 %s100, 1
        %s1410 = scalar_lea.sflag [#allocation12], %s1409
        %s1411 = sand.u32 %s432, 1
        %s1412 = smul.addr %s1411, 64
        %s1413 = scalar_lea.vmem [#allocation13], %s1412
        // Predicated region
        $region173: #{tpu_custom_call.1} parent=147 // pred_check
          %p1414 = pneg %p445
        $region174: #{tpu_custom_call.1} parent=147 // pred_check_branch
          %1416 = sbr.rel (%p1414) target = $region176
        $region175: #{tpu_custom_call.1} parent=147 // pred_region
          %1417 = dma.done %s1410, 1024
        $region176: #{tpu_custom_call.1} parent=147 // pred_fallthru
          _
        %s1418 = sand.u32 %s100, 1
        %s1419 = scalar_lea.sflag [#allocation15], %s1418
        %s1420 = sand.u32 %s536, 1
        %s1421 = smul.addr %s1420, 64
        %s1422 = scalar_lea.vmem [#allocation14], %s1421
        // Predicated region
        $region177: #{tpu_custom_call.1} parent=147 // pred_check
          %p1423 = pneg %p549
        $region178: #{tpu_custom_call.1} parent=147 // pred_check_branch
          %1425 = sbr.rel (%p1423) target = $region180
        $region179: #{tpu_custom_call.1} parent=147 // pred_region
          %1426 = dma.done %s1419, 1024
        $region180: #{tpu_custom_call.1} parent=147 // pred_fallthru
          _
        %s1427 = sand.u32 %s100, 1
        %s1428 = scalar_lea.sflag [#allocation15], %s1427
        %s1429 = sand.u32 %s588, 1
        %s1430 = smul.addr %s1429, 64
        %s1431 = scalar_lea.vmem [#allocation16], %s1430
        // Predicated region
        $region181: #{tpu_custom_call.1} parent=147 // pred_check
          %p1432 = pneg %p601
        $region182: #{tpu_custom_call.1} parent=147 // pred_check_branch
          %1434 = sbr.rel (%p1432) target = $region184
        $region183: #{tpu_custom_call.1} parent=147 // pred_region
          %1435 = dma.done %s1428, 1024
        $region184: #{tpu_custom_call.1} parent=147 // pred_fallthru
          _
        %s1436 = sand.u32 %s100, 1
        %s1437 = scalar_lea.sflag [#allocation18], %s1436
        %s1438 = sand.u32 %s640, 1
        %s1439 = smul.addr %s1438, 64
        %s1440 = scalar_lea.vmem [#allocation17], %s1439
        // Predicated region
        $region185: #{tpu_custom_call.1} parent=147 // pred_check
          %p1441 = pneg %p653
        $region186: #{tpu_custom_call.1} parent=147 // pred_check_branch
          %1443 = sbr.rel (%p1441) target = $region188
        $region187: #{tpu_custom_call.1} parent=147 // pred_region
          %1444 = dma.done %s1437, 1024
        $region188: #{tpu_custom_call.1} parent=147 // pred_fallthru
          _
        %s1445 = sand.u32 %s100, 1
        %s1446 = scalar_lea.sflag [#allocation18], %s1445
        %s1447 = sand.u32 %s692, 1
        %s1448 = smul.addr %s1447, 64
        %s1449 = scalar_lea.vmem [#allocation19], %s1448
        // Predicated region
        $region189: #{tpu_custom_call.1} parent=147 // pred_check
          %p1450 = pneg %p705
        $region190: #{tpu_custom_call.1} parent=147 // pred_check_branch
          %1452 = sbr.rel (%p1450) target = $region192
        $region191: #{tpu_custom_call.1} parent=147 // pred_region
          %1453 = dma.done %s1446, 1024
        $region192: #{tpu_custom_call.1} parent=147 // pred_fallthru
          _
        %s1454 = sand.u32 %s100, 1
        %s1455 = scalar_lea.sflag [#allocation21], %s1454
        %s1456 = sand.u32 %s796, 1
        %s1457 = smul.addr %s1456, 1024
        %s1458 = scalar_lea.vmem [#allocation20], %s1457
        // Predicated region
        $region193: #{tpu_custom_call.1} parent=147 // pred_check
          %p1459 = pneg %p809
        $region194: #{tpu_custom_call.1} parent=147 // pred_check_branch
          %1461 = sbr.rel (%p1459) target = $region196
        $region195: #{tpu_custom_call.1} parent=147 // pred_region
          %1462 = dma.done %s1455, 16384
        $region196: #{tpu_custom_call.1} parent=147 // pred_fallthru
          _
        %s1463 = sand.u32 %s100, 1
        %s1464 = scalar_lea.sflag [#allocation21], %s1463
        %s1465 = sand.u32 %s848, 1
        %s1466 = smul.addr %s1465, 1024
        %s1467 = scalar_lea.vmem [#allocation22], %s1466
        // Predicated region
        $region197: #{tpu_custom_call.1} parent=147 // pred_check
          %p1468 = pneg %p861
        $region198: #{tpu_custom_call.1} parent=147 // pred_check_branch
          %1470 = sbr.rel (%p1468) target = $region200
        $region199: #{tpu_custom_call.1} parent=147 // pred_region
          %1471 = dma.done %s1464, 16384
        $region200: #{tpu_custom_call.1} parent=147 // pred_fallthru
          _
        %s1472 = sand.u32 %s120, 1
        %s1473 = scalar_lea.sflag [#allocation3], %s1472
        %s1474 = sand.u32 %s120, 1
        %s1475 = smul.addr %s1474, 8
        %s1476 = scalar_lea.vmem [#allocation2], %s1475
        %p1477 = pneg %p133
        %p1478 = pneg %p130
        %s1479 = sand.u32 %s100, 1
        %s1480 = scalar_lea.sflag [#allocation6], %s1479
        %s1481 = sand.u32 %s146, 1
        %s1482 = smul.addr %s1481, 4
        %s1483 = scalar_lea.vmem [#allocation5], %s1482
        %p1484 = pneg %p159
        %p1485 = pneg %p156
        %s1486 = sand.u32 %s100, 1
        %s1487 = scalar_lea.sflag [#allocation6], %s1486
        %s1488 = sand.u32 %s172, 1
        %s1489 = smul.addr %s1488, 4
        %s1490 = scalar_lea.vmem [#allocation7], %s1489
        %p1491 = pneg %p185
        %p1492 = pneg %p182
        %p1493 = scmp.lt.s32.totalorder %s104, 1
        %s1494 = scalar_select %p1493, %s104, 1
        %s1495 = smul.addr %s1494, 4
        %s1496 = scalar_lea.vmem %s7, %s1495
        %p1497 = pneg %p211
        %p1498 = pneg %p208
        %p1499 = scmp.lt.s32.totalorder %s105, 1
        %s1500 = scalar_select %p1499, %s105, 1
        %s1501 = scalar_lea.vmem %s9, %s1500
        %p1502 = pneg %p237
        %p1503 = pneg %p234
        %p1504 = scmp.lt.s32.totalorder %s105, 1
        %s1505 = scalar_select %p1504, %s105, 1
        %s1506 = scalar_lea.vmem %s11, %s1505
        %p1507 = pneg %p263
        %p1508 = pneg %p260
        %s1509 = sand.u32 %s100, 1
        %s1510 = scalar_lea.sflag [#allocation9], %s1509
        %s1511 = sand.u32 %s276, 1
        %s1512 = smul.addr %s1511, 64
        %s1513 = scalar_lea.vmem [#allocation8], %s1512
        %p1514 = pneg %p289
        %p1515 = pneg %p286
        %p1516 = scmp.lt.s32.totalorder %s105, 1
        %s1517 = scalar_select %p1516, %s105, 1
        %s1518 = scalar_lea.vmem %s15, %s1517
        %p1519 = pneg %p315
        %p1520 = pneg %p312
        %s1521 = sand.u32 %s100, 1
        %s1522 = scalar_lea.sflag [#allocation9], %s1521
        %s1523 = sand.u32 %s328, 1
        %s1524 = smul.addr %s1523, 64
        %s1525 = scalar_lea.vmem [#allocation10], %s1524
        %p1526 = pneg %p341
        %p1527 = pneg %p338
        %p1528 = scmp.lt.s32.totalorder %s105, 1
        %s1529 = scalar_select %p1528, %s105, 1
        %s1530 = scalar_lea.vmem %s19, %s1529
        %p1531 = pneg %p367
        %p1532 = pneg %p364
        %s1533 = sand.u32 %s100, 1
        %s1534 = scalar_lea.sflag [#allocation12], %s1533
        %s1535 = sand.u32 %s380, 1
        %s1536 = smul.addr %s1535, 64
        %s1537 = scalar_lea.vmem [#allocation11], %s1536
        %p1538 = pneg %p393
        %p1539 = pneg %p390
        %p1540 = scmp.lt.s32.totalorder %s105, 1
        %s1541 = scalar_select %p1540, %s105, 1
        %s1542 = scalar_lea.vmem %s23, %s1541
        %p1543 = pneg %p419
        %p1544 = pneg %p416
        %s1545 = sand.u32 %s100, 1
        %s1546 = scalar_lea.sflag [#allocation12], %s1545
        %s1547 = sand.u32 %s432, 1
        %s1548 = smul.addr %s1547, 64
        %s1549 = scalar_lea.vmem [#allocation13], %s1548
        %p1550 = pneg %p445
        %p1551 = pneg %p442
        %p1552 = scmp.lt.s32.totalorder %s105, 1
        %s1553 = scalar_select %p1552, %s105, 1
        %s1554 = scalar_lea.vmem %s27, %s1553
        %p1555 = pneg %p471
        %p1556 = pneg %p468
        %p1557 = scmp.lt.s32.totalorder %s105, 1
        %s1558 = scalar_select %p1557, %s105, 1
        %s1559 = scalar_lea.vmem %s29, %s1558
        %p1560 = pneg %p497
        %p1561 = pneg %p494
        %p1562 = scmp.lt.s32.totalorder %s105, 1
        %s1563 = scalar_select %p1562, %s105, 1
        %s1564 = scalar_lea.vmem %s31, %s1563
        %p1565 = pneg %p523
        %p1566 = pneg %p520
        %s1567 = sand.u32 %s100, 1
        %s1568 = scalar_lea.sflag [#allocation15], %s1567
        %s1569 = sand.u32 %s536, 1
        %s1570 = smul.addr %s1569, 64
        %s1571 = scalar_lea.vmem [#allocation14], %s1570
        %p1572 = pneg %p549
        %p1573 = pneg %p546
        %p1574 = scmp.lt.s32.totalorder %s105, 1
        %s1575 = scalar_select %p1574, %s105, 1
        %s1576 = scalar_lea.vmem %s35, %s1575
        %p1577 = pneg %p575
        %p1578 = pneg %p572
        %s1579 = sand.u32 %s100, 1
        %s1580 = scalar_lea.sflag [#allocation15], %s1579
        %s1581 = sand.u32 %s588, 1
        %s1582 = smul.addr %s1581, 64
        %s1583 = scalar_lea.vmem [#allocation16], %s1582
        %p1584 = pneg %p601
        %p1585 = pneg %p598
        %p1586 = scmp.lt.s32.totalorder %s105, 1
        %s1587 = scalar_select %p1586, %s105, 1
        %s1588 = scalar_lea.vmem %s39, %s1587
        %p1589 = pneg %p627
        %p1590 = pneg %p624
        %s1591 = sand.u32 %s100, 1
        %s1592 = scalar_lea.sflag [#allocation18], %s1591
        %s1593 = sand.u32 %s640, 1
        %s1594 = smul.addr %s1593, 64
        %s1595 = scalar_lea.vmem [#allocation17], %s1594
        %p1596 = pneg %p653
        %p1597 = pneg %p650
        %p1598 = scmp.lt.s32.totalorder %s105, 1
        %s1599 = scalar_select %p1598, %s105, 1
        %s1600 = scalar_lea.vmem %s43, %s1599
        %p1601 = pneg %p679
        %p1602 = pneg %p676
        %s1603 = sand.u32 %s100, 1
        %s1604 = scalar_lea.sflag [#allocation18], %s1603
        %s1605 = sand.u32 %s692, 1
        %s1606 = smul.addr %s1605, 64
        %s1607 = scalar_lea.vmem [#allocation19], %s1606
        %p1608 = pneg %p705
        %p1609 = pneg %p702
        %p1610 = scmp.lt.s32.totalorder %s105, 1
        %s1611 = scalar_select %p1610, %s105, 1
        %s1612 = scalar_lea.vmem %s47, %s1611
        %p1613 = pneg %p731
        %p1614 = pneg %p728
        %p1615 = scmp.lt.s32.totalorder %s105, 1
        %s1616 = scalar_select %p1615, %s105, 1
        %s1617 = scalar_lea.vmem %s49, %s1616
        %p1618 = pneg %p757
        %p1619 = pneg %p754
        %p1620 = scmp.lt.s32.totalorder %s105, 1
        %s1621 = scalar_select %p1620, %s105, 1
        %s1622 = scalar_lea.vmem %s51, %s1621
        %p1623 = pneg %p783
        %p1624 = pneg %p780
        %s1625 = sand.u32 %s100, 1
        %s1626 = scalar_lea.sflag [#allocation21], %s1625
        %s1627 = sand.u32 %s796, 1
        %s1628 = smul.addr %s1627, 1024
        %s1629 = scalar_lea.vmem [#allocation20], %s1628
        %p1630 = pneg %p809
        %p1631 = pneg %p806
        %p1632 = scmp.lt.s32.totalorder %s105, 1
        %s1633 = scalar_select %p1632, %s105, 1
        %s1634 = smul.addr %s1633, 16
        %s1635 = scalar_lea.vmem %s55, %s1634
        %p1636 = pneg %p835
        %p1637 = pneg %p832
        %s1638 = sand.u32 %s100, 1
        %s1639 = scalar_lea.sflag [#allocation21], %s1638
        %s1640 = sand.u32 %s848, 1
        %s1641 = smul.addr %s1640, 1024
        %s1642 = scalar_lea.vmem [#allocation22], %s1641
        %p1643 = pneg %p861
        %p1644 = pneg %p858
        %p1645 = scmp.lt.s32.totalorder %s105, 1
        %s1646 = scalar_select %p1645, %s105, 1
        %s1647 = scalar_lea.vmem %s59, %s1646
        %p1648 = pneg %p887
        %p1649 = pneg %p884
        %p1650 = pneg %p908
        %p1651 = pneg %p905
        %p1652 = pneg %p929
        %p1653 = pneg %p926
        %p1654 = pneg %p955
        %p1655 = pneg %p952
        %s1656 = sand.u32 %s942, 1
        %s1657 = scalar_lea.sflag [#allocation4], %s1656
        %s1658 = sand.u32 %s942, 1
        %s1659 = smul.addr %s1658, 8
        %s1660 = scalar_lea.vmem [#allocation23], %s1659
        %p1661 = scmp.lt.s32.totalorder %s104, 1
        %s1662 = scalar_select %p1661, %s104, 1
        %s1663 = smul.addr %s1662, 4
        %s1664 = scalar_lea.vmem %s7, %s1663
        %p1665 = scmp.lt.s32.totalorder %s105, 1
        %s1666 = scalar_select %p1665, %s105, 1
        %s1667 = scalar_lea.vmem %s9, %s1666
        %p1668 = scmp.lt.s32.totalorder %s105, 1
        %s1669 = scalar_select %p1668, %s105, 1
        %s1670 = scalar_lea.vmem %s11, %s1669
        %p1671 = scmp.lt.s32.totalorder %s105, 1
        %s1672 = scalar_select %p1671, %s105, 1
        %s1673 = scalar_lea.vmem %s15, %s1672
        %p1674 = scmp.lt.s32.totalorder %s105, 1
        %s1675 = scalar_select %p1674, %s105, 1
        %s1676 = scalar_lea.vmem %s19, %s1675
        %p1677 = scmp.lt.s32.totalorder %s105, 1
        %s1678 = scalar_select %p1677, %s105, 1
        %s1679 = scalar_lea.vmem %s23, %s1678
        %p1680 = scmp.lt.s32.totalorder %s105, 1
        %s1681 = scalar_select %p1680, %s105, 1
        %s1682 = scalar_lea.vmem %s27, %s1681
        %p1683 = scmp.lt.s32.totalorder %s105, 1
        %s1684 = scalar_select %p1683, %s105, 1
        %s1685 = scalar_lea.vmem %s29, %s1684
        %p1686 = scmp.lt.s32.totalorder %s105, 1
        %s1687 = scalar_select %p1686, %s105, 1
        %s1688 = scalar_lea.vmem %s31, %s1687
        %p1689 = scmp.lt.s32.totalorder %s105, 1
        %s1690 = scalar_select %p1689, %s105, 1
        %s1691 = scalar_lea.vmem %s35, %s1690
        %p1692 = scmp.lt.s32.totalorder %s105, 1
        %s1693 = scalar_select %p1692, %s105, 1
        %s1694 = scalar_lea.vmem %s39, %s1693
        %p1695 = scmp.lt.s32.totalorder %s105, 1
        %s1696 = scalar_select %p1695, %s105, 1
        %s1697 = scalar_lea.vmem %s43, %s1696
        %p1698 = scmp.lt.s32.totalorder %s105, 1
        %s1699 = scalar_select %p1698, %s105, 1
        %s1700 = scalar_lea.vmem %s47, %s1699
        %p1701 = scmp.lt.s32.totalorder %s105, 1
        %s1702 = scalar_select %p1701, %s105, 1
        %s1703 = scalar_lea.vmem %s49, %s1702
        %p1704 = scmp.lt.s32.totalorder %s105, 1
        %s1705 = scalar_select %p1704, %s105, 1
        %s1706 = scalar_lea.vmem %s51, %s1705
        %p1707 = scmp.lt.s32.totalorder %s105, 1
        %s1708 = scalar_select %p1707, %s105, 1
        %s1709 = smul.addr %s1708, 16
        %s1710 = scalar_lea.vmem %s55, %s1709
        %p1711 = scmp.lt.s32.totalorder %s105, 1
        %s1712 = scalar_select %p1711, %s105, 1
        %s1713 = scalar_lea.vmem %s59, %s1712
        %p1715 = scmp.eq.s32.totalorder %s105, 0
        // Predicated region
        $region201: #{tpu_custom_call.1} parent=147 // pred_check
          %p1716 = pneg %p1715
        $region202: #{tpu_custom_call.1} parent=147 // pred_check_branch
          %1718 = sbr.rel (%p1716) target = $region204
        $region203: #{tpu_custom_call.1} parent=147 // pred_region
          %v1719 = vld [vmem:[%s1359] sm:$0xff]
          %1720 = vst [vmem:[%s1660] sm:$0xff] %v1719
        $region204: #{tpu_custom_call.1} parent=147 // pred_fallthru
          _
        %v1721 = vld [vmem:[%s1660] sm:$0xff]
        %v1722 = vld [vmem:[%s1368] sm:$0xf]
        %v1723 = vld [vmem:[%s1377] sm:$0xf]
        %v1724 = vunpack.c.l.bf16 %v1723
        %v1725 = vld [vmem:[%s1664] sm:$0xf]
        %v1726 = vunpack.c.l.bf16 %v1725
        %v1727 = vld [vmem:[%s1667] sm:$0x1]
        %v1728 = vld [vmem:[%s1670] sm:$0x1]
        %1729 = vadd.xlane.f32.xlu0 %v1721
        %v1730 = vpop.xlane.xlu0 %1729
        %v1731 = vrcp.pop 128.0
        %v1732 = vmul.f32 %v1730, %v1731
        %v1733 = vsub.f32 %v1721, %v1732
        %v1734 = vmul.f32 %v1733, %v1733
        %1735 = vadd.xlane.f32.xlu0 %v1734
        %v1736 = vpop.xlane.xlu0 %1735
        %v1737 = vmul.f32 %v1736, 0.007874016
        %v1738 = vrsqrt.pop %v1737
        %v1739 = vmul.f32 %v1737, %v1738
        %vm1740 = vcmp.eq.f32.partialorder %v1737, inf
        %v1741 = vsel %vm1740, %v1737, %v1739
        %vm1742 = vcmp.eq.f32.partialorder %v1737, 0.0
        %v1743 = vand.u32 %v1737, 2147483648
        %v1744 = vsel %vm1742, %v1743, %v1741
        %v1745 = vadd.f32 %v1744, 1e-06
        %v1746 = vrcp.pop %v1745
        %v1748 = vlaneseq
        %v1749 = vshrl.u32 %v1748, 7
        %v1750 = vsub.s32 0, %v1749
        %v1751 = vrot.slane %v1727, %v1750
        %v1753 = vmul.f32 %v1751, %v1733
        %v1754 = vmul.f32 %v1753, %v1746
        %v1756 = vlaneseq
        %v1757 = vshrl.u32 %v1756, 7
        %v1758 = vsub.s32 0, %v1757
        %v1759 = vrot.slane %v1728, %v1758
        %v1761 = vadd.f32 %v1754, %v1759
        %v1762 = vpack.c.bf16 %v1761, %v1761
        %v1763 = vld [vmem:[%s1386] sm:$0xf]
        %v1764 = vld [vmem:[%s1386 + $0x4] sm:$0xf]
        %v1765 = vld [vmem:[%s1386 + $0x8] sm:$0xf]
        %v1766 = vld [vmem:[%s1386 + $0xc] sm:$0xf]
        %v1767 = vld [vmem:[%s1386 + $0x10] sm:$0xf]
        %v1768 = vld [vmem:[%s1386 + $0x14] sm:$0xf]
        %v1769 = vld [vmem:[%s1386 + $0x18] sm:$0xf]
        %v1770 = vld [vmem:[%s1386 + $0x1c] sm:$0xf]
        %v1771 = vld [vmem:[%s1386 + $0x20] sm:$0xf]
        %v1772 = vld [vmem:[%s1386 + $0x24] sm:$0xf]
        %v1773 = vld [vmem:[%s1386 + $0x28] sm:$0xf]
        %v1774 = vld [vmem:[%s1386 + $0x2c] sm:$0xf]
        %v1775 = vld [vmem:[%s1386 + $0x30] sm:$0xf]
        %v1776 = vld [vmem:[%s1386 + $0x34] sm:$0xf]
        %v1777 = vld [vmem:[%s1386 + $0x38] sm:$0xf]
        %v1778 = vld [vmem:[%s1386 + $0x3c] sm:$0xf]
        %v1779 = vld [vmem:[%s1673] sm:$0x1]
        %v1780 = vld [vmem:[%s1395] sm:$0xf]
        %v1781 = vld [vmem:[%s1395 + $0x4] sm:$0xf]
        %v1782 = vld [vmem:[%s1395 + $0x8] sm:$0xf]
        %v1783 = vld [vmem:[%s1395 + $0xc] sm:$0xf]
        %v1784 = vld [vmem:[%s1395 + $0x10] sm:$0xf]
        %v1785 = vld [vmem:[%s1395 + $0x14] sm:$0xf]
        %v1786 = vld [vmem:[%s1395 + $0x18] sm:$0xf]
        %v1787 = vld [vmem:[%s1395 + $0x1c] sm:$0xf]
        %v1788 = vld [vmem:[%s1395 + $0x20] sm:$0xf]
        %v1789 = vld [vmem:[%s1395 + $0x24] sm:$0xf]
        %v1790 = vld [vmem:[%s1395 + $0x28] sm:$0xf]
        %v1791 = vld [vmem:[%s1395 + $0x2c] sm:$0xf]
        %v1792 = vld [vmem:[%s1395 + $0x30] sm:$0xf]
        %v1793 = vld [vmem:[%s1395 + $0x34] sm:$0xf]
        %v1794 = vld [vmem:[%s1395 + $0x38] sm:$0xf]
        %v1795 = vld [vmem:[%s1395 + $0x3c] sm:$0xf]
        %v1796 = vld [vmem:[%s1676] sm:$0x1]
        %v1797 = vld [vmem:[%s1404] sm:$0xf]
        %v1798 = vld [vmem:[%s1404 + $0x4] sm:$0xf]
        %v1799 = vld [vmem:[%s1404 + $0x8] sm:$0xf]
        %v1800 = vld [vmem:[%s1404 + $0xc] sm:$0xf]
        %v1801 = vld [vmem:[%s1404 + $0x10] sm:$0xf]
        %v1802 = vld [vmem:[%s1404 + $0x14] sm:$0xf]
        %v1803 = vld [vmem:[%s1404 + $0x18] sm:$0xf]
        %v1804 = vld [vmem:[%s1404 + $0x1c] sm:$0xf]
        %v1805 = vld [vmem:[%s1404 + $0x20] sm:$0xf]
        %v1806 = vld [vmem:[%s1404 + $0x24] sm:$0xf]
        %v1807 = vld [vmem:[%s1404 + $0x28] sm:$0xf]
        %v1808 = vld [vmem:[%s1404 + $0x2c] sm:$0xf]
        %v1809 = vld [vmem:[%s1404 + $0x30] sm:$0xf]
        %v1810 = vld [vmem:[%s1404 + $0x34] sm:$0xf]
        %v1811 = vld [vmem:[%s1404 + $0x38] sm:$0xf]
        %v1812 = vld [vmem:[%s1404 + $0x3c] sm:$0xf]
        %v1813 = vld [vmem:[%s1679] sm:$0x1]
        %v1814 = vld [vmem:[%s1413] sm:$0xf]
        %v1815 = vld [vmem:[%s1413 + $0x4] sm:$0xf]
        %v1816 = vld [vmem:[%s1413 + $0x8] sm:$0xf]
        %v1817 = vld [vmem:[%s1413 + $0xc] sm:$0xf]
        %v1818 = vld [vmem:[%s1413 + $0x10] sm:$0xf]
        %v1819 = vld [vmem:[%s1413 + $0x14] sm:$0xf]
        %v1820 = vld [vmem:[%s1413 + $0x18] sm:$0xf]
        %v1821 = vld [vmem:[%s1413 + $0x1c] sm:$0xf]
        %v1822 = vld [vmem:[%s1413 + $0x20] sm:$0xf]
        %v1823 = vld [vmem:[%s1413 + $0x24] sm:$0xf]
        %v1824 = vld [vmem:[%s1413 + $0x28] sm:$0xf]
        %v1825 = vld [vmem:[%s1413 + $0x2c] sm:$0xf]
        %v1826 = vld [vmem:[%s1413 + $0x30] sm:$0xf]
        %v1827 = vld [vmem:[%s1413 + $0x34] sm:$0xf]
        %v1828 = vld [vmem:[%s1413 + $0x38] sm:$0xf]
        %v1829 = vld [vmem:[%s1413 + $0x3c] sm:$0xf]
        %v1830 = vld [vmem:[%s1682] sm:$0x1]
        %v1832 = vlaneseq
        %v1833 = vshrl.u32 %v1832, 7
        %v1834 = vsub.s32 0, %v1833
        %v1835 = vrot.slane %v1779, %v1834
        %v1853 = vunpack.c.l.b16 %v1763
        %v1854 = vunpack.c.l.b16 %v1764
        %v1855 = vunpack.c.l.b16 %v1765
        %v1856 = vunpack.c.l.b16 %v1766
        %v1857 = vunpack.c.l.b16 %v1767
        %v1858 = vunpack.c.l.b16 %v1768
        %v1859 = vunpack.c.l.b16 %v1769
        %v1860 = vunpack.c.l.b16 %v1770
        %v1861 = vunpack.c.l.b16 %v1771
        %v1862 = vunpack.c.l.b16 %v1772
        %v1863 = vunpack.c.l.b16 %v1773
        %v1864 = vunpack.c.l.b16 %v1774
        %v1865 = vunpack.c.l.b16 %v1775
        %v1866 = vunpack.c.l.b16 %v1776
        %v1867 = vunpack.c.l.b16 %v1777
        %v1868 = vunpack.c.l.b16 %v1778
        %v1869 = vpack.c.b16 %v1854, %v1853
        %v1870 = vpack.c.b16 %v1856, %v1855
        %v1871 = vpack.c.b16 %v1858, %v1857
        %v1872 = vpack.c.b16 %v1860, %v1859
        %v1873 = vpack.c.b16 %v1862, %v1861
        %v1874 = vpack.c.b16 %v1864, %v1863
        %v1875 = vpack.c.b16 %v1866, %v1865
        %v1876 = vpack.c.b16 %v1868, %v1867
        %1885 = vmatprep.subr.bf16.mxu0 0
        %1886 = vmatpush1.bf16.msra.mxu0 %v1869
        %1887 = vmatprep.subr.bf16.mxu0 0
        %1888 = vmatpush1.bf16.msra.mxu0 %v1870
        %1889 = vmatprep.subr.bf16.mxu0 0
        %1890 = vmatpush1.bf16.msra.mxu0 %v1871
        %1891 = vmatprep.subr.bf16.mxu0 0
        %1892 = vmatpush1.bf16.msra.mxu0 %v1872
        %1893 = vmatprep.subr.bf16.mxu0 0
        %1894 = vmatpush1.bf16.msra.mxu0 %v1873
        %1895 = vmatprep.subr.bf16.mxu0 0
        %1896 = vmatpush1.bf16.msra.mxu0 %v1874
        %1897 = vmatprep.subr.bf16.mxu0 0
        %1898 = vmatpush1.bf16.msra.mxu0 %v1875
        %1899 = vmatprep.subr.bf16.mxu0 0
        %1900 = vmatpush1.bf16.msra.mxu0 %v1876
        %1901 = vmatprep.subr.bf16.mxu0 0
        %1902 = vmatpush1.bf16.msra.mxu0 0
        %1903 = vmatprep.subr.bf16.mxu0 0
        %1904 = vmatpush1.bf16.msra.mxu0 0
        %1905 = vmatprep.subr.bf16.mxu0 0
        %1906 = vmatpush1.bf16.msra.mxu0 0
        %1907 = vmatprep.subr.bf16.mxu0 0
        %1908 = vmatpush1.bf16.msra.mxu0 0
        %1909 = vmatprep.subr.bf16.mxu0 0
        %1910 = vmatpush1.bf16.msra.mxu0 0
        %1911 = vmatprep.subr.bf16.mxu0 0
        %1912 = vmatpush1.bf16.msra.mxu0 0
        %1913 = vmatprep.subr.bf16.mxu0 0
        %1914 = vmatpush1.bf16.msra.mxu0 0
        %1915 = vmatprep.subr.bf16.mxu0 0
        %1916 = vmatpush1.bf16.msra.mxu0 0
        %1917 = vmatprep.mubr.bf16.mxu0 0
        %1918 = vmatmul.mubr.bf16.gmra.mrb[0].mxu0 %v1762
        %v1919 = vpop.f32.mrb[0].mxu0
        %v1920 = vadd.f32 %v1835, %v1919
        %v1921 = vpop.f32.mrb[0].mxu0
        %v1922 = vpop.f32.mrb[0].mxu0
        %v1923 = vpop.f32.mrb[0].mxu0
        %1924 = vdwg.mxu0
        %v1925 = vpack.c.bf16 %v1920, %v1920
        %v1927 = vlaneseq
        %v1928 = vshrl.u32 %v1927, 7
        %v1929 = vsub.s32 0, %v1928
        %v1930 = vrot.slane %v1796, %v1929
        %v1948 = vunpack.c.l.b16 %v1780
        %v1949 = vunpack.c.l.b16 %v1781
        %v1950 = vunpack.c.l.b16 %v1782
        %v1951 = vunpack.c.l.b16 %v1783
        %v1952 = vunpack.c.l.b16 %v1784
        %v1953 = vunpack.c.l.b16 %v1785
        %v1954 = vunpack.c.l.b16 %v1786
        %v1955 = vunpack.c.l.b16 %v1787
        %v1956 = vunpack.c.l.b16 %v1788
        %v1957 = vunpack.c.l.b16 %v1789
        %v1958 = vunpack.c.l.b16 %v1790
        %v1959 = vunpack.c.l.b16 %v1791
        %v1960 = vunpack.c.l.b16 %v1792
        %v1961 = vunpack.c.l.b16 %v1793
        %v1962 = vunpack.c.l.b16 %v1794
        %v1963 = vunpack.c.l.b16 %v1795
        %v1964 = vpack.c.b16 %v1949, %v1948
        %v1965 = vpack.c.b16 %v1951, %v1950
        %v1966 = vpack.c.b16 %v1953, %v1952
        %v1967 = vpack.c.b16 %v1955, %v1954
        %v1968 = vpack.c.b16 %v1957, %v1956
        %v1969 = vpack.c.b16 %v1959, %v1958
        %v1970 = vpack.c.b16 %v1961, %v1960
        %v1971 = vpack.c.b16 %v1963, %v1962
        %1980 = vmatprep.subr.bf16.mxu0 0
        %1981 = vmatpush1.bf16.msra.mxu0 %v1964
        %1982 = vmatprep.subr.bf16.mxu0 0
        %1983 = vmatpush1.bf16.msra.mxu0 %v1965
        %1984 = vmatprep.subr.bf16.mxu0 0
        %1985 = vmatpush1.bf16.msra.mxu0 %v1966
        %1986 = vmatprep.subr.bf16.mxu0 0
        %1987 = vmatpush1.bf16.msra.mxu0 %v1967
        %1988 = vmatprep.subr.bf16.mxu0 0
        %1989 = vmatpush1.bf16.msra.mxu0 %v1968
        %1990 = vmatprep.subr.bf16.mxu0 0
        %1991 = vmatpush1.bf16.msra.mxu0 %v1969
        %1992 = vmatprep.subr.bf16.mxu0 0
        %1993 = vmatpush1.bf16.msra.mxu0 %v1970
        %1994 = vmatprep.subr.bf16.mxu0 0
        %1995 = vmatpush1.bf16.msra.mxu0 %v1971
        %1996 = vmatprep.subr.bf16.mxu0 0
        %1997 = vmatpush1.bf16.msra.mxu0 0
        %1998 = vmatprep.subr.bf16.mxu0 0
        %1999 = vmatpush1.bf16.msra.mxu0 0
        %2000 = vmatprep.subr.bf16.mxu0 0
        %2001 = vmatpush1.bf16.msra.mxu0 0
        %2002 = vmatprep.subr.bf16.mxu0 0
        %2003 = vmatpush1.bf16.msra.mxu0 0
        %2004 = vmatprep.subr.bf16.mxu0 0
        %2005 = vmatpush1.bf16.msra.mxu0 0
        %2006 = vmatprep.subr.bf16.mxu0 0
        %2007 = vmatpush1.bf16.msra.mxu0 0
        %2008 = vmatprep.subr.bf16.mxu0 0
        %2009 = vmatpush1.bf16.msra.mxu0 0
        %2010 = vmatprep.subr.bf16.mxu0 0
        %2011 = vmatpush1.bf16.msra.mxu0 0
        %2012 = vmatprep.mubr.bf16.mxu0 0
        %2013 = vmatmul.mubr.bf16.gmra.mrb[0].mxu0 %v1762
        %v2014 = vpop.f32.mrb[0].mxu0
        %v2015 = vadd.f32 %v1930, %v2014
        %v2016 = vpop.f32.mrb[0].mxu0
        %v2017 = vpop.f32.mrb[0].mxu0
        %v2018 = vpop.f32.mrb[0].mxu0
        %2019 = vdwg.mxu0
        %v2020 = vpack.c.bf16 %v2015, %v2015
        %v2022 = vlaneseq
        %v2023 = vshrl.u32 %v2022, 7
        %v2024 = vsub.s32 0, %v2023
        %v2025 = vrot.slane %v1813, %v2024
        %v2043 = vunpack.c.l.b16 %v1797
        %v2044 = vunpack.c.l.b16 %v1798
        %v2045 = vunpack.c.l.b16 %v1799
        %v2046 = vunpack.c.l.b16 %v1800
        %v2047 = vunpack.c.l.b16 %v1801
        %v2048 = vunpack.c.l.b16 %v1802
        %v2049 = vunpack.c.l.b16 %v1803
        %v2050 = vunpack.c.l.b16 %v1804
        %v2051 = vunpack.c.l.b16 %v1805
        %v2052 = vunpack.c.l.b16 %v1806
        %v2053 = vunpack.c.l.b16 %v1807
        %v2054 = vunpack.c.l.b16 %v1808
        %v2055 = vunpack.c.l.b16 %v1809
        %v2056 = vunpack.c.l.b16 %v1810
        %v2057 = vunpack.c.l.b16 %v1811
        %v2058 = vunpack.c.l.b16 %v1812
        %v2059 = vpack.c.b16 %v2044, %v2043
        %v2060 = vpack.c.b16 %v2046, %v2045
        %v2061 = vpack.c.b16 %v2048, %v2047
        %v2062 = vpack.c.b16 %v2050, %v2049
        %v2063 = vpack.c.b16 %v2052, %v2051
        %v2064 = vpack.c.b16 %v2054, %v2053
        %v2065 = vpack.c.b16 %v2056, %v2055
        %v2066 = vpack.c.b16 %v2058, %v2057
        %2075 = vmatprep.subr.bf16.mxu0 0
        %2076 = vmatpush1.bf16.msra.mxu0 %v2059
        %2077 = vmatprep.subr.bf16.mxu0 0
        %2078 = vmatpush1.bf16.msra.mxu0 %v2060
        %2079 = vmatprep.subr.bf16.mxu0 0
        %2080 = vmatpush1.bf16.msra.mxu0 %v2061
        %2081 = vmatprep.subr.bf16.mxu0 0
        %2082 = vmatpush1.bf16.msra.mxu0 %v2062
        %2083 = vmatprep.subr.bf16.mxu0 0
        %2084 = vmatpush1.bf16.msra.mxu0 %v2063
        %2085 = vmatprep.subr.bf16.mxu0 0
        %2086 = vmatpush1.bf16.msra.mxu0 %v2064
        %2087 = vmatprep.subr.bf16.mxu0 0
        %2088 = vmatpush1.bf16.msra.mxu0 %v2065
        %2089 = vmatprep.subr.bf16.mxu0 0
        %2090 = vmatpush1.bf16.msra.mxu0 %v2066
        %2091 = vmatprep.subr.bf16.mxu0 0
        %2092 = vmatpush1.bf16.msra.mxu0 0
        %2093 = vmatprep.subr.bf16.mxu0 0
        %2094 = vmatpush1.bf16.msra.mxu0 0
        %2095 = vmatprep.subr.bf16.mxu0 0
        %2096 = vmatpush1.bf16.msra.mxu0 0
        %2097 = vmatprep.subr.bf16.mxu0 0
        %2098 = vmatpush1.bf16.msra.mxu0 0
        %2099 = vmatprep.subr.bf16.mxu0 0
        %2100 = vmatpush1.bf16.msra.mxu0 0
        %2101 = vmatprep.subr.bf16.mxu0 0
        %2102 = vmatpush1.bf16.msra.mxu0 0
        %2103 = vmatprep.subr.bf16.mxu0 0
        %2104 = vmatpush1.bf16.msra.mxu0 0
        %2105 = vmatprep.subr.bf16.mxu0 0
        %2106 = vmatpush1.bf16.msra.mxu0 0
        %2107 = vmatprep.mubr.bf16.mxu0 0
        %2108 = vmatmul.mubr.bf16.gmra.mrb[0].mxu0 %v1762
        %v2109 = vpop.f32.mrb[0].mxu0
        %v2110 = vadd.f32 %v2025, %v2109
        %v2111 = vpop.f32.mrb[0].mxu0
        %v2112 = vpop.f32.mrb[0].mxu0
        %v2113 = vpop.f32.mrb[0].mxu0
        %2114 = vdwg.mxu0
        %v2115 = vpack.c.bf16 %v2110, %v2110
        %vm2116 = vcmask 130048
        %v2118 = vsel %vm2116, %v1925, 0
        %v2121 = vsel %vm2116, %v2020, 0
        %2123 = vmatprep.subr.bf16.mxu0 0
        %2124 = vmatpush1.bf16.xpose.msra.mxu0 %v2121
        %2125 = vmatprep.subr.bf16.mxu0 0
        %2126 = vmatpush1.bf16.xpose.msra.mxu0 0
        %2127 = vmatprep.subr.bf16.mxu0 0
        %2128 = vmatpush1.bf16.xpose.msra.mxu0 0
        %2129 = vmatprep.subr.bf16.mxu0 0
        %2130 = vmatpush1.bf16.xpose.msra.mxu0 0
        %2131 = vmatprep.subr.bf16.mxu0 0
        %2132 = vmatpush1.bf16.xpose.msra.mxu0 0
        %2133 = vmatprep.subr.bf16.mxu0 0
        %2134 = vmatpush1.bf16.xpose.msra.mxu0 0
        %2135 = vmatprep.subr.bf16.mxu0 0
        %2136 = vmatpush1.bf16.xpose.msra.mxu0 0
        %2137 = vmatprep.subr.bf16.mxu0 0
        %2138 = vmatpush1.bf16.xpose.msra.mxu0 0
        %2139 = vmatprep.subr.bf16.mxu0 0
        %2140 = vmatpush1.bf16.xpose.msra.mxu0 0
        %2141 = vmatprep.subr.bf16.mxu0 0
        %2142 = vmatpush1.bf16.xpose.msra.mxu0 0
        %2143 = vmatprep.subr.bf16.mxu0 0
        %2144 = vmatpush1.bf16.xpose.msra.mxu0 0
        %2145 = vmatprep.subr.bf16.mxu0 0
        %2146 = vmatpush1.bf16.xpose.msra.mxu0 0
        %2147 = vmatprep.subr.bf16.mxu0 0
        %2148 = vmatpush1.bf16.xpose.msra.mxu0 0
        %2149 = vmatprep.subr.bf16.mxu0 0
        %2150 = vmatpush1.bf16.xpose.msra.mxu0 0
        %2151 = vmatprep.subr.bf16.mxu0 0
        %2152 = vmatpush1.bf16.xpose.msra.mxu0 0
        %2153 = vmatprep.subr.bf16.mxu0 0
        %2154 = vmatpush1.bf16.xpose.msra.mxu0 0
        %2155 = vmatprep.mubr.bf16.mxu0 0
        %2156 = vmatmul.mubr.bf16.gmra.mrb[0].mxu0 %v2118
        %v2157 = vpop.f32.mrb[0].mxu0
        %v2158 = vadd.f32 %v1724, %v2157
        %v2159 = vpop.f32.mrb[0].mxu0
        %v2160 = vpop.f32.mrb[0].mxu0
        %v2161 = vpop.f32.mrb[0].mxu0
        %2162 = vdwg.mxu0
        %vm2163 = vcmask 64512
        %v2164 = vsel %vm2163, %v2158, -inf
        %2165 = vmax.xlane.f32.xlu0 %v2164
        %v2166 = vpop.xlane.xlu0 %2165
        %v2167 = vsub.f32 %v2158, %v2166
        %v2168 = vmul.f32 %v2167, 1.442695
        %v2169 = vpow.pop %v2168
        %v2170 = vsel %vm2163, %v2169, 0.0
        %2171 = vadd.xlane.f32.xlu0 %v2170
        %v2172 = vpop.xlane.xlu0 %2171
        %v2173 = vrcp.pop %v2172
        %v2174 = vmul.f32 %v2169, %v2173
        %v2175 = vpack.c.bf16 %v2174, %v2174
        %v2177 = vsel %vm2163, %v2175, 0
        %vm2179 = vcmask 1043456
        %v2181 = vsel %vm2179, %v2115, 0
        %2183 = vmatprep.subr.bf16.mxu0 0
        %2184 = vmatpush1.bf16.msra.mxu0 %v2181
        %2185 = vmatprep.subr.bf16.mxu0 0
        %2186 = vmatpush1.bf16.msra.mxu0 0
        %2187 = vmatprep.subr.bf16.mxu0 0
        %2188 = vmatpush1.bf16.msra.mxu0 0
        %2189 = vmatprep.subr.bf16.mxu0 0
        %2190 = vmatpush1.bf16.msra.mxu0 0
        %2191 = vmatprep.subr.bf16.mxu0 0
        %2192 = vmatpush1.bf16.msra.mxu0 0
        %2193 = vmatprep.subr.bf16.mxu0 0
        %2194 = vmatpush1.bf16.msra.mxu0 0
        %2195 = vmatprep.subr.bf16.mxu0 0
        %2196 = vmatpush1.bf16.msra.mxu0 0
        %2197 = vmatprep.subr.bf16.mxu0 0
        %2198 = vmatpush1.bf16.msra.mxu0 0
        %2199 = vmatprep.subr.bf16.mxu0 0
        %2200 = vmatpush1.bf16.msra.mxu0 0
        %2201 = vmatprep.subr.bf16.mxu0 0
        %2202 = vmatpush1.bf16.msra.mxu0 0
        %2203 = vmatprep.subr.bf16.mxu0 0
        %2204 = vmatpush1.bf16.msra.mxu0 0
        %2205 = vmatprep.subr.bf16.mxu0 0
        %2206 = vmatpush1.bf16.msra.mxu0 0
        %2207 = vmatprep.subr.bf16.mxu0 0
        %2208 = vmatpush1.bf16.msra.mxu0 0
        %2209 = vmatprep.subr.bf16.mxu0 0
        %2210 = vmatpush1.bf16.msra.mxu0 0
        %2211 = vmatprep.subr.bf16.mxu0 0
        %2212 = vmatpush1.bf16.msra.mxu0 0
        %2213 = vmatprep.subr.bf16.mxu0 0
        %2214 = vmatpush1.bf16.msra.mxu0 0
        %2215 = vmatprep.mubr.bf16.mxu0 0
        %2216 = vmatmul.mubr.bf16.gmra.mrb[0].mxu0 %v2177
        %v2217 = vpop.f32.mrb[0].mxu0
        %v2218 = vadd.f32 0.0, %v2217
        %v2219 = vpop.f32.mrb[0].mxu0
        %v2220 = vpop.f32.mrb[0].mxu0
        %v2221 = vpop.f32.mrb[0].mxu0
        %2222 = vdwg.mxu0
        %2224 = vrot.lane.b32.xlu0 %v1925, 112
        %v2225 = vpop.permute.xlu0 %2224
        %2227 = vrot.lane.b32.xlu0 %v2020, 112
        %v2228 = vpop.permute.xlu0 %2227
        %v2230 = vsel %vm2116, %v2225, 0
        %v2233 = vsel %vm2116, %v2228, 0
        %2235 = vmatprep.subr.bf16.mxu0 0
        %2236 = vmatpush1.bf16.xpose.msra.mxu0 %v2233
        %2237 = vmatprep.subr.bf16.mxu0 0
        %2238 = vmatpush1.bf16.xpose.msra.mxu0 0
        %2239 = vmatprep.subr.bf16.mxu0 0
        %2240 = vmatpush1.bf16.xpose.msra.mxu0 0
        %2241 = vmatprep.subr.bf16.mxu0 0
        %2242 = vmatpush1.bf16.xpose.msra.mxu0 0
        %2243 = vmatprep.subr.bf16.mxu0 0
        %2244 = vmatpush1.bf16.xpose.msra.mxu0 0
        %2245 = vmatprep.subr.bf16.mxu0 0
        %2246 = vmatpush1.bf16.xpose.msra.mxu0 0
        %2247 = vmatprep.subr.bf16.mxu0 0
        %2248 = vmatpush1.bf16.xpose.msra.mxu0 0
        %2249 = vmatprep.subr.bf16.mxu0 0
        %2250 = vmatpush1.bf16.xpose.msra.mxu0 0
        %2251 = vmatprep.subr.bf16.mxu0 0
        %2252 = vmatpush1.bf16.xpose.msra.mxu0 0
        %2253 = vmatprep.subr.bf16.mxu0 0
        %2254 = vmatpush1.bf16.xpose.msra.mxu0 0
        %2255 = vmatprep.subr.bf16.mxu0 0
        %2256 = vmatpush1.bf16.xpose.msra.mxu0 0
        %2257 = vmatprep.subr.bf16.mxu0 0
        %2258 = vmatpush1.bf16.xpose.msra.mxu0 0
        %2259 = vmatprep.subr.bf16.mxu0 0
        %2260 = vmatpush1.bf16.xpose.msra.mxu0 0
        %2261 = vmatprep.subr.bf16.mxu0 0
        %2262 = vmatpush1.bf16.xpose.msra.mxu0 0
        %2263 = vmatprep.subr.bf16.mxu0 0
        %2264 = vmatpush1.bf16.xpose.msra.mxu0 0
        %2265 = vmatprep.subr.bf16.mxu0 0
        %2266 = vmatpush1.bf16.xpose.msra.mxu0 0
        %2267 = vmatprep.mubr.bf16.mxu0 0
        %2268 = vmatmul.mubr.bf16.gmra.mrb[0].mxu0 %v2230
        %v2269 = vpop.f32.mrb[0].mxu0
        %v2270 = vadd.f32 %v1724, %v2269
        %v2271 = vpop.f32.mrb[0].mxu0
        %v2272 = vpop.f32.mrb[0].mxu0
        %v2273 = vpop.f32.mrb[0].mxu0
        %2274 = vdwg.mxu0
        %v2275 = vsel %vm2163, %v2270, -inf
        %2276 = vmax.xlane.f32.xlu0 %v2275
        %v2277 = vpop.xlane.xlu0 %2276
        %v2278 = vsub.f32 %v2270, %v2277
        %v2279 = vmul.f32 %v2278, 1.442695
        %v2280 = vpow.pop %v2279
        %v2281 = vsel %vm2163, %v2280, 0.0
        %2282 = vadd.xlane.f32.xlu0 %v2281
        %v2283 = vpop.xlane.xlu0 %2282
        %v2284 = vrcp.pop %v2283
        %v2285 = vmul.f32 %v2280, %v2284
        %v2286 = vpack.c.bf16 %v2285, %v2285
        %2288 = vrot.lane.b32.xlu0 %v2115, 112
        %v2289 = vpop.permute.xlu0 %2288
        %v2291 = vsel %vm2163, %v2286, 0
        %v2294 = vsel %vm2179, %v2289, 0
        %2296 = vmatprep.subr.bf16.mxu0 0
        %2297 = vmatpush1.bf16.msra.mxu0 %v2294
        %2298 = vmatprep.subr.bf16.mxu0 0
        %2299 = vmatpush1.bf16.msra.mxu0 0
        %2300 = vmatprep.subr.bf16.mxu0 0
        %2301 = vmatpush1.bf16.msra.mxu0 0
        %2302 = vmatprep.subr.bf16.mxu0 0
        %2303 = vmatpush1.bf16.msra.mxu0 0
        %2304 = vmatprep.subr.bf16.mxu0 0
        %2305 = vmatpush1.bf16.msra.mxu0 0
        %2306 = vmatprep.subr.bf16.mxu0 0
        %2307 = vmatpush1.bf16.msra.mxu0 0
        %2308 = vmatprep.subr.bf16.mxu0 0
        %2309 = vmatpush1.bf16.msra.mxu0 0
        %2310 = vmatprep.subr.bf16.mxu0 0
        %2311 = vmatpush1.bf16.msra.mxu0 0
        %2312 = vmatprep.subr.bf16.mxu0 0
        %2313 = vmatpush1.bf16.msra.mxu0 0
        %2314 = vmatprep.subr.bf16.mxu0 0
        %2315 = vmatpush1.bf16.msra.mxu0 0
        %2316 = vmatprep.subr.bf16.mxu0 0
        %2317 = vmatpush1.bf16.msra.mxu0 0
        %2318 = vmatprep.subr.bf16.mxu0 0
        %2319 = vmatpush1.bf16.msra.mxu0 0
        %2320 = vmatprep.subr.bf16.mxu0 0
        %2321 = vmatpush1.bf16.msra.mxu0 0
        %2322 = vmatprep.subr.bf16.mxu0 0
        %2323 = vmatpush1.bf16.msra.mxu0 0
        %2324 = vmatprep.subr.bf16.mxu0 0
        %2325 = vmatpush1.bf16.msra.mxu0 0
        %2326 = vmatprep.subr.bf16.mxu0 0
        %2327 = vmatpush1.bf16.msra.mxu0 0
        %2328 = vmatprep.mubr.bf16.mxu0 0
        %2329 = vmatmul.mubr.bf16.gmra.mrb[0].mxu0 %v2291
        %v2330 = vpop.f32.mrb[0].mxu0
        %v2331 = vadd.f32 0.0, %v2330
        %v2332 = vpop.f32.mrb[0].mxu0
        %v2333 = vpop.f32.mrb[0].mxu0
        %v2334 = vpop.f32.mrb[0].mxu0
        %2335 = vdwg.mxu0
        %2336 = vrot.lane.b32.xlu0 %v1925, 96
        %v2337 = vpop.permute.xlu0 %2336
        %2338 = vrot.lane.b32.xlu0 %v2020, 96
        %v2339 = vpop.permute.xlu0 %2338
        %v2341 = vsel %vm2116, %v2337, 0
        %v2344 = vsel %vm2116, %v2339, 0
        %2346 = vmatprep.subr.bf16.mxu0 0
        %2347 = vmatpush1.bf16.xpose.msra.mxu0 %v2344
        %2348 = vmatprep.subr.bf16.mxu0 0
        %2349 = vmatpush1.bf16.xpose.msra.mxu0 0
        %2350 = vmatprep.subr.bf16.mxu0 0
        %2351 = vmatpush1.bf16.xpose.msra.mxu0 0
        %2352 = vmatprep.subr.bf16.mxu0 0
        %2353 = vmatpush1.bf16.xpose.msra.mxu0 0
        %2354 = vmatprep.subr.bf16.mxu0 0
        %2355 = vmatpush1.bf16.xpose.msra.mxu0 0
        %2356 = vmatprep.subr.bf16.mxu0 0
        %2357 = vmatpush1.bf16.xpose.msra.mxu0 0
        %2358 = vmatprep.subr.bf16.mxu0 0
        %2359 = vmatpush1.bf16.xpose.msra.mxu0 0
        %2360 = vmatprep.subr.bf16.mxu0 0
        %2361 = vmatpush1.bf16.xpose.msra.mxu0 0
        %2362 = vmatprep.subr.bf16.mxu0 0
        %2363 = vmatpush1.bf16.xpose.msra.mxu0 0
        %2364 = vmatprep.subr.bf16.mxu0 0
        %2365 = vmatpush1.bf16.xpose.msra.mxu0 0
        %2366 = vmatprep.subr.bf16.mxu0 0
        %2367 = vmatpush1.bf16.xpose.msra.mxu0 0
        %2368 = vmatprep.subr.bf16.mxu0 0
        %2369 = vmatpush1.bf16.xpose.msra.mxu0 0
        %2370 = vmatprep.subr.bf16.mxu0 0
        %2371 = vmatpush1.bf16.xpose.msra.mxu0 0
        %2372 = vmatprep.subr.bf16.mxu0 0
        %2373 = vmatpush1.bf16.xpose.msra.mxu0 0
        %2374 = vmatprep.subr.bf16.mxu0 0
        %2375 = vmatpush1.bf16.xpose.msra.mxu0 0
        %2376 = vmatprep.subr.bf16.mxu0 0
        %2377 = vmatpush1.bf16.xpose.msra.mxu0 0
        %2378 = vmatprep.mubr.bf16.mxu0 0
        %2379 = vmatmul.mubr.bf16.gmra.mrb[0].mxu0 %v2341
        %v2380 = vpop.f32.mrb[0].mxu0
        %v2381 = vadd.f32 %v1724, %v2380
        %v2382 = vpop.f32.mrb[0].mxu0
        %v2383 = vpop.f32.mrb[0].mxu0
        %v2384 = vpop.f32.mrb[0].mxu0
        %2385 = vdwg.mxu0
        %v2386 = vsel %vm2163, %v2381, -inf
        %2387 = vmax.xlane.f32.xlu0 %v2386
        %v2388 = vpop.xlane.xlu0 %2387
        %v2389 = vsub.f32 %v2381, %v2388
        %v2390 = vmul.f32 %v2389, 1.442695
        %v2391 = vpow.pop %v2390
        %v2392 = vsel %vm2163, %v2391, 0.0
        %2393 = vadd.xlane.f32.xlu0 %v2392
        %v2394 = vpop.xlane.xlu0 %2393
        %v2395 = vrcp.pop %v2394
        %v2396 = vmul.f32 %v2391, %v2395
        %v2397 = vpack.c.bf16 %v2396, %v2396
        %2398 = vrot.lane.b32.xlu0 %v2115, 96
        %v2399 = vpop.permute.xlu0 %2398
        %v2401 = vsel %vm2163, %v2397, 0
        %v2404 = vsel %vm2179, %v2399, 0
        %2406 = vmatprep.subr.bf16.mxu0 0
        %2407 = vmatpush1.bf16.msra.mxu0 %v2404
        %2408 = vmatprep.subr.bf16.mxu0 0
        %2409 = vmatpush1.bf16.msra.mxu0 0
        %2410 = vmatprep.subr.bf16.mxu0 0
        %2411 = vmatpush1.bf16.msra.mxu0 0
        %2412 = vmatprep.subr.bf16.mxu0 0
        %2413 = vmatpush1.bf16.msra.mxu0 0
        %2414 = vmatprep.subr.bf16.mxu0 0
        %2415 = vmatpush1.bf16.msra.mxu0 0
        %2416 = vmatprep.subr.bf16.mxu0 0
        %2417 = vmatpush1.bf16.msra.mxu0 0
        %2418 = vmatprep.subr.bf16.mxu0 0
        %2419 = vmatpush1.bf16.msra.mxu0 0
        %2420 = vmatprep.subr.bf16.mxu0 0
        %2421 = vmatpush1.bf16.msra.mxu0 0
        %2422 = vmatprep.subr.bf16.mxu0 0
        %2423 = vmatpush1.bf16.msra.mxu0 0
        %2424 = vmatprep.subr.bf16.mxu0 0
        %2425 = vmatpush1.bf16.msra.mxu0 0
        %2426 = vmatprep.subr.bf16.mxu0 0
        %2427 = vmatpush1.bf16.msra.mxu0 0
        %2428 = vmatprep.subr.bf16.mxu0 0
        %2429 = vmatpush1.bf16.msra.mxu0 0
        %2430 = vmatprep.subr.bf16.mxu0 0
        %2431 = vmatpush1.bf16.msra.mxu0 0
        %2432 = vmatprep.subr.bf16.mxu0 0
        %2433 = vmatpush1.bf16.msra.mxu0 0
        %2434 = vmatprep.subr.bf16.mxu0 0
        %2435 = vmatpush1.bf16.msra.mxu0 0
        %2436 = vmatprep.subr.bf16.mxu0 0
        %2437 = vmatpush1.bf16.msra.mxu0 0
        %2438 = vmatprep.mubr.bf16.mxu0 0
        %2439 = vmatmul.mubr.bf16.gmra.mrb[0].mxu0 %v2401
        %v2440 = vpop.f32.mrb[0].mxu0
        %v2441 = vadd.f32 0.0, %v2440
        %v2442 = vpop.f32.mrb[0].mxu0
        %v2443 = vpop.f32.mrb[0].mxu0
        %v2444 = vpop.f32.mrb[0].mxu0
        %2445 = vdwg.mxu0
        %2446 = vrot.lane.b32.xlu0 %v1925, 80
        %v2447 = vpop.permute.xlu0 %2446
        %2448 = vrot.lane.b32.xlu0 %v2020, 80
        %v2449 = vpop.permute.xlu0 %2448
        %v2451 = vsel %vm2116, %v2447, 0
        %v2454 = vsel %vm2116, %v2449, 0
        %2456 = vmatprep.subr.bf16.mxu0 0
        %2457 = vmatpush1.bf16.xpose.msra.mxu0 %v2454
        %2458 = vmatprep.subr.bf16.mxu0 0
        %2459 = vmatpush1.bf16.xpose.msra.mxu0 0
        %2460 = vmatprep.subr.bf16.mxu0 0
        %2461 = vmatpush1.bf16.xpose.msra.mxu0 0
        %2462 = vmatprep.subr.bf16.mxu0 0
        %2463 = vmatpush1.bf16.xpose.msra.mxu0 0
        %2464 = vmatprep.subr.bf16.mxu0 0
        %2465 = vmatpush1.bf16.xpose.msra.mxu0 0
        %2466 = vmatprep.subr.bf16.mxu0 0
        %2467 = vmatpush1.bf16.xpose.msra.mxu0 0
        %2468 = vmatprep.subr.bf16.mxu0 0
        %2469 = vmatpush1.bf16.xpose.msra.mxu0 0
        %2470 = vmatprep.subr.bf16.mxu0 0
        %2471 = vmatpush1.bf16.xpose.msra.mxu0 0
        %2472 = vmatprep.subr.bf16.mxu0 0
        %2473 = vmatpush1.bf16.xpose.msra.mxu0 0
        %2474 = vmatprep.subr.bf16.mxu0 0
        %2475 = vmatpush1.bf16.xpose.msra.mxu0 0
        %2476 = vmatprep.subr.bf16.mxu0 0
        %2477 = vmatpush1.bf16.xpose.msra.mxu0 0
        %2478 = vmatprep.subr.bf16.mxu0 0
        %2479 = vmatpush1.bf16.xpose.msra.mxu0 0
        %2480 = vmatprep.subr.bf16.mxu0 0
        %2481 = vmatpush1.bf16.xpose.msra.mxu0 0
        %2482 = vmatprep.subr.bf16.mxu0 0
        %2483 = vmatpush1.bf16.xpose.msra.mxu0 0
        %2484 = vmatprep.subr.bf16.mxu0 0
        %2485 = vmatpush1.bf16.xpose.msra.mxu0 0
        %2486 = vmatprep.subr.bf16.mxu0 0
        %2487 = vmatpush1.bf16.xpose.msra.mxu0 0
        %2488 = vmatprep.mubr.bf16.mxu0 0
        %2489 = vmatmul.mubr.bf16.gmra.mrb[0].mxu0 %v2451
        %v2490 = vpop.f32.mrb[0].mxu0
        %v2491 = vadd.f32 %v1724, %v2490
        %v2492 = vpop.f32.mrb[0].mxu0
        %v2493 = vpop.f32.mrb[0].mxu0
        %v2494 = vpop.f32.mrb[0].mxu0
        %2495 = vdwg.mxu0
        %v2496 = vsel %vm2163, %v2491, -inf
        %2497 = vmax.xlane.f32.xlu0 %v2496
        %v2498 = vpop.xlane.xlu0 %2497
        %v2499 = vsub.f32 %v2491, %v2498
        %v2500 = vmul.f32 %v2499, 1.442695
        %v2501 = vpow.pop %v2500
        %v2502 = vsel %vm2163, %v2501, 0.0
        %2503 = vadd.xlane.f32.xlu0 %v2502
        %v2504 = vpop.xlane.xlu0 %2503
        %v2505 = vrcp.pop %v2504
        %v2506 = vmul.f32 %v2501, %v2505
        %v2507 = vpack.c.bf16 %v2506, %v2506
        %2508 = vrot.lane.b32.xlu0 %v2115, 80
        %v2509 = vpop.permute.xlu0 %2508
        %v2511 = vsel %vm2163, %v2507, 0
        %v2514 = vsel %vm2179, %v2509, 0
        %2516 = vmatprep.subr.bf16.mxu0 0
        %2517 = vmatpush1.bf16.msra.mxu0 %v2514
        %2518 = vmatprep.subr.bf16.mxu0 0
        %2519 = vmatpush1.bf16.msra.mxu0 0
        %2520 = vmatprep.subr.bf16.mxu0 0
        %2521 = vmatpush1.bf16.msra.mxu0 0
        %2522 = vmatprep.subr.bf16.mxu0 0
        %2523 = vmatpush1.bf16.msra.mxu0 0
        %2524 = vmatprep.subr.bf16.mxu0 0
        %2525 = vmatpush1.bf16.msra.mxu0 0
        %2526 = vmatprep.subr.bf16.mxu0 0
        %2527 = vmatpush1.bf16.msra.mxu0 0
        %2528 = vmatprep.subr.bf16.mxu0 0
        %2529 = vmatpush1.bf16.msra.mxu0 0
        %2530 = vmatprep.subr.bf16.mxu0 0
        %2531 = vmatpush1.bf16.msra.mxu0 0
        %2532 = vmatprep.subr.bf16.mxu0 0
        %2533 = vmatpush1.bf16.msra.mxu0 0
        %2534 = vmatprep.subr.bf16.mxu0 0
        %2535 = vmatpush1.bf16.msra.mxu0 0
        %2536 = vmatprep.subr.bf16.mxu0 0
        %2537 = vmatpush1.bf16.msra.mxu0 0
        %2538 = vmatprep.subr.bf16.mxu0 0
        %2539 = vmatpush1.bf16.msra.mxu0 0
        %2540 = vmatprep.subr.bf16.mxu0 0
        %2541 = vmatpush1.bf16.msra.mxu0 0
        %2542 = vmatprep.subr.bf16.mxu0 0
        %2543 = vmatpush1.bf16.msra.mxu0 0
        %2544 = vmatprep.subr.bf16.mxu0 0
        %2545 = vmatpush1.bf16.msra.mxu0 0
        %2546 = vmatprep.subr.bf16.mxu0 0
        %2547 = vmatpush1.bf16.msra.mxu0 0
        %2548 = vmatprep.mubr.bf16.mxu0 0
        %2549 = vmatmul.mubr.bf16.gmra.mrb[0].mxu0 %v2511
        %v2550 = vpop.f32.mrb[0].mxu0
        %v2551 = vadd.f32 0.0, %v2550
        %v2552 = vpop.f32.mrb[0].mxu0
        %v2553 = vpop.f32.mrb[0].mxu0
        %v2554 = vpop.f32.mrb[0].mxu0
        %2555 = vdwg.mxu0
        %2556 = vrot.lane.b32.xlu0 %v1925, 64
        %v2557 = vpop.permute.xlu0 %2556
        %2558 = vrot.lane.b32.xlu0 %v2020, 64
        %v2559 = vpop.permute.xlu0 %2558
        %v2561 = vsel %vm2116, %v2557, 0
        %v2564 = vsel %vm2116, %v2559, 0
        %2566 = vmatprep.subr.bf16.mxu0 0
        %2567 = vmatpush1.bf16.xpose.msra.mxu0 %v2564
        %2568 = vmatprep.subr.bf16.mxu0 0
        %2569 = vmatpush1.bf16.xpose.msra.mxu0 0
        %2570 = vmatprep.subr.bf16.mxu0 0
        %2571 = vmatpush1.bf16.xpose.msra.mxu0 0
        %2572 = vmatprep.subr.bf16.mxu0 0
        %2573 = vmatpush1.bf16.xpose.msra.mxu0 0
        %2574 = vmatprep.subr.bf16.mxu0 0
        %2575 = vmatpush1.bf16.xpose.msra.mxu0 0
        %2576 = vmatprep.subr.bf16.mxu0 0
        %2577 = vmatpush1.bf16.xpose.msra.mxu0 0
        %2578 = vmatprep.subr.bf16.mxu0 0
        %2579 = vmatpush1.bf16.xpose.msra.mxu0 0
        %2580 = vmatprep.subr.bf16.mxu0 0
        %2581 = vmatpush1.bf16.xpose.msra.mxu0 0
        %2582 = vmatprep.subr.bf16.mxu0 0
        %2583 = vmatpush1.bf16.xpose.msra.mxu0 0
        %2584 = vmatprep.subr.bf16.mxu0 0
        %2585 = vmatpush1.bf16.xpose.msra.mxu0 0
        %2586 = vmatprep.subr.bf16.mxu0 0
        %2587 = vmatpush1.bf16.xpose.msra.mxu0 0
        %2588 = vmatprep.subr.bf16.mxu0 0
        %2589 = vmatpush1.bf16.xpose.msra.mxu0 0
        %2590 = vmatprep.subr.bf16.mxu0 0
        %2591 = vmatpush1.bf16.xpose.msra.mxu0 0
        %2592 = vmatprep.subr.bf16.mxu0 0
        %2593 = vmatpush1.bf16.xpose.msra.mxu0 0
        %2594 = vmatprep.subr.bf16.mxu0 0
        %2595 = vmatpush1.bf16.xpose.msra.mxu0 0
        %2596 = vmatprep.subr.bf16.mxu0 0
        %2597 = vmatpush1.bf16.xpose.msra.mxu0 0
        %2598 = vmatprep.mubr.bf16.mxu0 0
        %2599 = vmatmul.mubr.bf16.gmra.mrb[0].mxu0 %v2561
        %v2600 = vpop.f32.mrb[0].mxu0
        %v2601 = vadd.f32 %v1724, %v2600
        %v2602 = vpop.f32.mrb[0].mxu0
        %v2603 = vpop.f32.mrb[0].mxu0
        %v2604 = vpop.f32.mrb[0].mxu0
        %2605 = vdwg.mxu0
        %v2606 = vsel %vm2163, %v2601, -inf
        %2607 = vmax.xlane.f32.xlu0 %v2606
        %v2608 = vpop.xlane.xlu0 %2607
        %v2609 = vsub.f32 %v2601, %v2608
        %v2610 = vmul.f32 %v2609, 1.442695
        %v2611 = vpow.pop %v2610
        %v2612 = vsel %vm2163, %v2611, 0.0
        %2613 = vadd.xlane.f32.xlu0 %v2612
        %v2614 = vpop.xlane.xlu0 %2613
        %v2615 = vrcp.pop %v2614
        %v2616 = vmul.f32 %v2611, %v2615
        %v2617 = vpack.c.bf16 %v2616, %v2616
        %2618 = vrot.lane.b32.xlu0 %v2115, 64
        %v2619 = vpop.permute.xlu0 %2618
        %v2621 = vsel %vm2163, %v2617, 0
        %v2624 = vsel %vm2179, %v2619, 0
        %2626 = vmatprep.subr.bf16.mxu0 0
        %2627 = vmatpush1.bf16.msra.mxu0 %v2624
        %2628 = vmatprep.subr.bf16.mxu0 0
        %2629 = vmatpush1.bf16.msra.mxu0 0
        %2630 = vmatprep.subr.bf16.mxu0 0
        %2631 = vmatpush1.bf16.msra.mxu0 0
        %2632 = vmatprep.subr.bf16.mxu0 0
        %2633 = vmatpush1.bf16.msra.mxu0 0
        %2634 = vmatprep.subr.bf16.mxu0 0
        %2635 = vmatpush1.bf16.msra.mxu0 0
        %2636 = vmatprep.subr.bf16.mxu0 0
        %2637 = vmatpush1.bf16.msra.mxu0 0
        %2638 = vmatprep.subr.bf16.mxu0 0
        %2639 = vmatpush1.bf16.msra.mxu0 0
        %2640 = vmatprep.subr.bf16.mxu0 0
        %2641 = vmatpush1.bf16.msra.mxu0 0
        %2642 = vmatprep.subr.bf16.mxu0 0
        %2643 = vmatpush1.bf16.msra.mxu0 0
        %2644 = vmatprep.subr.bf16.mxu0 0
        %2645 = vmatpush1.bf16.msra.mxu0 0
        %2646 = vmatprep.subr.bf16.mxu0 0
        %2647 = vmatpush1.bf16.msra.mxu0 0
        %2648 = vmatprep.subr.bf16.mxu0 0
        %2649 = vmatpush1.bf16.msra.mxu0 0
        %2650 = vmatprep.subr.bf16.mxu0 0
        %2651 = vmatpush1.bf16.msra.mxu0 0
        %2652 = vmatprep.subr.bf16.mxu0 0
        %2653 = vmatpush1.bf16.msra.mxu0 0
        %2654 = vmatprep.subr.bf16.mxu0 0
        %2655 = vmatpush1.bf16.msra.mxu0 0
        %2656 = vmatprep.subr.bf16.mxu0 0
        %2657 = vmatpush1.bf16.msra.mxu0 0
        %2658 = vmatprep.mubr.bf16.mxu0 0
        %2659 = vmatmul.mubr.bf16.gmra.mrb[0].mxu0 %v2621
        %v2660 = vpop.f32.mrb[0].mxu0
        %v2661 = vadd.f32 0.0, %v2660
        %v2662 = vpop.f32.mrb[0].mxu0
        %v2663 = vpop.f32.mrb[0].mxu0
        %v2664 = vpop.f32.mrb[0].mxu0
        %2665 = vdwg.mxu0
        %2666 = vrot.lane.b32.xlu0 %v1925, 48
        %v2667 = vpop.permute.xlu0 %2666
        %2668 = vrot.lane.b32.xlu0 %v2020, 48
        %v2669 = vpop.permute.xlu0 %2668
        %v2671 = vsel %vm2116, %v2667, 0
        %v2674 = vsel %vm2116, %v2669, 0
        %2676 = vmatprep.subr.bf16.mxu0 0
        %2677 = vmatpush1.bf16.xpose.msra.mxu0 %v2674
        %2678 = vmatprep.subr.bf16.mxu0 0
        %2679 = vmatpush1.bf16.xpose.msra.mxu0 0
        %2680 = vmatprep.subr.bf16.mxu0 0
        %2681 = vmatpush1.bf16.xpose.msra.mxu0 0
        %2682 = vmatprep.subr.bf16.mxu0 0
        %2683 = vmatpush1.bf16.xpose.msra.mxu0 0
        %2684 = vmatprep.subr.bf16.mxu0 0
        %2685 = vmatpush1.bf16.xpose.msra.mxu0 0
        %2686 = vmatprep.subr.bf16.mxu0 0
        %2687 = vmatpush1.bf16.xpose.msra.mxu0 0
        %2688 = vmatprep.subr.bf16.mxu0 0
        %2689 = vmatpush1.bf16.xpose.msra.mxu0 0
        %2690 = vmatprep.subr.bf16.mxu0 0
        %2691 = vmatpush1.bf16.xpose.msra.mxu0 0
        %2692 = vmatprep.subr.bf16.mxu0 0
        %2693 = vmatpush1.bf16.xpose.msra.mxu0 0
        %2694 = vmatprep.subr.bf16.mxu0 0
        %2695 = vmatpush1.bf16.xpose.msra.mxu0 0
        %2696 = vmatprep.subr.bf16.mxu0 0
        %2697 = vmatpush1.bf16.xpose.msra.mxu0 0
        %2698 = vmatprep.subr.bf16.mxu0 0
        %2699 = vmatpush1.bf16.xpose.msra.mxu0 0
        %2700 = vmatprep.subr.bf16.mxu0 0
        %2701 = vmatpush1.bf16.xpose.msra.mxu0 0
        %2702 = vmatprep.subr.bf16.mxu0 0
        %2703 = vmatpush1.bf16.xpose.msra.mxu0 0
        %2704 = vmatprep.subr.bf16.mxu0 0
        %2705 = vmatpush1.bf16.xpose.msra.mxu0 0
        %2706 = vmatprep.subr.bf16.mxu0 0
        %2707 = vmatpush1.bf16.xpose.msra.mxu0 0
        %2708 = vmatprep.mubr.bf16.mxu0 0
        %2709 = vmatmul.mubr.bf16.gmra.mrb[0].mxu0 %v2671
        %v2710 = vpop.f32.mrb[0].mxu0
        %v2711 = vadd.f32 %v1724, %v2710
        %v2712 = vpop.f32.mrb[0].mxu0
        %v2713 = vpop.f32.mrb[0].mxu0
        %v2714 = vpop.f32.mrb[0].mxu0
        %2715 = vdwg.mxu0
        %v2716 = vsel %vm2163, %v2711, -inf
        %2717 = vmax.xlane.f32.xlu0 %v2716
        %v2718 = vpop.xlane.xlu0 %2717
        %v2719 = vsub.f32 %v2711, %v2718
        %v2720 = vmul.f32 %v2719, 1.442695
        %v2721 = vpow.pop %v2720
        %v2722 = vsel %vm2163, %v2721, 0.0
        %2723 = vadd.xlane.f32.xlu0 %v2722
        %v2724 = vpop.xlane.xlu0 %2723
        %v2725 = vrcp.pop %v2724
        %v2726 = vmul.f32 %v2721, %v2725
        %v2727 = vpack.c.bf16 %v2726, %v2726
        %2728 = vrot.lane.b32.xlu0 %v2115, 48
        %v2729 = vpop.permute.xlu0 %2728
        %v2731 = vsel %vm2163, %v2727, 0
        %v2734 = vsel %vm2179, %v2729, 0
        %2736 = vmatprep.subr.bf16.mxu0 0
        %2737 = vmatpush1.bf16.msra.mxu0 %v2734
        %2738 = vmatprep.subr.bf16.mxu0 0
        %2739 = vmatpush1.bf16.msra.mxu0 0
        %2740 = vmatprep.subr.bf16.mxu0 0
        %2741 = vmatpush1.bf16.msra.mxu0 0
        %2742 = vmatprep.subr.bf16.mxu0 0
        %2743 = vmatpush1.bf16.msra.mxu0 0
        %2744 = vmatprep.subr.bf16.mxu0 0
        %2745 = vmatpush1.bf16.msra.mxu0 0
        %2746 = vmatprep.subr.bf16.mxu0 0
        %2747 = vmatpush1.bf16.msra.mxu0 0
        %2748 = vmatprep.subr.bf16.mxu0 0
        %2749 = vmatpush1.bf16.msra.mxu0 0
        %2750 = vmatprep.subr.bf16.mxu0 0
        %2751 = vmatpush1.bf16.msra.mxu0 0
        %2752 = vmatprep.subr.bf16.mxu0 0
        %2753 = vmatpush1.bf16.msra.mxu0 0
        %2754 = vmatprep.subr.bf16.mxu0 0
        %2755 = vmatpush1.bf16.msra.mxu0 0
        %2756 = vmatprep.subr.bf16.mxu0 0
        %2757 = vmatpush1.bf16.msra.mxu0 0
        %2758 = vmatprep.subr.bf16.mxu0 0
        %2759 = vmatpush1.bf16.msra.mxu0 0
        %2760 = vmatprep.subr.bf16.mxu0 0
        %2761 = vmatpush1.bf16.msra.mxu0 0
        %2762 = vmatprep.subr.bf16.mxu0 0
        %2763 = vmatpush1.bf16.msra.mxu0 0
        %2764 = vmatprep.subr.bf16.mxu0 0
        %2765 = vmatpush1.bf16.msra.mxu0 0
        %2766 = vmatprep.subr.bf16.mxu0 0
        %2767 = vmatpush1.bf16.msra.mxu0 0
        %2768 = vmatprep.mubr.bf16.mxu0 0
        %2769 = vmatmul.mubr.bf16.gmra.mrb[0].mxu0 %v2731
        %v2770 = vpop.f32.mrb[0].mxu0
        %v2771 = vadd.f32 0.0, %v2770
        %v2772 = vpop.f32.mrb[0].mxu0
        %v2773 = vpop.f32.mrb[0].mxu0
        %v2774 = vpop.f32.mrb[0].mxu0
        %2775 = vdwg.mxu0
        %2776 = vrot.lane.b32.xlu0 %v1925, 32
        %v2777 = vpop.permute.xlu0 %2776
        %2778 = vrot.lane.b32.xlu0 %v2020, 32
        %v2779 = vpop.permute.xlu0 %2778
        %v2781 = vsel %vm2116, %v2777, 0
        %v2784 = vsel %vm2116, %v2779, 0
        %2786 = vmatprep.subr.bf16.mxu0 0
        %2787 = vmatpush1.bf16.xpose.msra.mxu0 %v2784
        %2788 = vmatprep.subr.bf16.mxu0 0
        %2789 = vmatpush1.bf16.xpose.msra.mxu0 0
        %2790 = vmatprep.subr.bf16.mxu0 0
        %2791 = vmatpush1.bf16.xpose.msra.mxu0 0
        %2792 = vmatprep.subr.bf16.mxu0 0
        %2793 = vmatpush1.bf16.xpose.msra.mxu0 0
        %2794 = vmatprep.subr.bf16.mxu0 0
        %2795 = vmatpush1.bf16.xpose.msra.mxu0 0
        %2796 = vmatprep.subr.bf16.mxu0 0
        %2797 = vmatpush1.bf16.xpose.msra.mxu0 0
        %2798 = vmatprep.subr.bf16.mxu0 0
        %2799 = vmatpush1.bf16.xpose.msra.mxu0 0
        %2800 = vmatprep.subr.bf16.mxu0 0
        %2801 = vmatpush1.bf16.xpose.msra.mxu0 0
        %2802 = vmatprep.subr.bf16.mxu0 0
        %2803 = vmatpush1.bf16.xpose.msra.mxu0 0
        %2804 = vmatprep.subr.bf16.mxu0 0
        %2805 = vmatpush1.bf16.xpose.msra.mxu0 0
        %2806 = vmatprep.subr.bf16.mxu0 0
        %2807 = vmatpush1.bf16.xpose.msra.mxu0 0
        %2808 = vmatprep.subr.bf16.mxu0 0
        %2809 = vmatpush1.bf16.xpose.msra.mxu0 0
        %2810 = vmatprep.subr.bf16.mxu0 0
        %2811 = vmatpush1.bf16.xpose.msra.mxu0 0
        %2812 = vmatprep.subr.bf16.mxu0 0
        %2813 = vmatpush1.bf16.xpose.msra.mxu0 0
        %2814 = vmatprep.subr.bf16.mxu0 0
        %2815 = vmatpush1.bf16.xpose.msra.mxu0 0
        %2816 = vmatprep.subr.bf16.mxu0 0
        %2817 = vmatpush1.bf16.xpose.msra.mxu0 0
        %2818 = vmatprep.mubr.bf16.mxu0 0
        %2819 = vmatmul.mubr.bf16.gmra.mrb[0].mxu0 %v2781
        %v2820 = vpop.f32.mrb[0].mxu0
        %v2821 = vadd.f32 %v1724, %v2820
        %v2822 = vpop.f32.mrb[0].mxu0
        %v2823 = vpop.f32.mrb[0].mxu0
        %v2824 = vpop.f32.mrb[0].mxu0
        %2825 = vdwg.mxu0
        %v2826 = vsel %vm2163, %v2821, -inf
        %2827 = vmax.xlane.f32.xlu0 %v2826
        %v2828 = vpop.xlane.xlu0 %2827
        %v2829 = vsub.f32 %v2821, %v2828
        %v2830 = vmul.f32 %v2829, 1.442695
        %v2831 = vpow.pop %v2830
        %v2832 = vsel %vm2163, %v2831, 0.0
        %2833 = vadd.xlane.f32.xlu0 %v2832
        %v2834 = vpop.xlane.xlu0 %2833
        %v2835 = vrcp.pop %v2834
        %v2836 = vmul.f32 %v2831, %v2835
        %v2837 = vpack.c.bf16 %v2836, %v2836
        %2838 = vrot.lane.b32.xlu0 %v2115, 32
        %v2839 = vpop.permute.xlu0 %2838
        %v2841 = vsel %vm2163, %v2837, 0
        %v2844 = vsel %vm2179, %v2839, 0
        %2846 = vmatprep.subr.bf16.mxu0 0
        %2847 = vmatpush1.bf16.msra.mxu0 %v2844
        %2848 = vmatprep.subr.bf16.mxu0 0
        %2849 = vmatpush1.bf16.msra.mxu0 0
        %2850 = vmatprep.subr.bf16.mxu0 0
        %2851 = vmatpush1.bf16.msra.mxu0 0
        %2852 = vmatprep.subr.bf16.mxu0 0
        %2853 = vmatpush1.bf16.msra.mxu0 0
        %2854 = vmatprep.subr.bf16.mxu0 0
        %2855 = vmatpush1.bf16.msra.mxu0 0
        %2856 = vmatprep.subr.bf16.mxu0 0
        %2857 = vmatpush1.bf16.msra.mxu0 0
        %2858 = vmatprep.subr.bf16.mxu0 0
        %2859 = vmatpush1.bf16.msra.mxu0 0
        %2860 = vmatprep.subr.bf16.mxu0 0
        %2861 = vmatpush1.bf16.msra.mxu0 0
        %2862 = vmatprep.subr.bf16.mxu0 0
        %2863 = vmatpush1.bf16.msra.mxu0 0
        %2864 = vmatprep.subr.bf16.mxu0 0
        %2865 = vmatpush1.bf16.msra.mxu0 0
        %2866 = vmatprep.subr.bf16.mxu0 0
        %2867 = vmatpush1.bf16.msra.mxu0 0
        %2868 = vmatprep.subr.bf16.mxu0 0
        %2869 = vmatpush1.bf16.msra.mxu0 0
        %2870 = vmatprep.subr.bf16.mxu0 0
        %2871 = vmatpush1.bf16.msra.mxu0 0
        %2872 = vmatprep.subr.bf16.mxu0 0
        %2873 = vmatpush1.bf16.msra.mxu0 0
        %2874 = vmatprep.subr.bf16.mxu0 0
        %2875 = vmatpush1.bf16.msra.mxu0 0
        %2876 = vmatprep.subr.bf16.mxu0 0
        %2877 = vmatpush1.bf16.msra.mxu0 0
        %2878 = vmatprep.mubr.bf16.mxu0 0
        %2879 = vmatmul.mubr.bf16.gmra.mrb[0].mxu0 %v2841
        %v2880 = vpop.f32.mrb[0].mxu0
        %v2881 = vadd.f32 0.0, %v2880
        %v2882 = vpop.f32.mrb[0].mxu0
        %v2883 = vpop.f32.mrb[0].mxu0
        %v2884 = vpop.f32.mrb[0].mxu0
        %2885 = vdwg.mxu0
        %2886 = vrot.lane.b32.xlu0 %v1925, 16
        %v2887 = vpop.permute.xlu0 %2886
        %2888 = vrot.lane.b32.xlu0 %v2020, 16
        %v2889 = vpop.permute.xlu0 %2888
        %v2891 = vsel %vm2116, %v2887, 0
        %v2894 = vsel %vm2116, %v2889, 0
        %2896 = vmatprep.subr.bf16.mxu0 0
        %2897 = vmatpush1.bf16.xpose.msra.mxu0 %v2894
        %2898 = vmatprep.subr.bf16.mxu0 0
        %2899 = vmatpush1.bf16.xpose.msra.mxu0 0
        %2900 = vmatprep.subr.bf16.mxu0 0
        %2901 = vmatpush1.bf16.xpose.msra.mxu0 0
        %2902 = vmatprep.subr.bf16.mxu0 0
        %2903 = vmatpush1.bf16.xpose.msra.mxu0 0
        %2904 = vmatprep.subr.bf16.mxu0 0
        %2905 = vmatpush1.bf16.xpose.msra.mxu0 0
        %2906 = vmatprep.subr.bf16.mxu0 0
        %2907 = vmatpush1.bf16.xpose.msra.mxu0 0
        %2908 = vmatprep.subr.bf16.mxu0 0
        %2909 = vmatpush1.bf16.xpose.msra.mxu0 0
        %2910 = vmatprep.subr.bf16.mxu0 0
        %2911 = vmatpush1.bf16.xpose.msra.mxu0 0
        %2912 = vmatprep.subr.bf16.mxu0 0
        %2913 = vmatpush1.bf16.xpose.msra.mxu0 0
        %2914 = vmatprep.subr.bf16.mxu0 0
        %2915 = vmatpush1.bf16.xpose.msra.mxu0 0
        %2916 = vmatprep.subr.bf16.mxu0 0
        %2917 = vmatpush1.bf16.xpose.msra.mxu0 0
        %2918 = vmatprep.subr.bf16.mxu0 0
        %2919 = vmatpush1.bf16.xpose.msra.mxu0 0
        %2920 = vmatprep.subr.bf16.mxu0 0
        %2921 = vmatpush1.bf16.xpose.msra.mxu0 0
        %2922 = vmatprep.subr.bf16.mxu0 0
        %2923 = vmatpush1.bf16.xpose.msra.mxu0 0
        %2924 = vmatprep.subr.bf16.mxu0 0
        %2925 = vmatpush1.bf16.xpose.msra.mxu0 0
        %2926 = vmatprep.subr.bf16.mxu0 0
        %2927 = vmatpush1.bf16.xpose.msra.mxu0 0
        %2928 = vmatprep.mubr.bf16.mxu0 0
        %2929 = vmatmul.mubr.bf16.gmra.mrb[0].mxu0 %v2891
        %v2930 = vpop.f32.mrb[0].mxu0
        %v2931 = vadd.f32 %v1724, %v2930
        %v2932 = vpop.f32.mrb[0].mxu0
        %v2933 = vpop.f32.mrb[0].mxu0
        %v2934 = vpop.f32.mrb[0].mxu0
        %2935 = vdwg.mxu0
        %v2936 = vsel %vm2163, %v2931, -inf
        %2937 = vmax.xlane.f32.xlu0 %v2936
        %v2938 = vpop.xlane.xlu0 %2937
        %v2939 = vsub.f32 %v2931, %v2938
        %v2940 = vmul.f32 %v2939, 1.442695
        %v2941 = vpow.pop %v2940
        %v2942 = vsel %vm2163, %v2941, 0.0
        %2943 = vadd.xlane.f32.xlu0 %v2942
        %v2944 = vpop.xlane.xlu0 %2943
        %v2945 = vrcp.pop %v2944
        %v2946 = vmul.f32 %v2941, %v2945
        %v2947 = vpack.c.bf16 %v2946, %v2946
        %2948 = vrot.lane.b32.xlu0 %v2115, 16
        %v2949 = vpop.permute.xlu0 %2948
        %v2951 = vsel %vm2163, %v2947, 0
        %v2954 = vsel %vm2179, %v2949, 0
        %2956 = vmatprep.subr.bf16.mxu0 0
        %2957 = vmatpush1.bf16.msra.mxu0 %v2954
        %2958 = vmatprep.subr.bf16.mxu0 0
        %2959 = vmatpush1.bf16.msra.mxu0 0
        %2960 = vmatprep.subr.bf16.mxu0 0
        %2961 = vmatpush1.bf16.msra.mxu0 0
        %2962 = vmatprep.subr.bf16.mxu0 0
        %2963 = vmatpush1.bf16.msra.mxu0 0
        %2964 = vmatprep.subr.bf16.mxu0 0
        %2965 = vmatpush1.bf16.msra.mxu0 0
        %2966 = vmatprep.subr.bf16.mxu0 0
        %2967 = vmatpush1.bf16.msra.mxu0 0
        %2968 = vmatprep.subr.bf16.mxu0 0
        %2969 = vmatpush1.bf16.msra.mxu0 0
        %2970 = vmatprep.subr.bf16.mxu0 0
        %2971 = vmatpush1.bf16.msra.mxu0 0
        %2972 = vmatprep.subr.bf16.mxu0 0
        %2973 = vmatpush1.bf16.msra.mxu0 0
        %2974 = vmatprep.subr.bf16.mxu0 0
        %2975 = vmatpush1.bf16.msra.mxu0 0
        %2976 = vmatprep.subr.bf16.mxu0 0
        %2977 = vmatpush1.bf16.msra.mxu0 0
        %2978 = vmatprep.subr.bf16.mxu0 0
        %2979 = vmatpush1.bf16.msra.mxu0 0
        %2980 = vmatprep.subr.bf16.mxu0 0
        %2981 = vmatpush1.bf16.msra.mxu0 0
        %2982 = vmatprep.subr.bf16.mxu0 0
        %2983 = vmatpush1.bf16.msra.mxu0 0
        %2984 = vmatprep.subr.bf16.mxu0 0
        %2985 = vmatpush1.bf16.msra.mxu0 0
        %2986 = vmatprep.subr.bf16.mxu0 0
        %2987 = vmatpush1.bf16.msra.mxu0 0
        %2988 = vmatprep.mubr.bf16.mxu0 0
        %2989 = vmatmul.mubr.bf16.gmra.mrb[0].mxu0 %v2951
        %v2990 = vpop.f32.mrb[0].mxu0
        %v2991 = vadd.f32 0.0, %v2990
        %v2992 = vpop.f32.mrb[0].mxu0
        %v2993 = vpop.f32.mrb[0].mxu0
        %v2994 = vpop.f32.mrb[0].mxu0
        %2995 = vdwg.mxu0
        %2997 = vrot.lane.b32.xlu0 %v2331, 16
        %v2998 = vpop.permute.xlu0 %2997
        %3001 = vrot.lane.b32.xlu0 %v2441, 32
        %v3002 = vpop.permute.xlu0 %3001
        %3005 = vrot.lane.b32.xlu0 %v2551, 48
        %v3006 = vpop.permute.xlu0 %3005
        %3009 = vrot.lane.b32.xlu0 %v2661, 64
        %v3010 = vpop.permute.xlu0 %3009
        %3013 = vrot.lane.b32.xlu0 %v2771, 80
        %v3014 = vpop.permute.xlu0 %3013
        %3017 = vrot.lane.b32.xlu0 %v2881, 96
        %v3018 = vpop.permute.xlu0 %3017
        %3021 = vrot.lane.b32.xlu0 %v2991, 112
        %v3022 = vpop.permute.xlu0 %3021
        %v3024 = vsel %vm2116, %v2218, %v2998
        %vm3025 = vcmask 261120
        %v3026 = vsel %vm3025, %v3024, %v3002
        %vm3027 = vcmask 392192
        %v3028 = vsel %vm3027, %v3026, %v3006
        %vm3029 = vcmask 523264
        %v3030 = vsel %vm3029, %v3028, %v3010
        %vm3031 = vcmask 654336
        %v3032 = vsel %vm3031, %v3030, %v3014
        %vm3033 = vcmask 785408
        %v3034 = vsel %vm3033, %v3032, %v3018
        %vm3035 = vcmask 916480
        %v3036 = vsel %vm3035, %v3034, %v3022
        %v3037 = vpack.c.bf16 %v3036, %v3036
        %v3039 = vlaneseq
        %v3040 = vshrl.u32 %v3039, 7
        %v3041 = vsub.s32 0, %v3040
        %v3042 = vrot.slane %v1830, %v3041
        %v3060 = vunpack.c.l.b16 %v1814
        %v3061 = vunpack.c.l.b16 %v1815
        %v3062 = vunpack.c.l.b16 %v1816
        %v3063 = vunpack.c.l.b16 %v1817
        %v3064 = vunpack.c.l.b16 %v1818
        %v3065 = vunpack.c.l.b16 %v1819
        %v3066 = vunpack.c.l.b16 %v1820
        %v3067 = vunpack.c.l.b16 %v1821
        %v3068 = vunpack.c.l.b16 %v1822
        %v3069 = vunpack.c.l.b16 %v1823
        %v3070 = vunpack.c.l.b16 %v1824
        %v3071 = vunpack.c.l.b16 %v1825
        %v3072 = vunpack.c.l.b16 %v1826
        %v3073 = vunpack.c.l.b16 %v1827
        %v3074 = vunpack.c.l.b16 %v1828
        %v3075 = vunpack.c.l.b16 %v1829
        %v3076 = vpack.c.b16 %v3061, %v3060
        %v3077 = vpack.c.b16 %v3063, %v3062
        %v3078 = vpack.c.b16 %v3065, %v3064
        %v3079 = vpack.c.b16 %v3067, %v3066
        %v3080 = vpack.c.b16 %v3069, %v3068
        %v3081 = vpack.c.b16 %v3071, %v3070
        %v3082 = vpack.c.b16 %v3073, %v3072
        %v3083 = vpack.c.b16 %v3075, %v3074
        %3092 = vmatprep.subr.bf16.mxu0 0
        %3093 = vmatpush1.bf16.msra.mxu0 %v3076
        %3094 = vmatprep.subr.bf16.mxu0 0
        %3095 = vmatpush1.bf16.msra.mxu0 %v3077
        %3096 = vmatprep.subr.bf16.mxu0 0
        %3097 = vmatpush1.bf16.msra.mxu0 %v3078
        %3098 = vmatprep.subr.bf16.mxu0 0
        %3099 = vmatpush1.bf16.msra.mxu0 %v3079
        %3100 = vmatprep.subr.bf16.mxu0 0
        %3101 = vmatpush1.bf16.msra.mxu0 %v3080
        %3102 = vmatprep.subr.bf16.mxu0 0
        %3103 = vmatpush1.bf16.msra.mxu0 %v3081
        %3104 = vmatprep.subr.bf16.mxu0 0
        %3105 = vmatpush1.bf16.msra.mxu0 %v3082
        %3106 = vmatprep.subr.bf16.mxu0 0
        %3107 = vmatpush1.bf16.msra.mxu0 %v3083
        %3108 = vmatprep.subr.bf16.mxu0 0
        %3109 = vmatpush1.bf16.msra.mxu0 0
        %3110 = vmatprep.subr.bf16.mxu0 0
        %3111 = vmatpush1.bf16.msra.mxu0 0
        %3112 = vmatprep.subr.bf16.mxu0 0
        %3113 = vmatpush1.bf16.msra.mxu0 0
        %3114 = vmatprep.subr.bf16.mxu0 0
        %3115 = vmatpush1.bf16.msra.mxu0 0
        %3116 = vmatprep.subr.bf16.mxu0 0
        %3117 = vmatpush1.bf16.msra.mxu0 0
        %3118 = vmatprep.subr.bf16.mxu0 0
        %3119 = vmatpush1.bf16.msra.mxu0 0
        %3120 = vmatprep.subr.bf16.mxu0 0
        %3121 = vmatpush1.bf16.msra.mxu0 0
        %3122 = vmatprep.subr.bf16.mxu0 0
        %3123 = vmatpush1.bf16.msra.mxu0 0
        %3124 = vmatprep.mubr.bf16.mxu0 0
        %3125 = vmatmul.mubr.bf16.gmra.mrb[0].mxu0 %v3037
        %v3126 = vpop.f32.mrb[0].mxu0
        %v3127 = vadd.f32 %v3042, %v3126
        %v3128 = vpop.f32.mrb[0].mxu0
        %v3129 = vpop.f32.mrb[0].mxu0
        %v3130 = vpop.f32.mrb[0].mxu0
        %3131 = vdwg.mxu0
        %v3132 = vadd.f32 %v1721, %v3127
        %v3133 = vld [vmem:[%s1685] sm:$0x1]
        %v3134 = vld [vmem:[%s1688] sm:$0x1]
        %3135 = vadd.xlane.f32.xlu0 %v3132
        %v3136 = vpop.xlane.xlu0 %3135
        %v3137 = vmul.f32 %v3136, %v1731
        %v3138 = vsub.f32 %v3132, %v3137
        %v3139 = vmul.f32 %v3138, %v3138
        %3140 = vadd.xlane.f32.xlu0 %v3139
        %v3141 = vpop.xlane.xlu0 %3140
        %v3142 = vmul.f32 %v3141, 0.007874016
        %v3143 = vrsqrt.pop %v3142
        %v3144 = vmul.f32 %v3142, %v3143
        %vm3145 = vcmp.eq.f32.partialorder %v3142, inf
        %v3146 = vsel %vm3145, %v3142, %v3144
        %vm3147 = vcmp.eq.f32.partialorder %v3142, 0.0
        %v3148 = vand.u32 %v3142, 2147483648
        %v3149 = vsel %vm3147, %v3148, %v3146
        %v3150 = vadd.f32 %v3149, 1e-06
        %v3151 = vrcp.pop %v3150
        %v3153 = vlaneseq
        %v3154 = vshrl.u32 %v3153, 7
        %v3155 = vsub.s32 0, %v3154
        %v3156 = vrot.slane %v3133, %v3155
        %v3158 = vmul.f32 %v3156, %v3138
        %v3159 = vmul.f32 %v3158, %v3151
        %v3161 = vlaneseq
        %v3162 = vshrl.u32 %v3161, 7
        %v3163 = vsub.s32 0, %v3162
        %v3164 = vrot.slane %v3134, %v3163
        %v3166 = vadd.f32 %v3159, %v3164
        %v3167 = vpack.c.bf16 %v3166, %v3166
        %v3168 = vld [vmem:[%s1422] sm:$0xf]
        %v3169 = vld [vmem:[%s1422 + $0x4] sm:$0xf]
        %v3170 = vld [vmem:[%s1422 + $0x8] sm:$0xf]
        %v3171 = vld [vmem:[%s1422 + $0xc] sm:$0xf]
        %v3172 = vld [vmem:[%s1422 + $0x10] sm:$0xf]
        %v3173 = vld [vmem:[%s1422 + $0x14] sm:$0xf]
        %v3174 = vld [vmem:[%s1422 + $0x18] sm:$0xf]
        %v3175 = vld [vmem:[%s1422 + $0x1c] sm:$0xf]
        %v3176 = vld [vmem:[%s1422 + $0x20] sm:$0xf]
        %v3177 = vld [vmem:[%s1422 + $0x24] sm:$0xf]
        %v3178 = vld [vmem:[%s1422 + $0x28] sm:$0xf]
        %v3179 = vld [vmem:[%s1422 + $0x2c] sm:$0xf]
        %v3180 = vld [vmem:[%s1422 + $0x30] sm:$0xf]
        %v3181 = vld [vmem:[%s1422 + $0x34] sm:$0xf]
        %v3182 = vld [vmem:[%s1422 + $0x38] sm:$0xf]
        %v3183 = vld [vmem:[%s1422 + $0x3c] sm:$0xf]
        %v3184 = vld [vmem:[%s1691] sm:$0x1]
        %v3185 = vld [vmem:[%s1431] sm:$0xf]
        %v3186 = vld [vmem:[%s1431 + $0x4] sm:$0xf]
        %v3187 = vld [vmem:[%s1431 + $0x8] sm:$0xf]
        %v3188 = vld [vmem:[%s1431 + $0xc] sm:$0xf]
        %v3189 = vld [vmem:[%s1431 + $0x10] sm:$0xf]
        %v3190 = vld [vmem:[%s1431 + $0x14] sm:$0xf]
        %v3191 = vld [vmem:[%s1431 + $0x18] sm:$0xf]
        %v3192 = vld [vmem:[%s1431 + $0x1c] sm:$0xf]
        %v3193 = vld [vmem:[%s1431 + $0x20] sm:$0xf]
        %v3194 = vld [vmem:[%s1431 + $0x24] sm:$0xf]
        %v3195 = vld [vmem:[%s1431 + $0x28] sm:$0xf]
        %v3196 = vld [vmem:[%s1431 + $0x2c] sm:$0xf]
        %v3197 = vld [vmem:[%s1431 + $0x30] sm:$0xf]
        %v3198 = vld [vmem:[%s1431 + $0x34] sm:$0xf]
        %v3199 = vld [vmem:[%s1431 + $0x38] sm:$0xf]
        %v3200 = vld [vmem:[%s1431 + $0x3c] sm:$0xf]
        %v3201 = vld [vmem:[%s1694] sm:$0x1]
        %v3202 = vld [vmem:[%s1440] sm:$0xf]
        %v3203 = vld [vmem:[%s1440 + $0x4] sm:$0xf]
        %v3204 = vld [vmem:[%s1440 + $0x8] sm:$0xf]
        %v3205 = vld [vmem:[%s1440 + $0xc] sm:$0xf]
        %v3206 = vld [vmem:[%s1440 + $0x10] sm:$0xf]
        %v3207 = vld [vmem:[%s1440 + $0x14] sm:$0xf]
        %v3208 = vld [vmem:[%s1440 + $0x18] sm:$0xf]
        %v3209 = vld [vmem:[%s1440 + $0x1c] sm:$0xf]
        %v3210 = vld [vmem:[%s1440 + $0x20] sm:$0xf]
        %v3211 = vld [vmem:[%s1440 + $0x24] sm:$0xf]
        %v3212 = vld [vmem:[%s1440 + $0x28] sm:$0xf]
        %v3213 = vld [vmem:[%s1440 + $0x2c] sm:$0xf]
        %v3214 = vld [vmem:[%s1440 + $0x30] sm:$0xf]
        %v3215 = vld [vmem:[%s1440 + $0x34] sm:$0xf]
        %v3216 = vld [vmem:[%s1440 + $0x38] sm:$0xf]
        %v3217 = vld [vmem:[%s1440 + $0x3c] sm:$0xf]
        %v3218 = vld [vmem:[%s1697] sm:$0x1]
        %v3219 = vld [vmem:[%s1449] sm:$0xf]
        %v3220 = vld [vmem:[%s1449 + $0x4] sm:$0xf]
        %v3221 = vld [vmem:[%s1449 + $0x8] sm:$0xf]
        %v3222 = vld [vmem:[%s1449 + $0xc] sm:$0xf]
        %v3223 = vld [vmem:[%s1449 + $0x10] sm:$0xf]
        %v3224 = vld [vmem:[%s1449 + $0x14] sm:$0xf]
        %v3225 = vld [vmem:[%s1449 + $0x18] sm:$0xf]
        %v3226 = vld [vmem:[%s1449 + $0x1c] sm:$0xf]
        %v3227 = vld [vmem:[%s1449 + $0x20] sm:$0xf]
        %v3228 = vld [vmem:[%s1449 + $0x24] sm:$0xf]
        %v3229 = vld [vmem:[%s1449 + $0x28] sm:$0xf]
        %v3230 = vld [vmem:[%s1449 + $0x2c] sm:$0xf]
        %v3231 = vld [vmem:[%s1449 + $0x30] sm:$0xf]
        %v3232 = vld [vmem:[%s1449 + $0x34] sm:$0xf]
        %v3233 = vld [vmem:[%s1449 + $0x38] sm:$0xf]
        %v3234 = vld [vmem:[%s1449 + $0x3c] sm:$0xf]
        %v3235 = vld [vmem:[%s1700] sm:$0x1]
        %v3237 = vlaneseq
        %v3238 = vshrl.u32 %v3237, 7
        %v3239 = vsub.s32 0, %v3238
        %v3240 = vrot.slane %v3184, %v3239
        %v3258 = vunpack.c.l.b16 %v3168
        %v3259 = vunpack.c.l.b16 %v3169
        %v3260 = vunpack.c.l.b16 %v3170
        %v3261 = vunpack.c.l.b16 %v3171
        %v3262 = vunpack.c.l.b16 %v3172
        %v3263 = vunpack.c.l.b16 %v3173
        %v3264 = vunpack.c.l.b16 %v3174
        %v3265 = vunpack.c.l.b16 %v3175
        %v3266 = vunpack.c.l.b16 %v3176
        %v3267 = vunpack.c.l.b16 %v3177
        %v3268 = vunpack.c.l.b16 %v3178
        %v3269 = vunpack.c.l.b16 %v3179
        %v3270 = vunpack.c.l.b16 %v3180
        %v3271 = vunpack.c.l.b16 %v3181
        %v3272 = vunpack.c.l.b16 %v3182
        %v3273 = vunpack.c.l.b16 %v3183
        %v3274 = vpack.c.b16 %v3259, %v3258
        %v3275 = vpack.c.b16 %v3261, %v3260
        %v3276 = vpack.c.b16 %v3263, %v3262
        %v3277 = vpack.c.b16 %v3265, %v3264
        %v3278 = vpack.c.b16 %v3267, %v3266
        %v3279 = vpack.c.b16 %v3269, %v3268
        %v3280 = vpack.c.b16 %v3271, %v3270
        %v3281 = vpack.c.b16 %v3273, %v3272
        %3290 = vmatprep.subr.bf16.mxu0 0
        %3291 = vmatpush1.bf16.msra.mxu0 %v3274
        %3292 = vmatprep.subr.bf16.mxu0 0
        %3293 = vmatpush1.bf16.msra.mxu0 %v3275
        %3294 = vmatprep.subr.bf16.mxu0 0
        %3295 = vmatpush1.bf16.msra.mxu0 %v3276
        %3296 = vmatprep.subr.bf16.mxu0 0
        %3297 = vmatpush1.bf16.msra.mxu0 %v3277
        %3298 = vmatprep.subr.bf16.mxu0 0
        %3299 = vmatpush1.bf16.msra.mxu0 %v3278
        %3300 = vmatprep.subr.bf16.mxu0 0
        %3301 = vmatpush1.bf16.msra.mxu0 %v3279
        %3302 = vmatprep.subr.bf16.mxu0 0
        %3303 = vmatpush1.bf16.msra.mxu0 %v3280
        %3304 = vmatprep.subr.bf16.mxu0 0
        %3305 = vmatpush1.bf16.msra.mxu0 %v3281
        %3306 = vmatprep.subr.bf16.mxu0 0
        %3307 = vmatpush1.bf16.msra.mxu0 0
        %3308 = vmatprep.subr.bf16.mxu0 0
        %3309 = vmatpush1.bf16.msra.mxu0 0
        %3310 = vmatprep.subr.bf16.mxu0 0
        %3311 = vmatpush1.bf16.msra.mxu0 0
        %3312 = vmatprep.subr.bf16.mxu0 0
        %3313 = vmatpush1.bf16.msra.mxu0 0
        %3314 = vmatprep.subr.bf16.mxu0 0
        %3315 = vmatpush1.bf16.msra.mxu0 0
        %3316 = vmatprep.subr.bf16.mxu0 0
        %3317 = vmatpush1.bf16.msra.mxu0 0
        %3318 = vmatprep.subr.bf16.mxu0 0
        %3319 = vmatpush1.bf16.msra.mxu0 0
        %3320 = vmatprep.subr.bf16.mxu0 0
        %3321 = vmatpush1.bf16.msra.mxu0 0
        %3322 = vmatprep.mubr.bf16.mxu0 0
        %3323 = vmatmul.mubr.bf16.gmra.mrb[0].mxu0 %v3167
        %v3324 = vpop.f32.mrb[0].mxu0
        %v3325 = vadd.f32 %v3240, %v3324
        %v3326 = vpop.f32.mrb[0].mxu0
        %v3327 = vpop.f32.mrb[0].mxu0
        %v3328 = vpop.f32.mrb[0].mxu0
        %3329 = vdwg.mxu0
        %v3330 = vpack.c.bf16 %v3325, %v3325
        %v3332 = vlaneseq
        %v3333 = vshrl.u32 %v3332, 7
        %v3334 = vsub.s32 0, %v3333
        %v3335 = vrot.slane %v3201, %v3334
        %v3353 = vunpack.c.l.b16 %v3185
        %v3354 = vunpack.c.l.b16 %v3186
        %v3355 = vunpack.c.l.b16 %v3187
        %v3356 = vunpack.c.l.b16 %v3188
        %v3357 = vunpack.c.l.b16 %v3189
        %v3358 = vunpack.c.l.b16 %v3190
        %v3359 = vunpack.c.l.b16 %v3191
        %v3360 = vunpack.c.l.b16 %v3192
        %v3361 = vunpack.c.l.b16 %v3193
        %v3362 = vunpack.c.l.b16 %v3194
        %v3363 = vunpack.c.l.b16 %v3195
        %v3364 = vunpack.c.l.b16 %v3196
        %v3365 = vunpack.c.l.b16 %v3197
        %v3366 = vunpack.c.l.b16 %v3198
        %v3367 = vunpack.c.l.b16 %v3199
        %v3368 = vunpack.c.l.b16 %v3200
        %v3369 = vpack.c.b16 %v3354, %v3353
        %v3370 = vpack.c.b16 %v3356, %v3355
        %v3371 = vpack.c.b16 %v3358, %v3357
        %v3372 = vpack.c.b16 %v3360, %v3359
        %v3373 = vpack.c.b16 %v3362, %v3361
        %v3374 = vpack.c.b16 %v3364, %v3363
        %v3375 = vpack.c.b16 %v3366, %v3365
        %v3376 = vpack.c.b16 %v3368, %v3367
        %3385 = vmatprep.subr.bf16.mxu0 0
        %3386 = vmatpush1.bf16.msra.mxu0 %v3369
        %3387 = vmatprep.subr.bf16.mxu0 0
        %3388 = vmatpush1.bf16.msra.mxu0 %v3370
        %3389 = vmatprep.subr.bf16.mxu0 0
        %3390 = vmatpush1.bf16.msra.mxu0 %v3371
        %3391 = vmatprep.subr.bf16.mxu0 0
        %3392 = vmatpush1.bf16.msra.mxu0 %v3372
        %3393 = vmatprep.subr.bf16.mxu0 0
        %3394 = vmatpush1.bf16.msra.mxu0 %v3373
        %3395 = vmatprep.subr.bf16.mxu0 0
        %3396 = vmatpush1.bf16.msra.mxu0 %v3374
        %3397 = vmatprep.subr.bf16.mxu0 0
        %3398 = vmatpush1.bf16.msra.mxu0 %v3375
        %3399 = vmatprep.subr.bf16.mxu0 0
        %3400 = vmatpush1.bf16.msra.mxu0 %v3376
        %3401 = vmatprep.subr.bf16.mxu0 0
        %3402 = vmatpush1.bf16.msra.mxu0 0
        %3403 = vmatprep.subr.bf16.mxu0 0
        %3404 = vmatpush1.bf16.msra.mxu0 0
        %3405 = vmatprep.subr.bf16.mxu0 0
        %3406 = vmatpush1.bf16.msra.mxu0 0
        %3407 = vmatprep.subr.bf16.mxu0 0
        %3408 = vmatpush1.bf16.msra.mxu0 0
        %3409 = vmatprep.subr.bf16.mxu0 0
        %3410 = vmatpush1.bf16.msra.mxu0 0
        %3411 = vmatprep.subr.bf16.mxu0 0
        %3412 = vmatpush1.bf16.msra.mxu0 0
        %3413 = vmatprep.subr.bf16.mxu0 0
        %3414 = vmatpush1.bf16.msra.mxu0 0
        %3415 = vmatprep.subr.bf16.mxu0 0
        %3416 = vmatpush1.bf16.msra.mxu0 0
        %3417 = vmatprep.mubr.bf16.mxu0 0
        %3418 = vmatmul.mubr.bf16.gmra.mrb[0].mxu0 %v1722
        %v3419 = vpop.f32.mrb[0].mxu0
        %v3420 = vadd.f32 %v3335, %v3419
        %v3421 = vpop.f32.mrb[0].mxu0
        %v3422 = vpop.f32.mrb[0].mxu0
        %v3423 = vpop.f32.mrb[0].mxu0
        %3424 = vdwg.mxu0
        %v3425 = vpack.c.bf16 %v3420, %v3420
        %v3427 = vlaneseq
        %v3428 = vshrl.u32 %v3427, 7
        %v3429 = vsub.s32 0, %v3428
        %v3430 = vrot.slane %v3218, %v3429
        %v3448 = vunpack.c.l.b16 %v3202
        %v3449 = vunpack.c.l.b16 %v3203
        %v3450 = vunpack.c.l.b16 %v3204
        %v3451 = vunpack.c.l.b16 %v3205
        %v3452 = vunpack.c.l.b16 %v3206
        %v3453 = vunpack.c.l.b16 %v3207
        %v3454 = vunpack.c.l.b16 %v3208
        %v3455 = vunpack.c.l.b16 %v3209
        %v3456 = vunpack.c.l.b16 %v3210
        %v3457 = vunpack.c.l.b16 %v3211
        %v3458 = vunpack.c.l.b16 %v3212
        %v3459 = vunpack.c.l.b16 %v3213
        %v3460 = vunpack.c.l.b16 %v3214
        %v3461 = vunpack.c.l.b16 %v3215
        %v3462 = vunpack.c.l.b16 %v3216
        %v3463 = vunpack.c.l.b16 %v3217
        %v3464 = vpack.c.b16 %v3449, %v3448
        %v3465 = vpack.c.b16 %v3451, %v3450
        %v3466 = vpack.c.b16 %v3453, %v3452
        %v3467 = vpack.c.b16 %v3455, %v3454
        %v3468 = vpack.c.b16 %v3457, %v3456
        %v3469 = vpack.c.b16 %v3459, %v3458
        %v3470 = vpack.c.b16 %v3461, %v3460
        %v3471 = vpack.c.b16 %v3463, %v3462
        %3480 = vmatprep.subr.bf16.mxu0 0
        %3481 = vmatpush1.bf16.msra.mxu0 %v3464
        %3482 = vmatprep.subr.bf16.mxu0 0
        %3483 = vmatpush1.bf16.msra.mxu0 %v3465
        %3484 = vmatprep.subr.bf16.mxu0 0
        %3485 = vmatpush1.bf16.msra.mxu0 %v3466
        %3486 = vmatprep.subr.bf16.mxu0 0
        %3487 = vmatpush1.bf16.msra.mxu0 %v3467
        %3488 = vmatprep.subr.bf16.mxu0 0
        %3489 = vmatpush1.bf16.msra.mxu0 %v3468
        %3490 = vmatprep.subr.bf16.mxu0 0
        %3491 = vmatpush1.bf16.msra.mxu0 %v3469
        %3492 = vmatprep.subr.bf16.mxu0 0
        %3493 = vmatpush1.bf16.msra.mxu0 %v3470
        %3494 = vmatprep.subr.bf16.mxu0 0
        %3495 = vmatpush1.bf16.msra.mxu0 %v3471
        %3496 = vmatprep.subr.bf16.mxu0 0
        %3497 = vmatpush1.bf16.msra.mxu0 0
        %3498 = vmatprep.subr.bf16.mxu0 0
        %3499 = vmatpush1.bf16.msra.mxu0 0
        %3500 = vmatprep.subr.bf16.mxu0 0
        %3501 = vmatpush1.bf16.msra.mxu0 0
        %3502 = vmatprep.subr.bf16.mxu0 0
        %3503 = vmatpush1.bf16.msra.mxu0 0
        %3504 = vmatprep.subr.bf16.mxu0 0
        %3505 = vmatpush1.bf16.msra.mxu0 0
        %3506 = vmatprep.subr.bf16.mxu0 0
        %3507 = vmatpush1.bf16.msra.mxu0 0
        %3508 = vmatprep.subr.bf16.mxu0 0
        %3509 = vmatpush1.bf16.msra.mxu0 0
        %3510 = vmatprep.subr.bf16.mxu0 0
        %3511 = vmatpush1.bf16.msra.mxu0 0
        %3512 = vmatprep.mubr.bf16.mxu0 0
        %3513 = vmatmul.mubr.bf16.gmra.mrb[0].mxu0 %v1722
        %v3514 = vpop.f32.mrb[0].mxu0
        %v3515 = vadd.f32 %v3430, %v3514
        %v3516 = vpop.f32.mrb[0].mxu0
        %v3517 = vpop.f32.mrb[0].mxu0
        %v3518 = vpop.f32.mrb[0].mxu0
        %3519 = vdwg.mxu0
        %v3520 = vpack.c.bf16 %v3515, %v3515
        %v3522 = vsel %vm2116, %v3330, 0
        %v3525 = vsel %vm2116, %v3425, 0
        %3527 = vmatprep.subr.bf16.mxu0 0
        %3528 = vmatpush1.bf16.xpose.msra.mxu0 %v3525
        %3529 = vmatprep.subr.bf16.mxu0 0
        %3530 = vmatpush1.bf16.xpose.msra.mxu0 0
        %3531 = vmatprep.subr.bf16.mxu0 0
        %3532 = vmatpush1.bf16.xpose.msra.mxu0 0
        %3533 = vmatprep.subr.bf16.mxu0 0
        %3534 = vmatpush1.bf16.xpose.msra.mxu0 0
        %3535 = vmatprep.subr.bf16.mxu0 0
        %3536 = vmatpush1.bf16.xpose.msra.mxu0 0
        %3537 = vmatprep.subr.bf16.mxu0 0
        %3538 = vmatpush1.bf16.xpose.msra.mxu0 0
        %3539 = vmatprep.subr.bf16.mxu0 0
        %3540 = vmatpush1.bf16.xpose.msra.mxu0 0
        %3541 = vmatprep.subr.bf16.mxu0 0
        %3542 = vmatpush1.bf16.xpose.msra.mxu0 0
        %3543 = vmatprep.subr.bf16.mxu0 0
        %3544 = vmatpush1.bf16.xpose.msra.mxu0 0
        %3545 = vmatprep.subr.bf16.mxu0 0
        %3546 = vmatpush1.bf16.xpose.msra.mxu0 0
        %3547 = vmatprep.subr.bf16.mxu0 0
        %3548 = vmatpush1.bf16.xpose.msra.mxu0 0
        %3549 = vmatprep.subr.bf16.mxu0 0
        %3550 = vmatpush1.bf16.xpose.msra.mxu0 0
        %3551 = vmatprep.subr.bf16.mxu0 0
        %3552 = vmatpush1.bf16.xpose.msra.mxu0 0
        %3553 = vmatprep.subr.bf16.mxu0 0
        %3554 = vmatpush1.bf16.xpose.msra.mxu0 0
        %3555 = vmatprep.subr.bf16.mxu0 0
        %3556 = vmatpush1.bf16.xpose.msra.mxu0 0
        %3557 = vmatprep.subr.bf16.mxu0 0
        %3558 = vmatpush1.bf16.xpose.msra.mxu0 0
        %3559 = vmatprep.mubr.bf16.mxu0 0
        %3560 = vmatmul.mubr.bf16.gmra.mrb[0].mxu0 %v3522
        %v3561 = vpop.f32.mrb[0].mxu0
        %v3562 = vadd.f32 %v1726, %v3561
        %v3563 = vpop.f32.mrb[0].mxu0
        %v3564 = vpop.f32.mrb[0].mxu0
        %v3565 = vpop.f32.mrb[0].mxu0
        %3566 = vdwg.mxu0
        %v3567 = vsel %vm2163, %v3562, -inf
        %3568 = vmax.xlane.f32.xlu0 %v3567
        %v3569 = vpop.xlane.xlu0 %3568
        %v3570 = vsub.f32 %v3562, %v3569
        %v3571 = vmul.f32 %v3570, 1.442695
        %v3572 = vpow.pop %v3571
        %v3573 = vsel %vm2163, %v3572, 0.0
        %3574 = vadd.xlane.f32.xlu0 %v3573
        %v3575 = vpop.xlane.xlu0 %3574
        %v3576 = vrcp.pop %v3575
        %v3577 = vmul.f32 %v3572, %v3576
        %v3578 = vpack.c.bf16 %v3577, %v3577
        %v3580 = vsel %vm2163, %v3578, 0
        %v3583 = vsel %vm2179, %v3520, 0
        %3585 = vmatprep.subr.bf16.mxu0 0
        %3586 = vmatpush1.bf16.msra.mxu0 %v3583
        %3587 = vmatprep.subr.bf16.mxu0 0
        %3588 = vmatpush1.bf16.msra.mxu0 0
        %3589 = vmatprep.subr.bf16.mxu0 0
        %3590 = vmatpush1.bf16.msra.mxu0 0
        %3591 = vmatprep.subr.bf16.mxu0 0
        %3592 = vmatpush1.bf16.msra.mxu0 0
        %3593 = vmatprep.subr.bf16.mxu0 0
        %3594 = vmatpush1.bf16.msra.mxu0 0
        %3595 = vmatprep.subr.bf16.mxu0 0
        %3596 = vmatpush1.bf16.msra.mxu0 0
        %3597 = vmatprep.subr.bf16.mxu0 0
        %3598 = vmatpush1.bf16.msra.mxu0 0
        %3599 = vmatprep.subr.bf16.mxu0 0
        %3600 = vmatpush1.bf16.msra.mxu0 0
        %3601 = vmatprep.subr.bf16.mxu0 0
        %3602 = vmatpush1.bf16.msra.mxu0 0
        %3603 = vmatprep.subr.bf16.mxu0 0
        %3604 = vmatpush1.bf16.msra.mxu0 0
        %3605 = vmatprep.subr.bf16.mxu0 0
        %3606 = vmatpush1.bf16.msra.mxu0 0
        %3607 = vmatprep.subr.bf16.mxu0 0
        %3608 = vmatpush1.bf16.msra.mxu0 0
        %3609 = vmatprep.subr.bf16.mxu0 0
        %3610 = vmatpush1.bf16.msra.mxu0 0
        %3611 = vmatprep.subr.bf16.mxu0 0
        %3612 = vmatpush1.bf16.msra.mxu0 0
        %3613 = vmatprep.subr.bf16.mxu0 0
        %3614 = vmatpush1.bf16.msra.mxu0 0
        %3615 = vmatprep.subr.bf16.mxu0 0
        %3616 = vmatpush1.bf16.msra.mxu0 0
        %3617 = vmatprep.mubr.bf16.mxu0 0
        %3618 = vmatmul.mubr.bf16.gmra.mrb[0].mxu0 %v3580
        %v3619 = vpop.f32.mrb[0].mxu0
        %v3620 = vadd.f32 0.0, %v3619
        %v3621 = vpop.f32.mrb[0].mxu0
        %v3622 = vpop.f32.mrb[0].mxu0
        %v3623 = vpop.f32.mrb[0].mxu0
        %3624 = vdwg.mxu0
        %3626 = vrot.lane.b32.xlu0 %v3330, 112
        %v3627 = vpop.permute.xlu0 %3626
        %3629 = vrot.lane.b32.xlu0 %v3425, 112
        %v3630 = vpop.permute.xlu0 %3629
        %v3632 = vsel %vm2116, %v3627, 0
        %v3635 = vsel %vm2116, %v3630, 0
        %3637 = vmatprep.subr.bf16.mxu0 0
        %3638 = vmatpush1.bf16.xpose.msra.mxu0 %v3635
        %3639 = vmatprep.subr.bf16.mxu0 0
        %3640 = vmatpush1.bf16.xpose.msra.mxu0 0
        %3641 = vmatprep.subr.bf16.mxu0 0
        %3642 = vmatpush1.bf16.xpose.msra.mxu0 0
        %3643 = vmatprep.subr.bf16.mxu0 0
        %3644 = vmatpush1.bf16.xpose.msra.mxu0 0
        %3645 = vmatprep.subr.bf16.mxu0 0
        %3646 = vmatpush1.bf16.xpose.msra.mxu0 0
        %3647 = vmatprep.subr.bf16.mxu0 0
        %3648 = vmatpush1.bf16.xpose.msra.mxu0 0
        %3649 = vmatprep.subr.bf16.mxu0 0
        %3650 = vmatpush1.bf16.xpose.msra.mxu0 0
        %3651 = vmatprep.subr.bf16.mxu0 0
        %3652 = vmatpush1.bf16.xpose.msra.mxu0 0
        %3653 = vmatprep.subr.bf16.mxu0 0
        %3654 = vmatpush1.bf16.xpose.msra.mxu0 0
        %3655 = vmatprep.subr.bf16.mxu0 0
        %3656 = vmatpush1.bf16.xpose.msra.mxu0 0
        %3657 = vmatprep.subr.bf16.mxu0 0
        %3658 = vmatpush1.bf16.xpose.msra.mxu0 0
        %3659 = vmatprep.subr.bf16.mxu0 0
        %3660 = vmatpush1.bf16.xpose.msra.mxu0 0
        %3661 = vmatprep.subr.bf16.mxu0 0
        %3662 = vmatpush1.bf16.xpose.msra.mxu0 0
        %3663 = vmatprep.subr.bf16.mxu0 0
        %3664 = vmatpush1.bf16.xpose.msra.mxu0 0
        %3665 = vmatprep.subr.bf16.mxu0 0
        %3666 = vmatpush1.bf16.xpose.msra.mxu0 0
        %3667 = vmatprep.subr.bf16.mxu0 0
        %3668 = vmatpush1.bf16.xpose.msra.mxu0 0
        %3669 = vmatprep.mubr.bf16.mxu0 0
        %3670 = vmatmul.mubr.bf16.gmra.mrb[0].mxu0 %v3632
        %v3671 = vpop.f32.mrb[0].mxu0
        %v3672 = vadd.f32 %v1726, %v3671
        %v3673 = vpop.f32.mrb[0].mxu0
        %v3674 = vpop.f32.mrb[0].mxu0
        %v3675 = vpop.f32.mrb[0].mxu0
        %3676 = vdwg.mxu0
        %v3677 = vsel %vm2163, %v3672, -inf
        %3678 = vmax.xlane.f32.xlu0 %v3677
        %v3679 = vpop.xlane.xlu0 %3678
        %v3680 = vsub.f32 %v3672, %v3679
        %v3681 = vmul.f32 %v3680, 1.442695
        %v3682 = vpow.pop %v3681
        %v3683 = vsel %vm2163, %v3682, 0.0
        %3684 = vadd.xlane.f32.xlu0 %v3683
        %v3685 = vpop.xlane.xlu0 %3684
        %v3686 = vrcp.pop %v3685
        %v3687 = vmul.f32 %v3682, %v3686
        %v3688 = vpack.c.bf16 %v3687, %v3687
        %3690 = vrot.lane.b32.xlu0 %v3520, 112
        %v3691 = vpop.permute.xlu0 %3690
        %v3693 = vsel %vm2163, %v3688, 0
        %v3696 = vsel %vm2179, %v3691, 0
        %3698 = vmatprep.subr.bf16.mxu0 0
        %3699 = vmatpush1.bf16.msra.mxu0 %v3696
        %3700 = vmatprep.subr.bf16.mxu0 0
        %3701 = vmatpush1.bf16.msra.mxu0 0
        %3702 = vmatprep.subr.bf16.mxu0 0
        %3703 = vmatpush1.bf16.msra.mxu0 0
        %3704 = vmatprep.subr.bf16.mxu0 0
        %3705 = vmatpush1.bf16.msra.mxu0 0
        %3706 = vmatprep.subr.bf16.mxu0 0
        %3707 = vmatpush1.bf16.msra.mxu0 0
        %3708 = vmatprep.subr.bf16.mxu0 0
        %3709 = vmatpush1.bf16.msra.mxu0 0
        %3710 = vmatprep.subr.bf16.mxu0 0
        %3711 = vmatpush1.bf16.msra.mxu0 0
        %3712 = vmatprep.subr.bf16.mxu0 0
        %3713 = vmatpush1.bf16.msra.mxu0 0
        %3714 = vmatprep.subr.bf16.mxu0 0
        %3715 = vmatpush1.bf16.msra.mxu0 0
        %3716 = vmatprep.subr.bf16.mxu0 0
        %3717 = vmatpush1.bf16.msra.mxu0 0
        %3718 = vmatprep.subr.bf16.mxu0 0
        %3719 = vmatpush1.bf16.msra.mxu0 0
        %3720 = vmatprep.subr.bf16.mxu0 0
        %3721 = vmatpush1.bf16.msra.mxu0 0
        %3722 = vmatprep.subr.bf16.mxu0 0
        %3723 = vmatpush1.bf16.msra.mxu0 0
        %3724 = vmatprep.subr.bf16.mxu0 0
        %3725 = vmatpush1.bf16.msra.mxu0 0
        %3726 = vmatprep.subr.bf16.mxu0 0
        %3727 = vmatpush1.bf16.msra.mxu0 0
        %3728 = vmatprep.subr.bf16.mxu0 0
        %3729 = vmatpush1.bf16.msra.mxu0 0
        %3730 = vmatprep.mubr.bf16.mxu0 0
        %3731 = vmatmul.mubr.bf16.gmra.mrb[0].mxu0 %v3693
        %v3732 = vpop.f32.mrb[0].mxu0
        %v3733 = vadd.f32 0.0, %v3732
        %v3734 = vpop.f32.mrb[0].mxu0
        %v3735 = vpop.f32.mrb[0].mxu0
        %v3736 = vpop.f32.mrb[0].mxu0
        %3737 = vdwg.mxu0
        %3738 = vrot.lane.b32.xlu0 %v3330, 96
        %v3739 = vpop.permute.xlu0 %3738
        %3740 = vrot.lane.b32.xlu0 %v3425, 96
        %v3741 = vpop.permute.xlu0 %3740
        %v3743 = vsel %vm2116, %v3739, 0
        %v3746 = vsel %vm2116, %v3741, 0
        %3748 = vmatprep.subr.bf16.mxu0 0
        %3749 = vmatpush1.bf16.xpose.msra.mxu0 %v3746
        %3750 = vmatprep.subr.bf16.mxu0 0
        %3751 = vmatpush1.bf16.xpose.msra.mxu0 0
        %3752 = vmatprep.subr.bf16.mxu0 0
        %3753 = vmatpush1.bf16.xpose.msra.mxu0 0
        %3754 = vmatprep.subr.bf16.mxu0 0
        %3755 = vmatpush1.bf16.xpose.msra.mxu0 0
        %3756 = vmatprep.subr.bf16.mxu0 0
        %3757 = vmatpush1.bf16.xpose.msra.mxu0 0
        %3758 = vmatprep.subr.bf16.mxu0 0
        %3759 = vmatpush1.bf16.xpose.msra.mxu0 0
        %3760 = vmatprep.subr.bf16.mxu0 0
        %3761 = vmatpush1.bf16.xpose.msra.mxu0 0
        %3762 = vmatprep.subr.bf16.mxu0 0
        %3763 = vmatpush1.bf16.xpose.msra.mxu0 0
        %3764 = vmatprep.subr.bf16.mxu0 0
        %3765 = vmatpush1.bf16.xpose.msra.mxu0 0
        %3766 = vmatprep.subr.bf16.mxu0 0
        %3767 = vmatpush1.bf16.xpose.msra.mxu0 0
        %3768 = vmatprep.subr.bf16.mxu0 0
        %3769 = vmatpush1.bf16.xpose.msra.mxu0 0
        %3770 = vmatprep.subr.bf16.mxu0 0
        %3771 = vmatpush1.bf16.xpose.msra.mxu0 0
        %3772 = vmatprep.subr.bf16.mxu0 0
        %3773 = vmatpush1.bf16.xpose.msra.mxu0 0
        %3774 = vmatprep.subr.bf16.mxu0 0
        %3775 = vmatpush1.bf16.xpose.msra.mxu0 0
        %3776 = vmatprep.subr.bf16.mxu0 0
        %3777 = vmatpush1.bf16.xpose.msra.mxu0 0
        %3778 = vmatprep.subr.bf16.mxu0 0
        %3779 = vmatpush1.bf16.xpose.msra.mxu0 0
        %3780 = vmatprep.mubr.bf16.mxu0 0
        %3781 = vmatmul.mubr.bf16.gmra.mrb[0].mxu0 %v3743
        %v3782 = vpop.f32.mrb[0].mxu0
        %v3783 = vadd.f32 %v1726, %v3782
        %v3784 = vpop.f32.mrb[0].mxu0
        %v3785 = vpop.f32.mrb[0].mxu0
        %v3786 = vpop.f32.mrb[0].mxu0
        %3787 = vdwg.mxu0
        %v3788 = vsel %vm2163, %v3783, -inf
        %3789 = vmax.xlane.f32.xlu0 %v3788
        %v3790 = vpop.xlane.xlu0 %3789
        %v3791 = vsub.f32 %v3783, %v3790
        %v3792 = vmul.f32 %v3791, 1.442695
        %v3793 = vpow.pop %v3792
        %v3794 = vsel %vm2163, %v3793, 0.0
        %3795 = vadd.xlane.f32.xlu0 %v3794
        %v3796 = vpop.xlane.xlu0 %3795
        %v3797 = vrcp.pop %v3796
        %v3798 = vmul.f32 %v3793, %v3797
        %v3799 = vpack.c.bf16 %v3798, %v3798
        %3800 = vrot.lane.b32.xlu0 %v3520, 96
        %v3801 = vpop.permute.xlu0 %3800
        %v3803 = vsel %vm2163, %v3799, 0
        %v3806 = vsel %vm2179, %v3801, 0
        %3808 = vmatprep.subr.bf16.mxu0 0
        %3809 = vmatpush1.bf16.msra.mxu0 %v3806
        %3810 = vmatprep.subr.bf16.mxu0 0
        %3811 = vmatpush1.bf16.msra.mxu0 0
        %3812 = vmatprep.subr.bf16.mxu0 0
        %3813 = vmatpush1.bf16.msra.mxu0 0
        %3814 = vmatprep.subr.bf16.mxu0 0
        %3815 = vmatpush1.bf16.msra.mxu0 0
        %3816 = vmatprep.subr.bf16.mxu0 0
        %3817 = vmatpush1.bf16.msra.mxu0 0
        %3818 = vmatprep.subr.bf16.mxu0 0
        %3819 = vmatpush1.bf16.msra.mxu0 0
        %3820 = vmatprep.subr.bf16.mxu0 0
        %3821 = vmatpush1.bf16.msra.mxu0 0
        %3822 = vmatprep.subr.bf16.mxu0 0
        %3823 = vmatpush1.bf16.msra.mxu0 0
        %3824 = vmatprep.subr.bf16.mxu0 0
        %3825 = vmatpush1.bf16.msra.mxu0 0
        %3826 = vmatprep.subr.bf16.mxu0 0
        %3827 = vmatpush1.bf16.msra.mxu0 0
        %3828 = vmatprep.subr.bf16.mxu0 0
        %3829 = vmatpush1.bf16.msra.mxu0 0
        %3830 = vmatprep.subr.bf16.mxu0 0
        %3831 = vmatpush1.bf16.msra.mxu0 0
        %3832 = vmatprep.subr.bf16.mxu0 0
        %3833 = vmatpush1.bf16.msra.mxu0 0
        %3834 = vmatprep.subr.bf16.mxu0 0
        %3835 = vmatpush1.bf16.msra.mxu0 0
        %3836 = vmatprep.subr.bf16.mxu0 0
        %3837 = vmatpush1.bf16.msra.mxu0 0
        %3838 = vmatprep.subr.bf16.mxu0 0
        %3839 = vmatpush1.bf16.msra.mxu0 0
        %3840 = vmatprep.mubr.bf16.mxu0 0
        %3841 = vmatmul.mubr.bf16.gmra.mrb[0].mxu0 %v3803
        %v3842 = vpop.f32.mrb[0].mxu0
        %v3843 = vadd.f32 0.0, %v3842
        %v3844 = vpop.f32.mrb[0].mxu0
        %v3845 = vpop.f32.mrb[0].mxu0
        %v3846 = vpop.f32.mrb[0].mxu0
        %3847 = vdwg.mxu0
        %3848 = vrot.lane.b32.xlu0 %v3330, 80
        %v3849 = vpop.permute.xlu0 %3848
        %3850 = vrot.lane.b32.xlu0 %v3425, 80
        %v3851 = vpop.permute.xlu0 %3850
        %v3853 = vsel %vm2116, %v3849, 0
        %v3856 = vsel %vm2116, %v3851, 0
        %3858 = vmatprep.subr.bf16.mxu0 0
        %3859 = vmatpush1.bf16.xpose.msra.mxu0 %v3856
        %3860 = vmatprep.subr.bf16.mxu0 0
        %3861 = vmatpush1.bf16.xpose.msra.mxu0 0
        %3862 = vmatprep.subr.bf16.mxu0 0
        %3863 = vmatpush1.bf16.xpose.msra.mxu0 0
        %3864 = vmatprep.subr.bf16.mxu0 0
        %3865 = vmatpush1.bf16.xpose.msra.mxu0 0
        %3866 = vmatprep.subr.bf16.mxu0 0
        %3867 = vmatpush1.bf16.xpose.msra.mxu0 0
        %3868 = vmatprep.subr.bf16.mxu0 0
        %3869 = vmatpush1.bf16.xpose.msra.mxu0 0
        %3870 = vmatprep.subr.bf16.mxu0 0
        %3871 = vmatpush1.bf16.xpose.msra.mxu0 0
        %3872 = vmatprep.subr.bf16.mxu0 0
        %3873 = vmatpush1.bf16.xpose.msra.mxu0 0
        %3874 = vmatprep.subr.bf16.mxu0 0
        %3875 = vmatpush1.bf16.xpose.msra.mxu0 0
        %3876 = vmatprep.subr.bf16.mxu0 0
        %3877 = vmatpush1.bf16.xpose.msra.mxu0 0
        %3878 = vmatprep.subr.bf16.mxu0 0
        %3879 = vmatpush1.bf16.xpose.msra.mxu0 0
        %3880 = vmatprep.subr.bf16.mxu0 0
        %3881 = vmatpush1.bf16.xpose.msra.mxu0 0
        %3882 = vmatprep.subr.bf16.mxu0 0
        %3883 = vmatpush1.bf16.xpose.msra.mxu0 0
        %3884 = vmatprep.subr.bf16.mxu0 0
        %3885 = vmatpush1.bf16.xpose.msra.mxu0 0
        %3886 = vmatprep.subr.bf16.mxu0 0
        %3887 = vmatpush1.bf16.xpose.msra.mxu0 0
        %3888 = vmatprep.subr.bf16.mxu0 0
        %3889 = vmatpush1.bf16.xpose.msra.mxu0 0
        %3890 = vmatprep.mubr.bf16.mxu0 0
        %3891 = vmatmul.mubr.bf16.gmra.mrb[0].mxu0 %v3853
        %v3892 = vpop.f32.mrb[0].mxu0
        %v3893 = vadd.f32 %v1726, %v3892
        %v3894 = vpop.f32.mrb[0].mxu0
        %v3895 = vpop.f32.mrb[0].mxu0
        %v3896 = vpop.f32.mrb[0].mxu0
        %3897 = vdwg.mxu0
        %v3898 = vsel %vm2163, %v3893, -inf
        %3899 = vmax.xlane.f32.xlu0 %v3898
        %v3900 = vpop.xlane.xlu0 %3899
        %v3901 = vsub.f32 %v3893, %v3900
        %v3902 = vmul.f32 %v3901, 1.442695
        %v3903 = vpow.pop %v3902
        %v3904 = vsel %vm2163, %v3903, 0.0
        %3905 = vadd.xlane.f32.xlu0 %v3904
        %v3906 = vpop.xlane.xlu0 %3905
        %v3907 = vrcp.pop %v3906
        %v3908 = vmul.f32 %v3903, %v3907
        %v3909 = vpack.c.bf16 %v3908, %v3908
        %3910 = vrot.lane.b32.xlu0 %v3520, 80
        %v3911 = vpop.permute.xlu0 %3910
        %v3913 = vsel %vm2163, %v3909, 0
        %v3916 = vsel %vm2179, %v3911, 0
        %3918 = vmatprep.subr.bf16.mxu0 0
        %3919 = vmatpush1.bf16.msra.mxu0 %v3916
        %3920 = vmatprep.subr.bf16.mxu0 0
        %3921 = vmatpush1.bf16.msra.mxu0 0
        %3922 = vmatprep.subr.bf16.mxu0 0
        %3923 = vmatpush1.bf16.msra.mxu0 0
        %3924 = vmatprep.subr.bf16.mxu0 0
        %3925 = vmatpush1.bf16.msra.mxu0 0
        %3926 = vmatprep.subr.bf16.mxu0 0
        %3927 = vmatpush1.bf16.msra.mxu0 0
        %3928 = vmatprep.subr.bf16.mxu0 0
        %3929 = vmatpush1.bf16.msra.mxu0 0
        %3930 = vmatprep.subr.bf16.mxu0 0
        %3931 = vmatpush1.bf16.msra.mxu0 0
        %3932 = vmatprep.subr.bf16.mxu0 0
        %3933 = vmatpush1.bf16.msra.mxu0 0
        %3934 = vmatprep.subr.bf16.mxu0 0
        %3935 = vmatpush1.bf16.msra.mxu0 0
        %3936 = vmatprep.subr.bf16.mxu0 0
        %3937 = vmatpush1.bf16.msra.mxu0 0
        %3938 = vmatprep.subr.bf16.mxu0 0
        %3939 = vmatpush1.bf16.msra.mxu0 0
        %3940 = vmatprep.subr.bf16.mxu0 0
        %3941 = vmatpush1.bf16.msra.mxu0 0
        %3942 = vmatprep.subr.bf16.mxu0 0
        %3943 = vmatpush1.bf16.msra.mxu0 0
        %3944 = vmatprep.subr.bf16.mxu0 0
        %3945 = vmatpush1.bf16.msra.mxu0 0
        %3946 = vmatprep.subr.bf16.mxu0 0
        %3947 = vmatpush1.bf16.msra.mxu0 0
        %3948 = vmatprep.subr.bf16.mxu0 0
        %3949 = vmatpush1.bf16.msra.mxu0 0
        %3950 = vmatprep.mubr.bf16.mxu0 0
        %3951 = vmatmul.mubr.bf16.gmra.mrb[0].mxu0 %v3913
        %v3952 = vpop.f32.mrb[0].mxu0
        %v3953 = vadd.f32 0.0, %v3952
        %v3954 = vpop.f32.mrb[0].mxu0
        %v3955 = vpop.f32.mrb[0].mxu0
        %v3956 = vpop.f32.mrb[0].mxu0
        %3957 = vdwg.mxu0
        %3958 = vrot.lane.b32.xlu0 %v3330, 64
        %v3959 = vpop.permute.xlu0 %3958
        %3960 = vrot.lane.b32.xlu0 %v3425, 64
        %v3961 = vpop.permute.xlu0 %3960
        %v3963 = vsel %vm2116, %v3959, 0
        %v3966 = vsel %vm2116, %v3961, 0
        %3968 = vmatprep.subr.bf16.mxu0 0
        %3969 = vmatpush1.bf16.xpose.msra.mxu0 %v3966
        %3970 = vmatprep.subr.bf16.mxu0 0
        %3971 = vmatpush1.bf16.xpose.msra.mxu0 0
        %3972 = vmatprep.subr.bf16.mxu0 0
        %3973 = vmatpush1.bf16.xpose.msra.mxu0 0
        %3974 = vmatprep.subr.bf16.mxu0 0
        %3975 = vmatpush1.bf16.xpose.msra.mxu0 0
        %3976 = vmatprep.subr.bf16.mxu0 0
        %3977 = vmatpush1.bf16.xpose.msra.mxu0 0
        %3978 = vmatprep.subr.bf16.mxu0 0
        %3979 = vmatpush1.bf16.xpose.msra.mxu0 0
        %3980 = vmatprep.subr.bf16.mxu0 0
        %3981 = vmatpush1.bf16.xpose.msra.mxu0 0
        %3982 = vmatprep.subr.bf16.mxu0 0
        %3983 = vmatpush1.bf16.xpose.msra.mxu0 0
        %3984 = vmatprep.subr.bf16.mxu0 0
        %3985 = vmatpush1.bf16.xpose.msra.mxu0 0
        %3986 = vmatprep.subr.bf16.mxu0 0
        %3987 = vmatpush1.bf16.xpose.msra.mxu0 0
        %3988 = vmatprep.subr.bf16.mxu0 0
        %3989 = vmatpush1.bf16.xpose.msra.mxu0 0
        %3990 = vmatprep.subr.bf16.mxu0 0
        %3991 = vmatpush1.bf16.xpose.msra.mxu0 0
        %3992 = vmatprep.subr.bf16.mxu0 0
        %3993 = vmatpush1.bf16.xpose.msra.mxu0 0
        %3994 = vmatprep.subr.bf16.mxu0 0
        %3995 = vmatpush1.bf16.xpose.msra.mxu0 0
        %3996 = vmatprep.subr.bf16.mxu0 0
        %3997 = vmatpush1.bf16.xpose.msra.mxu0 0
        %3998 = vmatprep.subr.bf16.mxu0 0
        %3999 = vmatpush1.bf16.xpose.msra.mxu0 0
        %4000 = vmatprep.mubr.bf16.mxu0 0
        %4001 = vmatmul.mubr.bf16.gmra.mrb[0].mxu0 %v3963
        %v4002 = vpop.f32.mrb[0].mxu0
        %v4003 = vadd.f32 %v1726, %v4002
        %v4004 = vpop.f32.mrb[0].mxu0
        %v4005 = vpop.f32.mrb[0].mxu0
        %v4006 = vpop.f32.mrb[0].mxu0
        %4007 = vdwg.mxu0
        %v4008 = vsel %vm2163, %v4003, -inf
        %4009 = vmax.xlane.f32.xlu0 %v4008
        %v4010 = vpop.xlane.xlu0 %4009
        %v4011 = vsub.f32 %v4003, %v4010
        %v4012 = vmul.f32 %v4011, 1.442695
        %v4013 = vpow.pop %v4012
        %v4014 = vsel %vm2163, %v4013, 0.0
        %4015 = vadd.xlane.f32.xlu0 %v4014
        %v4016 = vpop.xlane.xlu0 %4015
        %v4017 = vrcp.pop %v4016
        %v4018 = vmul.f32 %v4013, %v4017
        %v4019 = vpack.c.bf16 %v4018, %v4018
        %4020 = vrot.lane.b32.xlu0 %v3520, 64
        %v4021 = vpop.permute.xlu0 %4020
        %v4023 = vsel %vm2163, %v4019, 0
        %v4026 = vsel %vm2179, %v4021, 0
        %4028 = vmatprep.subr.bf16.mxu0 0
        %4029 = vmatpush1.bf16.msra.mxu0 %v4026
        %4030 = vmatprep.subr.bf16.mxu0 0
        %4031 = vmatpush1.bf16.msra.mxu0 0
        %4032 = vmatprep.subr.bf16.mxu0 0
        %4033 = vmatpush1.bf16.msra.mxu0 0
        %4034 = vmatprep.subr.bf16.mxu0 0
        %4035 = vmatpush1.bf16.msra.mxu0 0
        %4036 = vmatprep.subr.bf16.mxu0 0
        %4037 = vmatpush1.bf16.msra.mxu0 0
        %4038 = vmatprep.subr.bf16.mxu0 0
        %4039 = vmatpush1.bf16.msra.mxu0 0
        %4040 = vmatprep.subr.bf16.mxu0 0
        %4041 = vmatpush1.bf16.msra.mxu0 0
        %4042 = vmatprep.subr.bf16.mxu0 0
        %4043 = vmatpush1.bf16.msra.mxu0 0
        %4044 = vmatprep.subr.bf16.mxu0 0
        %4045 = vmatpush1.bf16.msra.mxu0 0
        %4046 = vmatprep.subr.bf16.mxu0 0
        %4047 = vmatpush1.bf16.msra.mxu0 0
        %4048 = vmatprep.subr.bf16.mxu0 0
        %4049 = vmatpush1.bf16.msra.mxu0 0
        %4050 = vmatprep.subr.bf16.mxu0 0
        %4051 = vmatpush1.bf16.msra.mxu0 0
        %4052 = vmatprep.subr.bf16.mxu0 0
        %4053 = vmatpush1.bf16.msra.mxu0 0
        %4054 = vmatprep.subr.bf16.mxu0 0
        %4055 = vmatpush1.bf16.msra.mxu0 0
        %4056 = vmatprep.subr.bf16.mxu0 0
        %4057 = vmatpush1.bf16.msra.mxu0 0
        %4058 = vmatprep.subr.bf16.mxu0 0
        %4059 = vmatpush1.bf16.msra.mxu0 0
        %4060 = vmatprep.mubr.bf16.mxu0 0
        %4061 = vmatmul.mubr.bf16.gmra.mrb[0].mxu0 %v4023
        %v4062 = vpop.f32.mrb[0].mxu0
        %v4063 = vadd.f32 0.0, %v4062
        %v4064 = vpop.f32.mrb[0].mxu0
        %v4065 = vpop.f32.mrb[0].mxu0
        %v4066 = vpop.f32.mrb[0].mxu0
        %4067 = vdwg.mxu0
        %4068 = vrot.lane.b32.xlu0 %v3330, 48
        %v4069 = vpop.permute.xlu0 %4068
        %4070 = vrot.lane.b32.xlu0 %v3425, 48
        %v4071 = vpop.permute.xlu0 %4070
        %v4073 = vsel %vm2116, %v4069, 0
        %v4076 = vsel %vm2116, %v4071, 0
        %4078 = vmatprep.subr.bf16.mxu0 0
        %4079 = vmatpush1.bf16.xpose.msra.mxu0 %v4076
        %4080 = vmatprep.subr.bf16.mxu0 0
        %4081 = vmatpush1.bf16.xpose.msra.mxu0 0
        %4082 = vmatprep.subr.bf16.mxu0 0
        %4083 = vmatpush1.bf16.xpose.msra.mxu0 0
        %4084 = vmatprep.subr.bf16.mxu0 0
        %4085 = vmatpush1.bf16.xpose.msra.mxu0 0
        %4086 = vmatprep.subr.bf16.mxu0 0
        %4087 = vmatpush1.bf16.xpose.msra.mxu0 0
        %4088 = vmatprep.subr.bf16.mxu0 0
        %4089 = vmatpush1.bf16.xpose.msra.mxu0 0
        %4090 = vmatprep.subr.bf16.mxu0 0
        %4091 = vmatpush1.bf16.xpose.msra.mxu0 0
        %4092 = vmatprep.subr.bf16.mxu0 0
        %4093 = vmatpush1.bf16.xpose.msra.mxu0 0
        %4094 = vmatprep.subr.bf16.mxu0 0
        %4095 = vmatpush1.bf16.xpose.msra.mxu0 0
        %4096 = vmatprep.subr.bf16.mxu0 0
        %4097 = vmatpush1.bf16.xpose.msra.mxu0 0
        %4098 = vmatprep.subr.bf16.mxu0 0
        %4099 = vmatpush1.bf16.xpose.msra.mxu0 0
        %4100 = vmatprep.subr.bf16.mxu0 0
        %4101 = vmatpush1.bf16.xpose.msra.mxu0 0
        %4102 = vmatprep.subr.bf16.mxu0 0
        %4103 = vmatpush1.bf16.xpose.msra.mxu0 0
        %4104 = vmatprep.subr.bf16.mxu0 0
        %4105 = vmatpush1.bf16.xpose.msra.mxu0 0
        %4106 = vmatprep.subr.bf16.mxu0 0
        %4107 = vmatpush1.bf16.xpose.msra.mxu0 0
        %4108 = vmatprep.subr.bf16.mxu0 0
        %4109 = vmatpush1.bf16.xpose.msra.mxu0 0
        %4110 = vmatprep.mubr.bf16.mxu0 0
        %4111 = vmatmul.mubr.bf16.gmra.mrb[0].mxu0 %v4073
        %v4112 = vpop.f32.mrb[0].mxu0
        %v4113 = vadd.f32 %v1726, %v4112
        %v4114 = vpop.f32.mrb[0].mxu0
        %v4115 = vpop.f32.mrb[0].mxu0
        %v4116 = vpop.f32.mrb[0].mxu0
        %4117 = vdwg.mxu0
        %v4118 = vsel %vm2163, %v4113, -inf
        %4119 = vmax.xlane.f32.xlu0 %v4118
        %v4120 = vpop.xlane.xlu0 %4119
        %v4121 = vsub.f32 %v4113, %v4120
        %v4122 = vmul.f32 %v4121, 1.442695
        %v4123 = vpow.pop %v4122
        %v4124 = vsel %vm2163, %v4123, 0.0
        %4125 = vadd.xlane.f32.xlu0 %v4124
        %v4126 = vpop.xlane.xlu0 %4125
        %v4127 = vrcp.pop %v4126
        %v4128 = vmul.f32 %v4123, %v4127
        %v4129 = vpack.c.bf16 %v4128, %v4128
        %4130 = vrot.lane.b32.xlu0 %v3520, 48
        %v4131 = vpop.permute.xlu0 %4130
        %v4133 = vsel %vm2163, %v4129, 0
        %v4136 = vsel %vm2179, %v4131, 0
        %4138 = vmatprep.subr.bf16.mxu0 0
        %4139 = vmatpush1.bf16.msra.mxu0 %v4136
        %4140 = vmatprep.subr.bf16.mxu0 0
        %4141 = vmatpush1.bf16.msra.mxu0 0
        %4142 = vmatprep.subr.bf16.mxu0 0
        %4143 = vmatpush1.bf16.msra.mxu0 0
        %4144 = vmatprep.subr.bf16.mxu0 0
        %4145 = vmatpush1.bf16.msra.mxu0 0
        %4146 = vmatprep.subr.bf16.mxu0 0
        %4147 = vmatpush1.bf16.msra.mxu0 0
        %4148 = vmatprep.subr.bf16.mxu0 0
        %4149 = vmatpush1.bf16.msra.mxu0 0
        %4150 = vmatprep.subr.bf16.mxu0 0
        %4151 = vmatpush1.bf16.msra.mxu0 0
        %4152 = vmatprep.subr.bf16.mxu0 0
        %4153 = vmatpush1.bf16.msra.mxu0 0
        %4154 = vmatprep.subr.bf16.mxu0 0
        %4155 = vmatpush1.bf16.msra.mxu0 0
        %4156 = vmatprep.subr.bf16.mxu0 0
        %4157 = vmatpush1.bf16.msra.mxu0 0
        %4158 = vmatprep.subr.bf16.mxu0 0
        %4159 = vmatpush1.bf16.msra.mxu0 0
        %4160 = vmatprep.subr.bf16.mxu0 0
        %4161 = vmatpush1.bf16.msra.mxu0 0
        %4162 = vmatprep.subr.bf16.mxu0 0
        %4163 = vmatpush1.bf16.msra.mxu0 0
        %4164 = vmatprep.subr.bf16.mxu0 0
        %4165 = vmatpush1.bf16.msra.mxu0 0
        %4166 = vmatprep.subr.bf16.mxu0 0
        %4167 = vmatpush1.bf16.msra.mxu0 0
        %4168 = vmatprep.subr.bf16.mxu0 0
        %4169 = vmatpush1.bf16.msra.mxu0 0
        %4170 = vmatprep.mubr.bf16.mxu0 0
        %4171 = vmatmul.mubr.bf16.gmra.mrb[0].mxu0 %v4133
        %v4172 = vpop.f32.mrb[0].mxu0
        %v4173 = vadd.f32 0.0, %v4172
        %v4174 = vpop.f32.mrb[0].mxu0
        %v4175 = vpop.f32.mrb[0].mxu0
        %v4176 = vpop.f32.mrb[0].mxu0
        %4177 = vdwg.mxu0
        %4178 = vrot.lane.b32.xlu0 %v3330, 32
        %v4179 = vpop.permute.xlu0 %4178
        %4180 = vrot.lane.b32.xlu0 %v3425, 32
        %v4181 = vpop.permute.xlu0 %4180
        %v4183 = vsel %vm2116, %v4179, 0
        %v4186 = vsel %vm2116, %v4181, 0
        %4188 = vmatprep.subr.bf16.mxu0 0
        %4189 = vmatpush1.bf16.xpose.msra.mxu0 %v4186
        %4190 = vmatprep.subr.bf16.mxu0 0
        %4191 = vmatpush1.bf16.xpose.msra.mxu0 0
        %4192 = vmatprep.subr.bf16.mxu0 0
        %4193 = vmatpush1.bf16.xpose.msra.mxu0 0
        %4194 = vmatprep.subr.bf16.mxu0 0
        %4195 = vmatpush1.bf16.xpose.msra.mxu0 0
        %4196 = vmatprep.subr.bf16.mxu0 0
        %4197 = vmatpush1.bf16.xpose.msra.mxu0 0
        %4198 = vmatprep.subr.bf16.mxu0 0
        %4199 = vmatpush1.bf16.xpose.msra.mxu0 0
        %4200 = vmatprep.subr.bf16.mxu0 0
        %4201 = vmatpush1.bf16.xpose.msra.mxu0 0
        %4202 = vmatprep.subr.bf16.mxu0 0
        %4203 = vmatpush1.bf16.xpose.msra.mxu0 0
        %4204 = vmatprep.subr.bf16.mxu0 0
        %4205 = vmatpush1.bf16.xpose.msra.mxu0 0
        %4206 = vmatprep.subr.bf16.mxu0 0
        %4207 = vmatpush1.bf16.xpose.msra.mxu0 0
        %4208 = vmatprep.subr.bf16.mxu0 0
        %4209 = vmatpush1.bf16.xpose.msra.mxu0 0
        %4210 = vmatprep.subr.bf16.mxu0 0
        %4211 = vmatpush1.bf16.xpose.msra.mxu0 0
        %4212 = vmatprep.subr.bf16.mxu0 0
        %4213 = vmatpush1.bf16.xpose.msra.mxu0 0
        %4214 = vmatprep.subr.bf16.mxu0 0
        %4215 = vmatpush1.bf16.xpose.msra.mxu0 0
        %4216 = vmatprep.subr.bf16.mxu0 0
        %4217 = vmatpush1.bf16.xpose.msra.mxu0 0
        %4218 = vmatprep.subr.bf16.mxu0 0
        %4219 = vmatpush1.bf16.xpose.msra.mxu0 0
        %4220 = vmatprep.mubr.bf16.mxu0 0
        %4221 = vmatmul.mubr.bf16.gmra.mrb[0].mxu0 %v4183
        %v4222 = vpop.f32.mrb[0].mxu0
        %v4223 = vadd.f32 %v1726, %v4222
        %v4224 = vpop.f32.mrb[0].mxu0
        %v4225 = vpop.f32.mrb[0].mxu0
        %v4226 = vpop.f32.mrb[0].mxu0
        %4227 = vdwg.mxu0
        %v4228 = vsel %vm2163, %v4223, -inf
        %4229 = vmax.xlane.f32.xlu0 %v4228
        %v4230 = vpop.xlane.xlu0 %4229
        %v4231 = vsub.f32 %v4223, %v4230
        %v4232 = vmul.f32 %v4231, 1.442695
        %v4233 = vpow.pop %v4232
        %v4234 = vsel %vm2163, %v4233, 0.0
        %4235 = vadd.xlane.f32.xlu0 %v4234
        %v4236 = vpop.xlane.xlu0 %4235
        %v4237 = vrcp.pop %v4236
        %v4238 = vmul.f32 %v4233, %v4237
        %v4239 = vpack.c.bf16 %v4238, %v4238
        %4240 = vrot.lane.b32.xlu0 %v3520, 32
        %v4241 = vpop.permute.xlu0 %4240
        %v4243 = vsel %vm2163, %v4239, 0
        %v4246 = vsel %vm2179, %v4241, 0
        %4248 = vmatprep.subr.bf16.mxu0 0
        %4249 = vmatpush1.bf16.msra.mxu0 %v4246
        %4250 = vmatprep.subr.bf16.mxu0 0
        %4251 = vmatpush1.bf16.msra.mxu0 0
        %4252 = vmatprep.subr.bf16.mxu0 0
        %4253 = vmatpush1.bf16.msra.mxu0 0
        %4254 = vmatprep.subr.bf16.mxu0 0
        %4255 = vmatpush1.bf16.msra.mxu0 0
        %4256 = vmatprep.subr.bf16.mxu0 0
        %4257 = vmatpush1.bf16.msra.mxu0 0
        %4258 = vmatprep.subr.bf16.mxu0 0
        %4259 = vmatpush1.bf16.msra.mxu0 0
        %4260 = vmatprep.subr.bf16.mxu0 0
        %4261 = vmatpush1.bf16.msra.mxu0 0
        %4262 = vmatprep.subr.bf16.mxu0 0
        %4263 = vmatpush1.bf16.msra.mxu0 0
        %4264 = vmatprep.subr.bf16.mxu0 0
        %4265 = vmatpush1.bf16.msra.mxu0 0
        %4266 = vmatprep.subr.bf16.mxu0 0
        %4267 = vmatpush1.bf16.msra.mxu0 0
        %4268 = vmatprep.subr.bf16.mxu0 0
        %4269 = vmatpush1.bf16.msra.mxu0 0
        %4270 = vmatprep.subr.bf16.mxu0 0
        %4271 = vmatpush1.bf16.msra.mxu0 0
        %4272 = vmatprep.subr.bf16.mxu0 0
        %4273 = vmatpush1.bf16.msra.mxu0 0
        %4274 = vmatprep.subr.bf16.mxu0 0
        %4275 = vmatpush1.bf16.msra.mxu0 0
        %4276 = vmatprep.subr.bf16.mxu0 0
        %4277 = vmatpush1.bf16.msra.mxu0 0
        %4278 = vmatprep.subr.bf16.mxu0 0
        %4279 = vmatpush1.bf16.msra.mxu0 0
        %4280 = vmatprep.mubr.bf16.mxu0 0
        %4281 = vmatmul.mubr.bf16.gmra.mrb[0].mxu0 %v4243
        %v4282 = vpop.f32.mrb[0].mxu0
        %v4283 = vadd.f32 0.0, %v4282
        %v4284 = vpop.f32.mrb[0].mxu0
        %v4285 = vpop.f32.mrb[0].mxu0
        %v4286 = vpop.f32.mrb[0].mxu0
        %4287 = vdwg.mxu0
        %4288 = vrot.lane.b32.xlu0 %v3330, 16
        %v4289 = vpop.permute.xlu0 %4288
        %4290 = vrot.lane.b32.xlu0 %v3425, 16
        %v4291 = vpop.permute.xlu0 %4290
        %v4293 = vsel %vm2116, %v4289, 0
        %v4296 = vsel %vm2116, %v4291, 0
        %4298 = vmatprep.subr.bf16.mxu0 0
        %4299 = vmatpush1.bf16.xpose.msra.mxu0 %v4296
        %4300 = vmatprep.subr.bf16.mxu0 0
        %4301 = vmatpush1.bf16.xpose.msra.mxu0 0
        %4302 = vmatprep.subr.bf16.mxu0 0
        %4303 = vmatpush1.bf16.xpose.msra.mxu0 0
        %4304 = vmatprep.subr.bf16.mxu0 0
        %4305 = vmatpush1.bf16.xpose.msra.mxu0 0
        %4306 = vmatprep.subr.bf16.mxu0 0
        %4307 = vmatpush1.bf16.xpose.msra.mxu0 0
        %4308 = vmatprep.subr.bf16.mxu0 0
        %4309 = vmatpush1.bf16.xpose.msra.mxu0 0
        %4310 = vmatprep.subr.bf16.mxu0 0
        %4311 = vmatpush1.bf16.xpose.msra.mxu0 0
        %4312 = vmatprep.subr.bf16.mxu0 0
        %4313 = vmatpush1.bf16.xpose.msra.mxu0 0
        %4314 = vmatprep.subr.bf16.mxu0 0
        %4315 = vmatpush1.bf16.xpose.msra.mxu0 0
        %4316 = vmatprep.subr.bf16.mxu0 0
        %4317 = vmatpush1.bf16.xpose.msra.mxu0 0
        %4318 = vmatprep.subr.bf16.mxu0 0
        %4319 = vmatpush1.bf16.xpose.msra.mxu0 0
        %4320 = vmatprep.subr.bf16.mxu0 0
        %4321 = vmatpush1.bf16.xpose.msra.mxu0 0
        %4322 = vmatprep.subr.bf16.mxu0 0
        %4323 = vmatpush1.bf16.xpose.msra.mxu0 0
        %4324 = vmatprep.subr.bf16.mxu0 0
        %4325 = vmatpush1.bf16.xpose.msra.mxu0 0
        %4326 = vmatprep.subr.bf16.mxu0 0
        %4327 = vmatpush1.bf16.xpose.msra.mxu0 0
        %4328 = vmatprep.subr.bf16.mxu0 0
        %4329 = vmatpush1.bf16.xpose.msra.mxu0 0
        %4330 = vmatprep.mubr.bf16.mxu0 0
        %4331 = vmatmul.mubr.bf16.gmra.mrb[0].mxu0 %v4293
        %v4332 = vpop.f32.mrb[0].mxu0
        %v4333 = vadd.f32 %v1726, %v4332
        %v4334 = vpop.f32.mrb[0].mxu0
        %v4335 = vpop.f32.mrb[0].mxu0
        %v4336 = vpop.f32.mrb[0].mxu0
        %4337 = vdwg.mxu0
        %v4338 = vsel %vm2163, %v4333, -inf
        %4339 = vmax.xlane.f32.xlu0 %v4338
        %v4340 = vpop.xlane.xlu0 %4339
        %v4341 = vsub.f32 %v4333, %v4340
        %v4342 = vmul.f32 %v4341, 1.442695
        %v4343 = vpow.pop %v4342
        %v4344 = vsel %vm2163, %v4343, 0.0
        %4345 = vadd.xlane.f32.xlu0 %v4344
        %v4346 = vpop.xlane.xlu0 %4345
        %v4347 = vrcp.pop %v4346
        %v4348 = vmul.f32 %v4343, %v4347
        %v4349 = vpack.c.bf16 %v4348, %v4348
        %4350 = vrot.lane.b32.xlu0 %v3520, 16
        %v4351 = vpop.permute.xlu0 %4350
        %v4353 = vsel %vm2163, %v4349, 0
        %v4356 = vsel %vm2179, %v4351, 0
        %4358 = vmatprep.subr.bf16.mxu0 0
        %4359 = vmatpush1.bf16.msra.mxu0 %v4356
        %4360 = vmatprep.subr.bf16.mxu0 0
        %4361 = vmatpush1.bf16.msra.mxu0 0
        %4362 = vmatprep.subr.bf16.mxu0 0
        %4363 = vmatpush1.bf16.msra.mxu0 0
        %4364 = vmatprep.subr.bf16.mxu0 0
        %4365 = vmatpush1.bf16.msra.mxu0 0
        %4366 = vmatprep.subr.bf16.mxu0 0
        %4367 = vmatpush1.bf16.msra.mxu0 0
        %4368 = vmatprep.subr.bf16.mxu0 0
        %4369 = vmatpush1.bf16.msra.mxu0 0
        %4370 = vmatprep.subr.bf16.mxu0 0
        %4371 = vmatpush1.bf16.msra.mxu0 0
        %4372 = vmatprep.subr.bf16.mxu0 0
        %4373 = vmatpush1.bf16.msra.mxu0 0
        %4374 = vmatprep.subr.bf16.mxu0 0
        %4375 = vmatpush1.bf16.msra.mxu0 0
        %4376 = vmatprep.subr.bf16.mxu0 0
        %4377 = vmatpush1.bf16.msra.mxu0 0
        %4378 = vmatprep.subr.bf16.mxu0 0
        %4379 = vmatpush1.bf16.msra.mxu0 0
        %4380 = vmatprep.subr.bf16.mxu0 0
        %4381 = vmatpush1.bf16.msra.mxu0 0
        %4382 = vmatprep.subr.bf16.mxu0 0
        %4383 = vmatpush1.bf16.msra.mxu0 0
        %4384 = vmatprep.subr.bf16.mxu0 0
        %4385 = vmatpush1.bf16.msra.mxu0 0
        %4386 = vmatprep.subr.bf16.mxu0 0
        %4387 = vmatpush1.bf16.msra.mxu0 0
        %4388 = vmatprep.subr.bf16.mxu0 0
        %4389 = vmatpush1.bf16.msra.mxu0 0
        %4390 = vmatprep.mubr.bf16.mxu0 0
        %4391 = vmatmul.mubr.bf16.gmra.mrb[0].mxu0 %v4353
        %v4392 = vpop.f32.mrb[0].mxu0
        %v4393 = vadd.f32 0.0, %v4392
        %v4394 = vpop.f32.mrb[0].mxu0
        %v4395 = vpop.f32.mrb[0].mxu0
        %v4396 = vpop.f32.mrb[0].mxu0
        %4397 = vdwg.mxu0
        %4399 = vrot.lane.b32.xlu0 %v3733, 16
        %v4400 = vpop.permute.xlu0 %4399
        %4403 = vrot.lane.b32.xlu0 %v3843, 32
        %v4404 = vpop.permute.xlu0 %4403
        %4407 = vrot.lane.b32.xlu0 %v3953, 48
        %v4408 = vpop.permute.xlu0 %4407
        %4411 = vrot.lane.b32.xlu0 %v4063, 64
        %v4412 = vpop.permute.xlu0 %4411
        %4415 = vrot.lane.b32.xlu0 %v4173, 80
        %v4416 = vpop.permute.xlu0 %4415
        %4419 = vrot.lane.b32.xlu0 %v4283, 96
        %v4420 = vpop.permute.xlu0 %4419
        %4423 = vrot.lane.b32.xlu0 %v4393, 112
        %v4424 = vpop.permute.xlu0 %4423
        %v4426 = vsel %vm2116, %v3620, %v4400
        %v4427 = vsel %vm3025, %v4426, %v4404
        %v4428 = vsel %vm3027, %v4427, %v4408
        %v4429 = vsel %vm3029, %v4428, %v4412
        %v4430 = vsel %vm3031, %v4429, %v4416
        %v4431 = vsel %vm3033, %v4430, %v4420
        %v4432 = vsel %vm3035, %v4431, %v4424
        %v4433 = vpack.c.bf16 %v4432, %v4432
        %v4435 = vlaneseq
        %v4436 = vshrl.u32 %v4435, 7
        %v4437 = vsub.s32 0, %v4436
        %v4438 = vrot.slane %v3235, %v4437
        %v4456 = vunpack.c.l.b16 %v3219
        %v4457 = vunpack.c.l.b16 %v3220
        %v4458 = vunpack.c.l.b16 %v3221
        %v4459 = vunpack.c.l.b16 %v3222
        %v4460 = vunpack.c.l.b16 %v3223
        %v4461 = vunpack.c.l.b16 %v3224
        %v4462 = vunpack.c.l.b16 %v3225
        %v4463 = vunpack.c.l.b16 %v3226
        %v4464 = vunpack.c.l.b16 %v3227
        %v4465 = vunpack.c.l.b16 %v3228
        %v4466 = vunpack.c.l.b16 %v3229
        %v4467 = vunpack.c.l.b16 %v3230
        %v4468 = vunpack.c.l.b16 %v3231
        %v4469 = vunpack.c.l.b16 %v3232
        %v4470 = vunpack.c.l.b16 %v3233
        %v4471 = vunpack.c.l.b16 %v3234
        %v4472 = vpack.c.b16 %v4457, %v4456
        %v4473 = vpack.c.b16 %v4459, %v4458
        %v4474 = vpack.c.b16 %v4461, %v4460
        %v4475 = vpack.c.b16 %v4463, %v4462
        %v4476 = vpack.c.b16 %v4465, %v4464
        %v4477 = vpack.c.b16 %v4467, %v4466
        %v4478 = vpack.c.b16 %v4469, %v4468
        %v4479 = vpack.c.b16 %v4471, %v4470
        %4488 = vmatprep.subr.bf16.mxu0 0
        %4489 = vmatpush1.bf16.msra.mxu0 %v4472
        %4490 = vmatprep.subr.bf16.mxu0 0
        %4491 = vmatpush1.bf16.msra.mxu0 %v4473
        %4492 = vmatprep.subr.bf16.mxu0 0
        %4493 = vmatpush1.bf16.msra.mxu0 %v4474
        %4494 = vmatprep.subr.bf16.mxu0 0
        %4495 = vmatpush1.bf16.msra.mxu0 %v4475
        %4496 = vmatprep.subr.bf16.mxu0 0
        %4497 = vmatpush1.bf16.msra.mxu0 %v4476
        %4498 = vmatprep.subr.bf16.mxu0 0
        %4499 = vmatpush1.bf16.msra.mxu0 %v4477
        %4500 = vmatprep.subr.bf16.mxu0 0
        %4501 = vmatpush1.bf16.msra.mxu0 %v4478
        %4502 = vmatprep.subr.bf16.mxu0 0
        %4503 = vmatpush1.bf16.msra.mxu0 %v4479
        %4504 = vmatprep.subr.bf16.mxu0 0
        %4505 = vmatpush1.bf16.msra.mxu0 0
        %4506 = vmatprep.subr.bf16.mxu0 0
        %4507 = vmatpush1.bf16.msra.mxu0 0
        %4508 = vmatprep.subr.bf16.mxu0 0
        %4509 = vmatpush1.bf16.msra.mxu0 0
        %4510 = vmatprep.subr.bf16.mxu0 0
        %4511 = vmatpush1.bf16.msra.mxu0 0
        %4512 = vmatprep.subr.bf16.mxu0 0
        %4513 = vmatpush1.bf16.msra.mxu0 0
        %4514 = vmatprep.subr.bf16.mxu0 0
        %4515 = vmatpush1.bf16.msra.mxu0 0
        %4516 = vmatprep.subr.bf16.mxu0 0
        %4517 = vmatpush1.bf16.msra.mxu0 0
        %4518 = vmatprep.subr.bf16.mxu0 0
        %4519 = vmatpush1.bf16.msra.mxu0 0
        %4520 = vmatprep.mubr.bf16.mxu0 0
        %4521 = vmatmul.mubr.bf16.gmra.mrb[0].mxu0 %v4433
        %v4522 = vpop.f32.mrb[0].mxu0
        %v4523 = vadd.f32 %v4438, %v4522
        %v4524 = vpop.f32.mrb[0].mxu0
        %v4525 = vpop.f32.mrb[0].mxu0
        %v4526 = vpop.f32.mrb[0].mxu0
        %4527 = vdwg.mxu0
        %v4528 = vadd.f32 %v3132, %v4523
        %v4529 = vld [vmem:[%s1703] sm:$0x1]
        %v4530 = vld [vmem:[%s1706] sm:$0x1]
        %4531 = vadd.xlane.f32.xlu0 %v4528
        %v4532 = vpop.xlane.xlu0 %4531
        %v4533 = vmul.f32 %v4532, %v1731
        %v4534 = vsub.f32 %v4528, %v4533
        %v4535 = vmul.f32 %v4534, %v4534
        %4536 = vadd.xlane.f32.xlu0 %v4535
        %v4537 = vpop.xlane.xlu0 %4536
        %v4538 = vmul.f32 %v4537, 0.007874016
        %v4539 = vrsqrt.pop %v4538
        %v4540 = vmul.f32 %v4538, %v4539
        %vm4541 = vcmp.eq.f32.partialorder %v4538, inf
        %v4542 = vsel %vm4541, %v4538, %v4540
        %vm4543 = vcmp.eq.f32.partialorder %v4538, 0.0
        %v4544 = vand.u32 %v4538, 2147483648
        %v4545 = vsel %vm4543, %v4544, %v4542
        %v4546 = vadd.f32 %v4545, 1e-06
        %v4547 = vrcp.pop %v4546
        %v4549 = vlaneseq
        %v4550 = vshrl.u32 %v4549, 7
        %v4551 = vsub.s32 0, %v4550
        %v4552 = vrot.slane %v4529, %v4551
        %v4554 = vmul.f32 %v4552, %v4534
        %v4555 = vmul.f32 %v4554, %v4547
        %v4557 = vlaneseq
        %v4558 = vshrl.u32 %v4557, 7
        %v4559 = vsub.s32 0, %v4558
        %v4560 = vrot.slane %v4530, %v4559
        %v4562 = vadd.f32 %v4555, %v4560
        %v4563 = vpack.c.bf16 %v4562, %v4562
        %v4564 = vld [vmem:[%s1458] sm:$0xff]
        %v4565 = vld [vmem:[%s1458 + $0x8] sm:$0xff]
        %v4566 = vld [vmem:[%s1458 + $0x10] sm:$0xff]
        %v4567 = vld [vmem:[%s1458 + $0x18] sm:$0xff]
        %v4568 = vld [vmem:[%s1458 + $0x20] sm:$0xff]
        %v4569 = vld [vmem:[%s1458 + $0x28] sm:$0xff]
        %v4570 = vld [vmem:[%s1458 + $0x30] sm:$0xff]
        %v4571 = vld [vmem:[%s1458 + $0x38] sm:$0xff]
        %v4572 = vld [vmem:[%s1458 + $0x40] sm:$0xff]
        %v4573 = vld [vmem:[%s1458 + $0x48] sm:$0xff]
        %v4574 = vld [vmem:[%s1458 + $0x50] sm:$0xff]
        %v4575 = vld [vmem:[%s1458 + $0x58] sm:$0xff]
        %v4576 = vld [vmem:[%s1458 + $0x60] sm:$0xff]
        %v4577 = vld [vmem:[%s1458 + $0x68] sm:$0xff]
        %v4578 = vld [vmem:[%s1458 + $0x70] sm:$0xff]
        %v4579 = vld [vmem:[%s1458 + $0x78] sm:$0xff]
        %v4580 = vld [vmem:[%s1458 + $0x80] sm:$0xff]
        %v4581 = vld [vmem:[%s1458 + $0x88] sm:$0xff]
        %v4582 = vld [vmem:[%s1458 + $0x90] sm:$0xff]
        %v4583 = vld [vmem:[%s1458 + $0x98] sm:$0xff]
        %v4584 = vld [vmem:[%s1458 + $0xa0] sm:$0xff]
        %v4585 = vld [vmem:[%s1458 + $0xa8] sm:$0xff]
        %v4586 = vld [vmem:[%s1458 + $0xb0] sm:$0xff]
        %v4587 = vld [vmem:[%s1458 + $0xb8] sm:$0xff]
        %v4588 = vld [vmem:[%s1458 + $0xc0] sm:$0xff]
        %v4589 = vld [vmem:[%s1458 + $0xc8] sm:$0xff]
        %v4590 = vld [vmem:[%s1458 + $0xd0] sm:$0xff]
        %v4591 = vld [vmem:[%s1458 + $0xd8] sm:$0xff]
        %v4592 = vld [vmem:[%s1458 + $0xe0] sm:$0xff]
        %v4593 = vld [vmem:[%s1458 + $0xe8] sm:$0xff]
        %v4594 = vld [vmem:[%s1458 + $0xf0] sm:$0xff]
        %v4595 = vld [vmem:[%s1458 + $0xf8] sm:$0xff]
        %v4596 = vld [vmem:[%s1458 + $0x100] sm:$0xff]
        %v4597 = vld [vmem:[%s1458 + $0x108] sm:$0xff]
        %v4598 = vld [vmem:[%s1458 + $0x110] sm:$0xff]
        %v4599 = vld [vmem:[%s1458 + $0x118] sm:$0xff]
        %v4600 = vld [vmem:[%s1458 + $0x120] sm:$0xff]
        %v4601 = vld [vmem:[%s1458 + $0x128] sm:$0xff]
        %v4602 = vld [vmem:[%s1458 + $0x130] sm:$0xff]
        %v4603 = vld [vmem:[%s1458 + $0x138] sm:$0xff]
        %v4604 = vld [vmem:[%s1458 + $0x140] sm:$0xff]
        %v4605 = vld [vmem:[%s1458 + $0x148] sm:$0xff]
        %v4606 = vld [vmem:[%s1458 + $0x150] sm:$0xff]
        %v4607 = vld [vmem:[%s1458 + $0x158] sm:$0xff]
        %v4608 = vld [vmem:[%s1458 + $0x160] sm:$0xff]
        %v4609 = vld [vmem:[%s1458 + $0x168] sm:$0xff]
        %v4610 = vld [vmem:[%s1458 + $0x170] sm:$0xff]
        %v4611 = vld [vmem:[%s1458 + $0x178] sm:$0xff]
        %v4612 = vld [vmem:[%s1458 + $0x180] sm:$0xff]
        %v4613 = vld [vmem:[%s1458 + $0x188] sm:$0xff]
        %v4614 = vld [vmem:[%s1458 + $0x190] sm:$0xff]
        %v4615 = vld [vmem:[%s1458 + $0x198] sm:$0xff]
        %v4616 = vld [vmem:[%s1458 + $0x1a0] sm:$0xff]
        %v4617 = vld [vmem:[%s1458 + $0x1a8] sm:$0xff]
        %v4618 = vld [vmem:[%s1458 + $0x1b0] sm:$0xff]
        %v4619 = vld [vmem:[%s1458 + $0x1b8] sm:$0xff]
        %v4620 = vld [vmem:[%s1458 + $0x1c0] sm:$0xff]
        %v4621 = vld [vmem:[%s1458 + $0x1c8] sm:$0xff]
        %v4622 = vld [vmem:[%s1458 + $0x1d0] sm:$0xff]
        %v4623 = vld [vmem:[%s1458 + $0x1d8] sm:$0xff]
        %v4624 = vld [vmem:[%s1458 + $0x1e0] sm:$0xff]
        %v4625 = vld [vmem:[%s1458 + $0x1e8] sm:$0xff]
        %v4626 = vld [vmem:[%s1458 + $0x1f0] sm:$0xff]
        %v4627 = vld [vmem:[%s1458 + $0x1f8] sm:$0xff]
        %v4628 = vld [vmem:[%s1458 + $0x200] sm:$0xff]
        %v4629 = vld [vmem:[%s1458 + $0x208] sm:$0xff]
        %v4630 = vld [vmem:[%s1458 + $0x210] sm:$0xff]
        %v4631 = vld [vmem:[%s1458 + $0x218] sm:$0xff]
        %v4632 = vld [vmem:[%s1458 + $0x220] sm:$0xff]
        %v4633 = vld [vmem:[%s1458 + $0x228] sm:$0xff]
        %v4634 = vld [vmem:[%s1458 + $0x230] sm:$0xff]
        %v4635 = vld [vmem:[%s1458 + $0x238] sm:$0xff]
        %v4636 = vld [vmem:[%s1458 + $0x240] sm:$0xff]
        %v4637 = vld [vmem:[%s1458 + $0x248] sm:$0xff]
        %v4638 = vld [vmem:[%s1458 + $0x250] sm:$0xff]
        %v4639 = vld [vmem:[%s1458 + $0x258] sm:$0xff]
        %v4640 = vld [vmem:[%s1458 + $0x260] sm:$0xff]
        %v4641 = vld [vmem:[%s1458 + $0x268] sm:$0xff]
        %v4642 = vld [vmem:[%s1458 + $0x270] sm:$0xff]
        %v4643 = vld [vmem:[%s1458 + $0x278] sm:$0xff]
        %v4644 = vld [vmem:[%s1458 + $0x280] sm:$0xff]
        %v4645 = vld [vmem:[%s1458 + $0x288] sm:$0xff]
        %v4646 = vld [vmem:[%s1458 + $0x290] sm:$0xff]
        %v4647 = vld [vmem:[%s1458 + $0x298] sm:$0xff]
        %v4648 = vld [vmem:[%s1458 + $0x2a0] sm:$0xff]
        %v4649 = vld [vmem:[%s1458 + $0x2a8] sm:$0xff]
        %v4650 = vld [vmem:[%s1458 + $0x2b0] sm:$0xff]
        %v4651 = vld [vmem:[%s1458 + $0x2b8] sm:$0xff]
        %v4652 = vld [vmem:[%s1458 + $0x2c0] sm:$0xff]
        %v4653 = vld [vmem:[%s1458 + $0x2c8] sm:$0xff]
        %v4654 = vld [vmem:[%s1458 + $0x2d0] sm:$0xff]
        %v4655 = vld [vmem:[%s1458 + $0x2d8] sm:$0xff]
        %v4656 = vld [vmem:[%s1458 + $0x2e0] sm:$0xff]
        %v4657 = vld [vmem:[%s1458 + $0x2e8] sm:$0xff]
        %v4658 = vld [vmem:[%s1458 + $0x2f0] sm:$0xff]
        %v4659 = vld [vmem:[%s1458 + $0x2f8] sm:$0xff]
        %v4660 = vld [vmem:[%s1458 + $0x300] sm:$0xff]
        %v4661 = vld [vmem:[%s1458 + $0x308] sm:$0xff]
        %v4662 = vld [vmem:[%s1458 + $0x310] sm:$0xff]
        %v4663 = vld [vmem:[%s1458 + $0x318] sm:$0xff]
        %v4664 = vld [vmem:[%s1458 + $0x320] sm:$0xff]
        %v4665 = vld [vmem:[%s1458 + $0x328] sm:$0xff]
        %v4666 = vld [vmem:[%s1458 + $0x330] sm:$0xff]
        %v4667 = vld [vmem:[%s1458 + $0x338] sm:$0xff]
        %v4668 = vld [vmem:[%s1458 + $0x340] sm:$0xff]
        %v4669 = vld [vmem:[%s1458 + $0x348] sm:$0xff]
        %v4670 = vld [vmem:[%s1458 + $0x350] sm:$0xff]
        %v4671 = vld [vmem:[%s1458 + $0x358] sm:$0xff]
        %v4672 = vld [vmem:[%s1458 + $0x360] sm:$0xff]
        %v4673 = vld [vmem:[%s1458 + $0x368] sm:$0xff]
        %v4674 = vld [vmem:[%s1458 + $0x370] sm:$0xff]
        %v4675 = vld [vmem:[%s1458 + $0x378] sm:$0xff]
        %v4676 = vld [vmem:[%s1458 + $0x380] sm:$0xff]
        %v4677 = vld [vmem:[%s1458 + $0x388] sm:$0xff]
        %v4678 = vld [vmem:[%s1458 + $0x390] sm:$0xff]
        %v4679 = vld [vmem:[%s1458 + $0x398] sm:$0xff]
        %v4680 = vld [vmem:[%s1458 + $0x3a0] sm:$0xff]
        %v4681 = vld [vmem:[%s1458 + $0x3a8] sm:$0xff]
        %v4682 = vld [vmem:[%s1458 + $0x3b0] sm:$0xff]
        %v4683 = vld [vmem:[%s1458 + $0x3b8] sm:$0xff]
        %v4684 = vld [vmem:[%s1458 + $0x3c0] sm:$0xff]
        %v4685 = vld [vmem:[%s1458 + $0x3c8] sm:$0xff]
        %v4686 = vld [vmem:[%s1458 + $0x3d0] sm:$0xff]
        %v4687 = vld [vmem:[%s1458 + $0x3d8] sm:$0xff]
        %v4688 = vld [vmem:[%s1458 + $0x3e0] sm:$0xff]
        %v4689 = vld [vmem:[%s1458 + $0x3e8] sm:$0xff]
        %v4690 = vld [vmem:[%s1458 + $0x3f0] sm:$0xff]
        %v4691 = vld [vmem:[%s1458 + $0x3f8] sm:$0xff]
        %v4692 = vld [vmem:[%s1710] sm:$0xff]
        %v4693 = vld [vmem:[%s1710 + $0x8] sm:$0xff]
        %v4696 = vlaneseq
        %v4697 = vshrl.u32 %v4696, 7
        %v4698 = vsub.s32 0, %v4697
        %v4699 = vrot.slane %v4692, %v4698
        %v4700 = vlaneseq
        %v4701 = vshrl.u32 %v4700, 7
        %v4702 = vsub.s32 1, %v4701
        %v4703 = vrot.slane %v4692, %v4702
        %v4704 = vlaneseq
        %v4705 = vshrl.u32 %v4704, 7
        %v4706 = vsub.s32 2, %v4705
        %v4707 = vrot.slane %v4692, %v4706
        %v4708 = vlaneseq
        %v4709 = vshrl.u32 %v4708, 7
        %v4710 = vsub.s32 3, %v4709
        %v4711 = vrot.slane %v4692, %v4710
        %v4712 = vlaneseq
        %v4713 = vshrl.u32 %v4712, 7
        %v4714 = vsub.s32 4, %v4713
        %v4715 = vrot.slane %v4692, %v4714
        %v4716 = vlaneseq
        %v4717 = vshrl.u32 %v4716, 7
        %v4718 = vsub.s32 5, %v4717
        %v4719 = vrot.slane %v4692, %v4718
        %v4720 = vlaneseq
        %v4721 = vshrl.u32 %v4720, 7
        %v4722 = vsub.s32 6, %v4721
        %v4723 = vrot.slane %v4692, %v4722
        %v4724 = vlaneseq
        %v4725 = vshrl.u32 %v4724, 7
        %v4726 = vsub.s32 7, %v4725
        %v4727 = vrot.slane %v4692, %v4726
        %v4728 = vlaneseq
        %v4729 = vshrl.u32 %v4728, 7
        %v4730 = vsub.s32 0, %v4729
        %v4731 = vrot.slane %v4693, %v4730
        %v4732 = vlaneseq
        %v4733 = vshrl.u32 %v4732, 7
        %v4734 = vsub.s32 1, %v4733
        %v4735 = vrot.slane %v4693, %v4734
        %v4736 = vlaneseq
        %v4737 = vshrl.u32 %v4736, 7
        %v4738 = vsub.s32 2, %v4737
        %v4739 = vrot.slane %v4693, %v4738
        %v4740 = vlaneseq
        %v4741 = vshrl.u32 %v4740, 7
        %v4742 = vsub.s32 3, %v4741
        %v4743 = vrot.slane %v4693, %v4742
        %v4744 = vlaneseq
        %v4745 = vshrl.u32 %v4744, 7
        %v4746 = vsub.s32 4, %v4745
        %v4747 = vrot.slane %v4693, %v4746
        %v4748 = vlaneseq
        %v4749 = vshrl.u32 %v4748, 7
        %v4750 = vsub.s32 5, %v4749
        %v4751 = vrot.slane %v4693, %v4750
        %v4752 = vlaneseq
        %v4753 = vshrl.u32 %v4752, 7
        %v4754 = vsub.s32 6, %v4753
        %v4755 = vrot.slane %v4693, %v4754
        %v4756 = vlaneseq
        %v4757 = vshrl.u32 %v4756, 7
        %v4758 = vsub.s32 7, %v4757
        %v4759 = vrot.slane %v4693, %v4758
        %v4904 = vunpack.c.l.b16 %v4564
        %v4905 = vunpack.c.h.b16 %v4564
        %v4906 = vunpack.c.l.b16 %v4565
        %v4907 = vunpack.c.h.b16 %v4565
        %v4908 = vunpack.c.l.b16 %v4566
        %v4909 = vunpack.c.h.b16 %v4566
        %v4910 = vunpack.c.l.b16 %v4567
        %v4911 = vunpack.c.h.b16 %v4567
        %v4912 = vunpack.c.l.b16 %v4568
        %v4913 = vunpack.c.h.b16 %v4568
        %v4914 = vunpack.c.l.b16 %v4569
        %v4915 = vunpack.c.h.b16 %v4569
        %v4916 = vunpack.c.l.b16 %v4570
        %v4917 = vunpack.c.h.b16 %v4570
        %v4918 = vunpack.c.l.b16 %v4571
        %v4919 = vunpack.c.h.b16 %v4571
        %v4920 = vunpack.c.l.b16 %v4572
        %v4921 = vunpack.c.h.b16 %v4572
        %v4922 = vunpack.c.l.b16 %v4573
        %v4923 = vunpack.c.h.b16 %v4573
        %v4924 = vunpack.c.l.b16 %v4574
        %v4925 = vunpack.c.h.b16 %v4574
        %v4926 = vunpack.c.l.b16 %v4575
        %v4927 = vunpack.c.h.b16 %v4575
        %v4928 = vunpack.c.l.b16 %v4576
        %v4929 = vunpack.c.h.b16 %v4576
        %v4930 = vunpack.c.l.b16 %v4577
        %v4931 = vunpack.c.h.b16 %v4577
        %v4932 = vunpack.c.l.b16 %v4578
        %v4933 = vunpack.c.h.b16 %v4578
        %v4934 = vunpack.c.l.b16 %v4579
        %v4935 = vunpack.c.h.b16 %v4579
        %v4936 = vunpack.c.l.b16 %v4580
        %v4937 = vunpack.c.h.b16 %v4580
        %v4938 = vunpack.c.l.b16 %v4581
        %v4939 = vunpack.c.h.b16 %v4581
        %v4940 = vunpack.c.l.b16 %v4582
        %v4941 = vunpack.c.h.b16 %v4582
        %v4942 = vunpack.c.l.b16 %v4583
        %v4943 = vunpack.c.h.b16 %v4583
        %v4944 = vunpack.c.l.b16 %v4584
        %v4945 = vunpack.c.h.b16 %v4584
        %v4946 = vunpack.c.l.b16 %v4585
        %v4947 = vunpack.c.h.b16 %v4585
        %v4948 = vunpack.c.l.b16 %v4586
        %v4949 = vunpack.c.h.b16 %v4586
        %v4950 = vunpack.c.l.b16 %v4587
        %v4951 = vunpack.c.h.b16 %v4587
        %v4952 = vunpack.c.l.b16 %v4588
        %v4953 = vunpack.c.h.b16 %v4588
        %v4954 = vunpack.c.l.b16 %v4589
        %v4955 = vunpack.c.h.b16 %v4589
        %v4956 = vunpack.c.l.b16 %v4590
        %v4957 = vunpack.c.h.b16 %v4590
        %v4958 = vunpack.c.l.b16 %v4591
        %v4959 = vunpack.c.h.b16 %v4591
        %v4960 = vunpack.c.l.b16 %v4592
        %v4961 = vunpack.c.h.b16 %v4592
        %v4962 = vunpack.c.l.b16 %v4593
        %v4963 = vunpack.c.h.b16 %v4593
        %v4964 = vunpack.c.l.b16 %v4594
        %v4965 = vunpack.c.h.b16 %v4594
        %v4966 = vunpack.c.l.b16 %v4595
        %v4967 = vunpack.c.h.b16 %v4595
        %v4968 = vunpack.c.l.b16 %v4596
        %v4969 = vunpack.c.h.b16 %v4596
        %v4970 = vunpack.c.l.b16 %v4597
        %v4971 = vunpack.c.h.b16 %v4597
        %v4972 = vunpack.c.l.b16 %v4598
        %v4973 = vunpack.c.h.b16 %v4598
        %v4974 = vunpack.c.l.b16 %v4599
        %v4975 = vunpack.c.h.b16 %v4599
        %v4976 = vunpack.c.l.b16 %v4600
        %v4977 = vunpack.c.h.b16 %v4600
        %v4978 = vunpack.c.l.b16 %v4601
        %v4979 = vunpack.c.h.b16 %v4601
        %v4980 = vunpack.c.l.b16 %v4602
        %v4981 = vunpack.c.h.b16 %v4602
        %v4982 = vunpack.c.l.b16 %v4603
        %v4983 = vunpack.c.h.b16 %v4603
        %v4984 = vunpack.c.l.b16 %v4604
        %v4985 = vunpack.c.h.b16 %v4604
        %v4986 = vunpack.c.l.b16 %v4605
        %v4987 = vunpack.c.h.b16 %v4605
        %v4988 = vunpack.c.l.b16 %v4606
        %v4989 = vunpack.c.h.b16 %v4606
        %v4990 = vunpack.c.l.b16 %v4607
        %v4991 = vunpack.c.h.b16 %v4607
        %v4992 = vunpack.c.l.b16 %v4608
        %v4993 = vunpack.c.h.b16 %v4608
        %v4994 = vunpack.c.l.b16 %v4609
        %v4995 = vunpack.c.h.b16 %v4609
        %v4996 = vunpack.c.l.b16 %v4610
        %v4997 = vunpack.c.h.b16 %v4610
        %v4998 = vunpack.c.l.b16 %v4611
        %v4999 = vunpack.c.h.b16 %v4611
        %v5000 = vunpack.c.l.b16 %v4612
        %v5001 = vunpack.c.h.b16 %v4612
        %v5002 = vunpack.c.l.b16 %v4613
        %v5003 = vunpack.c.h.b16 %v4613
        %v5004 = vunpack.c.l.b16 %v4614
        %v5005 = vunpack.c.h.b16 %v4614
        %v5006 = vunpack.c.l.b16 %v4615
        %v5007 = vunpack.c.h.b16 %v4615
        %v5008 = vunpack.c.l.b16 %v4616
        %v5009 = vunpack.c.h.b16 %v4616
        %v5010 = vunpack.c.l.b16 %v4617
        %v5011 = vunpack.c.h.b16 %v4617
        %v5012 = vunpack.c.l.b16 %v4618
        %v5013 = vunpack.c.h.b16 %v4618
        %v5014 = vunpack.c.l.b16 %v4619
        %v5015 = vunpack.c.h.b16 %v4619
        %v5016 = vunpack.c.l.b16 %v4620
        %v5017 = vunpack.c.h.b16 %v4620
        %v5018 = vunpack.c.l.b16 %v4621
        %v5019 = vunpack.c.h.b16 %v4621
        %v5020 = vunpack.c.l.b16 %v4622
        %v5021 = vunpack.c.h.b16 %v4622
        %v5022 = vunpack.c.l.b16 %v4623
        %v5023 = vunpack.c.h.b16 %v4623
        %v5024 = vunpack.c.l.b16 %v4624
        %v5025 = vunpack.c.h.b16 %v4624
        %v5026 = vunpack.c.l.b16 %v4625
        %v5027 = vunpack.c.h.b16 %v4625
        %v5028 = vunpack.c.l.b16 %v4626
        %v5029 = vunpack.c.h.b16 %v4626
        %v5030 = vunpack.c.l.b16 %v4627
        %v5031 = vunpack.c.h.b16 %v4627
        %v5032 = vunpack.c.l.b16 %v4628
        %v5033 = vunpack.c.h.b16 %v4628
        %v5034 = vunpack.c.l.b16 %v4629
        %v5035 = vunpack.c.h.b16 %v4629
        %v5036 = vunpack.c.l.b16 %v4630
        %v5037 = vunpack.c.h.b16 %v4630
        %v5038 = vunpack.c.l.b16 %v4631
        %v5039 = vunpack.c.h.b16 %v4631
        %v5040 = vunpack.c.l.b16 %v4632
        %v5041 = vunpack.c.h.b16 %v4632
        %v5042 = vunpack.c.l.b16 %v4633
        %v5043 = vunpack.c.h.b16 %v4633
        %v5044 = vunpack.c.l.b16 %v4634
        %v5045 = vunpack.c.h.b16 %v4634
        %v5046 = vunpack.c.l.b16 %v4635
        %v5047 = vunpack.c.h.b16 %v4635
        %v5048 = vunpack.c.l.b16 %v4636
        %v5049 = vunpack.c.h.b16 %v4636
        %v5050 = vunpack.c.l.b16 %v4637
        %v5051 = vunpack.c.h.b16 %v4637
        %v5052 = vunpack.c.l.b16 %v4638
        %v5053 = vunpack.c.h.b16 %v4638
        %v5054 = vunpack.c.l.b16 %v4639
        %v5055 = vunpack.c.h.b16 %v4639
        %v5056 = vunpack.c.l.b16 %v4640
        %v5057 = vunpack.c.h.b16 %v4640
        %v5058 = vunpack.c.l.b16 %v4641
        %v5059 = vunpack.c.h.b16 %v4641
        %v5060 = vunpack.c.l.b16 %v4642
        %v5061 = vunpack.c.h.b16 %v4642
        %v5062 = vunpack.c.l.b16 %v4643
        %v5063 = vunpack.c.h.b16 %v4643
        %v5064 = vunpack.c.l.b16 %v4644
        %v5065 = vunpack.c.h.b16 %v4644
        %v5066 = vunpack.c.l.b16 %v4645
        %v5067 = vunpack.c.h.b16 %v4645
        %v5068 = vunpack.c.l.b16 %v4646
        %v5069 = vunpack.c.h.b16 %v4646
        %v5070 = vunpack.c.l.b16 %v4647
        %v5071 = vunpack.c.h.b16 %v4647
        %v5072 = vunpack.c.l.b16 %v4648
        %v5073 = vunpack.c.h.b16 %v4648
        %v5074 = vunpack.c.l.b16 %v4649
        %v5075 = vunpack.c.h.b16 %v4649
        %v5076 = vunpack.c.l.b16 %v4650
        %v5077 = vunpack.c.h.b16 %v4650
        %v5078 = vunpack.c.l.b16 %v4651
        %v5079 = vunpack.c.h.b16 %v4651
        %v5080 = vunpack.c.l.b16 %v4652
        %v5081 = vunpack.c.h.b16 %v4652
        %v5082 = vunpack.c.l.b16 %v4653
        %v5083 = vunpack.c.h.b16 %v4653
        %v5084 = vunpack.c.l.b16 %v4654
        %v5085 = vunpack.c.h.b16 %v4654
        %v5086 = vunpack.c.l.b16 %v4655
        %v5087 = vunpack.c.h.b16 %v4655
        %v5088 = vunpack.c.l.b16 %v4656
        %v5089 = vunpack.c.h.b16 %v4656
        %v5090 = vunpack.c.l.b16 %v4657
        %v5091 = vunpack.c.h.b16 %v4657
        %v5092 = vunpack.c.l.b16 %v4658
        %v5093 = vunpack.c.h.b16 %v4658
        %v5094 = vunpack.c.l.b16 %v4659
        %v5095 = vunpack.c.h.b16 %v4659
        %v5096 = vunpack.c.l.b16 %v4660
        %v5097 = vunpack.c.h.b16 %v4660
        %v5098 = vunpack.c.l.b16 %v4661
        %v5099 = vunpack.c.h.b16 %v4661
        %v5100 = vunpack.c.l.b16 %v4662
        %v5101 = vunpack.c.h.b16 %v4662
        %v5102 = vunpack.c.l.b16 %v4663
        %v5103 = vunpack.c.h.b16 %v4663
        %v5104 = vunpack.c.l.b16 %v4664
        %v5105 = vunpack.c.h.b16 %v4664
        %v5106 = vunpack.c.l.b16 %v4665
        %v5107 = vunpack.c.h.b16 %v4665
        %v5108 = vunpack.c.l.b16 %v4666
        %v5109 = vunpack.c.h.b16 %v4666
        %v5110 = vunpack.c.l.b16 %v4667
        %v5111 = vunpack.c.h.b16 %v4667
        %v5112 = vunpack.c.l.b16 %v4668
        %v5113 = vunpack.c.h.b16 %v4668
        %v5114 = vunpack.c.l.b16 %v4669
        %v5115 = vunpack.c.h.b16 %v4669
        %v5116 = vunpack.c.l.b16 %v4670
        %v5117 = vunpack.c.h.b16 %v4670
        %v5118 = vunpack.c.l.b16 %v4671
        %v5119 = vunpack.c.h.b16 %v4671
        %v5120 = vunpack.c.l.b16 %v4672
        %v5121 = vunpack.c.h.b16 %v4672
        %v5122 = vunpack.c.l.b16 %v4673
        %v5123 = vunpack.c.h.b16 %v4673
        %v5124 = vunpack.c.l.b16 %v4674
        %v5125 = vunpack.c.h.b16 %v4674
        %v5126 = vunpack.c.l.b16 %v4675
        %v5127 = vunpack.c.h.b16 %v4675
        %v5128 = vunpack.c.l.b16 %v4676
        %v5129 = vunpack.c.h.b16 %v4676
        %v5130 = vunpack.c.l.b16 %v4677
        %v5131 = vunpack.c.h.b16 %v4677
        %v5132 = vunpack.c.l.b16 %v4678
        %v5133 = vunpack.c.h.b16 %v4678
        %v5134 = vunpack.c.l.b16 %v4679
        %v5135 = vunpack.c.h.b16 %v4679
        %v5136 = vunpack.c.l.b16 %v4680
        %v5137 = vunpack.c.h.b16 %v4680
        %v5138 = vunpack.c.l.b16 %v4681
        %v5139 = vunpack.c.h.b16 %v4681
        %v5140 = vunpack.c.l.b16 %v4682
        %v5141 = vunpack.c.h.b16 %v4682
        %v5142 = vunpack.c.l.b16 %v4683
        %v5143 = vunpack.c.h.b16 %v4683
        %v5144 = vunpack.c.l.b16 %v4684
        %v5145 = vunpack.c.h.b16 %v4684
        %v5146 = vunpack.c.l.b16 %v4685
        %v5147 = vunpack.c.h.b16 %v4685
        %v5148 = vunpack.c.l.b16 %v4686
        %v5149 = vunpack.c.h.b16 %v4686
        %v5150 = vunpack.c.l.b16 %v4687
        %v5151 = vunpack.c.h.b16 %v4687
        %v5152 = vunpack.c.l.b16 %v4688
        %v5153 = vunpack.c.h.b16 %v4688
        %v5154 = vunpack.c.l.b16 %v4689
        %v5155 = vunpack.c.h.b16 %v4689
        %v5156 = vunpack.c.l.b16 %v4690
        %v5157 = vunpack.c.h.b16 %v4690
        %v5158 = vunpack.c.l.b16 %v4691
        %v5159 = vunpack.c.h.b16 %v4691
        %v5160 = vpack.c.b16 %v4920, %v4904
        %v5161 = vpack.c.b16 %v4921, %v4905
        %v5162 = vpack.c.b16 %v4922, %v4906
        %v5163 = vpack.c.b16 %v4923, %v4907
        %v5164 = vpack.c.b16 %v4924, %v4908
        %v5165 = vpack.c.b16 %v4925, %v4909
        %v5166 = vpack.c.b16 %v4926, %v4910
        %v5167 = vpack.c.b16 %v4927, %v4911
        %v5168 = vpack.c.b16 %v4928, %v4912
        %v5169 = vpack.c.b16 %v4929, %v4913
        %v5170 = vpack.c.b16 %v4930, %v4914
        %v5171 = vpack.c.b16 %v4931, %v4915
        %v5172 = vpack.c.b16 %v4932, %v4916
        %v5173 = vpack.c.b16 %v4933, %v4917
        %v5174 = vpack.c.b16 %v4934, %v4918
        %v5175 = vpack.c.b16 %v4935, %v4919
        %v5176 = vpack.c.b16 %v4952, %v4936
        %v5177 = vpack.c.b16 %v4953, %v4937
        %v5178 = vpack.c.b16 %v4954, %v4938
        %v5179 = vpack.c.b16 %v4955, %v4939
        %v5180 = vpack.c.b16 %v4956, %v4940
        %v5181 = vpack.c.b16 %v4957, %v4941
        %v5182 = vpack.c.b16 %v4958, %v4942
        %v5183 = vpack.c.b16 %v4959, %v4943
        %v5184 = vpack.c.b16 %v4960, %v4944
        %v5185 = vpack.c.b16 %v4961, %v4945
        %v5186 = vpack.c.b16 %v4962, %v4946
        %v5187 = vpack.c.b16 %v4963, %v4947
        %v5188 = vpack.c.b16 %v4964, %v4948
        %v5189 = vpack.c.b16 %v4965, %v4949
        %v5190 = vpack.c.b16 %v4966, %v4950
        %v5191 = vpack.c.b16 %v4967, %v4951
        %v5192 = vpack.c.b16 %v4984, %v4968
        %v5193 = vpack.c.b16 %v4985, %v4969
        %v5194 = vpack.c.b16 %v4986, %v4970
        %v5195 = vpack.c.b16 %v4987, %v4971
        %v5196 = vpack.c.b16 %v4988, %v4972
        %v5197 = vpack.c.b16 %v4989, %v4973
        %v5198 = vpack.c.b16 %v4990, %v4974
        %v5199 = vpack.c.b16 %v4991, %v4975
        %v5200 = vpack.c.b16 %v4992, %v4976
        %v5201 = vpack.c.b16 %v4993, %v4977
        %v5202 = vpack.c.b16 %v4994, %v4978
        %v5203 = vpack.c.b16 %v4995, %v4979
        %v5204 = vpack.c.b16 %v4996, %v4980
        %v5205 = vpack.c.b16 %v4997, %v4981
        %v5206 = vpack.c.b16 %v4998, %v4982
        %v5207 = vpack.c.b16 %v4999, %v4983
        %v5208 = vpack.c.b16 %v5016, %v5000
        %v5209 = vpack.c.b16 %v5017, %v5001
        %v5210 = vpack.c.b16 %v5018, %v5002
        %v5211 = vpack.c.b16 %v5019, %v5003
        %v5212 = vpack.c.b16 %v5020, %v5004
        %v5213 = vpack.c.b16 %v5021, %v5005
        %v5214 = vpack.c.b16 %v5022, %v5006
        %v5215 = vpack.c.b16 %v5023, %v5007
        %v5216 = vpack.c.b16 %v5024, %v5008
        %v5217 = vpack.c.b16 %v5025, %v5009
        %v5218 = vpack.c.b16 %v5026, %v5010
        %v5219 = vpack.c.b16 %v5027, %v5011
        %v5220 = vpack.c.b16 %v5028, %v5012
        %v5221 = vpack.c.b16 %v5029, %v5013
        %v5222 = vpack.c.b16 %v5030, %v5014
        %v5223 = vpack.c.b16 %v5031, %v5015
        %v5224 = vpack.c.b16 %v5048, %v5032
        %v5225 = vpack.c.b16 %v5049, %v5033
        %v5226 = vpack.c.b16 %v5050, %v5034
        %v5227 = vpack.c.b16 %v5051, %v5035
        %v5228 = vpack.c.b16 %v5052, %v5036
        %v5229 = vpack.c.b16 %v5053, %v5037
        %v5230 = vpack.c.b16 %v5054, %v5038
        %v5231 = vpack.c.b16 %v5055, %v5039
        %v5232 = vpack.c.b16 %v5056, %v5040
        %v5233 = vpack.c.b16 %v5057, %v5041
        %v5234 = vpack.c.b16 %v5058, %v5042
        %v5235 = vpack.c.b16 %v5059, %v5043
        %v5236 = vpack.c.b16 %v5060, %v5044
        %v5237 = vpack.c.b16 %v5061, %v5045
        %v5238 = vpack.c.b16 %v5062, %v5046
        %v5239 = vpack.c.b16 %v5063, %v5047
        %v5240 = vpack.c.b16 %v5080, %v5064
        %v5241 = vpack.c.b16 %v5081, %v5065
        %v5242 = vpack.c.b16 %v5082, %v5066
        %v5243 = vpack.c.b16 %v5083, %v5067
        %v5244 = vpack.c.b16 %v5084, %v5068
        %v5245 = vpack.c.b16 %v5085, %v5069
        %v5246 = vpack.c.b16 %v5086, %v5070
        %v5247 = vpack.c.b16 %v5087, %v5071
        %v5248 = vpack.c.b16 %v5088, %v5072
        %v5249 = vpack.c.b16 %v5089, %v5073
        %v5250 = vpack.c.b16 %v5090, %v5074
        %v5251 = vpack.c.b16 %v5091, %v5075
        %v5252 = vpack.c.b16 %v5092, %v5076
        %v5253 = vpack.c.b16 %v5093, %v5077
        %v5254 = vpack.c.b16 %v5094, %v5078
        %v5255 = vpack.c.b16 %v5095, %v5079
        %v5256 = vpack.c.b16 %v5112, %v5096
        %v5257 = vpack.c.b16 %v5113, %v5097
        %v5258 = vpack.c.b16 %v5114, %v5098
        %v5259 = vpack.c.b16 %v5115, %v5099
        %v5260 = vpack.c.b16 %v5116, %v5100
        %v5261 = vpack.c.b16 %v5117, %v5101
        %v5262 = vpack.c.b16 %v5118, %v5102
        %v5263 = vpack.c.b16 %v5119, %v5103
        %v5264 = vpack.c.b16 %v5120, %v5104
        %v5265 = vpack.c.b16 %v5121, %v5105
        %v5266 = vpack.c.b16 %v5122, %v5106
        %v5267 = vpack.c.b16 %v5123, %v5107
        %v5268 = vpack.c.b16 %v5124, %v5108
        %v5269 = vpack.c.b16 %v5125, %v5109
        %v5270 = vpack.c.b16 %v5126, %v5110
        %v5271 = vpack.c.b16 %v5127, %v5111
        %v5272 = vpack.c.b16 %v5144, %v5128
        %v5273 = vpack.c.b16 %v5145, %v5129
        %v5274 = vpack.c.b16 %v5146, %v5130
        %v5275 = vpack.c.b16 %v5147, %v5131
        %v5276 = vpack.c.b16 %v5148, %v5132
        %v5277 = vpack.c.b16 %v5149, %v5133
        %v5278 = vpack.c.b16 %v5150, %v5134
        %v5279 = vpack.c.b16 %v5151, %v5135
        %v5280 = vpack.c.b16 %v5152, %v5136
        %v5281 = vpack.c.b16 %v5153, %v5137
        %v5282 = vpack.c.b16 %v5154, %v5138
        %v5283 = vpack.c.b16 %v5155, %v5139
        %v5284 = vpack.c.b16 %v5156, %v5140
        %v5285 = vpack.c.b16 %v5157, %v5141
        %v5286 = vpack.c.b16 %v5158, %v5142
        %v5287 = vpack.c.b16 %v5159, %v5143
        %5416 = vmatprep.subr.bf16.mxu0 %v5161
        %5417 = vmatpush1.bf16.msra.mxu0 %v5160
        %5418 = vmatprep.subr.bf16.mxu0 %v5177
        %5419 = vmatpush1.bf16.msra.mxu0 %v5176
        %5420 = vmatprep.subr.bf16.mxu0 %v5193
        %5421 = vmatpush1.bf16.msra.mxu0 %v5192
        %5422 = vmatprep.subr.bf16.mxu0 %v5209
        %5423 = vmatpush1.bf16.msra.mxu0 %v5208
        %5424 = vmatprep.subr.bf16.mxu0 %v5225
        %5425 = vmatpush1.bf16.msra.mxu0 %v5224
        %5426 = vmatprep.subr.bf16.mxu0 %v5241
        %5427 = vmatpush1.bf16.msra.mxu0 %v5240
        %5428 = vmatprep.subr.bf16.mxu0 %v5257
        %5429 = vmatpush1.bf16.msra.mxu0 %v5256
        %5430 = vmatprep.subr.bf16.mxu0 %v5273
        %5431 = vmatpush1.bf16.msra.mxu0 %v5272
        %5432 = vmatprep.subr.bf16.mxu0 0
        %5433 = vmatpush1.bf16.msra.mxu0 0
        %5434 = vmatprep.subr.bf16.mxu0 0
        %5435 = vmatpush1.bf16.msra.mxu0 0
        %5436 = vmatprep.subr.bf16.mxu0 0
        %5437 = vmatpush1.bf16.msra.mxu0 0
        %5438 = vmatprep.subr.bf16.mxu0 0
        %5439 = vmatpush1.bf16.msra.mxu0 0
        %5440 = vmatprep.subr.bf16.mxu0 0
        %5441 = vmatpush1.bf16.msra.mxu0 0
        %5442 = vmatprep.subr.bf16.mxu0 0
        %5443 = vmatpush1.bf16.msra.mxu0 0
        %5444 = vmatprep.subr.bf16.mxu0 0
        %5445 = vmatpush1.bf16.msra.mxu0 0
        %5446 = vmatprep.subr.bf16.mxu0 0
        %5447 = vmatpush1.bf16.msra.mxu0 0
        %5448 = vmatprep.mubr.bf16.mxu0 0
        %5449 = vmatmul.mubr.bf16.gmra.mrb[0].mxu0 %v4563
        %v5450 = vpop.f32.mrb[0].mxu0
        %v5451 = vadd.f32 %v4699, %v5450
        %v5452 = vpop.f32.mrb[0].mxu0
        %v5453 = vadd.f32 %v4703, %v5452
        %v5454 = vpop.f32.mrb[0].mxu0
        %v5455 = vpop.f32.mrb[0].mxu0
        %5456 = vdwg.mxu0
        %5457 = vmatprep.subr.bf16.mxu0 %v5163
        %5458 = vmatpush1.bf16.msra.mxu0 %v5162
        %5459 = vmatprep.subr.bf16.mxu0 %v5179
        %5460 = vmatpush1.bf16.msra.mxu0 %v5178
        %5461 = vmatprep.subr.bf16.mxu0 %v5195
        %5462 = vmatpush1.bf16.msra.mxu0 %v5194
        %5463 = vmatprep.subr.bf16.mxu0 %v5211
        %5464 = vmatpush1.bf16.msra.mxu0 %v5210
        %5465 = vmatprep.subr.bf16.mxu0 %v5227
        %5466 = vmatpush1.bf16.msra.mxu0 %v5226
        %5467 = vmatprep.subr.bf16.mxu0 %v5243
        %5468 = vmatpush1.bf16.msra.mxu0 %v5242
        %5469 = vmatprep.subr.bf16.mxu0 %v5259
        %5470 = vmatpush1.bf16.msra.mxu0 %v5258
        %5471 = vmatprep.subr.bf16.mxu0 %v5275
        %5472 = vmatpush1.bf16.msra.mxu0 %v5274
        %5473 = vmatprep.subr.bf16.mxu0 0
        %5474 = vmatpush1.bf16.msra.mxu0 0
        %5475 = vmatprep.subr.bf16.mxu0 0
        %5476 = vmatpush1.bf16.msra.mxu0 0
        %5477 = vmatprep.subr.bf16.mxu0 0
        %5478 = vmatpush1.bf16.msra.mxu0 0
        %5479 = vmatprep.subr.bf16.mxu0 0
        %5480 = vmatpush1.bf16.msra.mxu0 0
        %5481 = vmatprep.subr.bf16.mxu0 0
        %5482 = vmatpush1.bf16.msra.mxu0 0
        %5483 = vmatprep.subr.bf16.mxu0 0
        %5484 = vmatpush1.bf16.msra.mxu0 0
        %5485 = vmatprep.subr.bf16.mxu0 0
        %5486 = vmatpush1.bf16.msra.mxu0 0
        %5487 = vmatprep.subr.bf16.mxu0 0
        %5488 = vmatpush1.bf16.msra.mxu0 0
        %5489 = vmatprep.mubr.bf16.mxu0 0
        %5490 = vmatmul.mubr.bf16.gmra.mrb[0].mxu0 %v4563
        %v5491 = vpop.f32.mrb[0].mxu0
        %v5492 = vadd.f32 %v4707, %v5491
        %v5493 = vpop.f32.mrb[0].mxu0
        %v5494 = vadd.f32 %v4711, %v5493
        %v5495 = vpop.f32.mrb[0].mxu0
        %v5496 = vpop.f32.mrb[0].mxu0
        %5497 = vdwg.mxu0
        %5498 = vmatprep.subr.bf16.mxu0 %v5165
        %5499 = vmatpush1.bf16.msra.mxu0 %v5164
        %5500 = vmatprep.subr.bf16.mxu0 %v5181
        %5501 = vmatpush1.bf16.msra.mxu0 %v5180
        %5502 = vmatprep.subr.bf16.mxu0 %v5197
        %5503 = vmatpush1.bf16.msra.mxu0 %v5196
        %5504 = vmatprep.subr.bf16.mxu0 %v5213
        %5505 = vmatpush1.bf16.msra.mxu0 %v5212
        %5506 = vmatprep.subr.bf16.mxu0 %v5229
        %5507 = vmatpush1.bf16.msra.mxu0 %v5228
        %5508 = vmatprep.subr.bf16.mxu0 %v5245
        %5509 = vmatpush1.bf16.msra.mxu0 %v5244
        %5510 = vmatprep.subr.bf16.mxu0 %v5261
        %5511 = vmatpush1.bf16.msra.mxu0 %v5260
        %5512 = vmatprep.subr.bf16.mxu0 %v5277
        %5513 = vmatpush1.bf16.msra.mxu0 %v5276
        %5514 = vmatprep.subr.bf16.mxu0 0
        %5515 = vmatpush1.bf16.msra.mxu0 0
        %5516 = vmatprep.subr.bf16.mxu0 0
        %5517 = vmatpush1.bf16.msra.mxu0 0
        %5518 = vmatprep.subr.bf16.mxu0 0
        %5519 = vmatpush1.bf16.msra.mxu0 0
        %5520 = vmatprep.subr.bf16.mxu0 0
        %5521 = vmatpush1.bf16.msra.mxu0 0
        %5522 = vmatprep.subr.bf16.mxu0 0
        %5523 = vmatpush1.bf16.msra.mxu0 0
        %5524 = vmatprep.subr.bf16.mxu0 0
        %5525 = vmatpush1.bf16.msra.mxu0 0
        %5526 = vmatprep.subr.bf16.mxu0 0
        %5527 = vmatpush1.bf16.msra.mxu0 0
        %5528 = vmatprep.subr.bf16.mxu0 0
        %5529 = vmatpush1.bf16.msra.mxu0 0
        %5530 = vmatprep.mubr.bf16.mxu0 0
        %5531 = vmatmul.mubr.bf16.gmra.mrb[0].mxu0 %v4563
        %v5532 = vpop.f32.mrb[0].mxu0
        %v5533 = vadd.f32 %v4715, %v5532
        %v5534 = vpop.f32.mrb[0].mxu0
        %v5535 = vadd.f32 %v4719, %v5534
        %v5536 = vpop.f32.mrb[0].mxu0
        %v5537 = vpop.f32.mrb[0].mxu0
        %5538 = vdwg.mxu0
        %5539 = vmatprep.subr.bf16.mxu0 %v5167
        %5540 = vmatpush1.bf16.msra.mxu0 %v5166
        %5541 = vmatprep.subr.bf16.mxu0 %v5183
        %5542 = vmatpush1.bf16.msra.mxu0 %v5182
        %5543 = vmatprep.subr.bf16.mxu0 %v5199
        %5544 = vmatpush1.bf16.msra.mxu0 %v5198
        %5545 = vmatprep.subr.bf16.mxu0 %v5215
        %5546 = vmatpush1.bf16.msra.mxu0 %v5214
        %5547 = vmatprep.subr.bf16.mxu0 %v5231
        %5548 = vmatpush1.bf16.msra.mxu0 %v5230
        %5549 = vmatprep.subr.bf16.mxu0 %v5247
        %5550 = vmatpush1.bf16.msra.mxu0 %v5246
        %5551 = vmatprep.subr.bf16.mxu0 %v5263
        %5552 = vmatpush1.bf16.msra.mxu0 %v5262
        %5553 = vmatprep.subr.bf16.mxu0 %v5279
        %5554 = vmatpush1.bf16.msra.mxu0 %v5278
        %5555 = vmatprep.subr.bf16.mxu0 0
        %5556 = vmatpush1.bf16.msra.mxu0 0
        %5557 = vmatprep.subr.bf16.mxu0 0
        %5558 = vmatpush1.bf16.msra.mxu0 0
        %5559 = vmatprep.subr.bf16.mxu0 0
        %5560 = vmatpush1.bf16.msra.mxu0 0
        %5561 = vmatprep.subr.bf16.mxu0 0
        %5562 = vmatpush1.bf16.msra.mxu0 0
        %5563 = vmatprep.subr.bf16.mxu0 0
        %5564 = vmatpush1.bf16.msra.mxu0 0
        %5565 = vmatprep.subr.bf16.mxu0 0
        %5566 = vmatpush1.bf16.msra.mxu0 0
        %5567 = vmatprep.subr.bf16.mxu0 0
        %5568 = vmatpush1.bf16.msra.mxu0 0
        %5569 = vmatprep.subr.bf16.mxu0 0
        %5570 = vmatpush1.bf16.msra.mxu0 0
        %5571 = vmatprep.mubr.bf16.mxu0 0
        %5572 = vmatmul.mubr.bf16.gmra.mrb[0].mxu0 %v4563
        %v5573 = vpop.f32.mrb[0].mxu0
        %v5574 = vadd.f32 %v4723, %v5573
        %v5575 = vpop.f32.mrb[0].mxu0
        %v5576 = vadd.f32 %v4727, %v5575
        %v5577 = vpop.f32.mrb[0].mxu0
        %v5578 = vpop.f32.mrb[0].mxu0
        %5579 = vdwg.mxu0
        %5580 = vmatprep.subr.bf16.mxu0 %v5169
        %5581 = vmatpush1.bf16.msra.mxu0 %v5168
        %5582 = vmatprep.subr.bf16.mxu0 %v5185
        %5583 = vmatpush1.bf16.msra.mxu0 %v5184
        %5584 = vmatprep.subr.bf16.mxu0 %v5201
        %5585 = vmatpush1.bf16.msra.mxu0 %v5200
        %5586 = vmatprep.subr.bf16.mxu0 %v5217
        %5587 = vmatpush1.bf16.msra.mxu0 %v5216
        %5588 = vmatprep.subr.bf16.mxu0 %v5233
        %5589 = vmatpush1.bf16.msra.mxu0 %v5232
        %5590 = vmatprep.subr.bf16.mxu0 %v5249
        %5591 = vmatpush1.bf16.msra.mxu0 %v5248
        %5592 = vmatprep.subr.bf16.mxu0 %v5265
        %5593 = vmatpush1.bf16.msra.mxu0 %v5264
        %5594 = vmatprep.subr.bf16.mxu0 %v5281
        %5595 = vmatpush1.bf16.msra.mxu0 %v5280
        %5596 = vmatprep.subr.bf16.mxu0 0
        %5597 = vmatpush1.bf16.msra.mxu0 0
        %5598 = vmatprep.subr.bf16.mxu0 0
        %5599 = vmatpush1.bf16.msra.mxu0 0
        %5600 = vmatprep.subr.bf16.mxu0 0
        %5601 = vmatpush1.bf16.msra.mxu0 0
        %5602 = vmatprep.subr.bf16.mxu0 0
        %5603 = vmatpush1.bf16.msra.mxu0 0
        %5604 = vmatprep.subr.bf16.mxu0 0
        %5605 = vmatpush1.bf16.msra.mxu0 0
        %5606 = vmatprep.subr.bf16.mxu0 0
        %5607 = vmatpush1.bf16.msra.mxu0 0
        %5608 = vmatprep.subr.bf16.mxu0 0
        %5609 = vmatpush1.bf16.msra.mxu0 0
        %5610 = vmatprep.subr.bf16.mxu0 0
        %5611 = vmatpush1.bf16.msra.mxu0 0
        %5612 = vmatprep.mubr.bf16.mxu0 0
        %5613 = vmatmul.mubr.bf16.gmra.mrb[0].mxu0 %v4563
        %v5614 = vpop.f32.mrb[0].mxu0
        %v5615 = vadd.f32 %v4731, %v5614
        %v5616 = vpop.f32.mrb[0].mxu0
        %v5617 = vadd.f32 %v4735, %v5616
        %v5618 = vpop.f32.mrb[0].mxu0
        %v5619 = vpop.f32.mrb[0].mxu0
        %5620 = vdwg.mxu0
        %5621 = vmatprep.subr.bf16.mxu0 %v5171
        %5622 = vmatpush1.bf16.msra.mxu0 %v5170
        %5623 = vmatprep.subr.bf16.mxu0 %v5187
        %5624 = vmatpush1.bf16.msra.mxu0 %v5186
        %5625 = vmatprep.subr.bf16.mxu0 %v5203
        %5626 = vmatpush1.bf16.msra.mxu0 %v5202
        %5627 = vmatprep.subr.bf16.mxu0 %v5219
        %5628 = vmatpush1.bf16.msra.mxu0 %v5218
        %5629 = vmatprep.subr.bf16.mxu0 %v5235
        %5630 = vmatpush1.bf16.msra.mxu0 %v5234
        %5631 = vmatprep.subr.bf16.mxu0 %v5251
        %5632 = vmatpush1.bf16.msra.mxu0 %v5250
        %5633 = vmatprep.subr.bf16.mxu0 %v5267
        %5634 = vmatpush1.bf16.msra.mxu0 %v5266
        %5635 = vmatprep.subr.bf16.mxu0 %v5283
        %5636 = vmatpush1.bf16.msra.mxu0 %v5282
        %5637 = vmatprep.subr.bf16.mxu0 0
        %5638 = vmatpush1.bf16.msra.mxu0 0
        %5639 = vmatprep.subr.bf16.mxu0 0
        %5640 = vmatpush1.bf16.msra.mxu0 0
        %5641 = vmatprep.subr.bf16.mxu0 0
        %5642 = vmatpush1.bf16.msra.mxu0 0
        %5643 = vmatprep.subr.bf16.mxu0 0
        %5644 = vmatpush1.bf16.msra.mxu0 0
        %5645 = vmatprep.subr.bf16.mxu0 0
        %5646 = vmatpush1.bf16.msra.mxu0 0
        %5647 = vmatprep.subr.bf16.mxu0 0
        %5648 = vmatpush1.bf16.msra.mxu0 0
        %5649 = vmatprep.subr.bf16.mxu0 0
        %5650 = vmatpush1.bf16.msra.mxu0 0
        %5651 = vmatprep.subr.bf16.mxu0 0
        %5652 = vmatpush1.bf16.msra.mxu0 0
        %5653 = vmatprep.mubr.bf16.mxu0 0
        %5654 = vmatmul.mubr.bf16.gmra.mrb[0].mxu0 %v4563
        %v5655 = vpop.f32.mrb[0].mxu0
        %v5656 = vadd.f32 %v4739, %v5655
        %v5657 = vpop.f32.mrb[0].mxu0
        %v5658 = vadd.f32 %v4743, %v5657
        %v5659 = vpop.f32.mrb[0].mxu0
        %v5660 = vpop.f32.mrb[0].mxu0
        %5661 = vdwg.mxu0
        %5662 = vmatprep.subr.bf16.mxu0 %v5173
        %5663 = vmatpush1.bf16.msra.mxu0 %v5172
        %5664 = vmatprep.subr.bf16.mxu0 %v5189
        %5665 = vmatpush1.bf16.msra.mxu0 %v5188
        %5666 = vmatprep.subr.bf16.mxu0 %v5205
        %5667 = vmatpush1.bf16.msra.mxu0 %v5204
        %5668 = vmatprep.subr.bf16.mxu0 %v5221
        %5669 = vmatpush1.bf16.msra.mxu0 %v5220
        %5670 = vmatprep.subr.bf16.mxu0 %v5237
        %5671 = vmatpush1.bf16.msra.mxu0 %v5236
        %5672 = vmatprep.subr.bf16.mxu0 %v5253
        %5673 = vmatpush1.bf16.msra.mxu0 %v5252
        %5674 = vmatprep.subr.bf16.mxu0 %v5269
        %5675 = vmatpush1.bf16.msra.mxu0 %v5268
        %5676 = vmatprep.subr.bf16.mxu0 %v5285
        %5677 = vmatpush1.bf16.msra.mxu0 %v5284
        %5678 = vmatprep.subr.bf16.mxu0 0
        %5679 = vmatpush1.bf16.msra.mxu0 0
        %5680 = vmatprep.subr.bf16.mxu0 0
        %5681 = vmatpush1.bf16.msra.mxu0 0
        %5682 = vmatprep.subr.bf16.mxu0 0
        %5683 = vmatpush1.bf16.msra.mxu0 0
        %5684 = vmatprep.subr.bf16.mxu0 0
        %5685 = vmatpush1.bf16.msra.mxu0 0
        %5686 = vmatprep.subr.bf16.mxu0 0
        %5687 = vmatpush1.bf16.msra.mxu0 0
        %5688 = vmatprep.subr.bf16.mxu0 0
        %5689 = vmatpush1.bf16.msra.mxu0 0
        %5690 = vmatprep.subr.bf16.mxu0 0
        %5691 = vmatpush1.bf16.msra.mxu0 0
        %5692 = vmatprep.subr.bf16.mxu0 0
        %5693 = vmatpush1.bf16.msra.mxu0 0
        %5694 = vmatprep.mubr.bf16.mxu0 0
        %5695 = vmatmul.mubr.bf16.gmra.mrb[0].mxu0 %v4563
        %v5696 = vpop.f32.mrb[0].mxu0
        %v5697 = vadd.f32 %v4747, %v5696
        %v5698 = vpop.f32.mrb[0].mxu0
        %v5699 = vadd.f32 %v4751, %v5698
        %v5700 = vpop.f32.mrb[0].mxu0
        %v5701 = vpop.f32.mrb[0].mxu0
        %5702 = vdwg.mxu0
        %5703 = vmatprep.subr.bf16.mxu0 %v5175
        %5704 = vmatpush1.bf16.msra.mxu0 %v5174
        %5705 = vmatprep.subr.bf16.mxu0 %v5191
        %5706 = vmatpush1.bf16.msra.mxu0 %v5190
        %5707 = vmatprep.subr.bf16.mxu0 %v5207
        %5708 = vmatpush1.bf16.msra.mxu0 %v5206
        %5709 = vmatprep.subr.bf16.mxu0 %v5223
        %5710 = vmatpush1.bf16.msra.mxu0 %v5222
        %5711 = vmatprep.subr.bf16.mxu0 %v5239
        %5712 = vmatpush1.bf16.msra.mxu0 %v5238
        %5713 = vmatprep.subr.bf16.mxu0 %v5255
        %5714 = vmatpush1.bf16.msra.mxu0 %v5254
        %5715 = vmatprep.subr.bf16.mxu0 %v5271
        %5716 = vmatpush1.bf16.msra.mxu0 %v5270
        %5717 = vmatprep.subr.bf16.mxu0 %v5287
        %5718 = vmatpush1.bf16.msra.mxu0 %v5286
        %5719 = vmatprep.subr.bf16.mxu0 0
        %5720 = vmatpush1.bf16.msra.mxu0 0
        %5721 = vmatprep.subr.bf16.mxu0 0
        %5722 = vmatpush1.bf16.msra.mxu0 0
        %5723 = vmatprep.subr.bf16.mxu0 0
        %5724 = vmatpush1.bf16.msra.mxu0 0
        %5725 = vmatprep.subr.bf16.mxu0 0
        %5726 = vmatpush1.bf16.msra.mxu0 0
        %5727 = vmatprep.subr.bf16.mxu0 0
        %5728 = vmatpush1.bf16.msra.mxu0 0
        %5729 = vmatprep.subr.bf16.mxu0 0
        %5730 = vmatpush1.bf16.msra.mxu0 0
        %5731 = vmatprep.subr.bf16.mxu0 0
        %5732 = vmatpush1.bf16.msra.mxu0 0
        %5733 = vmatprep.subr.bf16.mxu0 0
        %5734 = vmatpush1.bf16.msra.mxu0 0
        %5735 = vmatprep.mubr.bf16.mxu0 0
        %5736 = vmatmul.mubr.bf16.gmra.mrb[0].mxu0 %v4563
        %v5737 = vpop.f32.mrb[0].mxu0
        %v5738 = vadd.f32 %v4755, %v5737
        %v5739 = vpop.f32.mrb[0].mxu0
        %v5740 = vadd.f32 %v4759, %v5739
        %v5741 = vpop.f32.mrb[0].mxu0
        %v5742 = vpop.f32.mrb[0].mxu0
        %5743 = vdwg.mxu0
        %v5744 = vmax.f32 %v5451, 0.0
        %v5745 = vmax.f32 %v5453, 0.0
        %v5746 = vmax.f32 %v5492, 0.0
        %v5747 = vmax.f32 %v5494, 0.0
        %v5748 = vmax.f32 %v5533, 0.0
        %v5749 = vmax.f32 %v5535, 0.0
        %v5750 = vmax.f32 %v5574, 0.0
        %v5751 = vmax.f32 %v5576, 0.0
        %v5752 = vmax.f32 %v5615, 0.0
        %v5753 = vmax.f32 %v5617, 0.0
        %v5754 = vmax.f32 %v5656, 0.0
        %v5755 = vmax.f32 %v5658, 0.0
        %v5756 = vmax.f32 %v5697, 0.0
        %v5757 = vmax.f32 %v5699, 0.0
        %v5758 = vmax.f32 %v5738, 0.0
        %v5759 = vmax.f32 %v5740, 0.0
        %v5760 = vpack.c.bf16 %v5744, %v5744
        %v5761 = vpack.c.bf16 %v5745, %v5745
        %v5762 = vpack.c.bf16 %v5746, %v5746
        %v5763 = vpack.c.bf16 %v5747, %v5747
        %v5764 = vpack.c.bf16 %v5748, %v5748
        %v5765 = vpack.c.bf16 %v5749, %v5749
        %v5766 = vpack.c.bf16 %v5750, %v5750
        %v5767 = vpack.c.bf16 %v5751, %v5751
        %v5768 = vpack.c.bf16 %v5752, %v5752
        %v5769 = vpack.c.bf16 %v5753, %v5753
        %v5770 = vpack.c.bf16 %v5754, %v5754
        %v5771 = vpack.c.bf16 %v5755, %v5755
        %v5772 = vpack.c.bf16 %v5756, %v5756
        %v5773 = vpack.c.bf16 %v5757, %v5757
        %v5774 = vpack.c.bf16 %v5758, %v5758
        %v5775 = vpack.c.bf16 %v5759, %v5759
        %v5776 = vld [vmem:[%s1467] sm:$0xf]
        %v5777 = vld [vmem:[%s1467 + $0x4] sm:$0xf]
        %v5778 = vld [vmem:[%s1467 + $0x8] sm:$0xf]
        %v5779 = vld [vmem:[%s1467 + $0xc] sm:$0xf]
        %v5780 = vld [vmem:[%s1467 + $0x10] sm:$0xf]
        %v5781 = vld [vmem:[%s1467 + $0x14] sm:$0xf]
        %v5782 = vld [vmem:[%s1467 + $0x18] sm:$0xf]
        %v5783 = vld [vmem:[%s1467 + $0x1c] sm:$0xf]
        %v5784 = vld [vmem:[%s1467 + $0x20] sm:$0xf]
        %v5785 = vld [vmem:[%s1467 + $0x24] sm:$0xf]
        %v5786 = vld [vmem:[%s1467 + $0x28] sm:$0xf]
        %v5787 = vld [vmem:[%s1467 + $0x2c] sm:$0xf]
        %v5788 = vld [vmem:[%s1467 + $0x30] sm:$0xf]
        %v5789 = vld [vmem:[%s1467 + $0x34] sm:$0xf]
        %v5790 = vld [vmem:[%s1467 + $0x38] sm:$0xf]
        %v5791 = vld [vmem:[%s1467 + $0x3c] sm:$0xf]
        %v5792 = vld [vmem:[%s1467 + $0x40] sm:$0xf]
        %v5793 = vld [vmem:[%s1467 + $0x44] sm:$0xf]
        %v5794 = vld [vmem:[%s1467 + $0x48] sm:$0xf]
        %v5795 = vld [vmem:[%s1467 + $0x4c] sm:$0xf]
        %v5796 = vld [vmem:[%s1467 + $0x50] sm:$0xf]
        %v5797 = vld [vmem:[%s1467 + $0x54] sm:$0xf]
        %v5798 = vld [vmem:[%s1467 + $0x58] sm:$0xf]
        %v5799 = vld [vmem:[%s1467 + $0x5c] sm:$0xf]
        %v5800 = vld [vmem:[%s1467 + $0x60] sm:$0xf]
        %v5801 = vld [vmem:[%s1467 + $0x64] sm:$0xf]
        %v5802 = vld [vmem:[%s1467 + $0x68] sm:$0xf]
        %v5803 = vld [vmem:[%s1467 + $0x6c] sm:$0xf]
        %v5804 = vld [vmem:[%s1467 + $0x70] sm:$0xf]
        %v5805 = vld [vmem:[%s1467 + $0x74] sm:$0xf]
        %v5806 = vld [vmem:[%s1467 + $0x78] sm:$0xf]
        %v5807 = vld [vmem:[%s1467 + $0x7c] sm:$0xf]
        %v5808 = vld [vmem:[%s1467 + $0x80] sm:$0xf]
        %v5809 = vld [vmem:[%s1467 + $0x84] sm:$0xf]
        %v5810 = vld [vmem:[%s1467 + $0x88] sm:$0xf]
        %v5811 = vld [vmem:[%s1467 + $0x8c] sm:$0xf]
        %v5812 = vld [vmem:[%s1467 + $0x90] sm:$0xf]
        %v5813 = vld [vmem:[%s1467 + $0x94] sm:$0xf]
        %v5814 = vld [vmem:[%s1467 + $0x98] sm:$0xf]
        %v5815 = vld [vmem:[%s1467 + $0x9c] sm:$0xf]
        %v5816 = vld [vmem:[%s1467 + $0xa0] sm:$0xf]
        %v5817 = vld [vmem:[%s1467 + $0xa4] sm:$0xf]
        %v5818 = vld [vmem:[%s1467 + $0xa8] sm:$0xf]
        %v5819 = vld [vmem:[%s1467 + $0xac] sm:$0xf]
        %v5820 = vld [vmem:[%s1467 + $0xb0] sm:$0xf]
        %v5821 = vld [vmem:[%s1467 + $0xb4] sm:$0xf]
        %v5822 = vld [vmem:[%s1467 + $0xb8] sm:$0xf]
        %v5823 = vld [vmem:[%s1467 + $0xbc] sm:$0xf]
        %v5824 = vld [vmem:[%s1467 + $0xc0] sm:$0xf]
        %v5825 = vld [vmem:[%s1467 + $0xc4] sm:$0xf]
        %v5826 = vld [vmem:[%s1467 + $0xc8] sm:$0xf]
        %v5827 = vld [vmem:[%s1467 + $0xcc] sm:$0xf]
        %v5828 = vld [vmem:[%s1467 + $0xd0] sm:$0xf]
        %v5829 = vld [vmem:[%s1467 + $0xd4] sm:$0xf]
        %v5830 = vld [vmem:[%s1467 + $0xd8] sm:$0xf]
        %v5831 = vld [vmem:[%s1467 + $0xdc] sm:$0xf]
        %v5832 = vld [vmem:[%s1467 + $0xe0] sm:$0xf]
        %v5833 = vld [vmem:[%s1467 + $0xe4] sm:$0xf]
        %v5834 = vld [vmem:[%s1467 + $0xe8] sm:$0xf]
        %v5835 = vld [vmem:[%s1467 + $0xec] sm:$0xf]
        %v5836 = vld [vmem:[%s1467 + $0xf0] sm:$0xf]
        %v5837 = vld [vmem:[%s1467 + $0xf4] sm:$0xf]
        %v5838 = vld [vmem:[%s1467 + $0xf8] sm:$0xf]
        %v5839 = vld [vmem:[%s1467 + $0xfc] sm:$0xf]
        %v5840 = vld [vmem:[%s1467 + $0x100] sm:$0xf]
        %v5841 = vld [vmem:[%s1467 + $0x104] sm:$0xf]
        %v5842 = vld [vmem:[%s1467 + $0x108] sm:$0xf]
        %v5843 = vld [vmem:[%s1467 + $0x10c] sm:$0xf]
        %v5844 = vld [vmem:[%s1467 + $0x110] sm:$0xf]
        %v5845 = vld [vmem:[%s1467 + $0x114] sm:$0xf]
        %v5846 = vld [vmem:[%s1467 + $0x118] sm:$0xf]
        %v5847 = vld [vmem:[%s1467 + $0x11c] sm:$0xf]
        %v5848 = vld [vmem:[%s1467 + $0x120] sm:$0xf]
        %v5849 = vld [vmem:[%s1467 + $0x124] sm:$0xf]
        %v5850 = vld [vmem:[%s1467 + $0x128] sm:$0xf]
        %v5851 = vld [vmem:[%s1467 + $0x12c] sm:$0xf]
        %v5852 = vld [vmem:[%s1467 + $0x130] sm:$0xf]
        %v5853 = vld [vmem:[%s1467 + $0x134] sm:$0xf]
        %v5854 = vld [vmem:[%s1467 + $0x138] sm:$0xf]
        %v5855 = vld [vmem:[%s1467 + $0x13c] sm:$0xf]
        %v5856 = vld [vmem:[%s1467 + $0x140] sm:$0xf]
        %v5857 = vld [vmem:[%s1467 + $0x144] sm:$0xf]
        %v5858 = vld [vmem:[%s1467 + $0x148] sm:$0xf]
        %v5859 = vld [vmem:[%s1467 + $0x14c] sm:$0xf]
        %v5860 = vld [vmem:[%s1467 + $0x150] sm:$0xf]
        %v5861 = vld [vmem:[%s1467 + $0x154] sm:$0xf]
        %v5862 = vld [vmem:[%s1467 + $0x158] sm:$0xf]
        %v5863 = vld [vmem:[%s1467 + $0x15c] sm:$0xf]
        %v5864 = vld [vmem:[%s1467 + $0x160] sm:$0xf]
        %v5865 = vld [vmem:[%s1467 + $0x164] sm:$0xf]
        %v5866 = vld [vmem:[%s1467 + $0x168] sm:$0xf]
        %v5867 = vld [vmem:[%s1467 + $0x16c] sm:$0xf]
        %v5868 = vld [vmem:[%s1467 + $0x170] sm:$0xf]
        %v5869 = vld [vmem:[%s1467 + $0x174] sm:$0xf]
        %v5870 = vld [vmem:[%s1467 + $0x178] sm:$0xf]
        %v5871 = vld [vmem:[%s1467 + $0x17c] sm:$0xf]
        %v5872 = vld [vmem:[%s1467 + $0x180] sm:$0xf]
        %v5873 = vld [vmem:[%s1467 + $0x184] sm:$0xf]
        %v5874 = vld [vmem:[%s1467 + $0x188] sm:$0xf]
        %v5875 = vld [vmem:[%s1467 + $0x18c] sm:$0xf]
        %v5876 = vld [vmem:[%s1467 + $0x190] sm:$0xf]
        %v5877 = vld [vmem:[%s1467 + $0x194] sm:$0xf]
        %v5878 = vld [vmem:[%s1467 + $0x198] sm:$0xf]
        %v5879 = vld [vmem:[%s1467 + $0x19c] sm:$0xf]
        %v5880 = vld [vmem:[%s1467 + $0x1a0] sm:$0xf]
        %v5881 = vld [vmem:[%s1467 + $0x1a4] sm:$0xf]
        %v5882 = vld [vmem:[%s1467 + $0x1a8] sm:$0xf]
        %v5883 = vld [vmem:[%s1467 + $0x1ac] sm:$0xf]
        %v5884 = vld [vmem:[%s1467 + $0x1b0] sm:$0xf]
        %v5885 = vld [vmem:[%s1467 + $0x1b4] sm:$0xf]
        %v5886 = vld [vmem:[%s1467 + $0x1b8] sm:$0xf]
        %v5887 = vld [vmem:[%s1467 + $0x1bc] sm:$0xf]
        %v5888 = vld [vmem:[%s1467 + $0x1c0] sm:$0xf]
        %v5889 = vld [vmem:[%s1467 + $0x1c4] sm:$0xf]
        %v5890 = vld [vmem:[%s1467 + $0x1c8] sm:$0xf]
        %v5891 = vld [vmem:[%s1467 + $0x1cc] sm:$0xf]
        %v5892 = vld [vmem:[%s1467 + $0x1d0] sm:$0xf]
        %v5893 = vld [vmem:[%s1467 + $0x1d4] sm:$0xf]
        %v5894 = vld [vmem:[%s1467 + $0x1d8] sm:$0xf]
        %v5895 = vld [vmem:[%s1467 + $0x1dc] sm:$0xf]
        %v5896 = vld [vmem:[%s1467 + $0x1e0] sm:$0xf]
        %v5897 = vld [vmem:[%s1467 + $0x1e4] sm:$0xf]
        %v5898 = vld [vmem:[%s1467 + $0x1e8] sm:$0xf]
        %v5899 = vld [vmem:[%s1467 + $0x1ec] sm:$0xf]
        %v5900 = vld [vmem:[%s1467 + $0x1f0] sm:$0xf]
        %v5901 = vld [vmem:[%s1467 + $0x1f4] sm:$0xf]
        %v5902 = vld [vmem:[%s1467 + $0x1f8] sm:$0xf]
        %v5903 = vld [vmem:[%s1467 + $0x1fc] sm:$0xf]
        %v5904 = vld [vmem:[%s1467 + $0x200] sm:$0xf]
        %v5905 = vld [vmem:[%s1467 + $0x204] sm:$0xf]
        %v5906 = vld [vmem:[%s1467 + $0x208] sm:$0xf]
        %v5907 = vld [vmem:[%s1467 + $0x20c] sm:$0xf]
        %v5908 = vld [vmem:[%s1467 + $0x210] sm:$0xf]
        %v5909 = vld [vmem:[%s1467 + $0x214] sm:$0xf]
        %v5910 = vld [vmem:[%s1467 + $0x218] sm:$0xf]
        %v5911 = vld [vmem:[%s1467 + $0x21c] sm:$0xf]
        %v5912 = vld [vmem:[%s1467 + $0x220] sm:$0xf]
        %v5913 = vld [vmem:[%s1467 + $0x224] sm:$0xf]
        %v5914 = vld [vmem:[%s1467 + $0x228] sm:$0xf]
        %v5915 = vld [vmem:[%s1467 + $0x22c] sm:$0xf]
        %v5916 = vld [vmem:[%s1467 + $0x230] sm:$0xf]
        %v5917 = vld [vmem:[%s1467 + $0x234] sm:$0xf]
        %v5918 = vld [vmem:[%s1467 + $0x238] sm:$0xf]
        %v5919 = vld [vmem:[%s1467 + $0x23c] sm:$0xf]
        %v5920 = vld [vmem:[%s1467 + $0x240] sm:$0xf]
        %v5921 = vld [vmem:[%s1467 + $0x244] sm:$0xf]
        %v5922 = vld [vmem:[%s1467 + $0x248] sm:$0xf]
        %v5923 = vld [vmem:[%s1467 + $0x24c] sm:$0xf]
        %v5924 = vld [vmem:[%s1467 + $0x250] sm:$0xf]
        %v5925 = vld [vmem:[%s1467 + $0x254] sm:$0xf]
        %v5926 = vld [vmem:[%s1467 + $0x258] sm:$0xf]
        %v5927 = vld [vmem:[%s1467 + $0x25c] sm:$0xf]
        %v5928 = vld [vmem:[%s1467 + $0x260] sm:$0xf]
        %v5929 = vld [vmem:[%s1467 + $0x264] sm:$0xf]
        %v5930 = vld [vmem:[%s1467 + $0x268] sm:$0xf]
        %v5931 = vld [vmem:[%s1467 + $0x26c] sm:$0xf]
        %v5932 = vld [vmem:[%s1467 + $0x270] sm:$0xf]
        %v5933 = vld [vmem:[%s1467 + $0x274] sm:$0xf]
        %v5934 = vld [vmem:[%s1467 + $0x278] sm:$0xf]
        %v5935 = vld [vmem:[%s1467 + $0x27c] sm:$0xf]
        %v5936 = vld [vmem:[%s1467 + $0x280] sm:$0xf]
        %v5937 = vld [vmem:[%s1467 + $0x284] sm:$0xf]
        %v5938 = vld [vmem:[%s1467 + $0x288] sm:$0xf]
        %v5939 = vld [vmem:[%s1467 + $0x28c] sm:$0xf]
        %v5940 = vld [vmem:[%s1467 + $0x290] sm:$0xf]
        %v5941 = vld [vmem:[%s1467 + $0x294] sm:$0xf]
        %v5942 = vld [vmem:[%s1467 + $0x298] sm:$0xf]
        %v5943 = vld [vmem:[%s1467 + $0x29c] sm:$0xf]
        %v5944 = vld [vmem:[%s1467 + $0x2a0] sm:$0xf]
        %v5945 = vld [vmem:[%s1467 + $0x2a4] sm:$0xf]
        %v5946 = vld [vmem:[%s1467 + $0x2a8] sm:$0xf]
        %v5947 = vld [vmem:[%s1467 + $0x2ac] sm:$0xf]
        %v5948 = vld [vmem:[%s1467 + $0x2b0] sm:$0xf]
        %v5949 = vld [vmem:[%s1467 + $0x2b4] sm:$0xf]
        %v5950 = vld [vmem:[%s1467 + $0x2b8] sm:$0xf]
        %v5951 = vld [vmem:[%s1467 + $0x2bc] sm:$0xf]
        %v5952 = vld [vmem:[%s1467 + $0x2c0] sm:$0xf]
        %v5953 = vld [vmem:[%s1467 + $0x2c4] sm:$0xf]
        %v5954 = vld [vmem:[%s1467 + $0x2c8] sm:$0xf]
        %v5955 = vld [vmem:[%s1467 + $0x2cc] sm:$0xf]
        %v5956 = vld [vmem:[%s1467 + $0x2d0] sm:$0xf]
        %v5957 = vld [vmem:[%s1467 + $0x2d4] sm:$0xf]
        %v5958 = vld [vmem:[%s1467 + $0x2d8] sm:$0xf]
        %v5959 = vld [vmem:[%s1467 + $0x2dc] sm:$0xf]
        %v5960 = vld [vmem:[%s1467 + $0x2e0] sm:$0xf]
        %v5961 = vld [vmem:[%s1467 + $0x2e4] sm:$0xf]
        %v5962 = vld [vmem:[%s1467 + $0x2e8] sm:$0xf]
        %v5963 = vld [vmem:[%s1467 + $0x2ec] sm:$0xf]
        %v5964 = vld [vmem:[%s1467 + $0x2f0] sm:$0xf]
        %v5965 = vld [vmem:[%s1467 + $0x2f4] sm:$0xf]
        %v5966 = vld [vmem:[%s1467 + $0x2f8] sm:$0xf]
        %v5967 = vld [vmem:[%s1467 + $0x2fc] sm:$0xf]
        %v5968 = vld [vmem:[%s1467 + $0x300] sm:$0xf]
        %v5969 = vld [vmem:[%s1467 + $0x304] sm:$0xf]
        %v5970 = vld [vmem:[%s1467 + $0x308] sm:$0xf]
        %v5971 = vld [vmem:[%s1467 + $0x30c] sm:$0xf]
        %v5972 = vld [vmem:[%s1467 + $0x310] sm:$0xf]
        %v5973 = vld [vmem:[%s1467 + $0x314] sm:$0xf]
        %v5974 = vld [vmem:[%s1467 + $0x318] sm:$0xf]
        %v5975 = vld [vmem:[%s1467 + $0x31c] sm:$0xf]
        %v5976 = vld [vmem:[%s1467 + $0x320] sm:$0xf]
        %v5977 = vld [vmem:[%s1467 + $0x324] sm:$0xf]
        %v5978 = vld [vmem:[%s1467 + $0x328] sm:$0xf]
        %v5979 = vld [vmem:[%s1467 + $0x32c] sm:$0xf]
        %v5980 = vld [vmem:[%s1467 + $0x330] sm:$0xf]
        %v5981 = vld [vmem:[%s1467 + $0x334] sm:$0xf]
        %v5982 = vld [vmem:[%s1467 + $0x338] sm:$0xf]
        %v5983 = vld [vmem:[%s1467 + $0x33c] sm:$0xf]
        %v5984 = vld [vmem:[%s1467 + $0x340] sm:$0xf]
        %v5985 = vld [vmem:[%s1467 + $0x344] sm:$0xf]
        %v5986 = vld [vmem:[%s1467 + $0x348] sm:$0xf]
        %v5987 = vld [vmem:[%s1467 + $0x34c] sm:$0xf]
        %v5988 = vld [vmem:[%s1467 + $0x350] sm:$0xf]
        %v5989 = vld [vmem:[%s1467 + $0x354] sm:$0xf]
        %v5990 = vld [vmem:[%s1467 + $0x358] sm:$0xf]
        %v5991 = vld [vmem:[%s1467 + $0x35c] sm:$0xf]
        %v5992 = vld [vmem:[%s1467 + $0x360] sm:$0xf]
        %v5993 = vld [vmem:[%s1467 + $0x364] sm:$0xf]
        %v5994 = vld [vmem:[%s1467 + $0x368] sm:$0xf]
        %v5995 = vld [vmem:[%s1467 + $0x36c] sm:$0xf]
        %v5996 = vld [vmem:[%s1467 + $0x370] sm:$0xf]
        %v5997 = vld [vmem:[%s1467 + $0x374] sm:$0xf]
        %v5998 = vld [vmem:[%s1467 + $0x378] sm:$0xf]
        %v5999 = vld [vmem:[%s1467 + $0x37c] sm:$0xf]
        %v6000 = vld [vmem:[%s1467 + $0x380] sm:$0xf]
        %v6001 = vld [vmem:[%s1467 + $0x384] sm:$0xf]
        %v6002 = vld [vmem:[%s1467 + $0x388] sm:$0xf]
        %v6003 = vld [vmem:[%s1467 + $0x38c] sm:$0xf]
        %v6004 = vld [vmem:[%s1467 + $0x390] sm:$0xf]
        %v6005 = vld [vmem:[%s1467 + $0x394] sm:$0xf]
        %v6006 = vld [vmem:[%s1467 + $0x398] sm:$0xf]
        %v6007 = vld [vmem:[%s1467 + $0x39c] sm:$0xf]
        %v6008 = vld [vmem:[%s1467 + $0x3a0] sm:$0xf]
        %v6009 = vld [vmem:[%s1467 + $0x3a4] sm:$0xf]
        %v6010 = vld [vmem:[%s1467 + $0x3a8] sm:$0xf]
        %v6011 = vld [vmem:[%s1467 + $0x3ac] sm:$0xf]
        %v6012 = vld [vmem:[%s1467 + $0x3b0] sm:$0xf]
        %v6013 = vld [vmem:[%s1467 + $0x3b4] sm:$0xf]
        %v6014 = vld [vmem:[%s1467 + $0x3b8] sm:$0xf]
        %v6015 = vld [vmem:[%s1467 + $0x3bc] sm:$0xf]
        %v6016 = vld [vmem:[%s1467 + $0x3c0] sm:$0xf]
        %v6017 = vld [vmem:[%s1467 + $0x3c4] sm:$0xf]
        %v6018 = vld [vmem:[%s1467 + $0x3c8] sm:$0xf]
        %v6019 = vld [vmem:[%s1467 + $0x3cc] sm:$0xf]
        %v6020 = vld [vmem:[%s1467 + $0x3d0] sm:$0xf]
        %v6021 = vld [vmem:[%s1467 + $0x3d4] sm:$0xf]
        %v6022 = vld [vmem:[%s1467 + $0x3d8] sm:$0xf]
        %v6023 = vld [vmem:[%s1467 + $0x3dc] sm:$0xf]
        %v6024 = vld [vmem:[%s1467 + $0x3e0] sm:$0xf]
        %v6025 = vld [vmem:[%s1467 + $0x3e4] sm:$0xf]
        %v6026 = vld [vmem:[%s1467 + $0x3e8] sm:$0xf]
        %v6027 = vld [vmem:[%s1467 + $0x3ec] sm:$0xf]
        %v6028 = vld [vmem:[%s1467 + $0x3f0] sm:$0xf]
        %v6029 = vld [vmem:[%s1467 + $0x3f4] sm:$0xf]
        %v6030 = vld [vmem:[%s1467 + $0x3f8] sm:$0xf]
        %v6031 = vld [vmem:[%s1467 + $0x3fc] sm:$0xf]
        %v6032 = vld [vmem:[%s1713] sm:$0x1]
        %v6034 = vlaneseq
        %v6035 = vshrl.u32 %v6034, 7
        %v6036 = vsub.s32 0, %v6035
        %v6037 = vrot.slane %v6032, %v6036
        %v6295 = vunpack.c.l.b16 %v5776
        %v6296 = vunpack.c.l.b16 %v5777
        %v6297 = vunpack.c.l.b16 %v5778
        %v6298 = vunpack.c.l.b16 %v5779
        %v6299 = vunpack.c.l.b16 %v5780
        %v6300 = vunpack.c.l.b16 %v5781
        %v6301 = vunpack.c.l.b16 %v5782
        %v6302 = vunpack.c.l.b16 %v5783
        %v6303 = vunpack.c.l.b16 %v5784
        %v6304 = vunpack.c.l.b16 %v5785
        %v6305 = vunpack.c.l.b16 %v5786
        %v6306 = vunpack.c.l.b16 %v5787
        %v6307 = vunpack.c.l.b16 %v5788
        %v6308 = vunpack.c.l.b16 %v5789
        %v6309 = vunpack.c.l.b16 %v5790
        %v6310 = vunpack.c.l.b16 %v5791
        %v6311 = vunpack.c.l.b16 %v5792
        %v6312 = vunpack.c.l.b16 %v5793
        %v6313 = vunpack.c.l.b16 %v5794
        %v6314 = vunpack.c.l.b16 %v5795
        %v6315 = vunpack.c.l.b16 %v5796
        %v6316 = vunpack.c.l.b16 %v5797
        %v6317 = vunpack.c.l.b16 %v5798
        %v6318 = vunpack.c.l.b16 %v5799
        %v6319 = vunpack.c.l.b16 %v5800
        %v6320 = vunpack.c.l.b16 %v5801
        %v6321 = vunpack.c.l.b16 %v5802
        %v6322 = vunpack.c.l.b16 %v5803
        %v6323 = vunpack.c.l.b16 %v5804
        %v6324 = vunpack.c.l.b16 %v5805
        %v6325 = vunpack.c.l.b16 %v5806
        %v6326 = vunpack.c.l.b16 %v5807
        %v6327 = vunpack.c.l.b16 %v5808
        %v6328 = vunpack.c.l.b16 %v5809
        %v6329 = vunpack.c.l.b16 %v5810
        %v6330 = vunpack.c.l.b16 %v5811
        %v6331 = vunpack.c.l.b16 %v5812
        %v6332 = vunpack.c.l.b16 %v5813
        %v6333 = vunpack.c.l.b16 %v5814
        %v6334 = vunpack.c.l.b16 %v5815
        %v6335 = vunpack.c.l.b16 %v5816
        %v6336 = vunpack.c.l.b16 %v5817
        %v6337 = vunpack.c.l.b16 %v5818
        %v6338 = vunpack.c.l.b16 %v5819
        %v6339 = vunpack.c.l.b16 %v5820
        %v6340 = vunpack.c.l.b16 %v5821
        %v6341 = vunpack.c.l.b16 %v5822
        %v6342 = vunpack.c.l.b16 %v5823
        %v6343 = vunpack.c.l.b16 %v5824
        %v6344 = vunpack.c.l.b16 %v5825
        %v6345 = vunpack.c.l.b16 %v5826
        %v6346 = vunpack.c.l.b16 %v5827
        %v6347 = vunpack.c.l.b16 %v5828
        %v6348 = vunpack.c.l.b16 %v5829
        %v6349 = vunpack.c.l.b16 %v5830
        %v6350 = vunpack.c.l.b16 %v5831
        %v6351 = vunpack.c.l.b16 %v5832
        %v6352 = vunpack.c.l.b16 %v5833
        %v6353 = vunpack.c.l.b16 %v5834
        %v6354 = vunpack.c.l.b16 %v5835
        %v6355 = vunpack.c.l.b16 %v5836
        %v6356 = vunpack.c.l.b16 %v5837
        %v6357 = vunpack.c.l.b16 %v5838
        %v6358 = vunpack.c.l.b16 %v5839
        %v6359 = vunpack.c.l.b16 %v5840
        %v6360 = vunpack.c.l.b16 %v5841
        %v6361 = vunpack.c.l.b16 %v5842
        %v6362 = vunpack.c.l.b16 %v5843
        %v6363 = vunpack.c.l.b16 %v5844
        %v6364 = vunpack.c.l.b16 %v5845
        %v6365 = vunpack.c.l.b16 %v5846
        %v6366 = vunpack.c.l.b16 %v5847
        %v6367 = vunpack.c.l.b16 %v5848
        %v6368 = vunpack.c.l.b16 %v5849
        %v6369 = vunpack.c.l.b16 %v5850
        %v6370 = vunpack.c.l.b16 %v5851
        %v6371 = vunpack.c.l.b16 %v5852
        %v6372 = vunpack.c.l.b16 %v5853
        %v6373 = vunpack.c.l.b16 %v5854
        %v6374 = vunpack.c.l.b16 %v5855
        %v6375 = vunpack.c.l.b16 %v5856
        %v6376 = vunpack.c.l.b16 %v5857
        %v6377 = vunpack.c.l.b16 %v5858
        %v6378 = vunpack.c.l.b16 %v5859
        %v6379 = vunpack.c.l.b16 %v5860
        %v6380 = vunpack.c.l.b16 %v5861
        %v6381 = vunpack.c.l.b16 %v5862
        %v6382 = vunpack.c.l.b16 %v5863
        %v6383 = vunpack.c.l.b16 %v5864
        %v6384 = vunpack.c.l.b16 %v5865
        %v6385 = vunpack.c.l.b16 %v5866
        %v6386 = vunpack.c.l.b16 %v5867
        %v6387 = vunpack.c.l.b16 %v5868
        %v6388 = vunpack.c.l.b16 %v5869
        %v6389 = vunpack.c.l.b16 %v5870
        %v6390 = vunpack.c.l.b16 %v5871
        %v6391 = vunpack.c.l.b16 %v5872
        %v6392 = vunpack.c.l.b16 %v5873
        %v6393 = vunpack.c.l.b16 %v5874
        %v6394 = vunpack.c.l.b16 %v5875
        %v6395 = vunpack.c.l.b16 %v5876
        %v6396 = vunpack.c.l.b16 %v5877
        %v6397 = vunpack.c.l.b16 %v5878
        %v6398 = vunpack.c.l.b16 %v5879
        %v6399 = vunpack.c.l.b16 %v5880
        %v6400 = vunpack.c.l.b16 %v5881
        %v6401 = vunpack.c.l.b16 %v5882
        %v6402 = vunpack.c.l.b16 %v5883
        %v6403 = vunpack.c.l.b16 %v5884
        %v6404 = vunpack.c.l.b16 %v5885
        %v6405 = vunpack.c.l.b16 %v5886
        %v6406 = vunpack.c.l.b16 %v5887
        %v6407 = vunpack.c.l.b16 %v5888
        %v6408 = vunpack.c.l.b16 %v5889
        %v6409 = vunpack.c.l.b16 %v5890
        %v6410 = vunpack.c.l.b16 %v5891
        %v6411 = vunpack.c.l.b16 %v5892
        %v6412 = vunpack.c.l.b16 %v5893
        %v6413 = vunpack.c.l.b16 %v5894
        %v6414 = vunpack.c.l.b16 %v5895
        %v6415 = vunpack.c.l.b16 %v5896
        %v6416 = vunpack.c.l.b16 %v5897
        %v6417 = vunpack.c.l.b16 %v5898
        %v6418 = vunpack.c.l.b16 %v5899
        %v6419 = vunpack.c.l.b16 %v5900
        %v6420 = vunpack.c.l.b16 %v5901
        %v6421 = vunpack.c.l.b16 %v5902
        %v6422 = vunpack.c.l.b16 %v5903
        %v6423 = vunpack.c.l.b16 %v5904
        %v6424 = vunpack.c.l.b16 %v5905
        %v6425 = vunpack.c.l.b16 %v5906
        %v6426 = vunpack.c.l.b16 %v5907
        %v6427 = vunpack.c.l.b16 %v5908
        %v6428 = vunpack.c.l.b16 %v5909
        %v6429 = vunpack.c.l.b16 %v5910
        %v6430 = vunpack.c.l.b16 %v5911
        %v6431 = vunpack.c.l.b16 %v5912
        %v6432 = vunpack.c.l.b16 %v5913
        %v6433 = vunpack.c.l.b16 %v5914
        %v6434 = vunpack.c.l.b16 %v5915
        %v6435 = vunpack.c.l.b16 %v5916
        %v6436 = vunpack.c.l.b16 %v5917
        %v6437 = vunpack.c.l.b16 %v5918
        %v6438 = vunpack.c.l.b16 %v5919
        %v6439 = vunpack.c.l.b16 %v5920
        %v6440 = vunpack.c.l.b16 %v5921
        %v6441 = vunpack.c.l.b16 %v5922
        %v6442 = vunpack.c.l.b16 %v5923
        %v6443 = vunpack.c.l.b16 %v5924
        %v6444 = vunpack.c.l.b16 %v5925
        %v6445 = vunpack.c.l.b16 %v5926
        %v6446 = vunpack.c.l.b16 %v5927
        %v6447 = vunpack.c.l.b16 %v5928
        %v6448 = vunpack.c.l.b16 %v5929
        %v6449 = vunpack.c.l.b16 %v5930
        %v6450 = vunpack.c.l.b16 %v5931
        %v6451 = vunpack.c.l.b16 %v5932
        %v6452 = vunpack.c.l.b16 %v5933
        %v6453 = vunpack.c.l.b16 %v5934
        %v6454 = vunpack.c.l.b16 %v5935
        %v6455 = vunpack.c.l.b16 %v5936
        %v6456 = vunpack.c.l.b16 %v5937
        %v6457 = vunpack.c.l.b16 %v5938
        %v6458 = vunpack.c.l.b16 %v5939
        %v6459 = vunpack.c.l.b16 %v5940
        %v6460 = vunpack.c.l.b16 %v5941
        %v6461 = vunpack.c.l.b16 %v5942
        %v6462 = vunpack.c.l.b16 %v5943
        %v6463 = vunpack.c.l.b16 %v5944
        %v6464 = vunpack.c.l.b16 %v5945
        %v6465 = vunpack.c.l.b16 %v5946
        %v6466 = vunpack.c.l.b16 %v5947
        %v6467 = vunpack.c.l.b16 %v5948
        %v6468 = vunpack.c.l.b16 %v5949
        %v6469 = vunpack.c.l.b16 %v5950
        %v6470 = vunpack.c.l.b16 %v5951
        %v6471 = vunpack.c.l.b16 %v5952
        %v6472 = vunpack.c.l.b16 %v5953
        %v6473 = vunpack.c.l.b16 %v5954
        %v6474 = vunpack.c.l.b16 %v5955
        %v6475 = vunpack.c.l.b16 %v5956
        %v6476 = vunpack.c.l.b16 %v5957
        %v6477 = vunpack.c.l.b16 %v5958
        %v6478 = vunpack.c.l.b16 %v5959
        %v6479 = vunpack.c.l.b16 %v5960
        %v6480 = vunpack.c.l.b16 %v5961
        %v6481 = vunpack.c.l.b16 %v5962
        %v6482 = vunpack.c.l.b16 %v5963
        %v6483 = vunpack.c.l.b16 %v5964
        %v6484 = vunpack.c.l.b16 %v5965
        %v6485 = vunpack.c.l.b16 %v5966
        %v6486 = vunpack.c.l.b16 %v5967
        %v6487 = vunpack.c.l.b16 %v5968
        %v6488 = vunpack.c.l.b16 %v5969
        %v6489 = vunpack.c.l.b16 %v5970
        %v6490 = vunpack.c.l.b16 %v5971
        %v6491 = vunpack.c.l.b16 %v5972
        %v6492 = vunpack.c.l.b16 %v5973
        %v6493 = vunpack.c.l.b16 %v5974
        %v6494 = vunpack.c.l.b16 %v5975
        %v6495 = vunpack.c.l.b16 %v5976
        %v6496 = vunpack.c.l.b16 %v5977
        %v6497 = vunpack.c.l.b16 %v5978
        %v6498 = vunpack.c.l.b16 %v5979
        %v6499 = vunpack.c.l.b16 %v5980
        %v6500 = vunpack.c.l.b16 %v5981
        %v6501 = vunpack.c.l.b16 %v5982
        %v6502 = vunpack.c.l.b16 %v5983
        %v6503 = vunpack.c.l.b16 %v5984
        %v6504 = vunpack.c.l.b16 %v5985
        %v6505 = vunpack.c.l.b16 %v5986
        %v6506 = vunpack.c.l.b16 %v5987
        %v6507 = vunpack.c.l.b16 %v5988
        %v6508 = vunpack.c.l.b16 %v5989
        %v6509 = vunpack.c.l.b16 %v5990
        %v6510 = vunpack.c.l.b16 %v5991
        %v6511 = vunpack.c.l.b16 %v5992
        %v6512 = vunpack.c.l.b16 %v5993
        %v6513 = vunpack.c.l.b16 %v5994
        %v6514 = vunpack.c.l.b16 %v5995
        %v6515 = vunpack.c.l.b16 %v5996
        %v6516 = vunpack.c.l.b16 %v5997
        %v6517 = vunpack.c.l.b16 %v5998
        %v6518 = vunpack.c.l.b16 %v5999
        %v6519 = vunpack.c.l.b16 %v6000
        %v6520 = vunpack.c.l.b16 %v6001
        %v6521 = vunpack.c.l.b16 %v6002
        %v6522 = vunpack.c.l.b16 %v6003
        %v6523 = vunpack.c.l.b16 %v6004
        %v6524 = vunpack.c.l.b16 %v6005
        %v6525 = vunpack.c.l.b16 %v6006
        %v6526 = vunpack.c.l.b16 %v6007
        %v6527 = vunpack.c.l.b16 %v6008
        %v6528 = vunpack.c.l.b16 %v6009
        %v6529 = vunpack.c.l.b16 %v6010
        %v6530 = vunpack.c.l.b16 %v6011
        %v6531 = vunpack.c.l.b16 %v6012
        %v6532 = vunpack.c.l.b16 %v6013
        %v6533 = vunpack.c.l.b16 %v6014
        %v6534 = vunpack.c.l.b16 %v6015
        %v6535 = vunpack.c.l.b16 %v6016
        %v6536 = vunpack.c.l.b16 %v6017
        %v6537 = vunpack.c.l.b16 %v6018
        %v6538 = vunpack.c.l.b16 %v6019
        %v6539 = vunpack.c.l.b16 %v6020
        %v6540 = vunpack.c.l.b16 %v6021
        %v6541 = vunpack.c.l.b16 %v6022
        %v6542 = vunpack.c.l.b16 %v6023
        %v6543 = vunpack.c.l.b16 %v6024
        %v6544 = vunpack.c.l.b16 %v6025
        %v6545 = vunpack.c.l.b16 %v6026
        %v6546 = vunpack.c.l.b16 %v6027
        %v6547 = vunpack.c.l.b16 %v6028
        %v6548 = vunpack.c.l.b16 %v6029
        %v6549 = vunpack.c.l.b16 %v6030
        %v6550 = vunpack.c.l.b16 %v6031
        %v6551 = vpack.c.b16 %v6296, %v6295
        %v6552 = vpack.c.b16 %v6298, %v6297
        %v6553 = vpack.c.b16 %v6300, %v6299
        %v6554 = vpack.c.b16 %v6302, %v6301
        %v6555 = vpack.c.b16 %v6304, %v6303
        %v6556 = vpack.c.b16 %v6306, %v6305
        %v6557 = vpack.c.b16 %v6308, %v6307
        %v6558 = vpack.c.b16 %v6310, %v6309
        %v6559 = vpack.c.b16 %v6312, %v6311
        %v6560 = vpack.c.b16 %v6314, %v6313
        %v6561 = vpack.c.b16 %v6316, %v6315
        %v6562 = vpack.c.b16 %v6318, %v6317
        %v6563 = vpack.c.b16 %v6320, %v6319
        %v6564 = vpack.c.b16 %v6322, %v6321
        %v6565 = vpack.c.b16 %v6324, %v6323
        %v6566 = vpack.c.b16 %v6326, %v6325
        %v6567 = vpack.c.b16 %v6328, %v6327
        %v6568 = vpack.c.b16 %v6330, %v6329
        %v6569 = vpack.c.b16 %v6332, %v6331
        %v6570 = vpack.c.b16 %v6334, %v6333
        %v6571 = vpack.c.b16 %v6336, %v6335
        %v6572 = vpack.c.b16 %v6338, %v6337
        %v6573 = vpack.c.b16 %v6340, %v6339
        %v6574 = vpack.c.b16 %v6342, %v6341
        %v6575 = vpack.c.b16 %v6344, %v6343
        %v6576 = vpack.c.b16 %v6346, %v6345
        %v6577 = vpack.c.b16 %v6348, %v6347
        %v6578 = vpack.c.b16 %v6350, %v6349
        %v6579 = vpack.c.b16 %v6352, %v6351
        %v6580 = vpack.c.b16 %v6354, %v6353
        %v6581 = vpack.c.b16 %v6356, %v6355
        %v6582 = vpack.c.b16 %v6358, %v6357
        %v6583 = vpack.c.b16 %v6360, %v6359
        %v6584 = vpack.c.b16 %v6362, %v6361
        %v6585 = vpack.c.b16 %v6364, %v6363
        %v6586 = vpack.c.b16 %v6366, %v6365
        %v6587 = vpack.c.b16 %v6368, %v6367
        %v6588 = vpack.c.b16 %v6370, %v6369
        %v6589 = vpack.c.b16 %v6372, %v6371
        %v6590 = vpack.c.b16 %v6374, %v6373
        %v6591 = vpack.c.b16 %v6376, %v6375
        %v6592 = vpack.c.b16 %v6378, %v6377
        %v6593 = vpack.c.b16 %v6380, %v6379
        %v6594 = vpack.c.b16 %v6382, %v6381
        %v6595 = vpack.c.b16 %v6384, %v6383
        %v6596 = vpack.c.b16 %v6386, %v6385
        %v6597 = vpack.c.b16 %v6388, %v6387
        %v6598 = vpack.c.b16 %v6390, %v6389
        %v6599 = vpack.c.b16 %v6392, %v6391
        %v6600 = vpack.c.b16 %v6394, %v6393
        %v6601 = vpack.c.b16 %v6396, %v6395
        %v6602 = vpack.c.b16 %v6398, %v6397
        %v6603 = vpack.c.b16 %v6400, %v6399
        %v6604 = vpack.c.b16 %v6402, %v6401
        %v6605 = vpack.c.b16 %v6404, %v6403
        %v6606 = vpack.c.b16 %v6406, %v6405
        %v6607 = vpack.c.b16 %v6408, %v6407
        %v6608 = vpack.c.b16 %v6410, %v6409
        %v6609 = vpack.c.b16 %v6412, %v6411
        %v6610 = vpack.c.b16 %v6414, %v6413
        %v6611 = vpack.c.b16 %v6416, %v6415
        %v6612 = vpack.c.b16 %v6418, %v6417
        %v6613 = vpack.c.b16 %v6420, %v6419
        %v6614 = vpack.c.b16 %v6422, %v6421
        %v6615 = vpack.c.b16 %v6424, %v6423
        %v6616 = vpack.c.b16 %v6426, %v6425
        %v6617 = vpack.c.b16 %v6428, %v6427
        %v6618 = vpack.c.b16 %v6430, %v6429
        %v6619 = vpack.c.b16 %v6432, %v6431
        %v6620 = vpack.c.b16 %v6434, %v6433
        %v6621 = vpack.c.b16 %v6436, %v6435
        %v6622 = vpack.c.b16 %v6438, %v6437
        %v6623 = vpack.c.b16 %v6440, %v6439
        %v6624 = vpack.c.b16 %v6442, %v6441
        %v6625 = vpack.c.b16 %v6444, %v6443
        %v6626 = vpack.c.b16 %v6446, %v6445
        %v6627 = vpack.c.b16 %v6448, %v6447
        %v6628 = vpack.c.b16 %v6450, %v6449
        %v6629 = vpack.c.b16 %v6452, %v6451
        %v6630 = vpack.c.b16 %v6454, %v6453
        %v6631 = vpack.c.b16 %v6456, %v6455
        %v6632 = vpack.c.b16 %v6458, %v6457
        %v6633 = vpack.c.b16 %v6460, %v6459
        %v6634 = vpack.c.b16 %v6462, %v6461
        %v6635 = vpack.c.b16 %v6464, %v6463
        %v6636 = vpack.c.b16 %v6466, %v6465
        %v6637 = vpack.c.b16 %v6468, %v6467
        %v6638 = vpack.c.b16 %v6470, %v6469
        %v6639 = vpack.c.b16 %v6472, %v6471
        %v6640 = vpack.c.b16 %v6474, %v6473
        %v6641 = vpack.c.b16 %v6476, %v6475
        %v6642 = vpack.c.b16 %v6478, %v6477
        %v6643 = vpack.c.b16 %v6480, %v6479
        %v6644 = vpack.c.b16 %v6482, %v6481
        %v6645 = vpack.c.b16 %v6484, %v6483
        %v6646 = vpack.c.b16 %v6486, %v6485
        %v6647 = vpack.c.b16 %v6488, %v6487
        %v6648 = vpack.c.b16 %v6490, %v6489
        %v6649 = vpack.c.b16 %v6492, %v6491
        %v6650 = vpack.c.b16 %v6494, %v6493
        %v6651 = vpack.c.b16 %v6496, %v6495
        %v6652 = vpack.c.b16 %v6498, %v6497
        %v6653 = vpack.c.b16 %v6500, %v6499
        %v6654 = vpack.c.b16 %v6502, %v6501
        %v6655 = vpack.c.b16 %v6504, %v6503
        %v6656 = vpack.c.b16 %v6506, %v6505
        %v6657 = vpack.c.b16 %v6508, %v6507
        %v6658 = vpack.c.b16 %v6510, %v6509
        %v6659 = vpack.c.b16 %v6512, %v6511
        %v6660 = vpack.c.b16 %v6514, %v6513
        %v6661 = vpack.c.b16 %v6516, %v6515
        %v6662 = vpack.c.b16 %v6518, %v6517
        %v6663 = vpack.c.b16 %v6520, %v6519
        %v6664 = vpack.c.b16 %v6522, %v6521
        %v6665 = vpack.c.b16 %v6524, %v6523
        %v6666 = vpack.c.b16 %v6526, %v6525
        %v6667 = vpack.c.b16 %v6528, %v6527
        %v6668 = vpack.c.b16 %v6530, %v6529
        %v6669 = vpack.c.b16 %v6532, %v6531
        %v6670 = vpack.c.b16 %v6534, %v6533
        %v6671 = vpack.c.b16 %v6536, %v6535
        %v6672 = vpack.c.b16 %v6538, %v6537
        %v6673 = vpack.c.b16 %v6540, %v6539
        %v6674 = vpack.c.b16 %v6542, %v6541
        %v6675 = vpack.c.b16 %v6544, %v6543
        %v6676 = vpack.c.b16 %v6546, %v6545
        %v6677 = vpack.c.b16 %v6548, %v6547
        %v6678 = vpack.c.b16 %v6550, %v6549
        %6807 = vmatprep.subr.bf16.mxu0 0
        %6808 = vmatpush1.bf16.msra.mxu0 %v6551
        %6809 = vmatprep.subr.bf16.mxu0 0
        %6810 = vmatpush1.bf16.msra.mxu0 %v6552
        %6811 = vmatprep.subr.bf16.mxu0 0
        %6812 = vmatpush1.bf16.msra.mxu0 %v6553
        %6813 = vmatprep.subr.bf16.mxu0 0
        %6814 = vmatpush1.bf16.msra.mxu0 %v6554
        %6815 = vmatprep.subr.bf16.mxu0 0
        %6816 = vmatpush1.bf16.msra.mxu0 %v6555
        %6817 = vmatprep.subr.bf16.mxu0 0
        %6818 = vmatpush1.bf16.msra.mxu0 %v6556
        %6819 = vmatprep.subr.bf16.mxu0 0
        %6820 = vmatpush1.bf16.msra.mxu0 %v6557
        %6821 = vmatprep.subr.bf16.mxu0 0
        %6822 = vmatpush1.bf16.msra.mxu0 %v6558
        %6823 = vmatprep.subr.bf16.mxu0 0
        %6824 = vmatpush1.bf16.msra.mxu0 %v6559
        %6825 = vmatprep.subr.bf16.mxu0 0
        %6826 = vmatpush1.bf16.msra.mxu0 %v6560
        %6827 = vmatprep.subr.bf16.mxu0 0
        %6828 = vmatpush1.bf16.msra.mxu0 %v6561
        %6829 = vmatprep.subr.bf16.mxu0 0
        %6830 = vmatpush1.bf16.msra.mxu0 %v6562
        %6831 = vmatprep.subr.bf16.mxu0 0
        %6832 = vmatpush1.bf16.msra.mxu0 %v6563
        %6833 = vmatprep.subr.bf16.mxu0 0
        %6834 = vmatpush1.bf16.msra.mxu0 %v6564
        %6835 = vmatprep.subr.bf16.mxu0 0
        %6836 = vmatpush1.bf16.msra.mxu0 %v6565
        %6837 = vmatprep.subr.bf16.mxu0 0
        %6838 = vmatpush1.bf16.msra.mxu0 %v6566
        %6839 = vmatprep.mubr.bf16.mxu0 %v5761
        %6840 = vmatmul.mubr.bf16.gmra.mrb[0].mxu0 %v5760
        %v6841 = vpop.f32.mrb[0].mxu0
        %v6842 = vadd.f32 %v6037, %v6841
        %v6843 = vpop.f32.mrb[0].mxu0
        %v6844 = vpop.f32.mrb[0].mxu0
        %v6845 = vpop.f32.mrb[0].mxu0
        %6846 = vdwg.mxu0
        %6847 = vmatprep.subr.bf16.mxu0 0
        %6848 = vmatpush1.bf16.msra.mxu0 %v6567
        %6849 = vmatprep.subr.bf16.mxu0 0
        %6850 = vmatpush1.bf16.msra.mxu0 %v6568
        %6851 = vmatprep.subr.bf16.mxu0 0
        %6852 = vmatpush1.bf16.msra.mxu0 %v6569
        %6853 = vmatprep.subr.bf16.mxu0 0
        %6854 = vmatpush1.bf16.msra.mxu0 %v6570
        %6855 = vmatprep.subr.bf16.mxu0 0
        %6856 = vmatpush1.bf16.msra.mxu0 %v6571
        %6857 = vmatprep.subr.bf16.mxu0 0
        %6858 = vmatpush1.bf16.msra.mxu0 %v6572
        %6859 = vmatprep.subr.bf16.mxu0 0
        %6860 = vmatpush1.bf16.msra.mxu0 %v6573
        %6861 = vmatprep.subr.bf16.mxu0 0
        %6862 = vmatpush1.bf16.msra.mxu0 %v6574
        %6863 = vmatprep.subr.bf16.mxu0 0
        %6864 = vmatpush1.bf16.msra.mxu0 %v6575
        %6865 = vmatprep.subr.bf16.mxu0 0
        %6866 = vmatpush1.bf16.msra.mxu0 %v6576
        %6867 = vmatprep.subr.bf16.mxu0 0
        %6868 = vmatpush1.bf16.msra.mxu0 %v6577
        %6869 = vmatprep.subr.bf16.mxu0 0
        %6870 = vmatpush1.bf16.msra.mxu0 %v6578
        %6871 = vmatprep.subr.bf16.mxu0 0
        %6872 = vmatpush1.bf16.msra.mxu0 %v6579
        %6873 = vmatprep.subr.bf16.mxu0 0
        %6874 = vmatpush1.bf16.msra.mxu0 %v6580
        %6875 = vmatprep.subr.bf16.mxu0 0
        %6876 = vmatpush1.bf16.msra.mxu0 %v6581
        %6877 = vmatprep.subr.bf16.mxu0 0
        %6878 = vmatpush1.bf16.msra.mxu0 %v6582
        %6879 = vmatprep.mubr.bf16.mxu0 %v5763
        %6880 = vmatmul.mubr.bf16.gmra.mrb[0].mxu0 %v5762
        %v6881 = vpop.f32.mrb[0].mxu0
        %v6882 = vadd.f32 %v6842, %v6881
        %v6883 = vpop.f32.mrb[0].mxu0
        %v6884 = vpop.f32.mrb[0].mxu0
        %v6885 = vpop.f32.mrb[0].mxu0
        %6886 = vdwg.mxu0
        %6887 = vmatprep.subr.bf16.mxu0 0
        %6888 = vmatpush1.bf16.msra.mxu0 %v6583
        %6889 = vmatprep.subr.bf16.mxu0 0
        %6890 = vmatpush1.bf16.msra.mxu0 %v6584
        %6891 = vmatprep.subr.bf16.mxu0 0
        %6892 = vmatpush1.bf16.msra.mxu0 %v6585
        %6893 = vmatprep.subr.bf16.mxu0 0
        %6894 = vmatpush1.bf16.msra.mxu0 %v6586
        %6895 = vmatprep.subr.bf16.mxu0 0
        %6896 = vmatpush1.bf16.msra.mxu0 %v6587
        %6897 = vmatprep.subr.bf16.mxu0 0
        %6898 = vmatpush1.bf16.msra.mxu0 %v6588
        %6899 = vmatprep.subr.bf16.mxu0 0
        %6900 = vmatpush1.bf16.msra.mxu0 %v6589
        %6901 = vmatprep.subr.bf16.mxu0 0
        %6902 = vmatpush1.bf16.msra.mxu0 %v6590
        %6903 = vmatprep.subr.bf16.mxu0 0
        %6904 = vmatpush1.bf16.msra.mxu0 %v6591
        %6905 = vmatprep.subr.bf16.mxu0 0
        %6906 = vmatpush1.bf16.msra.mxu0 %v6592
        %6907 = vmatprep.subr.bf16.mxu0 0
        %6908 = vmatpush1.bf16.msra.mxu0 %v6593
        %6909 = vmatprep.subr.bf16.mxu0 0
        %6910 = vmatpush1.bf16.msra.mxu0 %v6594
        %6911 = vmatprep.subr.bf16.mxu0 0
        %6912 = vmatpush1.bf16.msra.mxu0 %v6595
        %6913 = vmatprep.subr.bf16.mxu0 0
        %6914 = vmatpush1.bf16.msra.mxu0 %v6596
        %6915 = vmatprep.subr.bf16.mxu0 0
        %6916 = vmatpush1.bf16.msra.mxu0 %v6597
        %6917 = vmatprep.subr.bf16.mxu0 0
        %6918 = vmatpush1.bf16.msra.mxu0 %v6598
        %6919 = vmatprep.mubr.bf16.mxu0 %v5765
        %6920 = vmatmul.mubr.bf16.gmra.mrb[0].mxu0 %v5764
        %v6921 = vpop.f32.mrb[0].mxu0
        %v6922 = vadd.f32 %v6882, %v6921
        %v6923 = vpop.f32.mrb[0].mxu0
        %v6924 = vpop.f32.mrb[0].mxu0
        %v6925 = vpop.f32.mrb[0].mxu0
        %6926 = vdwg.mxu0
        %6927 = vmatprep.subr.bf16.mxu0 0
        %6928 = vmatpush1.bf16.msra.mxu0 %v6599
        %6929 = vmatprep.subr.bf16.mxu0 0
        %6930 = vmatpush1.bf16.msra.mxu0 %v6600
        %6931 = vmatprep.subr.bf16.mxu0 0
        %6932 = vmatpush1.bf16.msra.mxu0 %v6601
        %6933 = vmatprep.subr.bf16.mxu0 0
        %6934 = vmatpush1.bf16.msra.mxu0 %v6602
        %6935 = vmatprep.subr.bf16.mxu0 0
        %6936 = vmatpush1.bf16.msra.mxu0 %v6603
        %6937 = vmatprep.subr.bf16.mxu0 0
        %6938 = vmatpush1.bf16.msra.mxu0 %v6604
        %6939 = vmatprep.subr.bf16.mxu0 0
        %6940 = vmatpush1.bf16.msra.mxu0 %v6605
        %6941 = vmatprep.subr.bf16.mxu0 0
        %6942 = vmatpush1.bf16.msra.mxu0 %v6606
        %6943 = vmatprep.subr.bf16.mxu0 0
        %6944 = vmatpush1.bf16.msra.mxu0 %v6607
        %6945 = vmatprep.subr.bf16.mxu0 0
        %6946 = vmatpush1.bf16.msra.mxu0 %v6608
        %6947 = vmatprep.subr.bf16.mxu0 0
        %6948 = vmatpush1.bf16.msra.mxu0 %v6609
        %6949 = vmatprep.subr.bf16.mxu0 0
        %6950 = vmatpush1.bf16.msra.mxu0 %v6610
        %6951 = vmatprep.subr.bf16.mxu0 0
        %6952 = vmatpush1.bf16.msra.mxu0 %v6611
        %6953 = vmatprep.subr.bf16.mxu0 0
        %6954 = vmatpush1.bf16.msra.mxu0 %v6612
        %6955 = vmatprep.subr.bf16.mxu0 0
        %6956 = vmatpush1.bf16.msra.mxu0 %v6613
        %6957 = vmatprep.subr.bf16.mxu0 0
        %6958 = vmatpush1.bf16.msra.mxu0 %v6614
        %6959 = vmatprep.mubr.bf16.mxu0 %v5767
        %6960 = vmatmul.mubr.bf16.gmra.mrb[0].mxu0 %v5766
        %v6961 = vpop.f32.mrb[0].mxu0
        %v6962 = vadd.f32 %v6922, %v6961
        %v6963 = vpop.f32.mrb[0].mxu0
        %v6964 = vpop.f32.mrb[0].mxu0
        %v6965 = vpop.f32.mrb[0].mxu0
        %6966 = vdwg.mxu0
        %6967 = vmatprep.subr.bf16.mxu0 0
        %6968 = vmatpush1.bf16.msra.mxu0 %v6615
        %6969 = vmatprep.subr.bf16.mxu0 0
        %6970 = vmatpush1.bf16.msra.mxu0 %v6616
        %6971 = vmatprep.subr.bf16.mxu0 0
        %6972 = vmatpush1.bf16.msra.mxu0 %v6617
        %6973 = vmatprep.subr.bf16.mxu0 0
        %6974 = vmatpush1.bf16.msra.mxu0 %v6618
        %6975 = vmatprep.subr.bf16.mxu0 0
        %6976 = vmatpush1.bf16.msra.mxu0 %v6619
        %6977 = vmatprep.subr.bf16.mxu0 0
        %6978 = vmatpush1.bf16.msra.mxu0 %v6620
        %6979 = vmatprep.subr.bf16.mxu0 0
        %6980 = vmatpush1.bf16.msra.mxu0 %v6621
        %6981 = vmatprep.subr.bf16.mxu0 0
        %6982 = vmatpush1.bf16.msra.mxu0 %v6622
        %6983 = vmatprep.subr.bf16.mxu0 0
        %6984 = vmatpush1.bf16.msra.mxu0 %v6623
        %6985 = vmatprep.subr.bf16.mxu0 0
        %6986 = vmatpush1.bf16.msra.mxu0 %v6624
        %6987 = vmatprep.subr.bf16.mxu0 0
        %6988 = vmatpush1.bf16.msra.mxu0 %v6625
        %6989 = vmatprep.subr.bf16.mxu0 0
        %6990 = vmatpush1.bf16.msra.mxu0 %v6626
        %6991 = vmatprep.subr.bf16.mxu0 0
        %6992 = vmatpush1.bf16.msra.mxu0 %v6627
        %6993 = vmatprep.subr.bf16.mxu0 0
        %6994 = vmatpush1.bf16.msra.mxu0 %v6628
        %6995 = vmatprep.subr.bf16.mxu0 0
        %6996 = vmatpush1.bf16.msra.mxu0 %v6629
        %6997 = vmatprep.subr.bf16.mxu0 0
        %6998 = vmatpush1.bf16.msra.mxu0 %v6630
        %6999 = vmatprep.mubr.bf16.mxu0 %v5769
        %7000 = vmatmul.mubr.bf16.gmra.mrb[0].mxu0 %v5768
        %v7001 = vpop.f32.mrb[0].mxu0
        %v7002 = vadd.f32 %v6962, %v7001
        %v7003 = vpop.f32.mrb[0].mxu0
        %v7004 = vpop.f32.mrb[0].mxu0
        %v7005 = vpop.f32.mrb[0].mxu0
        %7006 = vdwg.mxu0
        %7007 = vmatprep.subr.bf16.mxu0 0
        %7008 = vmatpush1.bf16.msra.mxu0 %v6631
        %7009 = vmatprep.subr.bf16.mxu0 0
        %7010 = vmatpush1.bf16.msra.mxu0 %v6632
        %7011 = vmatprep.subr.bf16.mxu0 0
        %7012 = vmatpush1.bf16.msra.mxu0 %v6633
        %7013 = vmatprep.subr.bf16.mxu0 0
        %7014 = vmatpush1.bf16.msra.mxu0 %v6634
        %7015 = vmatprep.subr.bf16.mxu0 0
        %7016 = vmatpush1.bf16.msra.mxu0 %v6635
        %7017 = vmatprep.subr.bf16.mxu0 0
        %7018 = vmatpush1.bf16.msra.mxu0 %v6636
        %7019 = vmatprep.subr.bf16.mxu0 0
        %7020 = vmatpush1.bf16.msra.mxu0 %v6637
        %7021 = vmatprep.subr.bf16.mxu0 0
        %7022 = vmatpush1.bf16.msra.mxu0 %v6638
        %7023 = vmatprep.subr.bf16.mxu0 0
        %7024 = vmatpush1.bf16.msra.mxu0 %v6639
        %7025 = vmatprep.subr.bf16.mxu0 0
        %7026 = vmatpush1.bf16.msra.mxu0 %v6640
        %7027 = vmatprep.subr.bf16.mxu0 0
        %7028 = vmatpush1.bf16.msra.mxu0 %v6641
        %7029 = vmatprep.subr.bf16.mxu0 0
        %7030 = vmatpush1.bf16.msra.mxu0 %v6642
        %7031 = vmatprep.subr.bf16.mxu0 0
        %7032 = vmatpush1.bf16.msra.mxu0 %v6643
        %7033 = vmatprep.subr.bf16.mxu0 0
        %7034 = vmatpush1.bf16.msra.mxu0 %v6644
        %7035 = vmatprep.subr.bf16.mxu0 0
        %7036 = vmatpush1.bf16.msra.mxu0 %v6645
        %7037 = vmatprep.subr.bf16.mxu0 0
        %7038 = vmatpush1.bf16.msra.mxu0 %v6646
        %7039 = vmatprep.mubr.bf16.mxu0 %v5771
        %7040 = vmatmul.mubr.bf16.gmra.mrb[0].mxu0 %v5770
        %v7041 = vpop.f32.mrb[0].mxu0
        %v7042 = vadd.f32 %v7002, %v7041
        %v7043 = vpop.f32.mrb[0].mxu0
        %v7044 = vpop.f32.mrb[0].mxu0
        %v7045 = vpop.f32.mrb[0].mxu0
        %7046 = vdwg.mxu0
        %7047 = vmatprep.subr.bf16.mxu0 0
        %7048 = vmatpush1.bf16.msra.mxu0 %v6647
        %7049 = vmatprep.subr.bf16.mxu0 0
        %7050 = vmatpush1.bf16.msra.mxu0 %v6648
        %7051 = vmatprep.subr.bf16.mxu0 0
        %7052 = vmatpush1.bf16.msra.mxu0 %v6649
        %7053 = vmatprep.subr.bf16.mxu0 0
        %7054 = vmatpush1.bf16.msra.mxu0 %v6650
        %7055 = vmatprep.subr.bf16.mxu0 0
        %7056 = vmatpush1.bf16.msra.mxu0 %v6651
        %7057 = vmatprep.subr.bf16.mxu0 0
        %7058 = vmatpush1.bf16.msra.mxu0 %v6652
        %7059 = vmatprep.subr.bf16.mxu0 0
        %7060 = vmatpush1.bf16.msra.mxu0 %v6653
        %7061 = vmatprep.subr.bf16.mxu0 0
        %7062 = vmatpush1.bf16.msra.mxu0 %v6654
        %7063 = vmatprep.subr.bf16.mxu0 0
        %7064 = vmatpush1.bf16.msra.mxu0 %v6655
        %7065 = vmatprep.subr.bf16.mxu0 0
        %7066 = vmatpush1.bf16.msra.mxu0 %v6656
        %7067 = vmatprep.subr.bf16.mxu0 0
        %7068 = vmatpush1.bf16.msra.mxu0 %v6657
        %7069 = vmatprep.subr.bf16.mxu0 0
        %7070 = vmatpush1.bf16.msra.mxu0 %v6658
        %7071 = vmatprep.subr.bf16.mxu0 0
        %7072 = vmatpush1.bf16.msra.mxu0 %v6659
        %7073 = vmatprep.subr.bf16.mxu0 0
        %7074 = vmatpush1.bf16.msra.mxu0 %v6660
        %7075 = vmatprep.subr.bf16.mxu0 0
        %7076 = vmatpush1.bf16.msra.mxu0 %v6661
        %7077 = vmatprep.subr.bf16.mxu0 0
        %7078 = vmatpush1.bf16.msra.mxu0 %v6662
        %7079 = vmatprep.mubr.bf16.mxu0 %v5773
        %7080 = vmatmul.mubr.bf16.gmra.mrb[0].mxu0 %v5772
        %v7081 = vpop.f32.mrb[0].mxu0
        %v7082 = vadd.f32 %v7042, %v7081
        %v7083 = vpop.f32.mrb[0].mxu0
        %v7084 = vpop.f32.mrb[0].mxu0
        %v7085 = vpop.f32.mrb[0].mxu0
        %7086 = vdwg.mxu0
        %7087 = vmatprep.subr.bf16.mxu0 0
        %7088 = vmatpush1.bf16.msra.mxu0 %v6663
        %7089 = vmatprep.subr.bf16.mxu0 0
        %7090 = vmatpush1.bf16.msra.mxu0 %v6664
        %7091 = vmatprep.subr.bf16.mxu0 0
        %7092 = vmatpush1.bf16.msra.mxu0 %v6665
        %7093 = vmatprep.subr.bf16.mxu0 0
        %7094 = vmatpush1.bf16.msra.mxu0 %v6666
        %7095 = vmatprep.subr.bf16.mxu0 0
        %7096 = vmatpush1.bf16.msra.mxu0 %v6667
        %7097 = vmatprep.subr.bf16.mxu0 0
        %7098 = vmatpush1.bf16.msra.mxu0 %v6668
        %7099 = vmatprep.subr.bf16.mxu0 0
        %7100 = vmatpush1.bf16.msra.mxu0 %v6669
        %7101 = vmatprep.subr.bf16.mxu0 0
        %7102 = vmatpush1.bf16.msra.mxu0 %v6670
        %7103 = vmatprep.subr.bf16.mxu0 0
        %7104 = vmatpush1.bf16.msra.mxu0 %v6671
        %7105 = vmatprep.subr.bf16.mxu0 0
        %7106 = vmatpush1.bf16.msra.mxu0 %v6672
        %7107 = vmatprep.subr.bf16.mxu0 0
        %7108 = vmatpush1.bf16.msra.mxu0 %v6673
        %7109 = vmatprep.subr.bf16.mxu0 0
        %7110 = vmatpush1.bf16.msra.mxu0 %v6674
        %7111 = vmatprep.subr.bf16.mxu0 0
        %7112 = vmatpush1.bf16.msra.mxu0 %v6675
        %7113 = vmatprep.subr.bf16.mxu0 0
        %7114 = vmatpush1.bf16.msra.mxu0 %v6676
        %7115 = vmatprep.subr.bf16.mxu0 0
        %7116 = vmatpush1.bf16.msra.mxu0 %v6677
        %7117 = vmatprep.subr.bf16.mxu0 0
        %7118 = vmatpush1.bf16.msra.mxu0 %v6678
        %7119 = vmatprep.mubr.bf16.mxu0 %v5775
        %7120 = vmatmul.mubr.bf16.gmra.mrb[0].mxu0 %v5774
        %v7121 = vpop.f32.mrb[0].mxu0
        %v7122 = vadd.f32 %v7082, %v7121
        %v7123 = vpop.f32.mrb[0].mxu0
        %v7124 = vpop.f32.mrb[0].mxu0
        %v7125 = vpop.f32.mrb[0].mxu0
        %7126 = vdwg.mxu0
        %7127 = vst [vmem:[%s1660] sm:$0xff] %v7122
        %p7128 = scmp.eq.s32.totalorder %s105, 1
        // Predicated region
        $region205: #{tpu_custom_call.1} parent=147 // pred_check
          %p7129 = pneg %p7128
        $region206: #{tpu_custom_call.1} parent=147 // pred_check_branch
          %7131 = sbr.rel (%p7129) target = $region208
        $region207: #{tpu_custom_call.1} parent=147 // pred_region
          %v7132 = vld [vmem:[%s61] sm:$0x1]
          %v7133 = vld [vmem:[%s63] sm:$0x1]
          %7134 = vadd.xlane.f32.xlu0 %v7122
          %v7135 = vpop.xlane.xlu0 %7134
          %v7136 = vmul.f32 %v7135, %v1731
          %v7137 = vsub.f32 %v7122, %v7136
          %v7138 = vmul.f32 %v7137, %v7137
          %7139 = vadd.xlane.f32.xlu0 %v7138
          %v7140 = vpop.xlane.xlu0 %7139
          %v7141 = vmul.f32 %v7140, 0.007874016
          %v7142 = vrsqrt.pop %v7141
          %v7143 = vmul.f32 %v7141, %v7142
          %vm7144 = vcmp.eq.f32.partialorder %v7141, inf
          %v7145 = vsel %vm7144, %v7141, %v7143
          %vm7146 = vcmp.eq.f32.partialorder %v7141, 0.0
          %v7147 = vand.u32 %v7141, 2147483648
          %v7148 = vsel %vm7146, %v7147, %v7145
          %v7149 = vadd.f32 %v7148, 1e-06
          %v7150 = vrcp.pop %v7149
          %v7152 = vlaneseq
          %v7153 = vshrl.u32 %v7152, 7
          %v7154 = vsub.s32 0, %v7153
          %v7155 = vrot.slane %v7132, %v7154
          %v7157 = vmul.f32 %v7155, %v7137
          %v7158 = vmul.f32 %v7157, %v7150
          %v7160 = vlaneseq
          %v7161 = vshrl.u32 %v7160, 7
          %v7162 = vsub.s32 0, %v7161
          %v7163 = vrot.slane %v7133, %v7162
          %v7165 = vadd.f32 %v7158, %v7163
          %7166 = vst [vmem:[%s1660] sm:$0xff] %v7165
        $region208: #{tpu_custom_call.1} parent=147 // pred_fallthru
          _
        %s7167 = sand.u32 %s942, 1
        %s7168 = scalar_lea.sflag [#allocation4], %s7167
        %s7169 = sand.u32 %s942, 1
        %s7170 = smul.addr %s7169, 8
        %s7171 = scalar_lea.vmem [#allocation23], %s7170
        // Predicated region
        $region209: #{tpu_custom_call.1} parent=147 // pred_check
          %p7172 = pneg %p952
        $region210: #{tpu_custom_call.1} parent=147 // pred_check_branch
          %7174 = sbr.rel (%p7172) target = $region212
        $region211: #{tpu_custom_call.1} parent=147 // pred_region
          %s7176 = ssub.s32 128, 128
          %7177 = vsyncadd %s7168, %s7176
          %s7178 = smul.addr %s104, 128
          %s7179 = scalar_lea.hbm %s65, %s7178
          %s7181 = sshll.u32 %s7171, 4
          %s7182 = int_to_ptr.vmem [resolvable:$true] %s7181
          %7184 = dma.vmem_to_hbm [thread:$0]  %s7182, 128, %s7179, %s7168
        $region212: #{tpu_custom_call.1} parent=147 // pred_fallthru
          _
      $region148: #{tpu_custom_call.1} parent=5 // pred_fallthru
        _
      %p7185 = scmp.le.s32.totalorder 2, %s95
      // Predicated region
      $region213: #{tpu_custom_call.1} parent=5 // pred_check
        %p7186 = pneg %p7185
      $region214: #{tpu_custom_call.1} parent=5 // pred_check_branch
        %7188 = sbr.rel (%p7186) target = $region216
      $region215: #{tpu_custom_call.1} parent=5 // pred_region
        %s7189 = ssub.s32 %s95, 2
        // Predicated region
        $region217: #{tpu_custom_call.1} parent=215 // pred_check
          %p7190 = pneg %p958
        $region218: #{tpu_custom_call.1} parent=215 // pred_check_branch
          %7192 = sbr.rel (%p7190) target = $region220
        $region219: #{tpu_custom_call.1} parent=215 // pred_region
          %s7193 = sand.u32 %s943, 1
          %s7194 = scalar_lea.sflag [#allocation4], %s7193
          %s7195 = sand.u32 %s943, 1
          %s7196 = smul.addr %s7195, 8
          %s7197 = scalar_lea.vmem [#allocation23], %s7196
          %7198 = dma.done %s7194, 128
        $region220: #{tpu_custom_call.1} parent=215 // pred_fallthru
          _
      $region216: #{tpu_custom_call.1} parent=5 // pred_fallthru
        _
    $region6: #{tpu_custom_call.1} parent=1 // loop_footer
      %s99 = sadd.s32 1, %s95
    $region7: #{tpu_custom_call.1} parent=1 // loop_footer_branch
      %94 = sbr.rel target = $region3
    $region8: #{tpu_custom_call.1} parent=1 // loop_exit
      _
    %7199 = vsyncpa [#allocation3], 1
    %s7200 = scalar_lea.sflag [#allocation3], 1
    %7201 = vsyncpa %s7200, 1
    %7202 = vsyncpa [#allocation6], 1
    %s7203 = scalar_lea.sflag [#allocation6], 1
    %7204 = vsyncpa %s7203, 1
    %7205 = vsyncpa [#allocation9], 1
    %s7206 = scalar_lea.sflag [#allocation9], 1
    %7207 = vsyncpa %s7206, 1
    %7208 = vsyncpa [#allocation12], 1
    %s7209 = scalar_lea.sflag [#allocation12], 1
    %7210 = vsyncpa %s7209, 1
    %7211 = vsyncpa [#allocation15], 1
    %s7212 = scalar_lea.sflag [#allocation15], 1
    %7213 = vsyncpa %s7212, 1
    %7214 = vsyncpa [#allocation18], 1
    %s7215 = scalar_lea.sflag [#allocation18], 1
    %7216 = vsyncpa %s7215, 1
    %7217 = vsyncpa [#allocation21], 1
    %s7218 = scalar_lea.sflag [#allocation21], 1
    %7219 = vsyncpa %s7218, 1
    %7220 = vsyncpa [#allocation4], 1
    %s7221 = scalar_lea.sflag [#allocation4], 1
    %7222 = vsyncpa %s7221, 1

</llo_original>
